<compile_context>
chip_gen: v5e
topology: v5e:2x2
jax: 0.10.0
libtpu: 0.0.40
codegen_flags: <defaults>
</compile_context>

<pallas_src>
import numpy as np

import jax
import jax.numpy as jnp
from jax.experimental import pallas as pl
from jax.experimental.pallas import tpu as pltpu


# ----------------------------------------------------------------------------
# Static geometry implied by the PyTorch module (16x16 input).
# ----------------------------------------------------------------------------
C0, C1, C2 = 3, 16, 4            # conv1 in/out, conv2 out channels
CM, COUT = 16, 3                 # t_conv1 out, t_conv2 out channels
H1 = W1 = 16                     # input spatial size
H2 = W2 = 8                      # after pool1
H3 = W3 = 4                      # after pool2
HP1 = WP1 = H1 + 2               # padded conv1 grid (18)
HP2 = WP2 = H2 + 2               # padded conv2 grid (10)
R1 = HP1 * WP1                   # 324 rows of the padded conv1 grid (per image)
R2 = HP2 * WP2                   # 100 rows of the padded conv2 grid
G1 = 22                          # guard rows around conv1 grid (>= WP1+1, keeps block % 8 == 0)
G2 = 12                          # guard rows around conv2 grid (>= WP2+1)
R1G = R1 + 2 * G1                # 368  rows of the per-image input block
R2G = R2 + 2 * G2                # 124  rows of the padded conv2 input buffer
NW1 = R1 - WP1 - 1               # 305  rows of the dense 2x2-window max over the conv1 grid
NW2 = R2 - WP2 - 1               # 89   rows of the dense 2x2-window max over the conv2 grid
LANES_MID = 2 * W3 * CM          # 128  decoder mid lanes  (q, cm)
LANES_OUT = 2 * W2 * COUT        # 48   output lanes       (ww, c)


# ----------------------------------------------------------------------------
# The single fused kernel (one grid step per image).
# ----------------------------------------------------------------------------
def _autoencoder_kernel(xp1_ref, w1_ref, b1_ref, p1_ref, w2_ref, b2_ref,
                        p2_ref, e_ref, c1_ref, bt1_ref, bmat_ref, bt2_ref,
                        out_ref, acc1_ref, xp2_ref, y2_ref):
    f32, bf16 = jnp.float32, jnp.bfloat16

    # ---- conv1 (3x3, pad=1) + bias + relu: 9 shifted bf16 matmuls -----------
    for t in range(9):
        di, dj = divmod(t, 3)
        s = G1 + (di - 1) * WP1 + (dj - 1)                     # static offset
        xs = xp1_ref[s:s + R1, :].astype(bf16)                 # (324, 3)
        acc = jnp.dot(xs, w1_ref[t], preferred_element_type=f32)
        if t == 0:
            acc1_ref[...] = acc
        else:
            acc1_ref[...] += acc
    acc1_ref[...] = jnp.maximum(acc1_ref[...] + b1_ref[...], 0.0)  # (324, 16)

    # ---- maxpool 2x2 fused: dense 4-tap max + selection matmul that scatters
    #      the pooled pixels into the zero-padded conv2 input grid ------------
    wm1 = jnp.maximum(
        jnp.maximum(acc1_ref[0:NW1, :], acc1_ref[1:NW1 + 1, :]),
        jnp.maximum(acc1_ref[WP1:WP1 + NW1, :],
                    acc1_ref[WP1 + 1:WP1 + 1 + NW1, :]))       # (305, 16)
    xp2_ref[...] = jnp.dot(p1_ref[...], wm1.astype(bf16),
                           preferred_element_type=f32)         # (124, 16)

    # ---- conv2 (3x3, pad=1) + bias + relu ------------------------------------
    acc2 = jnp.zeros((R2, C2), f32)
    for t in range(9):
        di, dj = divmod(t, 3)
        s = G2 + (di - 1) * WP2 + (dj - 1)
        xs = xp2_ref[s:s + R2, :].astype(bf16)                 # (100, 16)
        acc2 = acc2 + jnp.dot(xs, w2_ref[t], preferred_element_type=f32)
    y2_ref[...] = jnp.maximum(acc2 + b2_ref[...], 0.0)         # (100, 4)

    # ---- maxpool 2x2 + regroup to rows=(i), lanes=(j*C2 + cin) ---------------
    wm2 = jnp.maximum(
        jnp.maximum(y2_ref[0:NW2, :], y2_ref[1:NW2 + 1, :]),
        jnp.maximum(y2_ref[WP2:WP2 + NW2, :],
                    y2_ref[WP2 + 1:WP2 + 1 + NW2, :]))         # (89, 4)
    wm2 = wm2.astype(bf16)
    zg = jnp.zeros((H3, W3 * C2), f32)                         # (4, 16)
    for j in range(W3):
        sel = jnp.dot(p2_ref[j], wm2, preferred_element_type=f32)       # (4, 4)
        zg = zg + jnp.dot(sel.astype(bf16), e_ref[j],
                          preferred_element_type=f32)
    zg = zg.astype(bf16)

    # ---- decoder: t_conv1 + relu, t_conv2 + sigmoid, per (a1, a2) row group --
    # rows of the matmuls are i (=h3 index), lanes carry (q, cm) / (ww, c); the
    # 2x2/stride-2 upsample interleave is realised by the output-row scatter.
    for a1 in range(2):
        m = jnp.dot(zg, c1_ref[a1], preferred_element_type=f32) + bt1_ref[...]
        m = jnp.maximum(m, 0.0).astype(bf16)                   # (4, 128)
        for a2 in range(2):
            o = jnp.dot(m, bmat_ref[a2],
                        preferred_element_type=f32) + bt2_ref[...]
            o = jax.nn.sigmoid(o)                              # (4, 48)
            off = 2 * a1 + a2                                  # output row hh = 4*i + off
            for i in range(H3):
                out_ref[4 * i + off:4 * i + off + 1, :] = o[i:i + 1, :]


# ----------------------------------------------------------------------------
# Host-side constants: pool selection matrices and transposed-conv indicators.
# ----------------------------------------------------------------------------
def _build_selection_constants():
    # P1: dense 2x2-max over conv1 grid -> zero-padded conv2 input rows.
    p1 = np.zeros((R2G, NW1), np.float32)
    for hp in range(1, H2 + 1):
        for wp in range(1, W2 + 1):
            p1[G2 + hp * WP2 + wp, (2 * hp - 1) * WP1 + (2 * wp - 1)] = 1.0
    # P2[j]: dense 2x2-max over conv2 grid -> pooled rows i (for column j).
    p2 = np.zeros((W3, H3, NW2), np.float32)
    for j in range(W3):
        for i in range(H3):
            p2[j, i, (2 * i + 1) * WP2 + (2 * j + 1)] = 1.0
    # E[j]: place the C2 channels into lane block j of the (j, cin) packing.
    e = np.zeros((W3, C2, W3 * C2), np.float32)
    for j in range(W3):
        for c in range(C2):
            e[j, c, j * C2 + c] = 1.0
    # Indicators used to build the block-structured transposed-conv weights.
    d1 = np.zeros((W3, 2 * W3, 2), np.float32)     # [j, q, b]  = (q  == 2j + b)
    for j in range(W3):
        for b in range(2):
            d1[j, 2 * j + b, b] = 1.0
    d2 = np.zeros((W2, 2 * W2, 2), np.float32)     # [q, ww, b] = (ww == 2q + b)
    for q in range(W2):
        for b in range(2):
            d2[q, 2 * q + b, b] = 1.0
    return p1, p2, e, d1, d2


_P1, _P2, _E, _D1, _D2 = _build_selection_constants()


def pack_params(params):
    """Pack PyTorch-layout weights into the kernel's matmul operands."""
    bf16 = jnp.bfloat16
    # t_conv1: C[a1][(j*4+cin), ((2j+b1)*16+cm)] = Wt1[cin, cm, a1, b1]
    c1 = jnp.einsum("jqb,nmab->ajnqm", jnp.asarray(_D1), params["tw1"])
    c1 = c1.reshape(2, W3 * C2, LANES_MID)                    # (2, 16, 128)
    # t_conv2: B[a2][(q*16+cm), ((2q+b2)*3+c)] = Wt2[cm, c, a2, b2]
    bmat = jnp.einsum("qwb,mcab->aqmwc", jnp.asarray(_D2), params["tw2"])
    bmat = bmat.reshape(2, LANES_MID, LANES_OUT)              # (2, 128, 48)
    return {
        "w1": jnp.transpose(params["w1"], (2, 3, 1, 0)).reshape(9, C0, C1).astype(bf16),
        "b1": params["b1"].reshape(1, C1).astype(jnp.float32),
        "p1": jnp.asarray(_P1, bf16),
        "w2": jnp.transpose(params["w2"], (2, 3, 1, 0)).reshape(9, C1, C2).astype(bf16),
        "b2": params["b2"].reshape(1, C2).astype(jnp.float32),
        "p2": jnp.asarray(_P2, bf16),
        "e": jnp.asarray(_E, bf16),
        "c1": c1.astype(bf16),
        "bt1": jnp.tile(params["tb1"], 2 * W3).reshape(1, LANES_MID).astype(jnp.float32),
        "bmat": bmat.astype(bf16),
        "bt2": jnp.tile(params["tb2"], 2 * W2).reshape(1, LANES_OUT).astype(jnp.float32),
    }


# ----------------------------------------------------------------------------
# Full forward pass: one pallas_call, grid over the batch ("parallel").
# ----------------------------------------------------------------------------
def conv_autoencoder_forward(x_nchw, packed):
    n = x_nchw.shape[0]
    # Tiny one-shot input prep (single fused XLA op on the 6 KB input):
    # NCHW -> NHWC -> 1-px zero border -> flat (hp, wp) rows -> zero guard rows.
    x = jnp.transpose(x_nchw, (0, 2, 3, 1))
    x = jnp.pad(x, ((0, 0), (1, 1), (1, 1), (0, 0)))
    x = x.reshape(n, R1, C0)
    x = jnp.pad(x, ((0, 0), (G1, G1), (0, 0)))
    x = x.reshape(n * R1G, C0)

    out = pl.pallas_call(
        _autoencoder_kernel,
        out_shape=jax.ShapeDtypeStruct((n * H1, W1 * COUT), jnp.float32),
        grid=(n,),
        in_specs=[
            pl.BlockSpec((R1G, C0), lambda i: (i, 0)),                 # per-image input
            pl.BlockSpec((9, C0, C1), lambda i: (0, 0, 0)),            # conv1 taps (bf16)
            pl.BlockSpec((1, C1), lambda i: (0, 0)),                   # conv1 bias
            pl.BlockSpec((R2G, NW1), lambda i: (0, 0)),                # pool1 scatter matrix
            pl.BlockSpec((9, C1, C2), lambda i: (0, 0, 0)),            # conv2 taps
            pl.BlockSpec((1, C2), lambda i: (0, 0)),                   # conv2 bias
            pl.BlockSpec((W3, H3, NW2), lambda i: (0, 0, 0)),          # pool2 row selectors
            pl.BlockSpec((W3, C2, W3 * C2), lambda i: (0, 0, 0)),      # pool2 lane placement
            pl.BlockSpec((2, W3 * C2, LANES_MID), lambda i: (0, 0, 0)),    # t_conv1 weights
            pl.BlockSpec((1, LANES_MID), lambda i: (0, 0)),            # t_conv1 bias (tiled)
            pl.BlockSpec((2, LANES_MID, LANES_OUT), lambda i: (0, 0, 0)),  # t_conv2 weights
            pl.BlockSpec((1, LANES_OUT), lambda i: (0, 0)),            # t_conv2 bias (tiled)
        ],
        out_specs=pl.BlockSpec((H1, W1 * COUT), lambda i: (i, 0)),     # per-image NHWC rows
        scratch_shapes=[
            pltpu.VMEM((R1, C1), jnp.float32),     # conv1 accumulator / activations
            pltpu.VMEM((R2G, C1), jnp.float32),    # zero-padded conv2 input
            pltpu.VMEM((R2, C2), jnp.float32),     # conv2 activations
        ],
        compiler_params=pltpu.CompilerParams(
            dimension_semantics=("parallel",),     # v7x: one image per TensorCore
        ),
    )(x, packed["w1"], packed["b1"], packed["p1"], packed["w2"], packed["b2"],
      packed["p2"], packed["e"], packed["c1"], packed["bt1"],
      packed["bmat"], packed["bt2"])

    # Only remaining XLA glue: one reshape/transpose of the final 6 KB output.
    out = out.reshape(n, H1, W1, COUT)
    return jnp.transpose(out, (0, 3, 1, 2))        # NHWC -> NCHW


# ----------------------------------------------------------------------------
# Pure-JAX f32 reference (for the correctness check).
# ----------------------------------------------------------------------------
def reference_forward(x, params):
    def conv(x, w, b):
        y = jax.lax.conv_general_dilated(
            x, w, (1, 1), ((1, 1), (1, 1)),
            dimension_numbers=("NCHW", "OIHW", "NCHW"))
        return y + b.reshape(1, -1, 1, 1)

    def pool(x):
        return jax.lax.reduce_window(
            x, -jnp.inf, jax.lax.max, (1, 1, 2, 2), (1, 1, 2, 2), "VALID")

    def tconv(x, w, b):
        wf = w[:, :, ::-1, ::-1]   # spatial flip; weight layout is IOHW
        y = jax.lax.conv_general_dilated(
            x, wf, (1, 1), ((1, 1), (1, 1)), lhs_dilation=(2, 2),
            dimension_numbers=("NCHW", "IOHW", "NCHW"))
        return y + b.reshape(1, -1, 1, 1)

    x = jax.nn.relu(conv(x, params["w1"], params["b1"]))
    x = pool(x)
    x = jax.nn.relu(conv(x, params["w2"], params["b2"]))
    x = pool(x)
    x = jax.nn.relu(tconv(x, params["tw1"], params["tb1"]))
    x = jax.nn.sigmoid(tconv(x, params["tw2"], params["tb2"]))
    return x


# ----------------------------------------------------------------------------
# Deterministic parameter init (PyTorch-default-style uniform bounds).
# ----------------------------------------------------------------------------
def init_params(key):
    def u(key, shape, fan_in):
        bound = 1.0 / np.sqrt(fan_in)
        return jax.random.uniform(key, shape, jnp.float32, -bound, bound)

    ks = jax.random.split(key, 8)
    return {
        # nn.Conv2d(3, 16, 3): weight (Cout, Cin, kh, kw)
        "w1": u(ks[0], (16, 3, 3, 3), 3 * 9), "b1": u(ks[1], (16,), 3 * 9),
        # nn.Conv2d(16, 4, 3)
        "w2": u(ks[2], (4, 16, 3, 3), 16 * 9), "b2": u(ks[3], (4,), 16 * 9),
        # nn.ConvTranspose2d(4, 16, 2): weight (Cin, Cout, kh, kw)
        "tw1": u(ks[4], (4, 16, 2, 2), 4 * 4), "tb1": u(ks[5], (16,), 4 * 4),
        # nn.ConvTranspose2d(16, 3, 2)
        "tw2": u(ks[6], (16, 3, 2, 2), 16 * 4), "tb2": u(ks[7], (3,), 16 * 4),
    }


if __name__ == "__main__":
    key = jax.random.PRNGKey(0)
    pkey, xkey = jax.random.split(key)
    params = init_params(pkey)

    # batch=2, 3 channels, 16x16 (NCHW), consistent with the module
    x = jax.random.normal(xkey, (2, 3, 16, 16), dtype=jnp.float32)

    packed = pack_params(params)
    fwd = jax.jit(conv_autoencoder_forward)
    out = jax.block_until_ready(fwd(x, packed))
    assert out.shape == (2, 3, 16, 16), out.shape

    ref = jax.block_until_ready(reference_forward(x, params))
    # bf16 MXU operands with f32 accumulation -> compare with a bf16-level tolerance.
    np.testing.assert_allclose(np.asarray(out), np.asarray(ref), rtol=2e-2, atol=2e-2)

    print("KERNEL_OK")
</pallas_src>

<mosaic_0001>
module attributes {stable_mosaic.version = 11 : i64} {
  func.func @_autoencoder_kernel(%arg0: i32, %arg1: memref<368x3xf32, #tpu.memory_space<vmem>>, %arg2: memref<9x3x16xbf16, #tpu.memory_space<vmem>>, %arg3: memref<1x16xf32, #tpu.memory_space<vmem>>, %arg4: memref<124x305xbf16, #tpu.memory_space<vmem>>, %arg5: memref<9x16x4xbf16, #tpu.memory_space<vmem>>, %arg6: memref<1x4xf32, #tpu.memory_space<vmem>>, %arg7: memref<4x4x89xbf16, #tpu.memory_space<vmem>>, %arg8: memref<4x4x16xbf16, #tpu.memory_space<vmem>>, %arg9: memref<2x16x128xbf16, #tpu.memory_space<vmem>>, %arg10: memref<1x128xf32, #tpu.memory_space<vmem>>, %arg11: memref<2x128x48xbf16, #tpu.memory_space<vmem>>, %arg12: memref<1x48xf32, #tpu.memory_space<vmem>>, %arg13: memref<16x48xf32, #tpu.memory_space<vmem>>, %arg14: memref<324x16xf32, #tpu.memory_space<vmem>>, %arg15: memref<124x16xf32, #tpu.memory_space<vmem>>, %arg16: memref<100x4xf32, #tpu.memory_space<vmem>>) attributes {dimension_semantics = [#tpu.dimension_semantics<parallel>], iteration_bounds = array<i64: 2>, scalar_prefetch = 0 : i64, scratch_operands = 3 : i64, tpu.core_type = #tpu.core_type<tc>, window_params = [{transform_indices = @transform_0, window_bounds = array<i64: 368, 3>}, {pipeline_mode = #tpu.pipeline_mode<synchronous>, transform_indices = @transform_1, window_bounds = array<i64: 9, 3, 16>}, {pipeline_mode = #tpu.pipeline_mode<synchronous>, transform_indices = @transform_2, window_bounds = array<i64: 1, 16>}, {pipeline_mode = #tpu.pipeline_mode<synchronous>, transform_indices = @transform_3, window_bounds = array<i64: 124, 305>}, {pipeline_mode = #tpu.pipeline_mode<synchronous>, transform_indices = @transform_4, window_bounds = array<i64: 9, 16, 4>}, {pipeline_mode = #tpu.pipeline_mode<synchronous>, transform_indices = @transform_5, window_bounds = array<i64: 1, 4>}, {pipeline_mode = #tpu.pipeline_mode<synchronous>, transform_indices = @transform_6, window_bounds = array<i64: 4, 4, 89>}, {pipeline_mode = #tpu.pipeline_mode<synchronous>, transform_indices = @transform_7, window_bounds = array<i64: 4, 4, 16>}, {pipeline_mode = #tpu.pipeline_mode<synchronous>, transform_indices = @transform_8, window_bounds = array<i64: 2, 16, 128>}, {pipeline_mode = #tpu.pipeline_mode<synchronous>, transform_indices = @transform_9, window_bounds = array<i64: 1, 128>}, {pipeline_mode = #tpu.pipeline_mode<synchronous>, transform_indices = @transform_10, window_bounds = array<i64: 2, 128, 48>}, {pipeline_mode = #tpu.pipeline_mode<synchronous>, transform_indices = @transform_11, window_bounds = array<i64: 1, 48>}, {transform_indices = @transform_12, window_bounds = array<i64: 16, 48>}]} {
    %c3 = arith.constant 3 : index
    %c0 = arith.constant 0 : index
    %0 = vector.load %arg1[%c3, %c0] : memref<368x3xf32, #tpu.memory_space<vmem>>, vector<324x3xf32>
    %1 = arith.truncf %0 : vector<324x3xf32> to vector<324x3xbf16>
    %c0_0 = arith.constant 0 : index
    %c0_1 = arith.constant 0 : index
    %c0_2 = arith.constant 0 : index
    %2 = vector.load %arg2[%c0_0, %c0_1, %c0_2] : memref<9x3x16xbf16, #tpu.memory_space<vmem>>, vector<1x3x16xbf16>
    %3 = vector.shape_cast %2 : vector<1x3x16xbf16> to vector<3x16xbf16>
    %cst = arith.constant dense<0.000000e+00> : vector<324x16xf32>
    %4 = tpu.matmul %1, %3, %cst {dimension_numbers = #tpu.dot_dimension_numbers<[1], [0], [0], [1], [0, 0, 1, 1], [], []>} : vector<324x3xbf16>, vector<3x16xbf16>, vector<324x16xf32> -> vector<324x16xf32>
    %c0_3 = arith.constant 0 : index
    %c0_4 = arith.constant 0 : index
    %5 = vector.load %arg14[%c0_3, %c0_4] : memref<324x16xf32, #tpu.memory_space<vmem>>, vector<324x16xf32>
    tpu.vector_store %arg14[%c0_3, %c0_4], %4 {strides = array<i32>} : memref<324x16xf32, #tpu.memory_space<vmem>>, vector<324x16xf32>,
    %c4 = arith.constant 4 : index
    %c0_5 = arith.constant 0 : index
    %6 = vector.load %arg1[%c4, %c0_5] : memref<368x3xf32, #tpu.memory_space<vmem>>, vector<324x3xf32>
    %7 = arith.truncf %6 : vector<324x3xf32> to vector<324x3xbf16>
    %c1 = arith.constant 1 : index
    %c0_6 = arith.constant 0 : index
    %c0_7 = arith.constant 0 : index
    %8 = vector.load %arg2[%c1, %c0_6, %c0_7] : memref<9x3x16xbf16, #tpu.memory_space<vmem>>, vector<1x3x16xbf16>
    %9 = vector.shape_cast %8 : vector<1x3x16xbf16> to vector<3x16xbf16>
    %cst_8 = arith.constant dense<0.000000e+00> : vector<324x16xf32>
    %10 = tpu.matmul %7, %9, %cst_8 {dimension_numbers = #tpu.dot_dimension_numbers<[1], [0], [0], [1], [0, 0, 1, 1], [], []>} : vector<324x3xbf16>, vector<3x16xbf16>, vector<324x16xf32> -> vector<324x16xf32>
    %c0_9 = arith.constant 0 : index
    %c0_10 = arith.constant 0 : index
    %11 = vector.load %arg14[%c0_9, %c0_10] : memref<324x16xf32, #tpu.memory_space<vmem>>, vector<324x16xf32>
    %12 = arith.addf %11, %10 : vector<324x16xf32>
    %c0_11 = arith.constant 0 : index
    %c0_12 = arith.constant 0 : index
    %13 = vector.load %arg14[%c0_11, %c0_12] : memref<324x16xf32, #tpu.memory_space<vmem>>, vector<324x16xf32>
    tpu.vector_store %arg14[%c0_11, %c0_12], %12 {strides = array<i32>} : memref<324x16xf32, #tpu.memory_space<vmem>>, vector<324x16xf32>,
    %c5 = arith.constant 5 : index
    %c0_13 = arith.constant 0 : index
    %14 = vector.load %arg1[%c5, %c0_13] : memref<368x3xf32, #tpu.memory_space<vmem>>, vector<324x3xf32>
    %15 = arith.truncf %14 : vector<324x3xf32> to vector<324x3xbf16>
    %c2 = arith.constant 2 : index
    %c0_14 = arith.constant 0 : index
    %c0_15 = arith.constant 0 : index
    %16 = vector.load %arg2[%c2, %c0_14, %c0_15] : memref<9x3x16xbf16, #tpu.memory_space<vmem>>, vector<1x3x16xbf16>
    %17 = vector.shape_cast %16 : vector<1x3x16xbf16> to vector<3x16xbf16>
    %cst_16 = arith.constant dense<0.000000e+00> : vector<324x16xf32>
    %18 = tpu.matmul %15, %17, %cst_16 {dimension_numbers = #tpu.dot_dimension_numbers<[1], [0], [0], [1], [0, 0, 1, 1], [], []>} : vector<324x3xbf16>, vector<3x16xbf16>, vector<324x16xf32> -> vector<324x16xf32>
    %c0_17 = arith.constant 0 : index
    %c0_18 = arith.constant 0 : index
    %19 = vector.load %arg14[%c0_17, %c0_18] : memref<324x16xf32, #tpu.memory_space<vmem>>, vector<324x16xf32>
    %20 = arith.addf %19, %18 : vector<324x16xf32>
    %c0_19 = arith.constant 0 : index
    %c0_20 = arith.constant 0 : index
    %21 = vector.load %arg14[%c0_19, %c0_20] : memref<324x16xf32, #tpu.memory_space<vmem>>, vector<324x16xf32>
    tpu.vector_store %arg14[%c0_19, %c0_20], %20 {strides = array<i32>} : memref<324x16xf32, #tpu.memory_space<vmem>>, vector<324x16xf32>,
    %c21 = arith.constant 21 : index
    %c0_21 = arith.constant 0 : index
    %22 = vector.load %arg1[%c21, %c0_21] : memref<368x3xf32, #tpu.memory_space<vmem>>, vector<324x3xf32>
    %23 = arith.truncf %22 : vector<324x3xf32> to vector<324x3xbf16>
    %c3_22 = arith.constant 3 : index
    %c0_23 = arith.constant 0 : index
    %c0_24 = arith.constant 0 : index
    %24 = vector.load %arg2[%c3_22, %c0_23, %c0_24] : memref<9x3x16xbf16, #tpu.memory_space<vmem>>, vector<1x3x16xbf16>
    %25 = vector.shape_cast %24 : vector<1x3x16xbf16> to vector<3x16xbf16>
    %cst_25 = arith.constant dense<0.000000e+00> : vector<324x16xf32>
    %26 = tpu.matmul %23, %25, %cst_25 {dimension_numbers = #tpu.dot_dimension_numbers<[1], [0], [0], [1], [0, 0, 1, 1], [], []>} : vector<324x3xbf16>, vector<3x16xbf16>, vector<324x16xf32> -> vector<324x16xf32>
    %c0_26 = arith.constant 0 : index
    %c0_27 = arith.constant 0 : index
    %27 = vector.load %arg14[%c0_26, %c0_27] : memref<324x16xf32, #tpu.memory_space<vmem>>, vector<324x16xf32>
    %28 = arith.addf %27, %26 : vector<324x16xf32>
    %c0_28 = arith.constant 0 : index
    %c0_29 = arith.constant 0 : index
    %29 = vector.load %arg14[%c0_28, %c0_29] : memref<324x16xf32, #tpu.memory_space<vmem>>, vector<324x16xf32>
    tpu.vector_store %arg14[%c0_28, %c0_29], %28 {strides = array<i32>} : memref<324x16xf32, #tpu.memory_space<vmem>>, vector<324x16xf32>,
    %c22 = arith.constant 22 : index
    %c0_30 = arith.constant 0 : index
    %30 = vector.load %arg1[%c22, %c0_30] : memref<368x3xf32, #tpu.memory_space<vmem>>, vector<324x3xf32>
    %31 = arith.truncf %30 : vector<324x3xf32> to vector<324x3xbf16>
    %c4_31 = arith.constant 4 : index
    %c0_32 = arith.constant 0 : index
    %c0_33 = arith.constant 0 : index
    %32 = vector.load %arg2[%c4_31, %c0_32, %c0_33] : memref<9x3x16xbf16, #tpu.memory_space<vmem>>, vector<1x3x16xbf16>
    %33 = vector.shape_cast %32 : vector<1x3x16xbf16> to vector<3x16xbf16>
    %cst_34 = arith.constant dense<0.000000e+00> : vector<324x16xf32>
    %34 = tpu.matmul %31, %33, %cst_34 {dimension_numbers = #tpu.dot_dimension_numbers<[1], [0], [0], [1], [0, 0, 1, 1], [], []>} : vector<324x3xbf16>, vector<3x16xbf16>, vector<324x16xf32> -> vector<324x16xf32>
    %c0_35 = arith.constant 0 : index
    %c0_36 = arith.constant 0 : index
    %35 = vector.load %arg14[%c0_35, %c0_36] : memref<324x16xf32, #tpu.memory_space<vmem>>, vector<324x16xf32>
    %36 = arith.addf %35, %34 : vector<324x16xf32>
    %c0_37 = arith.constant 0 : index
    %c0_38 = arith.constant 0 : index
    %37 = vector.load %arg14[%c0_37, %c0_38] : memref<324x16xf32, #tpu.memory_space<vmem>>, vector<324x16xf32>
    tpu.vector_store %arg14[%c0_37, %c0_38], %36 {strides = array<i32>} : memref<324x16xf32, #tpu.memory_space<vmem>>, vector<324x16xf32>,
    %c23 = arith.constant 23 : index
    %c0_39 = arith.constant 0 : index
    %38 = vector.load %arg1[%c23, %c0_39] : memref<368x3xf32, #tpu.memory_space<vmem>>, vector<324x3xf32>
    %39 = arith.truncf %38 : vector<324x3xf32> to vector<324x3xbf16>
    %c5_40 = arith.constant 5 : index
    %c0_41 = arith.constant 0 : index
    %c0_42 = arith.constant 0 : index
    %40 = vector.load %arg2[%c5_40, %c0_41, %c0_42] : memref<9x3x16xbf16, #tpu.memory_space<vmem>>, vector<1x3x16xbf16>
    %41 = vector.shape_cast %40 : vector<1x3x16xbf16> to vector<3x16xbf16>
    %cst_43 = arith.constant dense<0.000000e+00> : vector<324x16xf32>
    %42 = tpu.matmul %39, %41, %cst_43 {dimension_numbers = #tpu.dot_dimension_numbers<[1], [0], [0], [1], [0, 0, 1, 1], [], []>} : vector<324x3xbf16>, vector<3x16xbf16>, vector<324x16xf32> -> vector<324x16xf32>
    %c0_44 = arith.constant 0 : index
    %c0_45 = arith.constant 0 : index
    %43 = vector.load %arg14[%c0_44, %c0_45] : memref<324x16xf32, #tpu.memory_space<vmem>>, vector<324x16xf32>
    %44 = arith.addf %43, %42 : vector<324x16xf32>
    %c0_46 = arith.constant 0 : index
    %c0_47 = arith.constant 0 : index
    %45 = vector.load %arg14[%c0_46, %c0_47] : memref<324x16xf32, #tpu.memory_space<vmem>>, vector<324x16xf32>
    tpu.vector_store %arg14[%c0_46, %c0_47], %44 {strides = array<i32>} : memref<324x16xf32, #tpu.memory_space<vmem>>, vector<324x16xf32>,
    %c39 = arith.constant 39 : index
    %c0_48 = arith.constant 0 : index
    %46 = vector.load %arg1[%c39, %c0_48] : memref<368x3xf32, #tpu.memory_space<vmem>>, vector<324x3xf32>
    %47 = arith.truncf %46 : vector<324x3xf32> to vector<324x3xbf16>
    %c6 = arith.constant 6 : index
    %c0_49 = arith.constant 0 : index
    %c0_50 = arith.constant 0 : index
    %48 = vector.load %arg2[%c6, %c0_49, %c0_50] : memref<9x3x16xbf16, #tpu.memory_space<vmem>>, vector<1x3x16xbf16>
    %49 = vector.shape_cast %48 : vector<1x3x16xbf16> to vector<3x16xbf16>
    %cst_51 = arith.constant dense<0.000000e+00> : vector<324x16xf32>
    %50 = tpu.matmul %47, %49, %cst_51 {dimension_numbers = #tpu.dot_dimension_numbers<[1], [0], [0], [1], [0, 0, 1, 1], [], []>} : vector<324x3xbf16>, vector<3x16xbf16>, vector<324x16xf32> -> vector<324x16xf32>
    %c0_52 = arith.constant 0 : index
    %c0_53 = arith.constant 0 : index
    %51 = vector.load %arg14[%c0_52, %c0_53] : memref<324x16xf32, #tpu.memory_space<vmem>>, vector<324x16xf32>
    %52 = arith.addf %51, %50 : vector<324x16xf32>
    %c0_54 = arith.constant 0 : index
    %c0_55 = arith.constant 0 : index
    %53 = vector.load %arg14[%c0_54, %c0_55] : memref<324x16xf32, #tpu.memory_space<vmem>>, vector<324x16xf32>
    tpu.vector_store %arg14[%c0_54, %c0_55], %52 {strides = array<i32>} : memref<324x16xf32, #tpu.memory_space<vmem>>, vector<324x16xf32>,
    %c40 = arith.constant 40 : index
    %c0_56 = arith.constant 0 : index
    %54 = vector.load %arg1[%c40, %c0_56] : memref<368x3xf32, #tpu.memory_space<vmem>>, vector<324x3xf32>
    %55 = arith.truncf %54 : vector<324x3xf32> to vector<324x3xbf16>
    %c7 = arith.constant 7 : index
    %c0_57 = arith.constant 0 : index
    %c0_58 = arith.constant 0 : index
    %56 = vector.load %arg2[%c7, %c0_57, %c0_58] : memref<9x3x16xbf16, #tpu.memory_space<vmem>>, vector<1x3x16xbf16>
    %57 = vector.shape_cast %56 : vector<1x3x16xbf16> to vector<3x16xbf16>
    %cst_59 = arith.constant dense<0.000000e+00> : vector<324x16xf32>
    %58 = tpu.matmul %55, %57, %cst_59 {dimension_numbers = #tpu.dot_dimension_numbers<[1], [0], [0], [1], [0, 0, 1, 1], [], []>} : vector<324x3xbf16>, vector<3x16xbf16>, vector<324x16xf32> -> vector<324x16xf32>
    %c0_60 = arith.constant 0 : index
    %c0_61 = arith.constant 0 : index
    %59 = vector.load %arg14[%c0_60, %c0_61] : memref<324x16xf32, #tpu.memory_space<vmem>>, vector<324x16xf32>
    %60 = arith.addf %59, %58 : vector<324x16xf32>
    %c0_62 = arith.constant 0 : index
    %c0_63 = arith.constant 0 : index
    %61 = vector.load %arg14[%c0_62, %c0_63] : memref<324x16xf32, #tpu.memory_space<vmem>>, vector<324x16xf32>
    tpu.vector_store %arg14[%c0_62, %c0_63], %60 {strides = array<i32>} : memref<324x16xf32, #tpu.memory_space<vmem>>, vector<324x16xf32>,
    %c41 = arith.constant 41 : index
    %c0_64 = arith.constant 0 : index
    %62 = vector.load %arg1[%c41, %c0_64] : memref<368x3xf32, #tpu.memory_space<vmem>>, vector<324x3xf32>
    %63 = arith.truncf %62 : vector<324x3xf32> to vector<324x3xbf16>
    %c8 = arith.constant 8 : index
    %c0_65 = arith.constant 0 : index
    %c0_66 = arith.constant 0 : index
    %64 = vector.load %arg2[%c8, %c0_65, %c0_66] : memref<9x3x16xbf16, #tpu.memory_space<vmem>>, vector<1x3x16xbf16>
    %65 = vector.shape_cast %64 : vector<1x3x16xbf16> to vector<3x16xbf16>
    %cst_67 = arith.constant dense<0.000000e+00> : vector<324x16xf32>
    %66 = tpu.matmul %63, %65, %cst_67 {dimension_numbers = #tpu.dot_dimension_numbers<[1], [0], [0], [1], [0, 0, 1, 1], [], []>} : vector<324x3xbf16>, vector<3x16xbf16>, vector<324x16xf32> -> vector<324x16xf32>
    %c0_68 = arith.constant 0 : index
    %c0_69 = arith.constant 0 : index
    %67 = vector.load %arg14[%c0_68, %c0_69] : memref<324x16xf32, #tpu.memory_space<vmem>>, vector<324x16xf32>
    %68 = arith.addf %67, %66 : vector<324x16xf32>
    %c0_70 = arith.constant 0 : index
    %c0_71 = arith.constant 0 : index
    %69 = vector.load %arg14[%c0_70, %c0_71] : memref<324x16xf32, #tpu.memory_space<vmem>>, vector<324x16xf32>
    tpu.vector_store %arg14[%c0_70, %c0_71], %68 {strides = array<i32>} : memref<324x16xf32, #tpu.memory_space<vmem>>, vector<324x16xf32>,
    %c0_72 = arith.constant 0 : index
    %c0_73 = arith.constant 0 : index
    %70 = vector.load %arg14[%c0_72, %c0_73] : memref<324x16xf32, #tpu.memory_space<vmem>>, vector<324x16xf32>
    %c0_74 = arith.constant 0 : index
    %c0_75 = arith.constant 0 : index
    %71 = vector.load %arg3[%c0_74, %c0_75] : memref<1x16xf32, #tpu.memory_space<vmem>>, vector<1x16xf32>
    %72 = vector.broadcast %71 : vector<1x16xf32> to vector<324x16xf32>
    %73 = arith.addf %70, %72 : vector<324x16xf32>
    %cst_76 = arith.constant 0.000000e+00 : f32
    %74 = vector.broadcast %cst_76 : f32 to vector<324x16xf32>
    %75 = arith.maximumf %73, %74 : vector<324x16xf32>
    %c0_77 = arith.constant 0 : index
    %c0_78 = arith.constant 0 : index
    %76 = vector.load %arg14[%c0_77, %c0_78] : memref<324x16xf32, #tpu.memory_space<vmem>>, vector<324x16xf32>
    tpu.vector_store %arg14[%c0_77, %c0_78], %75 {strides = array<i32>} : memref<324x16xf32, #tpu.memory_space<vmem>>, vector<324x16xf32>,
    %c0_79 = arith.constant 0 : index
    %c0_80 = arith.constant 0 : index
    %77 = vector.load %arg14[%c0_79, %c0_80] : memref<324x16xf32, #tpu.memory_space<vmem>>, vector<305x16xf32>
    %c1_81 = arith.constant 1 : index
    %c0_82 = arith.constant 0 : index
    %78 = vector.load %arg14[%c1_81, %c0_82] : memref<324x16xf32, #tpu.memory_space<vmem>>, vector<305x16xf32>
    %79 = arith.maximumf %77, %78 : vector<305x16xf32>
    %c18 = arith.constant 18 : index
    %c0_83 = arith.constant 0 : index
    %80 = vector.load %arg14[%c18, %c0_83] : memref<324x16xf32, #tpu.memory_space<vmem>>, vector<305x16xf32>
    %c19 = arith.constant 19 : index
    %c0_84 = arith.constant 0 : index
    %81 = vector.load %arg14[%c19, %c0_84] : memref<324x16xf32, #tpu.memory_space<vmem>>, vector<305x16xf32>
    %82 = arith.maximumf %80, %81 : vector<305x16xf32>
    %83 = arith.maximumf %79, %82 : vector<305x16xf32>
    %c0_85 = arith.constant 0 : index
    %c0_86 = arith.constant 0 : index
    %84 = vector.load %arg4[%c0_85, %c0_86] : memref<124x305xbf16, #tpu.memory_space<vmem>>, vector<124x305xbf16>
    %85 = arith.truncf %83 : vector<305x16xf32> to vector<305x16xbf16>
    %cst_87 = arith.constant dense<0.000000e+00> : vector<124x16xf32>
    %86 = tpu.matmul %84, %85, %cst_87 {dimension_numbers = #tpu.dot_dimension_numbers<[1], [0], [0], [1], [0, 0, 1, 1], [], []>} : vector<124x305xbf16>, vector<305x16xbf16>, vector<124x16xf32> -> vector<124x16xf32>
    %c0_88 = arith.constant 0 : index
    %c0_89 = arith.constant 0 : index
    %87 = vector.load %arg15[%c0_88, %c0_89] : memref<124x16xf32, #tpu.memory_space<vmem>>, vector<124x16xf32>
    tpu.vector_store %arg15[%c0_88, %c0_89], %86 {strides = array<i32>} : memref<124x16xf32, #tpu.memory_space<vmem>>, vector<124x16xf32>,
    %cst_90 = arith.constant 0.000000e+00 : f32
    %88 = vector.broadcast %cst_90 : f32 to vector<100x4xf32>
    %c1_91 = arith.constant 1 : index
    %c0_92 = arith.constant 0 : index
    %89 = vector.load %arg15[%c1_91, %c0_92] : memref<124x16xf32, #tpu.memory_space<vmem>>, vector<100x16xf32>
    %90 = arith.truncf %89 : vector<100x16xf32> to vector<100x16xbf16>
    %c0_93 = arith.constant 0 : index
    %c0_94 = arith.constant 0 : index
    %c0_95 = arith.constant 0 : index
    %91 = vector.load %arg5[%c0_93, %c0_94, %c0_95] : memref<9x16x4xbf16, #tpu.memory_space<vmem>>, vector<1x16x4xbf16>
    %92 = vector.shape_cast %91 : vector<1x16x4xbf16> to vector<16x4xbf16>
    %cst_96 = arith.constant dense<0.000000e+00> : vector<100x4xf32>
    %93 = tpu.matmul %90, %92, %cst_96 {dimension_numbers = #tpu.dot_dimension_numbers<[1], [0], [0], [1], [0, 0, 1, 1], [], []>} : vector<100x16xbf16>, vector<16x4xbf16>, vector<100x4xf32> -> vector<100x4xf32>
    %94 = arith.addf %88, %93 : vector<100x4xf32>
    %c2_97 = arith.constant 2 : index
    %c0_98 = arith.constant 0 : index
    %95 = vector.load %arg15[%c2_97, %c0_98] : memref<124x16xf32, #tpu.memory_space<vmem>>, vector<100x16xf32>
    %96 = arith.truncf %95 : vector<100x16xf32> to vector<100x16xbf16>
    %c1_99 = arith.constant 1 : index
    %c0_100 = arith.constant 0 : index
    %c0_101 = arith.constant 0 : index
    %97 = vector.load %arg5[%c1_99, %c0_100, %c0_101] : memref<9x16x4xbf16, #tpu.memory_space<vmem>>, vector<1x16x4xbf16>
    %98 = vector.shape_cast %97 : vector<1x16x4xbf16> to vector<16x4xbf16>
    %cst_102 = arith.constant dense<0.000000e+00> : vector<100x4xf32>
    %99 = tpu.matmul %96, %98, %cst_102 {dimension_numbers = #tpu.dot_dimension_numbers<[1], [0], [0], [1], [0, 0, 1, 1], [], []>} : vector<100x16xbf16>, vector<16x4xbf16>, vector<100x4xf32> -> vector<100x4xf32>
    %100 = arith.addf %94, %99 : vector<100x4xf32>
    %c3_103 = arith.constant 3 : index
    %c0_104 = arith.constant 0 : index
    %101 = vector.load %arg15[%c3_103, %c0_104] : memref<124x16xf32, #tpu.memory_space<vmem>>, vector<100x16xf32>
    %102 = arith.truncf %101 : vector<100x16xf32> to vector<100x16xbf16>
    %c2_105 = arith.constant 2 : index
    %c0_106 = arith.constant 0 : index
    %c0_107 = arith.constant 0 : index
    %103 = vector.load %arg5[%c2_105, %c0_106, %c0_107] : memref<9x16x4xbf16, #tpu.memory_space<vmem>>, vector<1x16x4xbf16>
    %104 = vector.shape_cast %103 : vector<1x16x4xbf16> to vector<16x4xbf16>
    %cst_108 = arith.constant dense<0.000000e+00> : vector<100x4xf32>
    %105 = tpu.matmul %102, %104, %cst_108 {dimension_numbers = #tpu.dot_dimension_numbers<[1], [0], [0], [1], [0, 0, 1, 1], [], []>} : vector<100x16xbf16>, vector<16x4xbf16>, vector<100x4xf32> -> vector<100x4xf32>
    %106 = arith.addf %100, %105 : vector<100x4xf32>
    %c11 = arith.constant 11 : index
    %c0_109 = arith.constant 0 : index
    %107 = vector.load %arg15[%c11, %c0_109] : memref<124x16xf32, #tpu.memory_space<vmem>>, vector<100x16xf32>
    %108 = arith.truncf %107 : vector<100x16xf32> to vector<100x16xbf16>
    %c3_110 = arith.constant 3 : index
    %c0_111 = arith.constant 0 : index
    %c0_112 = arith.constant 0 : index
    %109 = vector.load %arg5[%c3_110, %c0_111, %c0_112] : memref<9x16x4xbf16, #tpu.memory_space<vmem>>, vector<1x16x4xbf16>
    %110 = vector.shape_cast %109 : vector<1x16x4xbf16> to vector<16x4xbf16>
    %cst_113 = arith.constant dense<0.000000e+00> : vector<100x4xf32>
    %111 = tpu.matmul %108, %110, %cst_113 {dimension_numbers = #tpu.dot_dimension_numbers<[1], [0], [0], [1], [0, 0, 1, 1], [], []>} : vector<100x16xbf16>, vector<16x4xbf16>, vector<100x4xf32> -> vector<100x4xf32>
    %112 = arith.addf %106, %111 : vector<100x4xf32>
    %c12 = arith.constant 12 : index
    %c0_114 = arith.constant 0 : index
    %113 = vector.load %arg15[%c12, %c0_114] : memref<124x16xf32, #tpu.memory_space<vmem>>, vector<100x16xf32>
    %114 = arith.truncf %113 : vector<100x16xf32> to vector<100x16xbf16>
    %c4_115 = arith.constant 4 : index
    %c0_116 = arith.constant 0 : index
    %c0_117 = arith.constant 0 : index
    %115 = vector.load %arg5[%c4_115, %c0_116, %c0_117] : memref<9x16x4xbf16, #tpu.memory_space<vmem>>, vector<1x16x4xbf16>
    %116 = vector.shape_cast %115 : vector<1x16x4xbf16> to vector<16x4xbf16>
    %cst_118 = arith.constant dense<0.000000e+00> : vector<100x4xf32>
    %117 = tpu.matmul %114, %116, %cst_118 {dimension_numbers = #tpu.dot_dimension_numbers<[1], [0], [0], [1], [0, 0, 1, 1], [], []>} : vector<100x16xbf16>, vector<16x4xbf16>, vector<100x4xf32> -> vector<100x4xf32>
    %118 = arith.addf %112, %117 : vector<100x4xf32>
    %c13 = arith.constant 13 : index
    %c0_119 = arith.constant 0 : index
    %119 = vector.load %arg15[%c13, %c0_119] : memref<124x16xf32, #tpu.memory_space<vmem>>, vector<100x16xf32>
    %120 = arith.truncf %119 : vector<100x16xf32> to vector<100x16xbf16>
    %c5_120 = arith.constant 5 : index
    %c0_121 = arith.constant 0 : index
    %c0_122 = arith.constant 0 : index
    %121 = vector.load %arg5[%c5_120, %c0_121, %c0_122] : memref<9x16x4xbf16, #tpu.memory_space<vmem>>, vector<1x16x4xbf16>
    %122 = vector.shape_cast %121 : vector<1x16x4xbf16> to vector<16x4xbf16>
    %cst_123 = arith.constant dense<0.000000e+00> : vector<100x4xf32>
    %123 = tpu.matmul %120, %122, %cst_123 {dimension_numbers = #tpu.dot_dimension_numbers<[1], [0], [0], [1], [0, 0, 1, 1], [], []>} : vector<100x16xbf16>, vector<16x4xbf16>, vector<100x4xf32> -> vector<100x4xf32>
    %124 = arith.addf %118, %123 : vector<100x4xf32>
    %c21_124 = arith.constant 21 : index
    %c0_125 = arith.constant 0 : index
    %125 = vector.load %arg15[%c21_124, %c0_125] : memref<124x16xf32, #tpu.memory_space<vmem>>, vector<100x16xf32>
    %126 = arith.truncf %125 : vector<100x16xf32> to vector<100x16xbf16>
    %c6_126 = arith.constant 6 : index
    %c0_127 = arith.constant 0 : index
    %c0_128 = arith.constant 0 : index
    %127 = vector.load %arg5[%c6_126, %c0_127, %c0_128] : memref<9x16x4xbf16, #tpu.memory_space<vmem>>, vector<1x16x4xbf16>
    %128 = vector.shape_cast %127 : vector<1x16x4xbf16> to vector<16x4xbf16>
    %cst_129 = arith.constant dense<0.000000e+00> : vector<100x4xf32>
    %129 = tpu.matmul %126, %128, %cst_129 {dimension_numbers = #tpu.dot_dimension_numbers<[1], [0], [0], [1], [0, 0, 1, 1], [], []>} : vector<100x16xbf16>, vector<16x4xbf16>, vector<100x4xf32> -> vector<100x4xf32>
    %130 = arith.addf %124, %129 : vector<100x4xf32>
    %c22_130 = arith.constant 22 : index
    %c0_131 = arith.constant 0 : index
    %131 = vector.load %arg15[%c22_130, %c0_131] : memref<124x16xf32, #tpu.memory_space<vmem>>, vector<100x16xf32>
    %132 = arith.truncf %131 : vector<100x16xf32> to vector<100x16xbf16>
    %c7_132 = arith.constant 7 : index
    %c0_133 = arith.constant 0 : index
    %c0_134 = arith.constant 0 : index
    %133 = vector.load %arg5[%c7_132, %c0_133, %c0_134] : memref<9x16x4xbf16, #tpu.memory_space<vmem>>, vector<1x16x4xbf16>
    %134 = vector.shape_cast %133 : vector<1x16x4xbf16> to vector<16x4xbf16>
    %cst_135 = arith.constant dense<0.000000e+00> : vector<100x4xf32>
    %135 = tpu.matmul %132, %134, %cst_135 {dimension_numbers = #tpu.dot_dimension_numbers<[1], [0], [0], [1], [0, 0, 1, 1], [], []>} : vector<100x16xbf16>, vector<16x4xbf16>, vector<100x4xf32> -> vector<100x4xf32>
    %136 = arith.addf %130, %135 : vector<100x4xf32>
    %c23_136 = arith.constant 23 : index
    %c0_137 = arith.constant 0 : index
    %137 = vector.load %arg15[%c23_136, %c0_137] : memref<124x16xf32, #tpu.memory_space<vmem>>, vector<100x16xf32>
    %138 = arith.truncf %137 : vector<100x16xf32> to vector<100x16xbf16>
    %c8_138 = arith.constant 8 : index
    %c0_139 = arith.constant 0 : index
    %c0_140 = arith.constant 0 : index
    %139 = vector.load %arg5[%c8_138, %c0_139, %c0_140] : memref<9x16x4xbf16, #tpu.memory_space<vmem>>, vector<1x16x4xbf16>
    %140 = vector.shape_cast %139 : vector<1x16x4xbf16> to vector<16x4xbf16>
    %cst_141 = arith.constant dense<0.000000e+00> : vector<100x4xf32>
    %141 = tpu.matmul %138, %140, %cst_141 {dimension_numbers = #tpu.dot_dimension_numbers<[1], [0], [0], [1], [0, 0, 1, 1], [], []>} : vector<100x16xbf16>, vector<16x4xbf16>, vector<100x4xf32> -> vector<100x4xf32>
    %142 = arith.addf %136, %141 : vector<100x4xf32>
    %c0_142 = arith.constant 0 : index
    %c0_143 = arith.constant 0 : index
    %143 = vector.load %arg6[%c0_142, %c0_143] : memref<1x4xf32, #tpu.memory_space<vmem>>, vector<1x4xf32>
    %144 = vector.broadcast %143 : vector<1x4xf32> to vector<100x4xf32>
    %145 = arith.addf %142, %144 : vector<100x4xf32>
    %cst_144 = arith.constant 0.000000e+00 : f32
    %146 = vector.broadcast %cst_144 : f32 to vector<100x4xf32>
    %147 = arith.maximumf %145, %146 : vector<100x4xf32>
    %c0_145 = arith.constant 0 : index
    %c0_146 = arith.constant 0 : index
    %148 = vector.load %arg16[%c0_145, %c0_146] : memref<100x4xf32, #tpu.memory_space<vmem>>, vector<100x4xf32>
    tpu.vector_store %arg16[%c0_145, %c0_146], %147 {strides = array<i32>} : memref<100x4xf32, #tpu.memory_space<vmem>>, vector<100x4xf32>,
    %c0_147 = arith.constant 0 : index
    %c0_148 = arith.constant 0 : index
    %149 = vector.load %arg16[%c0_147, %c0_148] : memref<100x4xf32, #tpu.memory_space<vmem>>, vector<89x4xf32>
    %c1_149 = arith.constant 1 : index
    %c0_150 = arith.constant 0 : index
    %150 = vector.load %arg16[%c1_149, %c0_150] : memref<100x4xf32, #tpu.memory_space<vmem>>, vector<89x4xf32>
    %151 = arith.maximumf %149, %150 : vector<89x4xf32>
    %c10 = arith.constant 10 : index
    %c0_151 = arith.constant 0 : index
    %152 = vector.load %arg16[%c10, %c0_151] : memref<100x4xf32, #tpu.memory_space<vmem>>, vector<89x4xf32>
    %c11_152 = arith.constant 11 : index
    %c0_153 = arith.constant 0 : index
    %153 = vector.load %arg16[%c11_152, %c0_153] : memref<100x4xf32, #tpu.memory_space<vmem>>, vector<89x4xf32>
    %154 = arith.maximumf %152, %153 : vector<89x4xf32>
    %155 = arith.maximumf %151, %154 : vector<89x4xf32>
    %156 = arith.truncf %155 : vector<89x4xf32> to vector<89x4xbf16>
    %cst_154 = arith.constant 0.000000e+00 : f32
    %157 = vector.broadcast %cst_154 : f32 to vector<4x16xf32>
    %c0_155 = arith.constant 0 : index
    %c0_156 = arith.constant 0 : index
    %c0_157 = arith.constant 0 : index
    %158 = vector.load %arg7[%c0_155, %c0_156, %c0_157] : memref<4x4x89xbf16, #tpu.memory_space<vmem>>, vector<1x4x89xbf16>
    %159 = vector.shape_cast %158 : vector<1x4x89xbf16> to vector<4x89xbf16>
    %cst_158 = arith.constant dense<0.000000e+00> : vector<4x4xf32>
    %160 = tpu.matmul %159, %156, %cst_158 {dimension_numbers = #tpu.dot_dimension_numbers<[1], [0], [0], [1], [0, 0, 1, 1], [], []>} : vector<4x89xbf16>, vector<89x4xbf16>, vector<4x4xf32> -> vector<4x4xf32>
    %161 = arith.truncf %160 : vector<4x4xf32> to vector<4x4xbf16>
    %c0_159 = arith.constant 0 : index
    %c0_160 = arith.constant 0 : index
    %c0_161 = arith.constant 0 : index
    %162 = vector.load %arg8[%c0_159, %c0_160, %c0_161] : memref<4x4x16xbf16, #tpu.memory_space<vmem>>, vector<1x4x16xbf16>
    %163 = vector.shape_cast %162 : vector<1x4x16xbf16> to vector<4x16xbf16>
    %cst_162 = arith.constant dense<0.000000e+00> : vector<4x16xf32>
    %164 = tpu.matmul %161, %163, %cst_162 {dimension_numbers = #tpu.dot_dimension_numbers<[1], [0], [0], [1], [0, 0, 1, 1], [], []>} : vector<4x4xbf16>, vector<4x16xbf16>, vector<4x16xf32> -> vector<4x16xf32>
    %165 = arith.addf %157, %164 : vector<4x16xf32>
    %c1_163 = arith.constant 1 : index
    %c0_164 = arith.constant 0 : index
    %c0_165 = arith.constant 0 : index
    %166 = vector.load %arg7[%c1_163, %c0_164, %c0_165] : memref<4x4x89xbf16, #tpu.memory_space<vmem>>, vector<1x4x89xbf16>
    %167 = vector.shape_cast %166 : vector<1x4x89xbf16> to vector<4x89xbf16>
    %cst_166 = arith.constant dense<0.000000e+00> : vector<4x4xf32>
    %168 = tpu.matmul %167, %156, %cst_166 {dimension_numbers = #tpu.dot_dimension_numbers<[1], [0], [0], [1], [0, 0, 1, 1], [], []>} : vector<4x89xbf16>, vector<89x4xbf16>, vector<4x4xf32> -> vector<4x4xf32>
    %169 = arith.truncf %168 : vector<4x4xf32> to vector<4x4xbf16>
    %c1_167 = arith.constant 1 : index
    %c0_168 = arith.constant 0 : index
    %c0_169 = arith.constant 0 : index
    %170 = vector.load %arg8[%c1_167, %c0_168, %c0_169] : memref<4x4x16xbf16, #tpu.memory_space<vmem>>, vector<1x4x16xbf16>
    %171 = vector.shape_cast %170 : vector<1x4x16xbf16> to vector<4x16xbf16>
    %cst_170 = arith.constant dense<0.000000e+00> : vector<4x16xf32>
    %172 = tpu.matmul %169, %171, %cst_170 {dimension_numbers = #tpu.dot_dimension_numbers<[1], [0], [0], [1], [0, 0, 1, 1], [], []>} : vector<4x4xbf16>, vector<4x16xbf16>, vector<4x16xf32> -> vector<4x16xf32>
    %173 = arith.addf %165, %172 : vector<4x16xf32>
    %c2_171 = arith.constant 2 : index
    %c0_172 = arith.constant 0 : index
    %c0_173 = arith.constant 0 : index
    %174 = vector.load %arg7[%c2_171, %c0_172, %c0_173] : memref<4x4x89xbf16, #tpu.memory_space<vmem>>, vector<1x4x89xbf16>
    %175 = vector.shape_cast %174 : vector<1x4x89xbf16> to vector<4x89xbf16>
    %cst_174 = arith.constant dense<0.000000e+00> : vector<4x4xf32>
    %176 = tpu.matmul %175, %156, %cst_174 {dimension_numbers = #tpu.dot_dimension_numbers<[1], [0], [0], [1], [0, 0, 1, 1], [], []>} : vector<4x89xbf16>, vector<89x4xbf16>, vector<4x4xf32> -> vector<4x4xf32>
    %177 = arith.truncf %176 : vector<4x4xf32> to vector<4x4xbf16>
    %c2_175 = arith.constant 2 : index
    %c0_176 = arith.constant 0 : index
    %c0_177 = arith.constant 0 : index
    %178 = vector.load %arg8[%c2_175, %c0_176, %c0_177] : memref<4x4x16xbf16, #tpu.memory_space<vmem>>, vector<1x4x16xbf16>
    %179 = vector.shape_cast %178 : vector<1x4x16xbf16> to vector<4x16xbf16>
    %cst_178 = arith.constant dense<0.000000e+00> : vector<4x16xf32>
    %180 = tpu.matmul %177, %179, %cst_178 {dimension_numbers = #tpu.dot_dimension_numbers<[1], [0], [0], [1], [0, 0, 1, 1], [], []>} : vector<4x4xbf16>, vector<4x16xbf16>, vector<4x16xf32> -> vector<4x16xf32>
    %181 = arith.addf %173, %180 : vector<4x16xf32>
    %c3_179 = arith.constant 3 : index
    %c0_180 = arith.constant 0 : index
    %c0_181 = arith.constant 0 : index
    %182 = vector.load %arg7[%c3_179, %c0_180, %c0_181] : memref<4x4x89xbf16, #tpu.memory_space<vmem>>, vector<1x4x89xbf16>
    %183 = vector.shape_cast %182 : vector<1x4x89xbf16> to vector<4x89xbf16>
    %cst_182 = arith.constant dense<0.000000e+00> : vector<4x4xf32>
    %184 = tpu.matmul %183, %156, %cst_182 {dimension_numbers = #tpu.dot_dimension_numbers<[1], [0], [0], [1], [0, 0, 1, 1], [], []>} : vector<4x89xbf16>, vector<89x4xbf16>, vector<4x4xf32> -> vector<4x4xf32>
    %185 = arith.truncf %184 : vector<4x4xf32> to vector<4x4xbf16>
    %c3_183 = arith.constant 3 : index
    %c0_184 = arith.constant 0 : index
    %c0_185 = arith.constant 0 : index
    %186 = vector.load %arg8[%c3_183, %c0_184, %c0_185] : memref<4x4x16xbf16, #tpu.memory_space<vmem>>, vector<1x4x16xbf16>
    %187 = vector.shape_cast %186 : vector<1x4x16xbf16> to vector<4x16xbf16>
    %cst_186 = arith.constant dense<0.000000e+00> : vector<4x16xf32>
    %188 = tpu.matmul %185, %187, %cst_186 {dimension_numbers = #tpu.dot_dimension_numbers<[1], [0], [0], [1], [0, 0, 1, 1], [], []>} : vector<4x4xbf16>, vector<4x16xbf16>, vector<4x16xf32> -> vector<4x16xf32>
    %189 = arith.addf %181, %188 : vector<4x16xf32>
    %190 = arith.truncf %189 : vector<4x16xf32> to vector<4x16xbf16>
    %c0_187 = arith.constant 0 : index
    %c0_188 = arith.constant 0 : index
    %c0_189 = arith.constant 0 : index
    %191 = vector.load %arg9[%c0_187, %c0_188, %c0_189] : memref<2x16x128xbf16, #tpu.memory_space<vmem>>, vector<1x16x128xbf16>
    %192 = vector.shape_cast %191 : vector<1x16x128xbf16> to vector<16x128xbf16>
    %cst_190 = arith.constant dense<0.000000e+00> : vector<4x128xf32>
    %193 = tpu.matmul %190, %192, %cst_190 {dimension_numbers = #tpu.dot_dimension_numbers<[1], [0], [0], [1], [0, 0, 1, 1], [], []>} : vector<4x16xbf16>, vector<16x128xbf16>, vector<4x128xf32> -> vector<4x128xf32>
    %c0_191 = arith.constant 0 : index
    %c0_192 = arith.constant 0 : index
    %194 = vector.load %arg10[%c0_191, %c0_192] : memref<1x128xf32, #tpu.memory_space<vmem>>, vector<1x128xf32>
    %195 = vector.broadcast %194 : vector<1x128xf32> to vector<4x128xf32>
    %196 = arith.addf %193, %195 : vector<4x128xf32>
    %cst_193 = arith.constant 0.000000e+00 : f32
    %197 = vector.broadcast %cst_193 : f32 to vector<4x128xf32>
    %198 = arith.maximumf %196, %197 : vector<4x128xf32>
    %199 = arith.truncf %198 : vector<4x128xf32> to vector<4x128xbf16>
    %c0_194 = arith.constant 0 : index
    %c0_195 = arith.constant 0 : index
    %c0_196 = arith.constant 0 : index
    %200 = vector.load %arg11[%c0_194, %c0_195, %c0_196] : memref<2x128x48xbf16, #tpu.memory_space<vmem>>, vector<1x128x48xbf16>
    %201 = vector.shape_cast %200 : vector<1x128x48xbf16> to vector<128x48xbf16>
    %cst_197 = arith.constant dense<0.000000e+00> : vector<4x48xf32>
    %202 = tpu.matmul %199, %201, %cst_197 {dimension_numbers = #tpu.dot_dimension_numbers<[1], [0], [0], [1], [0, 0, 1, 1], [], []>} : vector<4x128xbf16>, vector<128x48xbf16>, vector<4x48xf32> -> vector<4x48xf32>
    %c0_198 = arith.constant 0 : index
    %c0_199 = arith.constant 0 : index
    %203 = vector.load %arg12[%c0_198, %c0_199] : memref<1x48xf32, #tpu.memory_space<vmem>>, vector<1x48xf32>
    %204 = vector.broadcast %203 : vector<1x48xf32> to vector<4x48xf32>
    %205 = arith.addf %202, %204 : vector<4x48xf32>
    %206 = arith.negf %205 : vector<4x48xf32>
    %207 = math.exp %206 : vector<4x48xf32>
    %cst_200 = arith.constant 1.000000e+00 : f32
    %208 = vector.broadcast %cst_200 : f32 to vector<4x48xf32>
    %209 = arith.addf %208, %207 : vector<4x48xf32>
    %210 = arith.divf %208, %209 : vector<4x48xf32>
    %211 = vector.extract_strided_slice %210 {offsets = [0, 0], sizes = [1, 48], strides = [1, 1]} : vector<4x48xf32> to vector<1x48xf32>
    %c0_201 = arith.constant 0 : index
    %c0_202 = arith.constant 0 : index
    %212 = vector.load %arg13[%c0_201, %c0_202] : memref<16x48xf32, #tpu.memory_space<vmem>>, vector<1x48xf32>
    tpu.vector_store %arg13[%c0_201, %c0_202], %211 {strides = array<i32>} : memref<16x48xf32, #tpu.memory_space<vmem>>, vector<1x48xf32>,
    %213 = vector.extract_strided_slice %210 {offsets = [1, 0], sizes = [1, 48], strides = [1, 1]} : vector<4x48xf32> to vector<1x48xf32>
    %c4_203 = arith.constant 4 : index
    %c0_204 = arith.constant 0 : index
    %214 = vector.load %arg13[%c4_203, %c0_204] : memref<16x48xf32, #tpu.memory_space<vmem>>, vector<1x48xf32>
    tpu.vector_store %arg13[%c4_203, %c0_204], %213 {strides = array<i32>} : memref<16x48xf32, #tpu.memory_space<vmem>>, vector<1x48xf32>,
    %215 = vector.extract_strided_slice %210 {offsets = [2, 0], sizes = [1, 48], strides = [1, 1]} : vector<4x48xf32> to vector<1x48xf32>
    %c8_205 = arith.constant 8 : index
    %c0_206 = arith.constant 0 : index
    %216 = vector.load %arg13[%c8_205, %c0_206] : memref<16x48xf32, #tpu.memory_space<vmem>>, vector<1x48xf32>
    tpu.vector_store %arg13[%c8_205, %c0_206], %215 {strides = array<i32>} : memref<16x48xf32, #tpu.memory_space<vmem>>, vector<1x48xf32>,
    %217 = vector.extract_strided_slice %210 {offsets = [3, 0], sizes = [1, 48], strides = [1, 1]} : vector<4x48xf32> to vector<1x48xf32>
    %c12_207 = arith.constant 12 : index
    %c0_208 = arith.constant 0 : index
    %218 = vector.load %arg13[%c12_207, %c0_208] : memref<16x48xf32, #tpu.memory_space<vmem>>, vector<1x48xf32>
    tpu.vector_store %arg13[%c12_207, %c0_208], %217 {strides = array<i32>} : memref<16x48xf32, #tpu.memory_space<vmem>>, vector<1x48xf32>,
    %c1_209 = arith.constant 1 : index
    %c0_210 = arith.constant 0 : index
    %c0_211 = arith.constant 0 : index
    %219 = vector.load %arg11[%c1_209, %c0_210, %c0_211] : memref<2x128x48xbf16, #tpu.memory_space<vmem>>, vector<1x128x48xbf16>
    %220 = vector.shape_cast %219 : vector<1x128x48xbf16> to vector<128x48xbf16>
    %cst_212 = arith.constant dense<0.000000e+00> : vector<4x48xf32>
    %221 = tpu.matmul %199, %220, %cst_212 {dimension_numbers = #tpu.dot_dimension_numbers<[1], [0], [0], [1], [0, 0, 1, 1], [], []>} : vector<4x128xbf16>, vector<128x48xbf16>, vector<4x48xf32> -> vector<4x48xf32>
    %c0_213 = arith.constant 0 : index
    %c0_214 = arith.constant 0 : index
    %222 = vector.load %arg12[%c0_213, %c0_214] : memref<1x48xf32, #tpu.memory_space<vmem>>, vector<1x48xf32>
    %223 = vector.broadcast %222 : vector<1x48xf32> to vector<4x48xf32>
    %224 = arith.addf %221, %223 : vector<4x48xf32>
    %225 = arith.negf %224 : vector<4x48xf32>
    %226 = math.exp %225 : vector<4x48xf32>
    %cst_215 = arith.constant 1.000000e+00 : f32
    %227 = vector.broadcast %cst_215 : f32 to vector<4x48xf32>
    %228 = arith.addf %227, %226 : vector<4x48xf32>
    %229 = arith.divf %227, %228 : vector<4x48xf32>
    %230 = vector.extract_strided_slice %229 {offsets = [0, 0], sizes = [1, 48], strides = [1, 1]} : vector<4x48xf32> to vector<1x48xf32>
    %c1_216 = arith.constant 1 : index
    %c0_217 = arith.constant 0 : index
    %231 = vector.load %arg13[%c1_216, %c0_217] : memref<16x48xf32, #tpu.memory_space<vmem>>, vector<1x48xf32>
    tpu.vector_store %arg13[%c1_216, %c0_217], %230 {strides = array<i32>} : memref<16x48xf32, #tpu.memory_space<vmem>>, vector<1x48xf32>,
    %232 = vector.extract_strided_slice %229 {offsets = [1, 0], sizes = [1, 48], strides = [1, 1]} : vector<4x48xf32> to vector<1x48xf32>
    %c5_218 = arith.constant 5 : index
    %c0_219 = arith.constant 0 : index
    %233 = vector.load %arg13[%c5_218, %c0_219] : memref<16x48xf32, #tpu.memory_space<vmem>>, vector<1x48xf32>
    tpu.vector_store %arg13[%c5_218, %c0_219], %232 {strides = array<i32>} : memref<16x48xf32, #tpu.memory_space<vmem>>, vector<1x48xf32>,
    %234 = vector.extract_strided_slice %229 {offsets = [2, 0], sizes = [1, 48], strides = [1, 1]} : vector<4x48xf32> to vector<1x48xf32>
    %c9 = arith.constant 9 : index
    %c0_220 = arith.constant 0 : index
    %235 = vector.load %arg13[%c9, %c0_220] : memref<16x48xf32, #tpu.memory_space<vmem>>, vector<1x48xf32>
    tpu.vector_store %arg13[%c9, %c0_220], %234 {strides = array<i32>} : memref<16x48xf32, #tpu.memory_space<vmem>>, vector<1x48xf32>,
    %236 = vector.extract_strided_slice %229 {offsets = [3, 0], sizes = [1, 48], strides = [1, 1]} : vector<4x48xf32> to vector<1x48xf32>
    %c13_221 = arith.constant 13 : index
    %c0_222 = arith.constant 0 : index
    %237 = vector.load %arg13[%c13_221, %c0_222] : memref<16x48xf32, #tpu.memory_space<vmem>>, vector<1x48xf32>
    tpu.vector_store %arg13[%c13_221, %c0_222], %236 {strides = array<i32>} : memref<16x48xf32, #tpu.memory_space<vmem>>, vector<1x48xf32>,
    %c1_223 = arith.constant 1 : index
    %c0_224 = arith.constant 0 : index
    %c0_225 = arith.constant 0 : index
    %238 = vector.load %arg9[%c1_223, %c0_224, %c0_225] : memref<2x16x128xbf16, #tpu.memory_space<vmem>>, vector<1x16x128xbf16>
    %239 = vector.shape_cast %238 : vector<1x16x128xbf16> to vector<16x128xbf16>
    %cst_226 = arith.constant dense<0.000000e+00> : vector<4x128xf32>
    %240 = tpu.matmul %190, %239, %cst_226 {dimension_numbers = #tpu.dot_dimension_numbers<[1], [0], [0], [1], [0, 0, 1, 1], [], []>} : vector<4x16xbf16>, vector<16x128xbf16>, vector<4x128xf32> -> vector<4x128xf32>
    %c0_227 = arith.constant 0 : index
    %c0_228 = arith.constant 0 : index
    %241 = vector.load %arg10[%c0_227, %c0_228] : memref<1x128xf32, #tpu.memory_space<vmem>>, vector<1x128xf32>
    %242 = vector.broadcast %241 : vector<1x128xf32> to vector<4x128xf32>
    %243 = arith.addf %240, %242 : vector<4x128xf32>
    %cst_229 = arith.constant 0.000000e+00 : f32
    %244 = vector.broadcast %cst_229 : f32 to vector<4x128xf32>
    %245 = arith.maximumf %243, %244 : vector<4x128xf32>
    %246 = arith.truncf %245 : vector<4x128xf32> to vector<4x128xbf16>
    %c0_230 = arith.constant 0 : index
    %c0_231 = arith.constant 0 : index
    %c0_232 = arith.constant 0 : index
    %247 = vector.load %arg11[%c0_230, %c0_231, %c0_232] : memref<2x128x48xbf16, #tpu.memory_space<vmem>>, vector<1x128x48xbf16>
    %248 = vector.shape_cast %247 : vector<1x128x48xbf16> to vector<128x48xbf16>
    %cst_233 = arith.constant dense<0.000000e+00> : vector<4x48xf32>
    %249 = tpu.matmul %246, %248, %cst_233 {dimension_numbers = #tpu.dot_dimension_numbers<[1], [0], [0], [1], [0, 0, 1, 1], [], []>} : vector<4x128xbf16>, vector<128x48xbf16>, vector<4x48xf32> -> vector<4x48xf32>
    %c0_234 = arith.constant 0 : index
    %c0_235 = arith.constant 0 : index
    %250 = vector.load %arg12[%c0_234, %c0_235] : memref<1x48xf32, #tpu.memory_space<vmem>>, vector<1x48xf32>
    %251 = vector.broadcast %250 : vector<1x48xf32> to vector<4x48xf32>
    %252 = arith.addf %249, %251 : vector<4x48xf32>
    %253 = arith.negf %252 : vector<4x48xf32>
    %254 = math.exp %253 : vector<4x48xf32>
    %cst_236 = arith.constant 1.000000e+00 : f32
    %255 = vector.broadcast %cst_236 : f32 to vector<4x48xf32>
    %256 = arith.addf %255, %254 : vector<4x48xf32>
    %257 = arith.divf %255, %256 : vector<4x48xf32>
    %258 = vector.extract_strided_slice %257 {offsets = [0, 0], sizes = [1, 48], strides = [1, 1]} : vector<4x48xf32> to vector<1x48xf32>
    %c2_237 = arith.constant 2 : index
    %c0_238 = arith.constant 0 : index
    %259 = vector.load %arg13[%c2_237, %c0_238] : memref<16x48xf32, #tpu.memory_space<vmem>>, vector<1x48xf32>
    tpu.vector_store %arg13[%c2_237, %c0_238], %258 {strides = array<i32>} : memref<16x48xf32, #tpu.memory_space<vmem>>, vector<1x48xf32>,
    %260 = vector.extract_strided_slice %257 {offsets = [1, 0], sizes = [1, 48], strides = [1, 1]} : vector<4x48xf32> to vector<1x48xf32>
    %c6_239 = arith.constant 6 : index
    %c0_240 = arith.constant 0 : index
    %261 = vector.load %arg13[%c6_239, %c0_240] : memref<16x48xf32, #tpu.memory_space<vmem>>, vector<1x48xf32>
    tpu.vector_store %arg13[%c6_239, %c0_240], %260 {strides = array<i32>} : memref<16x48xf32, #tpu.memory_space<vmem>>, vector<1x48xf32>,
    %262 = vector.extract_strided_slice %257 {offsets = [2, 0], sizes = [1, 48], strides = [1, 1]} : vector<4x48xf32> to vector<1x48xf32>
    %c10_241 = arith.constant 10 : index
    %c0_242 = arith.constant 0 : index
    %263 = vector.load %arg13[%c10_241, %c0_242] : memref<16x48xf32, #tpu.memory_space<vmem>>, vector<1x48xf32>
    tpu.vector_store %arg13[%c10_241, %c0_242], %262 {strides = array<i32>} : memref<16x48xf32, #tpu.memory_space<vmem>>, vector<1x48xf32>,
    %264 = vector.extract_strided_slice %257 {offsets = [3, 0], sizes = [1, 48], strides = [1, 1]} : vector<4x48xf32> to vector<1x48xf32>
    %c14 = arith.constant 14 : index
    %c0_243 = arith.constant 0 : index
    %265 = vector.load %arg13[%c14, %c0_243] : memref<16x48xf32, #tpu.memory_space<vmem>>, vector<1x48xf32>
    tpu.vector_store %arg13[%c14, %c0_243], %264 {strides = array<i32>} : memref<16x48xf32, #tpu.memory_space<vmem>>, vector<1x48xf32>,
    %c1_244 = arith.constant 1 : index
    %c0_245 = arith.constant 0 : index
    %c0_246 = arith.constant 0 : index
    %266 = vector.load %arg11[%c1_244, %c0_245, %c0_246] : memref<2x128x48xbf16, #tpu.memory_space<vmem>>, vector<1x128x48xbf16>
    %267 = vector.shape_cast %266 : vector<1x128x48xbf16> to vector<128x48xbf16>
    %cst_247 = arith.constant dense<0.000000e+00> : vector<4x48xf32>
    %268 = tpu.matmul %246, %267, %cst_247 {dimension_numbers = #tpu.dot_dimension_numbers<[1], [0], [0], [1], [0, 0, 1, 1], [], []>} : vector<4x128xbf16>, vector<128x48xbf16>, vector<4x48xf32> -> vector<4x48xf32>
    %c0_248 = arith.constant 0 : index
    %c0_249 = arith.constant 0 : index
    %269 = vector.load %arg12[%c0_248, %c0_249] : memref<1x48xf32, #tpu.memory_space<vmem>>, vector<1x48xf32>
    %270 = vector.broadcast %269 : vector<1x48xf32> to vector<4x48xf32>
    %271 = arith.addf %268, %270 : vector<4x48xf32>
    %272 = arith.negf %271 : vector<4x48xf32>
    %273 = math.exp %272 : vector<4x48xf32>
    %cst_250 = arith.constant 1.000000e+00 : f32
    %274 = vector.broadcast %cst_250 : f32 to vector<4x48xf32>
    %275 = arith.addf %274, %273 : vector<4x48xf32>
    %276 = arith.divf %274, %275 : vector<4x48xf32>
    %277 = vector.extract_strided_slice %276 {offsets = [0, 0], sizes = [1, 48], strides = [1, 1]} : vector<4x48xf32> to vector<1x48xf32>
    %c3_251 = arith.constant 3 : index
    %c0_252 = arith.constant 0 : index
    %278 = vector.load %arg13[%c3_251, %c0_252] : memref<16x48xf32, #tpu.memory_space<vmem>>, vector<1x48xf32>
    tpu.vector_store %arg13[%c3_251, %c0_252], %277 {strides = array<i32>} : memref<16x48xf32, #tpu.memory_space<vmem>>, vector<1x48xf32>,
    %279 = vector.extract_strided_slice %276 {offsets = [1, 0], sizes = [1, 48], strides = [1, 1]} : vector<4x48xf32> to vector<1x48xf32>
    %c7_253 = arith.constant 7 : index
    %c0_254 = arith.constant 0 : index
    %280 = vector.load %arg13[%c7_253, %c0_254] : memref<16x48xf32, #tpu.memory_space<vmem>>, vector<1x48xf32>
    tpu.vector_store %arg13[%c7_253, %c0_254], %279 {strides = array<i32>} : memref<16x48xf32, #tpu.memory_space<vmem>>, vector<1x48xf32>,
    %281 = vector.extract_strided_slice %276 {offsets = [2, 0], sizes = [1, 48], strides = [1, 1]} : vector<4x48xf32> to vector<1x48xf32>
    %c11_255 = arith.constant 11 : index
    %c0_256 = arith.constant 0 : index
    %282 = vector.load %arg13[%c11_255, %c0_256] : memref<16x48xf32, #tpu.memory_space<vmem>>, vector<1x48xf32>
    tpu.vector_store %arg13[%c11_255, %c0_256], %281 {strides = array<i32>} : memref<16x48xf32, #tpu.memory_space<vmem>>, vector<1x48xf32>,
    %283 = vector.extract_strided_slice %276 {offsets = [3, 0], sizes = [1, 48], strides = [1, 1]} : vector<4x48xf32> to vector<1x48xf32>
    %c15 = arith.constant 15 : index
    %c0_257 = arith.constant 0 : index
    %284 = vector.load %arg13[%c15, %c0_257] : memref<16x48xf32, #tpu.memory_space<vmem>>, vector<1x48xf32>
    tpu.vector_store %arg13[%c15, %c0_257], %283 {strides = array<i32>} : memref<16x48xf32, #tpu.memory_space<vmem>>, vector<1x48xf32>,
    return
  }
  func.func @transform_0(%arg0: i32) -> (i32, i32) {
    %c0_i32 = arith.constant 0 : i32
    %c0_i32_0 = arith.constant 0 : i32
    return %arg0, %c0_i32 : i32, i32
  }
  func.func @transform_1(%arg0: i32) -> (i32, i32, i32) {
    %c0_i32 = arith.constant 0 : i32
    %c0_i32_0 = arith.constant 0 : i32
    %c0_i32_1 = arith.constant 0 : i32
    %c0_i32_2 = arith.constant 0 : i32
    return %c0_i32, %c0_i32_0, %c0_i32_1 : i32, i32, i32
  }
  func.func @transform_2(%arg0: i32) -> (i32, i32) {
    %c0_i32 = arith.constant 0 : i32
    %c0_i32_0 = arith.constant 0 : i32
    %c0_i32_1 = arith.constant 0 : i32
    return %c0_i32, %c0_i32_0 : i32, i32
  }
  func.func @transform_3(%arg0: i32) -> (i32, i32) {
    %c0_i32 = arith.constant 0 : i32
    %c0_i32_0 = arith.constant 0 : i32
    %c0_i32_1 = arith.constant 0 : i32
    return %c0_i32, %c0_i32_0 : i32, i32
  }
  func.func @transform_4(%arg0: i32) -> (i32, i32, i32) {
    %c0_i32 = arith.constant 0 : i32
    %c0_i32_0 = arith.constant 0 : i32
    %c0_i32_1 = arith.constant 0 : i32
    %c0_i32_2 = arith.constant 0 : i32
    return %c0_i32, %c0_i32_0, %c0_i32_1 : i32, i32, i32
  }
  func.func @transform_5(%arg0: i32) -> (i32, i32) {
    %c0_i32 = arith.constant 0 : i32
    %c0_i32_0 = arith.constant 0 : i32
    %c0_i32_1 = arith.constant 0 : i32
    return %c0_i32, %c0_i32_0 : i32, i32
  }
  func.func @transform_6(%arg0: i32) -> (i32, i32, i32) {
    %c0_i32 = arith.constant 0 : i32
    %c0_i32_0 = arith.constant 0 : i32
    %c0_i32_1 = arith.constant 0 : i32
    %c0_i32_2 = arith.constant 0 : i32
    return %c0_i32, %c0_i32_0, %c0_i32_1 : i32, i32, i32
  }
  func.func @transform_7(%arg0: i32) -> (i32, i32, i32) {
    %c0_i32 = arith.constant 0 : i32
    %c0_i32_0 = arith.constant 0 : i32
    %c0_i32_1 = arith.constant 0 : i32
    %c0_i32_2 = arith.constant 0 : i32
    return %c0_i32, %c0_i32_0, %c0_i32_1 : i32, i32, i32
  }
  func.func @transform_8(%arg0: i32) -> (i32, i32, i32) {
    %c0_i32 = arith.constant 0 : i32
    %c0_i32_0 = arith.constant 0 : i32
    %c0_i32_1 = arith.constant 0 : i32
    %c0_i32_2 = arith.constant 0 : i32
    return %c0_i32, %c0_i32_0, %c0_i32_1 : i32, i32, i32
  }
  func.func @transform_9(%arg0: i32) -> (i32, i32) {
    %c0_i32 = arith.constant 0 : i32
    %c0_i32_0 = arith.constant 0 : i32
    %c0_i32_1 = arith.constant 0 : i32
    return %c0_i32, %c0_i32_0 : i32, i32
  }
  func.func @transform_10(%arg0: i32) -> (i32, i32, i32) {
    %c0_i32 = arith.constant 0 : i32
    %c0_i32_0 = arith.constant 0 : i32
    %c0_i32_1 = arith.constant 0 : i32
    %c0_i32_2 = arith.constant 0 : i32
    return %c0_i32, %c0_i32_0, %c0_i32_1 : i32, i32, i32
  }
  func.func @transform_11(%arg0: i32) -> (i32, i32) {
    %c0_i32 = arith.constant 0 : i32
    %c0_i32_0 = arith.constant 0 : i32
    %c0_i32_1 = arith.constant 0 : i32
    return %c0_i32, %c0_i32_0 : i32, i32
  }
  func.func @transform_12(%arg0: i32) -> (i32, i32) {
    %c0_i32 = arith.constant 0 : i32
    %c0_i32_0 = arith.constant 0 : i32
    return %arg0, %c0_i32 : i32, i32
  }
}

</mosaic_0001>

<llo_original>
// kernel: conv_autoencoder_forward.1
$region0: #{conv_autoencoder_forward.1}
  #allocation0 [shape = 'u32[]', space=smem, size = 0x4, offset = 0x4, fixed_abs, tag = 'smem constant byte address 0x4 - core index']
  #allocation1 [shape = 'u32[72,128]{1,0:T(1,128)}', space=vmem, size = 0x9000, scoped, tag = 'internal scratch']
  #allocation2 [shape = 'f32[324,16]{1,0:T(8,128)}', space=vmem, size = 0x29000, scoped, tag = 'scratch operand']
  #allocation3 [shape = 'f32[124,16]{1,0:T(8,128)}', space=vmem, size = 0x10000, scoped, tag = 'scratch operand']
  #allocation4 [shape = 'f32[100,4]{1,0:T(8,128)}', space=vmem, size = 0xd000, scoped, tag = 'scratch operand']
  %s0 = inlined_call_operand.vmem [shape: f32[736,3], index: 0, kind: input, shape index: {}]
  %s1 = inlined_call_operand.vmem [shape: bf16[9,3,16], index: 1, kind: input, shape index: {}]
  %s2 = inlined_call_operand.vmem [shape: f32[1,16], index: 2, kind: input, shape index: {}]
  %s3 = inlined_call_operand.vmem [shape: bf16[124,305], index: 3, kind: input, shape index: {}]
  %s4 = inlined_call_operand.vmem [shape: bf16[9,16,4], index: 4, kind: input, shape index: {}]
  %s5 = inlined_call_operand.vmem [shape: f32[1,4], index: 5, kind: input, shape index: {}]
  %s6 = inlined_call_operand.vmem [shape: bf16[4,4,89], index: 6, kind: input, shape index: {}]
  %s7 = inlined_call_operand.vmem [shape: bf16[4,4,16], index: 7, kind: input, shape index: {}]
  %s8 = inlined_call_operand.vmem [shape: bf16[2,16,128], index: 8, kind: input, shape index: {}]
  %s9 = inlined_call_operand.vmem [shape: f32[1,128], index: 9, kind: input, shape index: {}]
  %s10 = inlined_call_operand.vmem [shape: bf16[2,128,48], index: 10, kind: input, shape index: {}]
  %s11 = inlined_call_operand.vmem [shape: f32[1,48], index: 11, kind: input, shape index: {}]
  %s12 = inlined_call_operand.vmem [shape: f32[32,48], index: 12, kind: output, shape index: {}]
  %s13 = sld [smem:[#allocation0]]
  $region81: #{conv_autoencoder_forward.1} parent=0
    _
  %s15 = ssub.s32 1, %s13
  %s16 = scalar_select 0, %s15, %s13
  loop: start=0, step=1, limit=4
  $region2: #{conv_autoencoder_forward.1} parent=0 // loop_pre_header
    _
  $region3: #{conv_autoencoder_forward.1} parent=0 // loop_header
    %s18 = sphi 0, %s22
    %p19 = scmp.ge.s32.totalorder %s18, 4
    %s28 = sphi 0, %s30
    %s31 = sphi 0, %s28
    %s32 = sphi 0, %s31
    %s48 = sphi 0, %s32
    %s52 = sphi 0, %s52
    %s54 = sphi 0, %s52
    %s55 = sphi 0, %s54
    %s69 = sphi 0, %s55
    %s73 = sphi 0, %s73
    %s75 = sphi 0, %s73
    %s76 = sphi 0, %s75
    %s90 = sphi 0, %s76
    %s94 = sphi 0, %s94
    %s96 = sphi 0, %s94
    %s97 = sphi 0, %s96
    %s111 = sphi 0, %s97
    %s115 = sphi 0, %s115
    %s117 = sphi 0, %s115
    %s118 = sphi 0, %s117
    %s132 = sphi 0, %s118
    %s136 = sphi 0, %s136
    %s138 = sphi 0, %s136
    %s139 = sphi 0, %s138
    %s153 = sphi 0, %s139
    %s157 = sphi 0, %s157
    %s159 = sphi 0, %s157
    %s160 = sphi 0, %s159
    %s174 = sphi 0, %s160
    %s178 = sphi 0, %s178
    %s180 = sphi 0, %s178
    %s181 = sphi 0, %s180
    %s195 = sphi 0, %s181
    %s199 = sphi 0, %s199
    %s201 = sphi 0, %s199
    %s202 = sphi 0, %s201
    %s216 = sphi 0, %s202
    %s220 = sphi 0, %s220
    %s222 = sphi 0, %s220
    %s223 = sphi 0, %s222
    %s237 = sphi 0, %s223
    %s241 = sphi 0, %s241
    %s243 = sphi 0, %s241
    %s244 = sphi 0, %s243
    %s258 = sphi 0, %s244
    %s262 = sphi 0, %s262
    %s264 = sphi 0, %s262
    %s265 = sphi 0, %s264
    %s279 = sphi 0, %s265
    %s285 = sphi 0, %s287
    %s288 = sphi 0, %s285
    %s289 = sphi 0, %s288
    %s305 = sphi 0, %s289
  $region4: #{conv_autoencoder_forward.1} parent=0 // loop_header_branch
    %21 = sbr.rel (%p19) target = $region8
  $region5: #{conv_autoencoder_forward.1} parent=0 // loop_body
    %s23 = ssub.s32 %s18, 1
    %s24 = ssub.s32 %s18, 2
    %s25 = sadd.s32 %s18, 1
    %s26 = ssub.s32 %s18, %s25
    %p27 = scmp.eq.s32.totalorder %s26, 0
    %s29 = sadd.s32 %s28, 1
    %s30 = scalar_select %p27, %s28, %s29
    %p33 = pneg %p27
    %p34 = scmp.eq.s32.totalorder %s18, 1
    %p35 = por %p33, %p34
    %p36 = scmp.ne.s32.totalorder %s28, %s31
    %p37 = scmp.eq.s32.totalorder %s18, 0
    %p38 = por %p36, %p37
    %p39 = scmp.ne.s32.totalorder %s28, %s31
    %p40 = scmp.eq.s32.totalorder %s23, 1
    %p41 = por %p39, %p40
    %p42 = scmp.ne.s32.totalorder %s31, %s32
    %p43 = scmp.eq.s32.totalorder %s23, 0
    %p44 = por %p42, %p43
    %p45 = scmp.ne.s32.totalorder %s31, %s32
    %p46 = scmp.eq.s32.totalorder %s24, 1
    %p47 = por %p45, %p46
    %p49 = scmp.ne.s32.totalorder %s32, %s48
    %p50 = scmp.eq.s32.totalorder %s24, 0
    %p51 = por %p49, %p50
    %s53 = sadd.s32 %s52, 1
    %p56 = scmp.eq.s32.totalorder %s18, 1
    %p57 = scmp.ne.s32.totalorder %s52, %s54
    %p58 = scmp.eq.s32.totalorder %s18, 0
    %p59 = por %p57, %p58
    %p60 = scmp.ne.s32.totalorder %s52, %s54
    %p61 = scmp.eq.s32.totalorder %s23, 1
    %p62 = por %p60, %p61
    %p63 = scmp.ne.s32.totalorder %s54, %s55
    %p64 = scmp.eq.s32.totalorder %s23, 0
    %p65 = por %p63, %p64
    %p66 = scmp.ne.s32.totalorder %s54, %s55
    %p67 = scmp.eq.s32.totalorder %s24, 1
    %p68 = por %p66, %p67
    %p70 = scmp.ne.s32.totalorder %s55, %s69
    %p71 = scmp.eq.s32.totalorder %s24, 0
    %p72 = por %p70, %p71
    %s74 = sadd.s32 %s73, 1
    %p77 = scmp.eq.s32.totalorder %s18, 1
    %p78 = scmp.ne.s32.totalorder %s73, %s75
    %p79 = scmp.eq.s32.totalorder %s18, 0
    %p80 = por %p78, %p79
    %p81 = scmp.ne.s32.totalorder %s73, %s75
    %p82 = scmp.eq.s32.totalorder %s23, 1
    %p83 = por %p81, %p82
    %p84 = scmp.ne.s32.totalorder %s75, %s76
    %p85 = scmp.eq.s32.totalorder %s23, 0
    %p86 = por %p84, %p85
    %p87 = scmp.ne.s32.totalorder %s75, %s76
    %p88 = scmp.eq.s32.totalorder %s24, 1
    %p89 = por %p87, %p88
    %p91 = scmp.ne.s32.totalorder %s76, %s90
    %p92 = scmp.eq.s32.totalorder %s24, 0
    %p93 = por %p91, %p92
    %s95 = sadd.s32 %s94, 1
    %p98 = scmp.eq.s32.totalorder %s18, 1
    %p99 = scmp.ne.s32.totalorder %s94, %s96
    %p100 = scmp.eq.s32.totalorder %s18, 0
    %p101 = por %p99, %p100
    %p102 = scmp.ne.s32.totalorder %s94, %s96
    %p103 = scmp.eq.s32.totalorder %s23, 1
    %p104 = por %p102, %p103
    %p105 = scmp.ne.s32.totalorder %s96, %s97
    %p106 = scmp.eq.s32.totalorder %s23, 0
    %p107 = por %p105, %p106
    %p108 = scmp.ne.s32.totalorder %s96, %s97
    %p109 = scmp.eq.s32.totalorder %s24, 1
    %p110 = por %p108, %p109
    %p112 = scmp.ne.s32.totalorder %s97, %s111
    %p113 = scmp.eq.s32.totalorder %s24, 0
    %p114 = por %p112, %p113
    %s116 = sadd.s32 %s115, 1
    %p119 = scmp.eq.s32.totalorder %s18, 1
    %p120 = scmp.ne.s32.totalorder %s115, %s117
    %p121 = scmp.eq.s32.totalorder %s18, 0
    %p122 = por %p120, %p121
    %p123 = scmp.ne.s32.totalorder %s115, %s117
    %p124 = scmp.eq.s32.totalorder %s23, 1
    %p125 = por %p123, %p124
    %p126 = scmp.ne.s32.totalorder %s117, %s118
    %p127 = scmp.eq.s32.totalorder %s23, 0
    %p128 = por %p126, %p127
    %p129 = scmp.ne.s32.totalorder %s117, %s118
    %p130 = scmp.eq.s32.totalorder %s24, 1
    %p131 = por %p129, %p130
    %p133 = scmp.ne.s32.totalorder %s118, %s132
    %p134 = scmp.eq.s32.totalorder %s24, 0
    %p135 = por %p133, %p134
    %s137 = sadd.s32 %s136, 1
    %p140 = scmp.eq.s32.totalorder %s18, 1
    %p141 = scmp.ne.s32.totalorder %s136, %s138
    %p142 = scmp.eq.s32.totalorder %s18, 0
    %p143 = por %p141, %p142
    %p144 = scmp.ne.s32.totalorder %s136, %s138
    %p145 = scmp.eq.s32.totalorder %s23, 1
    %p146 = por %p144, %p145
    %p147 = scmp.ne.s32.totalorder %s138, %s139
    %p148 = scmp.eq.s32.totalorder %s23, 0
    %p149 = por %p147, %p148
    %p150 = scmp.ne.s32.totalorder %s138, %s139
    %p151 = scmp.eq.s32.totalorder %s24, 1
    %p152 = por %p150, %p151
    %p154 = scmp.ne.s32.totalorder %s139, %s153
    %p155 = scmp.eq.s32.totalorder %s24, 0
    %p156 = por %p154, %p155
    %s158 = sadd.s32 %s157, 1
    %p161 = scmp.eq.s32.totalorder %s18, 1
    %p162 = scmp.ne.s32.totalorder %s157, %s159
    %p163 = scmp.eq.s32.totalorder %s18, 0
    %p164 = por %p162, %p163
    %p165 = scmp.ne.s32.totalorder %s157, %s159
    %p166 = scmp.eq.s32.totalorder %s23, 1
    %p167 = por %p165, %p166
    %p168 = scmp.ne.s32.totalorder %s159, %s160
    %p169 = scmp.eq.s32.totalorder %s23, 0
    %p170 = por %p168, %p169
    %p171 = scmp.ne.s32.totalorder %s159, %s160
    %p172 = scmp.eq.s32.totalorder %s24, 1
    %p173 = por %p171, %p172
    %p175 = scmp.ne.s32.totalorder %s160, %s174
    %p176 = scmp.eq.s32.totalorder %s24, 0
    %p177 = por %p175, %p176
    %s179 = sadd.s32 %s178, 1
    %p182 = scmp.eq.s32.totalorder %s18, 1
    %p183 = scmp.ne.s32.totalorder %s178, %s180
    %p184 = scmp.eq.s32.totalorder %s18, 0
    %p185 = por %p183, %p184
    %p186 = scmp.ne.s32.totalorder %s178, %s180
    %p187 = scmp.eq.s32.totalorder %s23, 1
    %p188 = por %p186, %p187
    %p189 = scmp.ne.s32.totalorder %s180, %s181
    %p190 = scmp.eq.s32.totalorder %s23, 0
    %p191 = por %p189, %p190
    %p192 = scmp.ne.s32.totalorder %s180, %s181
    %p193 = scmp.eq.s32.totalorder %s24, 1
    %p194 = por %p192, %p193
    %p196 = scmp.ne.s32.totalorder %s181, %s195
    %p197 = scmp.eq.s32.totalorder %s24, 0
    %p198 = por %p196, %p197
    %s200 = sadd.s32 %s199, 1
    %p203 = scmp.eq.s32.totalorder %s18, 1
    %p204 = scmp.ne.s32.totalorder %s199, %s201
    %p205 = scmp.eq.s32.totalorder %s18, 0
    %p206 = por %p204, %p205
    %p207 = scmp.ne.s32.totalorder %s199, %s201
    %p208 = scmp.eq.s32.totalorder %s23, 1
    %p209 = por %p207, %p208
    %p210 = scmp.ne.s32.totalorder %s201, %s202
    %p211 = scmp.eq.s32.totalorder %s23, 0
    %p212 = por %p210, %p211
    %p213 = scmp.ne.s32.totalorder %s201, %s202
    %p214 = scmp.eq.s32.totalorder %s24, 1
    %p215 = por %p213, %p214
    %p217 = scmp.ne.s32.totalorder %s202, %s216
    %p218 = scmp.eq.s32.totalorder %s24, 0
    %p219 = por %p217, %p218
    %s221 = sadd.s32 %s220, 1
    %p224 = scmp.eq.s32.totalorder %s18, 1
    %p225 = scmp.ne.s32.totalorder %s220, %s222
    %p226 = scmp.eq.s32.totalorder %s18, 0
    %p227 = por %p225, %p226
    %p228 = scmp.ne.s32.totalorder %s220, %s222
    %p229 = scmp.eq.s32.totalorder %s23, 1
    %p230 = por %p228, %p229
    %p231 = scmp.ne.s32.totalorder %s222, %s223
    %p232 = scmp.eq.s32.totalorder %s23, 0
    %p233 = por %p231, %p232
    %p234 = scmp.ne.s32.totalorder %s222, %s223
    %p235 = scmp.eq.s32.totalorder %s24, 1
    %p236 = por %p234, %p235
    %p238 = scmp.ne.s32.totalorder %s223, %s237
    %p239 = scmp.eq.s32.totalorder %s24, 0
    %p240 = por %p238, %p239
    %s242 = sadd.s32 %s241, 1
    %p245 = scmp.eq.s32.totalorder %s18, 1
    %p246 = scmp.ne.s32.totalorder %s241, %s243
    %p247 = scmp.eq.s32.totalorder %s18, 0
    %p248 = por %p246, %p247
    %p249 = scmp.ne.s32.totalorder %s241, %s243
    %p250 = scmp.eq.s32.totalorder %s23, 1
    %p251 = por %p249, %p250
    %p252 = scmp.ne.s32.totalorder %s243, %s244
    %p253 = scmp.eq.s32.totalorder %s23, 0
    %p254 = por %p252, %p253
    %p255 = scmp.ne.s32.totalorder %s243, %s244
    %p256 = scmp.eq.s32.totalorder %s24, 1
    %p257 = por %p255, %p256
    %p259 = scmp.ne.s32.totalorder %s244, %s258
    %p260 = scmp.eq.s32.totalorder %s24, 0
    %p261 = por %p259, %p260
    %s263 = sadd.s32 %s262, 1
    %p266 = scmp.eq.s32.totalorder %s18, 1
    %p267 = scmp.ne.s32.totalorder %s262, %s264
    %p268 = scmp.eq.s32.totalorder %s18, 0
    %p269 = por %p267, %p268
    %p270 = scmp.ne.s32.totalorder %s262, %s264
    %p271 = scmp.eq.s32.totalorder %s23, 1
    %p272 = por %p270, %p271
    %p273 = scmp.ne.s32.totalorder %s264, %s265
    %p274 = scmp.eq.s32.totalorder %s23, 0
    %p275 = por %p273, %p274
    %p276 = scmp.ne.s32.totalorder %s264, %s265
    %p277 = scmp.eq.s32.totalorder %s24, 1
    %p278 = por %p276, %p277
    %p280 = scmp.ne.s32.totalorder %s265, %s279
    %p281 = scmp.eq.s32.totalorder %s24, 0
    %p282 = por %p280, %p281
    %s283 = ssub.s32 %s18, %s25
    %p284 = scmp.eq.s32.totalorder %s283, 0
    %s286 = sadd.s32 %s285, 1
    %s287 = scalar_select %p284, %s285, %s286
    %p290 = pneg %p284
    %p291 = scmp.eq.s32.totalorder %s18, 1
    %p292 = por %p290, %p291
    %p293 = scmp.ne.s32.totalorder %s285, %s288
    %p294 = scmp.eq.s32.totalorder %s18, 0
    %p295 = por %p293, %p294
    %p296 = scmp.ne.s32.totalorder %s285, %s288
    %p297 = scmp.eq.s32.totalorder %s23, 1
    %p298 = por %p296, %p297
    %p299 = scmp.ne.s32.totalorder %s288, %s289
    %p300 = scmp.eq.s32.totalorder %s23, 0
    %p301 = por %p299, %p300
    %p302 = scmp.ne.s32.totalorder %s288, %s289
    %p303 = scmp.eq.s32.totalorder %s24, 1
    %p304 = por %p302, %p303
    %p306 = scmp.ne.s32.totalorder %s289, %s305
    %p307 = scmp.eq.s32.totalorder %s24, 0
    %p308 = por %p306, %p307
    %p309 = scmp.le.s32.totalorder 1, %s18
    %p310 = scmp.lt.s32.totalorder %s18, 3
    %p311 = pnand %p309, %p310
    %p312 = pneg %p311
    // Predicated region
    $region9: #{conv_autoencoder_forward.1} parent=5 // pred_check
      _
    $region10: #{conv_autoencoder_forward.1} parent=5 // pred_check_branch
      %314 = sbr.rel (%p311) target = $region12
    $region11: #{conv_autoencoder_forward.1} parent=5 // pred_region
      %s315 = ssub.s32 %s18, 1
      // Predicated region
      $region13: #{conv_autoencoder_forward.1} parent=11 // pred_check
        %p316 = pneg %p65
      $region14: #{conv_autoencoder_forward.1} parent=11 // pred_check_branch
        %318 = sbr.rel (%p316) target = $region16
      $region15: #{conv_autoencoder_forward.1} parent=11 // pred_region
        _
      $region16: #{conv_autoencoder_forward.1} parent=11 // pred_fallthru
        _
      // Predicated region
      $region17: #{conv_autoencoder_forward.1} parent=11 // pred_check
        %p319 = pneg %p86
      $region18: #{conv_autoencoder_forward.1} parent=11 // pred_check_branch
        %321 = sbr.rel (%p319) target = $region20
      $region19: #{conv_autoencoder_forward.1} parent=11 // pred_region
        _
      $region20: #{conv_autoencoder_forward.1} parent=11 // pred_fallthru
        _
      // Predicated region
      $region21: #{conv_autoencoder_forward.1} parent=11 // pred_check
        %p322 = pneg %p107
      $region22: #{conv_autoencoder_forward.1} parent=11 // pred_check_branch
        %324 = sbr.rel (%p322) target = $region24
      $region23: #{conv_autoencoder_forward.1} parent=11 // pred_region
        _
      $region24: #{conv_autoencoder_forward.1} parent=11 // pred_fallthru
        _
      // Predicated region
      $region25: #{conv_autoencoder_forward.1} parent=11 // pred_check
        %p325 = pneg %p128
      $region26: #{conv_autoencoder_forward.1} parent=11 // pred_check_branch
        %327 = sbr.rel (%p325) target = $region28
      $region27: #{conv_autoencoder_forward.1} parent=11 // pred_region
        _
      $region28: #{conv_autoencoder_forward.1} parent=11 // pred_fallthru
        _
      // Predicated region
      $region29: #{conv_autoencoder_forward.1} parent=11 // pred_check
        %p328 = pneg %p149
      $region30: #{conv_autoencoder_forward.1} parent=11 // pred_check_branch
        %330 = sbr.rel (%p328) target = $region32
      $region31: #{conv_autoencoder_forward.1} parent=11 // pred_region
        _
      $region32: #{conv_autoencoder_forward.1} parent=11 // pred_fallthru
        _
      // Predicated region
      $region33: #{conv_autoencoder_forward.1} parent=11 // pred_check
        %p331 = pneg %p170
      $region34: #{conv_autoencoder_forward.1} parent=11 // pred_check_branch
        %333 = sbr.rel (%p331) target = $region36
      $region35: #{conv_autoencoder_forward.1} parent=11 // pred_region
        _
      $region36: #{conv_autoencoder_forward.1} parent=11 // pred_fallthru
        _
      // Predicated region
      $region37: #{conv_autoencoder_forward.1} parent=11 // pred_check
        %p334 = pneg %p191
      $region38: #{conv_autoencoder_forward.1} parent=11 // pred_check_branch
        %336 = sbr.rel (%p334) target = $region40
      $region39: #{conv_autoencoder_forward.1} parent=11 // pred_region
        _
      $region40: #{conv_autoencoder_forward.1} parent=11 // pred_fallthru
        _
      // Predicated region
      $region41: #{conv_autoencoder_forward.1} parent=11 // pred_check
        %p337 = pneg %p212
      $region42: #{conv_autoencoder_forward.1} parent=11 // pred_check_branch
        %339 = sbr.rel (%p337) target = $region44
      $region43: #{conv_autoencoder_forward.1} parent=11 // pred_region
        _
      $region44: #{conv_autoencoder_forward.1} parent=11 // pred_fallthru
        _
      // Predicated region
      $region45: #{conv_autoencoder_forward.1} parent=11 // pred_check
        %p340 = pneg %p233
      $region46: #{conv_autoencoder_forward.1} parent=11 // pred_check_branch
        %342 = sbr.rel (%p340) target = $region48
      $region47: #{conv_autoencoder_forward.1} parent=11 // pred_region
        _
      $region48: #{conv_autoencoder_forward.1} parent=11 // pred_fallthru
        _
      // Predicated region
      $region49: #{conv_autoencoder_forward.1} parent=11 // pred_check
        %p343 = pneg %p254
      $region50: #{conv_autoencoder_forward.1} parent=11 // pred_check_branch
        %345 = sbr.rel (%p343) target = $region52
      $region51: #{conv_autoencoder_forward.1} parent=11 // pred_region
        _
      $region52: #{conv_autoencoder_forward.1} parent=11 // pred_fallthru
        _
      // Predicated region
      $region53: #{conv_autoencoder_forward.1} parent=11 // pred_check
        %p346 = pneg %p275
      $region54: #{conv_autoencoder_forward.1} parent=11 // pred_check_branch
        %348 = sbr.rel (%p346) target = $region56
      $region55: #{conv_autoencoder_forward.1} parent=11 // pred_region
        _
      $region56: #{conv_autoencoder_forward.1} parent=11 // pred_fallthru
        _
    $region12: #{conv_autoencoder_forward.1} parent=5 // pred_fallthru
      _
    %p349 = scmp.lt.s32.totalorder %s18, 2
    // Predicated region
    $region57: #{conv_autoencoder_forward.1} parent=5 // pred_check
      %p350 = pneg %p349
    $region58: #{conv_autoencoder_forward.1} parent=5 // pred_check_branch
      %352 = sbr.rel (%p350) target = $region60
    $region59: #{conv_autoencoder_forward.1} parent=5 // pred_region
      // Predicated region
      $region61: #{conv_autoencoder_forward.1} parent=59 // pred_check
        %p353 = pneg %p38
      $region62: #{conv_autoencoder_forward.1} parent=59 // pred_check_branch
        %355 = sbr.rel (%p353) target = $region64
      $region63: #{conv_autoencoder_forward.1} parent=59 // pred_region
        %s356 = smul.u32 46, %s18
        %p357 = scmp.lt.s32.totalorder %s356, 91
        %s358 = scalar_select %p357, %s356, 91
        %s359 = smul.addr %s358, 8
        %s360 = scalar_lea.vmem %s0, %s359
        %s361 = smul.u32 46, %s18
      $region64: #{conv_autoencoder_forward.1} parent=59 // pred_fallthru
        _
    $region60: #{conv_autoencoder_forward.1} parent=5 // pred_fallthru
      _
    %p362 = scmp.le.s32.totalorder 1, %s18
    %p363 = scmp.lt.s32.totalorder %s18, 3
    %p364 = pnand %p362, %p363
    %p365 = pneg %p364
    // Predicated region
    $region65: #{conv_autoencoder_forward.1} parent=5 // pred_check
      _
    $region66: #{conv_autoencoder_forward.1} parent=5 // pred_check_branch
      %367 = sbr.rel (%p364) target = $region68
    $region67: #{conv_autoencoder_forward.1} parent=5 // pred_region
      %s368 = ssub.s32 %s18, 1
      %s369 = smul.u32 46, %s23
      %p370 = scmp.lt.s32.totalorder %s369, 91
      %s371 = scalar_select %p370, %s369, 91
      %s372 = smul.addr %s371, 8
      %s373 = scalar_lea.vmem %s0, %s372
      %p374 = pneg %p44
      %p375 = pneg %p41
      %p376 = pneg %p65
      %p377 = pneg %p62
      %p378 = pneg %p86
      %p379 = pneg %p83
      %p380 = pneg %p107
      %p381 = pneg %p104
      %p382 = pneg %p128
      %p383 = pneg %p125
      %p384 = pneg %p149
      %p385 = pneg %p146
      %p386 = pneg %p170
      %p387 = pneg %p167
      %p388 = pneg %p191
      %p389 = pneg %p188
      %p390 = pneg %p212
      %p391 = pneg %p209
      %p392 = pneg %p233
      %p393 = pneg %p230
      %p394 = pneg %p254
      %p395 = pneg %p251
      %p396 = pneg %p275
      %p397 = pneg %p272
      %p398 = pneg %p301
      %p399 = pneg %p298
      %s400 = smul.u32 2, %s23
      %p401 = scmp.lt.s32.totalorder %s400, 3
      %s402 = scalar_select %p401, %s400, 3
      %s403 = smul.addr %s402, 8
      %s404 = scalar_lea.vmem %s12, %s403
      %s405 = smul.u32 46, %s23
      %p406 = scmp.lt.s32.totalorder %s405, 91
      %s407 = scalar_select %p406, %s405, 91
      %s408 = smul.addr %s407, 8
      %s409 = scalar_lea.vmem %s0, %s408
      %s410 = smul.u32 46, %s23
      %s411 = smul.u32 2, %s23
      %p412 = scmp.lt.s32.totalorder %s411, 3
      %s413 = scalar_select %p412, %s411, 3
      %s414 = smul.addr %s413, 8
      %s415 = scalar_lea.vmem %s12, %s414
      %s416 = smul.u32 2, %s23
      %v418 = vld [vmem:[%s409 + $0x3] sm:$0xff]
      %v419 = vld [vmem:[%s409 + $0xb] sm:$0xff]
      %v420 = vld [vmem:[%s409 + $0x13] sm:$0xff]
      %v421 = vld [vmem:[%s409 + $0x1b] sm:$0xff]
      %v422 = vld [vmem:[%s409 + $0x23] sm:$0xff]
      %v423 = vld [vmem:[%s409 + $0x2b] sm:$0xff]
      %v424 = vld [vmem:[%s409 + $0x33] sm:$0xff]
      %v425 = vld [vmem:[%s409 + $0x3b] sm:$0xff]
      %v426 = vld [vmem:[%s409 + $0x43] sm:$0xff]
      %v427 = vld [vmem:[%s409 + $0x4b] sm:$0xff]
      %v428 = vld [vmem:[%s409 + $0x53] sm:$0xff]
      %v429 = vld [vmem:[%s409 + $0x5b] sm:$0xff]
      %v430 = vld [vmem:[%s409 + $0x63] sm:$0xff]
      %v431 = vld [vmem:[%s409 + $0x6b] sm:$0xff]
      %v432 = vld [vmem:[%s409 + $0x73] sm:$0xff]
      %v433 = vld [vmem:[%s409 + $0x7b] sm:$0xff]
      %v434 = vld [vmem:[%s409 + $0x83] sm:$0xff]
      %v435 = vld [vmem:[%s409 + $0x8b] sm:$0xff]
      %v436 = vld [vmem:[%s409 + $0x93] sm:$0xff]
      %v437 = vld [vmem:[%s409 + $0x9b] sm:$0xff]
      %v438 = vld [vmem:[%s409 + $0xa3] sm:$0xff]
      %v439 = vld [vmem:[%s409 + $0xab] sm:$0xff]
      %v440 = vld [vmem:[%s409 + $0xb3] sm:$0xff]
      %v441 = vld [vmem:[%s409 + $0xbb] sm:$0xff]
      %v442 = vld [vmem:[%s409 + $0xc3] sm:$0xff]
      %v443 = vld [vmem:[%s409 + $0xcb] sm:$0xff]
      %v444 = vld [vmem:[%s409 + $0xd3] sm:$0xff]
      %v445 = vld [vmem:[%s409 + $0xdb] sm:$0xff]
      %v446 = vld [vmem:[%s409 + $0xe3] sm:$0xff]
      %v447 = vld [vmem:[%s409 + $0xeb] sm:$0xff]
      %v448 = vld [vmem:[%s409 + $0xf3] sm:$0xff]
      %v449 = vld [vmem:[%s409 + $0xfb] sm:$0xff]
      %v450 = vld [vmem:[%s409 + $0x103] sm:$0xff]
      %v451 = vld [vmem:[%s409 + $0x10b] sm:$0xff]
      %v452 = vld [vmem:[%s409 + $0x113] sm:$0xff]
      %v453 = vld [vmem:[%s409 + $0x11b] sm:$0xff]
      %v454 = vld [vmem:[%s409 + $0x123] sm:$0xff]
      %v455 = vld [vmem:[%s409 + $0x12b] sm:$0xff]
      %v456 = vld [vmem:[%s409 + $0x133] sm:$0xff]
      %v457 = vld [vmem:[%s409 + $0x13b] sm:$0xff]
      %v458 = vld [vmem:[%s409 + $0x143] sm:$0xf]
      %v459 = vpack.c.bf16 %v419, %v418
      %v460 = vpack.c.bf16 %v421, %v420
      %v461 = vpack.c.bf16 %v423, %v422
      %v462 = vpack.c.bf16 %v425, %v424
      %v463 = vpack.c.bf16 %v427, %v426
      %v464 = vpack.c.bf16 %v429, %v428
      %v465 = vpack.c.bf16 %v431, %v430
      %v466 = vpack.c.bf16 %v433, %v432
      %v467 = vpack.c.bf16 %v435, %v434
      %v468 = vpack.c.bf16 %v437, %v436
      %v469 = vpack.c.bf16 %v439, %v438
      %v470 = vpack.c.bf16 %v441, %v440
      %v471 = vpack.c.bf16 %v443, %v442
      %v472 = vpack.c.bf16 %v445, %v444
      %v473 = vpack.c.bf16 %v447, %v446
      %v474 = vpack.c.bf16 %v449, %v448
      %v475 = vpack.c.bf16 %v451, %v450
      %v476 = vpack.c.bf16 %v453, %v452
      %v477 = vpack.c.bf16 %v455, %v454
      %v478 = vpack.c.bf16 %v457, %v456
      %v479 = vpack.c.bf16 %v458, %v458
      %v480 = vld [vmem:[%s1] sm:$0x3]
      %vm481 = vcmask 23552
      %v483 = vsel %vm481, %v459, 0
      %v486 = vsel %vm481, %v460, 0
      %v489 = vsel %vm481, %v461, 0
      %v492 = vsel %vm481, %v462, 0
      %v495 = vsel %vm481, %v463, 0
      %v498 = vsel %vm481, %v464, 0
      %v501 = vsel %vm481, %v465, 0
      %v504 = vsel %vm481, %v466, 0
      %v507 = vsel %vm481, %v467, 0
      %v510 = vsel %vm481, %v468, 0
      %v513 = vsel %vm481, %v469, 0
      %v516 = vsel %vm481, %v470, 0
      %v519 = vsel %vm481, %v471, 0
      %v522 = vsel %vm481, %v472, 0
      %v525 = vsel %vm481, %v473, 0
      %v528 = vsel %vm481, %v474, 0
      %v531 = vsel %vm481, %v475, 0
      %v534 = vsel %vm481, %v476, 0
      %v537 = vsel %vm481, %v477, 0
      %v540 = vsel %vm481, %v478, 0
      %v543 = vsel %vm481, %v479, 0
      %vm545 = vcmask 1040384
      %vm546 = vcmask 1041408
      %v547 = vsel %vm545, 4294967295, 65535
      %v548 = vsel %vm546, %v547, 0
      %v550 = vand.u32 %v480, %v548
      %552 = vmatpush.bf16.msra.mxu0 0
      %553 = vmatpush.bf16.msra.mxu0 0
      %554 = vmatpush.bf16.msra.mxu0 0
      %555 = vmatpush.bf16.msra.mxu0 0
      %556 = vmatpush.bf16.msra.mxu0 0
      %557 = vmatpush.bf16.msra.mxu0 0
      %558 = vmatpush.bf16.msra.mxu0 0
      %559 = vmatpush.bf16.msra.mxu0 %v550
      %560 = vmatmul.bf16.gmra.mxu0 %v483
      %v561 = vpop.f32.mrf.mxu0
      %v562 = vadd.f32 0.0, %v561
      %v563 = vpop.f32.mrf.mxu0
      %v564 = vadd.f32 0.0, %v563
      %565 = vmatmul.bf16.gmra.mxu0 %v486
      %v566 = vpop.f32.mrf.mxu0
      %v567 = vadd.f32 0.0, %v566
      %v568 = vpop.f32.mrf.mxu0
      %v569 = vadd.f32 0.0, %v568
      %570 = vmatmul.bf16.gmra.mxu0 %v489
      %v571 = vpop.f32.mrf.mxu0
      %v572 = vadd.f32 0.0, %v571
      %v573 = vpop.f32.mrf.mxu0
      %v574 = vadd.f32 0.0, %v573
      %575 = vmatmul.bf16.gmra.mxu0 %v492
      %v576 = vpop.f32.mrf.mxu0
      %v577 = vadd.f32 0.0, %v576
      %v578 = vpop.f32.mrf.mxu0
      %v579 = vadd.f32 0.0, %v578
      %580 = vmatmul.bf16.gmra.mxu0 %v495
      %v581 = vpop.f32.mrf.mxu0
      %v582 = vadd.f32 0.0, %v581
      %v583 = vpop.f32.mrf.mxu0
      %v584 = vadd.f32 0.0, %v583
      %585 = vmatmul.bf16.gmra.mxu0 %v498
      %v586 = vpop.f32.mrf.mxu0
      %v587 = vadd.f32 0.0, %v586
      %v588 = vpop.f32.mrf.mxu0
      %v589 = vadd.f32 0.0, %v588
      %590 = vmatmul.bf16.gmra.mxu0 %v501
      %v591 = vpop.f32.mrf.mxu0
      %v592 = vadd.f32 0.0, %v591
      %v593 = vpop.f32.mrf.mxu0
      %v594 = vadd.f32 0.0, %v593
      %595 = vmatmul.bf16.gmra.mxu0 %v504
      %v596 = vpop.f32.mrf.mxu0
      %v597 = vadd.f32 0.0, %v596
      %v598 = vpop.f32.mrf.mxu0
      %v599 = vadd.f32 0.0, %v598
      %600 = vmatmul.bf16.gmra.mxu0 %v507
      %v601 = vpop.f32.mrf.mxu0
      %v602 = vadd.f32 0.0, %v601
      %v603 = vpop.f32.mrf.mxu0
      %v604 = vadd.f32 0.0, %v603
      %605 = vmatmul.bf16.gmra.mxu0 %v510
      %v606 = vpop.f32.mrf.mxu0
      %v607 = vadd.f32 0.0, %v606
      %v608 = vpop.f32.mrf.mxu0
      %v609 = vadd.f32 0.0, %v608
      %610 = vmatmul.bf16.gmra.mxu0 %v513
      %v611 = vpop.f32.mrf.mxu0
      %v612 = vadd.f32 0.0, %v611
      %v613 = vpop.f32.mrf.mxu0
      %v614 = vadd.f32 0.0, %v613
      %615 = vmatmul.bf16.gmra.mxu0 %v516
      %v616 = vpop.f32.mrf.mxu0
      %v617 = vadd.f32 0.0, %v616
      %v618 = vpop.f32.mrf.mxu0
      %v619 = vadd.f32 0.0, %v618
      %620 = vmatmul.bf16.gmra.mxu0 %v519
      %v621 = vpop.f32.mrf.mxu0
      %v622 = vadd.f32 0.0, %v621
      %v623 = vpop.f32.mrf.mxu0
      %v624 = vadd.f32 0.0, %v623
      %625 = vmatmul.bf16.gmra.mxu0 %v522
      %v626 = vpop.f32.mrf.mxu0
      %v627 = vadd.f32 0.0, %v626
      %v628 = vpop.f32.mrf.mxu0
      %v629 = vadd.f32 0.0, %v628
      %630 = vmatmul.bf16.gmra.mxu0 %v525
      %v631 = vpop.f32.mrf.mxu0
      %v632 = vadd.f32 0.0, %v631
      %v633 = vpop.f32.mrf.mxu0
      %v634 = vadd.f32 0.0, %v633
      %635 = vmatmul.bf16.gmra.mxu0 %v528
      %v636 = vpop.f32.mrf.mxu0
      %v637 = vadd.f32 0.0, %v636
      %v638 = vpop.f32.mrf.mxu0
      %v639 = vadd.f32 0.0, %v638
      %640 = vmatmul.bf16.gmra.mxu0 %v531
      %v641 = vpop.f32.mrf.mxu0
      %v642 = vadd.f32 0.0, %v641
      %v643 = vpop.f32.mrf.mxu0
      %v644 = vadd.f32 0.0, %v643
      %645 = vmatmul.bf16.gmra.mxu0 %v534
      %v646 = vpop.f32.mrf.mxu0
      %v647 = vadd.f32 0.0, %v646
      %v648 = vpop.f32.mrf.mxu0
      %v649 = vadd.f32 0.0, %v648
      %650 = vmatmul.bf16.gmra.mxu0 %v537
      %v651 = vpop.f32.mrf.mxu0
      %v652 = vadd.f32 0.0, %v651
      %v653 = vpop.f32.mrf.mxu0
      %v654 = vadd.f32 0.0, %v653
      %655 = vmatmul.bf16.gmra.mxu0 %v540
      %v656 = vpop.f32.mrf.mxu0
      %v657 = vadd.f32 0.0, %v656
      %v658 = vpop.f32.mrf.mxu0
      %v659 = vadd.f32 0.0, %v658
      %660 = vmatmul.bf16.gmra.mxu0 %v543
      %v661 = vpop.f32.mrf.mxu0
      %v662 = vadd.f32 0.0, %v661
      %v663 = vpop.f32.mrf.mxu0
      %664 = vdwg.mxu0
      %vm665 = vcmask 130048
      %666 = vst.msk [vmem:[#allocation2] sm:$0xff] %vm665, %v562
      %667 = vst.msk [vmem:[#allocation2 + $0x8] sm:$0xff] %vm665, %v564
      %668 = vst.msk [vmem:[#allocation2 + $0x10] sm:$0xff] %vm665, %v567
      %669 = vst.msk [vmem:[#allocation2 + $0x18] sm:$0xff] %vm665, %v569
      %670 = vst.msk [vmem:[#allocation2 + $0x20] sm:$0xff] %vm665, %v572
      %671 = vst.msk [vmem:[#allocation2 + $0x28] sm:$0xff] %vm665, %v574
      %672 = vst.msk [vmem:[#allocation2 + $0x30] sm:$0xff] %vm665, %v577
      %673 = vst.msk [vmem:[#allocation2 + $0x38] sm:$0xff] %vm665, %v579
      %674 = vst.msk [vmem:[#allocation2 + $0x40] sm:$0xff] %vm665, %v582
      %675 = vst.msk [vmem:[#allocation2 + $0x48] sm:$0xff] %vm665, %v584
      %676 = vst.msk [vmem:[#allocation2 + $0x50] sm:$0xff] %vm665, %v587
      %677 = vst.msk [vmem:[#allocation2 + $0x58] sm:$0xff] %vm665, %v589
      %678 = vst.msk [vmem:[#allocation2 + $0x60] sm:$0xff] %vm665, %v592
      %679 = vst.msk [vmem:[#allocation2 + $0x68] sm:$0xff] %vm665, %v594
      %680 = vst.msk [vmem:[#allocation2 + $0x70] sm:$0xff] %vm665, %v597
      %681 = vst.msk [vmem:[#allocation2 + $0x78] sm:$0xff] %vm665, %v599
      %682 = vst.msk [vmem:[#allocation2 + $0x80] sm:$0xff] %vm665, %v602
      %683 = vst.msk [vmem:[#allocation2 + $0x88] sm:$0xff] %vm665, %v604
      %684 = vst.msk [vmem:[#allocation2 + $0x90] sm:$0xff] %vm665, %v607
      %685 = vst.msk [vmem:[#allocation2 + $0x98] sm:$0xff] %vm665, %v609
      %686 = vst.msk [vmem:[#allocation2 + $0xa0] sm:$0xff] %vm665, %v612
      %687 = vst.msk [vmem:[#allocation2 + $0xa8] sm:$0xff] %vm665, %v614
      %688 = vst.msk [vmem:[#allocation2 + $0xb0] sm:$0xff] %vm665, %v617
      %689 = vst.msk [vmem:[#allocation2 + $0xb8] sm:$0xff] %vm665, %v619
      %690 = vst.msk [vmem:[#allocation2 + $0xc0] sm:$0xff] %vm665, %v622
      %691 = vst.msk [vmem:[#allocation2 + $0xc8] sm:$0xff] %vm665, %v624
      %692 = vst.msk [vmem:[#allocation2 + $0xd0] sm:$0xff] %vm665, %v627
      %693 = vst.msk [vmem:[#allocation2 + $0xd8] sm:$0xff] %vm665, %v629
      %694 = vst.msk [vmem:[#allocation2 + $0xe0] sm:$0xff] %vm665, %v632
      %695 = vst.msk [vmem:[#allocation2 + $0xe8] sm:$0xff] %vm665, %v634
      %696 = vst.msk [vmem:[#allocation2 + $0xf0] sm:$0xff] %vm665, %v637
      %697 = vst.msk [vmem:[#allocation2 + $0xf8] sm:$0xff] %vm665, %v639
      %698 = vst.msk [vmem:[#allocation2 + $0x100] sm:$0xff] %vm665, %v642
      %699 = vst.msk [vmem:[#allocation2 + $0x108] sm:$0xff] %vm665, %v644
      %700 = vst.msk [vmem:[#allocation2 + $0x110] sm:$0xff] %vm665, %v647
      %701 = vst.msk [vmem:[#allocation2 + $0x118] sm:$0xff] %vm665, %v649
      %702 = vst.msk [vmem:[#allocation2 + $0x120] sm:$0xff] %vm665, %v652
      %703 = vst.msk [vmem:[#allocation2 + $0x128] sm:$0xff] %vm665, %v654
      %704 = vst.msk [vmem:[#allocation2 + $0x130] sm:$0xff] %vm665, %v657
      %705 = vst.msk [vmem:[#allocation2 + $0x138] sm:$0xff] %vm665, %v659
      %vm706 = vcmask 125952
      %707 = vst.msk [vmem:[#allocation2 + $0x140] sm:$0xf] %vm706, %v662
      %v708 = vld [vmem:[%s409 + $0x4] sm:$0xff]
      %v709 = vld [vmem:[%s409 + $0xc] sm:$0xff]
      %v710 = vld [vmem:[%s409 + $0x14] sm:$0xff]
      %v711 = vld [vmem:[%s409 + $0x1c] sm:$0xff]
      %v712 = vld [vmem:[%s409 + $0x24] sm:$0xff]
      %v713 = vld [vmem:[%s409 + $0x2c] sm:$0xff]
      %v714 = vld [vmem:[%s409 + $0x34] sm:$0xff]
      %v715 = vld [vmem:[%s409 + $0x3c] sm:$0xff]
      %v716 = vld [vmem:[%s409 + $0x44] sm:$0xff]
      %v717 = vld [vmem:[%s409 + $0x4c] sm:$0xff]
      %v718 = vld [vmem:[%s409 + $0x54] sm:$0xff]
      %v719 = vld [vmem:[%s409 + $0x5c] sm:$0xff]
      %v720 = vld [vmem:[%s409 + $0x64] sm:$0xff]
      %v721 = vld [vmem:[%s409 + $0x6c] sm:$0xff]
      %v722 = vld [vmem:[%s409 + $0x74] sm:$0xff]
      %v723 = vld [vmem:[%s409 + $0x7c] sm:$0xff]
      %v724 = vld [vmem:[%s409 + $0x84] sm:$0xff]
      %v725 = vld [vmem:[%s409 + $0x8c] sm:$0xff]
      %v726 = vld [vmem:[%s409 + $0x94] sm:$0xff]
      %v727 = vld [vmem:[%s409 + $0x9c] sm:$0xff]
      %v728 = vld [vmem:[%s409 + $0xa4] sm:$0xff]
      %v729 = vld [vmem:[%s409 + $0xac] sm:$0xff]
      %v730 = vld [vmem:[%s409 + $0xb4] sm:$0xff]
      %v731 = vld [vmem:[%s409 + $0xbc] sm:$0xff]
      %v732 = vld [vmem:[%s409 + $0xc4] sm:$0xff]
      %v733 = vld [vmem:[%s409 + $0xcc] sm:$0xff]
      %v734 = vld [vmem:[%s409 + $0xd4] sm:$0xff]
      %v735 = vld [vmem:[%s409 + $0xdc] sm:$0xff]
      %v736 = vld [vmem:[%s409 + $0xe4] sm:$0xff]
      %v737 = vld [vmem:[%s409 + $0xec] sm:$0xff]
      %v738 = vld [vmem:[%s409 + $0xf4] sm:$0xff]
      %v739 = vld [vmem:[%s409 + $0xfc] sm:$0xff]
      %v740 = vld [vmem:[%s409 + $0x104] sm:$0xff]
      %v741 = vld [vmem:[%s409 + $0x10c] sm:$0xff]
      %v742 = vld [vmem:[%s409 + $0x114] sm:$0xff]
      %v743 = vld [vmem:[%s409 + $0x11c] sm:$0xff]
      %v744 = vld [vmem:[%s409 + $0x124] sm:$0xff]
      %v745 = vld [vmem:[%s409 + $0x12c] sm:$0xff]
      %v746 = vld [vmem:[%s409 + $0x134] sm:$0xff]
      %v747 = vld [vmem:[%s409 + $0x13c] sm:$0xff]
      %v748 = vld [vmem:[%s409 + $0x144] sm:$0xf]
      %v749 = vpack.c.bf16 %v709, %v708
      %v750 = vpack.c.bf16 %v711, %v710
      %v751 = vpack.c.bf16 %v713, %v712
      %v752 = vpack.c.bf16 %v715, %v714
      %v753 = vpack.c.bf16 %v717, %v716
      %v754 = vpack.c.bf16 %v719, %v718
      %v755 = vpack.c.bf16 %v721, %v720
      %v756 = vpack.c.bf16 %v723, %v722
      %v757 = vpack.c.bf16 %v725, %v724
      %v758 = vpack.c.bf16 %v727, %v726
      %v759 = vpack.c.bf16 %v729, %v728
      %v760 = vpack.c.bf16 %v731, %v730
      %v761 = vpack.c.bf16 %v733, %v732
      %v762 = vpack.c.bf16 %v735, %v734
      %v763 = vpack.c.bf16 %v737, %v736
      %v764 = vpack.c.bf16 %v739, %v738
      %v765 = vpack.c.bf16 %v741, %v740
      %v766 = vpack.c.bf16 %v743, %v742
      %v767 = vpack.c.bf16 %v745, %v744
      %v768 = vpack.c.bf16 %v747, %v746
      %v769 = vpack.c.bf16 %v748, %v748
      %s770 = scalar_lea.vmem %s1, 2
      %v771 = vld [vmem:[%s770] sm:$0x3]
      %v773 = vsel %vm481, %v749, 0
      %v776 = vsel %vm481, %v750, 0
      %v779 = vsel %vm481, %v751, 0
      %v782 = vsel %vm481, %v752, 0
      %v785 = vsel %vm481, %v753, 0
      %v788 = vsel %vm481, %v754, 0
      %v791 = vsel %vm481, %v755, 0
      %v794 = vsel %vm481, %v756, 0
      %v797 = vsel %vm481, %v757, 0
      %v800 = vsel %vm481, %v758, 0
      %v803 = vsel %vm481, %v759, 0
      %v806 = vsel %vm481, %v760, 0
      %v809 = vsel %vm481, %v761, 0
      %v812 = vsel %vm481, %v762, 0
      %v815 = vsel %vm481, %v763, 0
      %v818 = vsel %vm481, %v764, 0
      %v821 = vsel %vm481, %v765, 0
      %v824 = vsel %vm481, %v766, 0
      %v827 = vsel %vm481, %v767, 0
      %v830 = vsel %vm481, %v768, 0
      %v833 = vsel %vm481, %v769, 0
      %v836 = vand.u32 %v771, %v548
      %838 = vmatpush.bf16.msra.mxu0 0
      %839 = vmatpush.bf16.msra.mxu0 0
      %840 = vmatpush.bf16.msra.mxu0 0
      %841 = vmatpush.bf16.msra.mxu0 0
      %842 = vmatpush.bf16.msra.mxu0 0
      %843 = vmatpush.bf16.msra.mxu0 0
      %844 = vmatpush.bf16.msra.mxu0 0
      %845 = vmatpush.bf16.msra.mxu0 %v836
      %846 = vmatmul.bf16.gmra.mxu0 %v773
      %v847 = vpop.f32.mrf.mxu0
      %v848 = vadd.f32 0.0, %v847
      %v849 = vpop.f32.mrf.mxu0
      %v850 = vadd.f32 0.0, %v849
      %851 = vmatmul.bf16.gmra.mxu0 %v776
      %v852 = vpop.f32.mrf.mxu0
      %v853 = vadd.f32 0.0, %v852
      %v854 = vpop.f32.mrf.mxu0
      %v855 = vadd.f32 0.0, %v854
      %856 = vmatmul.bf16.gmra.mxu0 %v779
      %v857 = vpop.f32.mrf.mxu0
      %v858 = vadd.f32 0.0, %v857
      %v859 = vpop.f32.mrf.mxu0
      %v860 = vadd.f32 0.0, %v859
      %861 = vmatmul.bf16.gmra.mxu0 %v782
      %v862 = vpop.f32.mrf.mxu0
      %v863 = vadd.f32 0.0, %v862
      %v864 = vpop.f32.mrf.mxu0
      %v865 = vadd.f32 0.0, %v864
      %866 = vmatmul.bf16.gmra.mxu0 %v785
      %v867 = vpop.f32.mrf.mxu0
      %v868 = vadd.f32 0.0, %v867
      %v869 = vpop.f32.mrf.mxu0
      %v870 = vadd.f32 0.0, %v869
      %871 = vmatmul.bf16.gmra.mxu0 %v788
      %v872 = vpop.f32.mrf.mxu0
      %v873 = vadd.f32 0.0, %v872
      %v874 = vpop.f32.mrf.mxu0
      %v875 = vadd.f32 0.0, %v874
      %876 = vmatmul.bf16.gmra.mxu0 %v791
      %v877 = vpop.f32.mrf.mxu0
      %v878 = vadd.f32 0.0, %v877
      %v879 = vpop.f32.mrf.mxu0
      %v880 = vadd.f32 0.0, %v879
      %881 = vmatmul.bf16.gmra.mxu0 %v794
      %v882 = vpop.f32.mrf.mxu0
      %v883 = vadd.f32 0.0, %v882
      %v884 = vpop.f32.mrf.mxu0
      %v885 = vadd.f32 0.0, %v884
      %886 = vmatmul.bf16.gmra.mxu0 %v797
      %v887 = vpop.f32.mrf.mxu0
      %v888 = vadd.f32 0.0, %v887
      %v889 = vpop.f32.mrf.mxu0
      %v890 = vadd.f32 0.0, %v889
      %891 = vmatmul.bf16.gmra.mxu0 %v800
      %v892 = vpop.f32.mrf.mxu0
      %v893 = vadd.f32 0.0, %v892
      %v894 = vpop.f32.mrf.mxu0
      %v895 = vadd.f32 0.0, %v894
      %896 = vmatmul.bf16.gmra.mxu0 %v803
      %v897 = vpop.f32.mrf.mxu0
      %v898 = vadd.f32 0.0, %v897
      %v899 = vpop.f32.mrf.mxu0
      %v900 = vadd.f32 0.0, %v899
      %901 = vmatmul.bf16.gmra.mxu0 %v806
      %v902 = vpop.f32.mrf.mxu0
      %v903 = vadd.f32 0.0, %v902
      %v904 = vpop.f32.mrf.mxu0
      %v905 = vadd.f32 0.0, %v904
      %906 = vmatmul.bf16.gmra.mxu0 %v809
      %v907 = vpop.f32.mrf.mxu0
      %v908 = vadd.f32 0.0, %v907
      %v909 = vpop.f32.mrf.mxu0
      %v910 = vadd.f32 0.0, %v909
      %911 = vmatmul.bf16.gmra.mxu0 %v812
      %v912 = vpop.f32.mrf.mxu0
      %v913 = vadd.f32 0.0, %v912
      %v914 = vpop.f32.mrf.mxu0
      %v915 = vadd.f32 0.0, %v914
      %916 = vmatmul.bf16.gmra.mxu0 %v815
      %v917 = vpop.f32.mrf.mxu0
      %v918 = vadd.f32 0.0, %v917
      %v919 = vpop.f32.mrf.mxu0
      %v920 = vadd.f32 0.0, %v919
      %921 = vmatmul.bf16.gmra.mxu0 %v818
      %v922 = vpop.f32.mrf.mxu0
      %v923 = vadd.f32 0.0, %v922
      %v924 = vpop.f32.mrf.mxu0
      %v925 = vadd.f32 0.0, %v924
      %926 = vmatmul.bf16.gmra.mxu0 %v821
      %v927 = vpop.f32.mrf.mxu0
      %v928 = vadd.f32 0.0, %v927
      %v929 = vpop.f32.mrf.mxu0
      %v930 = vadd.f32 0.0, %v929
      %931 = vmatmul.bf16.gmra.mxu0 %v824
      %v932 = vpop.f32.mrf.mxu0
      %v933 = vadd.f32 0.0, %v932
      %v934 = vpop.f32.mrf.mxu0
      %v935 = vadd.f32 0.0, %v934
      %936 = vmatmul.bf16.gmra.mxu0 %v827
      %v937 = vpop.f32.mrf.mxu0
      %v938 = vadd.f32 0.0, %v937
      %v939 = vpop.f32.mrf.mxu0
      %v940 = vadd.f32 0.0, %v939
      %941 = vmatmul.bf16.gmra.mxu0 %v830
      %v942 = vpop.f32.mrf.mxu0
      %v943 = vadd.f32 0.0, %v942
      %v944 = vpop.f32.mrf.mxu0
      %v945 = vadd.f32 0.0, %v944
      %946 = vmatmul.bf16.gmra.mxu0 %v833
      %v947 = vpop.f32.mrf.mxu0
      %v948 = vadd.f32 0.0, %v947
      %v949 = vpop.f32.mrf.mxu0
      %950 = vdwg.mxu0
      %v951 = vld [vmem:[#allocation2] sm:$0xff]
      %v952 = vld [vmem:[#allocation2 + $0x8] sm:$0xff]
      %v953 = vld [vmem:[#allocation2 + $0x10] sm:$0xff]
      %v954 = vld [vmem:[#allocation2 + $0x18] sm:$0xff]
      %v955 = vld [vmem:[#allocation2 + $0x20] sm:$0xff]
      %v956 = vld [vmem:[#allocation2 + $0x28] sm:$0xff]
      %v957 = vld [vmem:[#allocation2 + $0x30] sm:$0xff]
      %v958 = vld [vmem:[#allocation2 + $0x38] sm:$0xff]
      %v959 = vld [vmem:[#allocation2 + $0x40] sm:$0xff]
      %v960 = vld [vmem:[#allocation2 + $0x48] sm:$0xff]
      %v961 = vld [vmem:[#allocation2 + $0x50] sm:$0xff]
      %v962 = vld [vmem:[#allocation2 + $0x58] sm:$0xff]
      %v963 = vld [vmem:[#allocation2 + $0x60] sm:$0xff]
      %v964 = vld [vmem:[#allocation2 + $0x68] sm:$0xff]
      %v965 = vld [vmem:[#allocation2 + $0x70] sm:$0xff]
      %v966 = vld [vmem:[#allocation2 + $0x78] sm:$0xff]
      %v967 = vld [vmem:[#allocation2 + $0x80] sm:$0xff]
      %v968 = vld [vmem:[#allocation2 + $0x88] sm:$0xff]
      %v969 = vld [vmem:[#allocation2 + $0x90] sm:$0xff]
      %v970 = vld [vmem:[#allocation2 + $0x98] sm:$0xff]
      %v971 = vld [vmem:[#allocation2 + $0xa0] sm:$0xff]
      %v972 = vld [vmem:[#allocation2 + $0xa8] sm:$0xff]
      %v973 = vld [vmem:[#allocation2 + $0xb0] sm:$0xff]
      %v974 = vld [vmem:[#allocation2 + $0xb8] sm:$0xff]
      %v975 = vld [vmem:[#allocation2 + $0xc0] sm:$0xff]
      %v976 = vld [vmem:[#allocation2 + $0xc8] sm:$0xff]
      %v977 = vld [vmem:[#allocation2 + $0xd0] sm:$0xff]
      %v978 = vld [vmem:[#allocation2 + $0xd8] sm:$0xff]
      %v979 = vld [vmem:[#allocation2 + $0xe0] sm:$0xff]
      %v980 = vld [vmem:[#allocation2 + $0xe8] sm:$0xff]
      %v981 = vld [vmem:[#allocation2 + $0xf0] sm:$0xff]
      %v982 = vld [vmem:[#allocation2 + $0xf8] sm:$0xff]
      %v983 = vld [vmem:[#allocation2 + $0x100] sm:$0xff]
      %v984 = vld [vmem:[#allocation2 + $0x108] sm:$0xff]
      %v985 = vld [vmem:[#allocation2 + $0x110] sm:$0xff]
      %v986 = vld [vmem:[#allocation2 + $0x118] sm:$0xff]
      %v987 = vld [vmem:[#allocation2 + $0x120] sm:$0xff]
      %v988 = vld [vmem:[#allocation2 + $0x128] sm:$0xff]
      %v989 = vld [vmem:[#allocation2 + $0x130] sm:$0xff]
      %v990 = vld [vmem:[#allocation2 + $0x138] sm:$0xff]
      %v991 = vld [vmem:[#allocation2 + $0x140] sm:$0xf]
      %v992 = vadd.f32 %v951, %v848
      %v993 = vadd.f32 %v952, %v850
      %v994 = vadd.f32 %v953, %v853
      %v995 = vadd.f32 %v954, %v855
      %v996 = vadd.f32 %v955, %v858
      %v997 = vadd.f32 %v956, %v860
      %v998 = vadd.f32 %v957, %v863
      %v999 = vadd.f32 %v958, %v865
      %v1000 = vadd.f32 %v959, %v868
      %v1001 = vadd.f32 %v960, %v870
      %v1002 = vadd.f32 %v961, %v873
      %v1003 = vadd.f32 %v962, %v875
      %v1004 = vadd.f32 %v963, %v878
      %v1005 = vadd.f32 %v964, %v880
      %v1006 = vadd.f32 %v965, %v883
      %v1007 = vadd.f32 %v966, %v885
      %v1008 = vadd.f32 %v967, %v888
      %v1009 = vadd.f32 %v968, %v890
      %v1010 = vadd.f32 %v969, %v893
      %v1011 = vadd.f32 %v970, %v895
      %v1012 = vadd.f32 %v971, %v898
      %v1013 = vadd.f32 %v972, %v900
      %v1014 = vadd.f32 %v973, %v903
      %v1015 = vadd.f32 %v974, %v905
      %v1016 = vadd.f32 %v975, %v908
      %v1017 = vadd.f32 %v976, %v910
      %v1018 = vadd.f32 %v977, %v913
      %v1019 = vadd.f32 %v978, %v915
      %v1020 = vadd.f32 %v979, %v918
      %v1021 = vadd.f32 %v980, %v920
      %v1022 = vadd.f32 %v981, %v923
      %v1023 = vadd.f32 %v982, %v925
      %v1024 = vadd.f32 %v983, %v928
      %v1025 = vadd.f32 %v984, %v930
      %v1026 = vadd.f32 %v985, %v933
      %v1027 = vadd.f32 %v986, %v935
      %v1028 = vadd.f32 %v987, %v938
      %v1029 = vadd.f32 %v988, %v940
      %v1030 = vadd.f32 %v989, %v943
      %v1031 = vadd.f32 %v990, %v945
      %v1032 = vadd.f32 %v991, %v948
      %1033 = vst.msk [vmem:[#allocation2] sm:$0xff] %vm665, %v992
      %1034 = vst.msk [vmem:[#allocation2 + $0x8] sm:$0xff] %vm665, %v993
      %1035 = vst.msk [vmem:[#allocation2 + $0x10] sm:$0xff] %vm665, %v994
      %1036 = vst.msk [vmem:[#allocation2 + $0x18] sm:$0xff] %vm665, %v995
      %1037 = vst.msk [vmem:[#allocation2 + $0x20] sm:$0xff] %vm665, %v996
      %1038 = vst.msk [vmem:[#allocation2 + $0x28] sm:$0xff] %vm665, %v997
      %1039 = vst.msk [vmem:[#allocation2 + $0x30] sm:$0xff] %vm665, %v998
      %1040 = vst.msk [vmem:[#allocation2 + $0x38] sm:$0xff] %vm665, %v999
      %1041 = vst.msk [vmem:[#allocation2 + $0x40] sm:$0xff] %vm665, %v1000
      %1042 = vst.msk [vmem:[#allocation2 + $0x48] sm:$0xff] %vm665, %v1001
      %1043 = vst.msk [vmem:[#allocation2 + $0x50] sm:$0xff] %vm665, %v1002
      %1044 = vst.msk [vmem:[#allocation2 + $0x58] sm:$0xff] %vm665, %v1003
      %1045 = vst.msk [vmem:[#allocation2 + $0x60] sm:$0xff] %vm665, %v1004
      %1046 = vst.msk [vmem:[#allocation2 + $0x68] sm:$0xff] %vm665, %v1005
      %1047 = vst.msk [vmem:[#allocation2 + $0x70] sm:$0xff] %vm665, %v1006
      %1048 = vst.msk [vmem:[#allocation2 + $0x78] sm:$0xff] %vm665, %v1007
      %1049 = vst.msk [vmem:[#allocation2 + $0x80] sm:$0xff] %vm665, %v1008
      %1050 = vst.msk [vmem:[#allocation2 + $0x88] sm:$0xff] %vm665, %v1009
      %1051 = vst.msk [vmem:[#allocation2 + $0x90] sm:$0xff] %vm665, %v1010
      %1052 = vst.msk [vmem:[#allocation2 + $0x98] sm:$0xff] %vm665, %v1011
      %1053 = vst.msk [vmem:[#allocation2 + $0xa0] sm:$0xff] %vm665, %v1012
      %1054 = vst.msk [vmem:[#allocation2 + $0xa8] sm:$0xff] %vm665, %v1013
      %1055 = vst.msk [vmem:[#allocation2 + $0xb0] sm:$0xff] %vm665, %v1014
      %1056 = vst.msk [vmem:[#allocation2 + $0xb8] sm:$0xff] %vm665, %v1015
      %1057 = vst.msk [vmem:[#allocation2 + $0xc0] sm:$0xff] %vm665, %v1016
      %1058 = vst.msk [vmem:[#allocation2 + $0xc8] sm:$0xff] %vm665, %v1017
      %1059 = vst.msk [vmem:[#allocation2 + $0xd0] sm:$0xff] %vm665, %v1018
      %1060 = vst.msk [vmem:[#allocation2 + $0xd8] sm:$0xff] %vm665, %v1019
      %1061 = vst.msk [vmem:[#allocation2 + $0xe0] sm:$0xff] %vm665, %v1020
      %1062 = vst.msk [vmem:[#allocation2 + $0xe8] sm:$0xff] %vm665, %v1021
      %1063 = vst.msk [vmem:[#allocation2 + $0xf0] sm:$0xff] %vm665, %v1022
      %1064 = vst.msk [vmem:[#allocation2 + $0xf8] sm:$0xff] %vm665, %v1023
      %1065 = vst.msk [vmem:[#allocation2 + $0x100] sm:$0xff] %vm665, %v1024
      %1066 = vst.msk [vmem:[#allocation2 + $0x108] sm:$0xff] %vm665, %v1025
      %1067 = vst.msk [vmem:[#allocation2 + $0x110] sm:$0xff] %vm665, %v1026
      %1068 = vst.msk [vmem:[#allocation2 + $0x118] sm:$0xff] %vm665, %v1027
      %1069 = vst.msk [vmem:[#allocation2 + $0x120] sm:$0xff] %vm665, %v1028
      %1070 = vst.msk [vmem:[#allocation2 + $0x128] sm:$0xff] %vm665, %v1029
      %1071 = vst.msk [vmem:[#allocation2 + $0x130] sm:$0xff] %vm665, %v1030
      %1072 = vst.msk [vmem:[#allocation2 + $0x138] sm:$0xff] %vm665, %v1031
      %1073 = vst.msk [vmem:[#allocation2 + $0x140] sm:$0xf] %vm706, %v1032
      %v1074 = vld [vmem:[%s409 + $0x5] sm:$0xff]
      %v1075 = vld [vmem:[%s409 + $0xd] sm:$0xff]
      %v1076 = vld [vmem:[%s409 + $0x15] sm:$0xff]
      %v1077 = vld [vmem:[%s409 + $0x1d] sm:$0xff]
      %v1078 = vld [vmem:[%s409 + $0x25] sm:$0xff]
      %v1079 = vld [vmem:[%s409 + $0x2d] sm:$0xff]
      %v1080 = vld [vmem:[%s409 + $0x35] sm:$0xff]
      %v1081 = vld [vmem:[%s409 + $0x3d] sm:$0xff]
      %v1082 = vld [vmem:[%s409 + $0x45] sm:$0xff]
      %v1083 = vld [vmem:[%s409 + $0x4d] sm:$0xff]
      %v1084 = vld [vmem:[%s409 + $0x55] sm:$0xff]
      %v1085 = vld [vmem:[%s409 + $0x5d] sm:$0xff]
      %v1086 = vld [vmem:[%s409 + $0x65] sm:$0xff]
      %v1087 = vld [vmem:[%s409 + $0x6d] sm:$0xff]
      %v1088 = vld [vmem:[%s409 + $0x75] sm:$0xff]
      %v1089 = vld [vmem:[%s409 + $0x7d] sm:$0xff]
      %v1090 = vld [vmem:[%s409 + $0x85] sm:$0xff]
      %v1091 = vld [vmem:[%s409 + $0x8d] sm:$0xff]
      %v1092 = vld [vmem:[%s409 + $0x95] sm:$0xff]
      %v1093 = vld [vmem:[%s409 + $0x9d] sm:$0xff]
      %v1094 = vld [vmem:[%s409 + $0xa5] sm:$0xff]
      %v1095 = vld [vmem:[%s409 + $0xad] sm:$0xff]
      %v1096 = vld [vmem:[%s409 + $0xb5] sm:$0xff]
      %v1097 = vld [vmem:[%s409 + $0xbd] sm:$0xff]
      %v1098 = vld [vmem:[%s409 + $0xc5] sm:$0xff]
      %v1099 = vld [vmem:[%s409 + $0xcd] sm:$0xff]
      %v1100 = vld [vmem:[%s409 + $0xd5] sm:$0xff]
      %v1101 = vld [vmem:[%s409 + $0xdd] sm:$0xff]
      %v1102 = vld [vmem:[%s409 + $0xe5] sm:$0xff]
      %v1103 = vld [vmem:[%s409 + $0xed] sm:$0xff]
      %v1104 = vld [vmem:[%s409 + $0xf5] sm:$0xff]
      %v1105 = vld [vmem:[%s409 + $0xfd] sm:$0xff]
      %v1106 = vld [vmem:[%s409 + $0x105] sm:$0xff]
      %v1107 = vld [vmem:[%s409 + $0x10d] sm:$0xff]
      %v1108 = vld [vmem:[%s409 + $0x115] sm:$0xff]
      %v1109 = vld [vmem:[%s409 + $0x11d] sm:$0xff]
      %v1110 = vld [vmem:[%s409 + $0x125] sm:$0xff]
      %v1111 = vld [vmem:[%s409 + $0x12d] sm:$0xff]
      %v1112 = vld [vmem:[%s409 + $0x135] sm:$0xff]
      %v1113 = vld [vmem:[%s409 + $0x13d] sm:$0xff]
      %v1114 = vld [vmem:[%s409 + $0x145] sm:$0xf]
      %v1115 = vpack.c.bf16 %v1075, %v1074
      %v1116 = vpack.c.bf16 %v1077, %v1076
      %v1117 = vpack.c.bf16 %v1079, %v1078
      %v1118 = vpack.c.bf16 %v1081, %v1080
      %v1119 = vpack.c.bf16 %v1083, %v1082
      %v1120 = vpack.c.bf16 %v1085, %v1084
      %v1121 = vpack.c.bf16 %v1087, %v1086
      %v1122 = vpack.c.bf16 %v1089, %v1088
      %v1123 = vpack.c.bf16 %v1091, %v1090
      %v1124 = vpack.c.bf16 %v1093, %v1092
      %v1125 = vpack.c.bf16 %v1095, %v1094
      %v1126 = vpack.c.bf16 %v1097, %v1096
      %v1127 = vpack.c.bf16 %v1099, %v1098
      %v1128 = vpack.c.bf16 %v1101, %v1100
      %v1129 = vpack.c.bf16 %v1103, %v1102
      %v1130 = vpack.c.bf16 %v1105, %v1104
      %v1131 = vpack.c.bf16 %v1107, %v1106
      %v1132 = vpack.c.bf16 %v1109, %v1108
      %v1133 = vpack.c.bf16 %v1111, %v1110
      %v1134 = vpack.c.bf16 %v1113, %v1112
      %v1135 = vpack.c.bf16 %v1114, %v1114
      %s1136 = scalar_lea.vmem %s1, 4
      %v1137 = vld [vmem:[%s1136] sm:$0x3]
      %v1139 = vsel %vm481, %v1115, 0
      %v1142 = vsel %vm481, %v1116, 0
      %v1145 = vsel %vm481, %v1117, 0
      %v1148 = vsel %vm481, %v1118, 0
      %v1151 = vsel %vm481, %v1119, 0
      %v1154 = vsel %vm481, %v1120, 0
      %v1157 = vsel %vm481, %v1121, 0
      %v1160 = vsel %vm481, %v1122, 0
      %v1163 = vsel %vm481, %v1123, 0
      %v1166 = vsel %vm481, %v1124, 0
      %v1169 = vsel %vm481, %v1125, 0
      %v1172 = vsel %vm481, %v1126, 0
      %v1175 = vsel %vm481, %v1127, 0
      %v1178 = vsel %vm481, %v1128, 0
      %v1181 = vsel %vm481, %v1129, 0
      %v1184 = vsel %vm481, %v1130, 0
      %v1187 = vsel %vm481, %v1131, 0
      %v1190 = vsel %vm481, %v1132, 0
      %v1193 = vsel %vm481, %v1133, 0
      %v1196 = vsel %vm481, %v1134, 0
      %v1199 = vsel %vm481, %v1135, 0
      %v1202 = vand.u32 %v1137, %v548
      %1204 = vmatpush.bf16.msra.mxu0 0
      %1205 = vmatpush.bf16.msra.mxu0 0
      %1206 = vmatpush.bf16.msra.mxu0 0
      %1207 = vmatpush.bf16.msra.mxu0 0
      %1208 = vmatpush.bf16.msra.mxu0 0
      %1209 = vmatpush.bf16.msra.mxu0 0
      %1210 = vmatpush.bf16.msra.mxu0 0
      %1211 = vmatpush.bf16.msra.mxu0 %v1202
      %1212 = vmatmul.bf16.gmra.mxu0 %v1139
      %v1213 = vpop.f32.mrf.mxu0
      %v1214 = vadd.f32 0.0, %v1213
      %v1215 = vpop.f32.mrf.mxu0
      %v1216 = vadd.f32 0.0, %v1215
      %1217 = vmatmul.bf16.gmra.mxu0 %v1142
      %v1218 = vpop.f32.mrf.mxu0
      %v1219 = vadd.f32 0.0, %v1218
      %v1220 = vpop.f32.mrf.mxu0
      %v1221 = vadd.f32 0.0, %v1220
      %1222 = vmatmul.bf16.gmra.mxu0 %v1145
      %v1223 = vpop.f32.mrf.mxu0
      %v1224 = vadd.f32 0.0, %v1223
      %v1225 = vpop.f32.mrf.mxu0
      %v1226 = vadd.f32 0.0, %v1225
      %1227 = vmatmul.bf16.gmra.mxu0 %v1148
      %v1228 = vpop.f32.mrf.mxu0
      %v1229 = vadd.f32 0.0, %v1228
      %v1230 = vpop.f32.mrf.mxu0
      %v1231 = vadd.f32 0.0, %v1230
      %1232 = vmatmul.bf16.gmra.mxu0 %v1151
      %v1233 = vpop.f32.mrf.mxu0
      %v1234 = vadd.f32 0.0, %v1233
      %v1235 = vpop.f32.mrf.mxu0
      %v1236 = vadd.f32 0.0, %v1235
      %1237 = vmatmul.bf16.gmra.mxu0 %v1154
      %v1238 = vpop.f32.mrf.mxu0
      %v1239 = vadd.f32 0.0, %v1238
      %v1240 = vpop.f32.mrf.mxu0
      %v1241 = vadd.f32 0.0, %v1240
      %1242 = vmatmul.bf16.gmra.mxu0 %v1157
      %v1243 = vpop.f32.mrf.mxu0
      %v1244 = vadd.f32 0.0, %v1243
      %v1245 = vpop.f32.mrf.mxu0
      %v1246 = vadd.f32 0.0, %v1245
      %1247 = vmatmul.bf16.gmra.mxu0 %v1160
      %v1248 = vpop.f32.mrf.mxu0
      %v1249 = vadd.f32 0.0, %v1248
      %v1250 = vpop.f32.mrf.mxu0
      %v1251 = vadd.f32 0.0, %v1250
      %1252 = vmatmul.bf16.gmra.mxu0 %v1163
      %v1253 = vpop.f32.mrf.mxu0
      %v1254 = vadd.f32 0.0, %v1253
      %v1255 = vpop.f32.mrf.mxu0
      %v1256 = vadd.f32 0.0, %v1255
      %1257 = vmatmul.bf16.gmra.mxu0 %v1166
      %v1258 = vpop.f32.mrf.mxu0
      %v1259 = vadd.f32 0.0, %v1258
      %v1260 = vpop.f32.mrf.mxu0
      %v1261 = vadd.f32 0.0, %v1260
      %1262 = vmatmul.bf16.gmra.mxu0 %v1169
      %v1263 = vpop.f32.mrf.mxu0
      %v1264 = vadd.f32 0.0, %v1263
      %v1265 = vpop.f32.mrf.mxu0
      %v1266 = vadd.f32 0.0, %v1265
      %1267 = vmatmul.bf16.gmra.mxu0 %v1172
      %v1268 = vpop.f32.mrf.mxu0
      %v1269 = vadd.f32 0.0, %v1268
      %v1270 = vpop.f32.mrf.mxu0
      %v1271 = vadd.f32 0.0, %v1270
      %1272 = vmatmul.bf16.gmra.mxu0 %v1175
      %v1273 = vpop.f32.mrf.mxu0
      %v1274 = vadd.f32 0.0, %v1273
      %v1275 = vpop.f32.mrf.mxu0
      %v1276 = vadd.f32 0.0, %v1275
      %1277 = vmatmul.bf16.gmra.mxu0 %v1178
      %v1278 = vpop.f32.mrf.mxu0
      %v1279 = vadd.f32 0.0, %v1278
      %v1280 = vpop.f32.mrf.mxu0
      %v1281 = vadd.f32 0.0, %v1280
      %1282 = vmatmul.bf16.gmra.mxu0 %v1181
      %v1283 = vpop.f32.mrf.mxu0
      %v1284 = vadd.f32 0.0, %v1283
      %v1285 = vpop.f32.mrf.mxu0
      %v1286 = vadd.f32 0.0, %v1285
      %1287 = vmatmul.bf16.gmra.mxu0 %v1184
      %v1288 = vpop.f32.mrf.mxu0
      %v1289 = vadd.f32 0.0, %v1288
      %v1290 = vpop.f32.mrf.mxu0
      %v1291 = vadd.f32 0.0, %v1290
      %1292 = vmatmul.bf16.gmra.mxu0 %v1187
      %v1293 = vpop.f32.mrf.mxu0
      %v1294 = vadd.f32 0.0, %v1293
      %v1295 = vpop.f32.mrf.mxu0
      %v1296 = vadd.f32 0.0, %v1295
      %1297 = vmatmul.bf16.gmra.mxu0 %v1190
      %v1298 = vpop.f32.mrf.mxu0
      %v1299 = vadd.f32 0.0, %v1298
      %v1300 = vpop.f32.mrf.mxu0
      %v1301 = vadd.f32 0.0, %v1300
      %1302 = vmatmul.bf16.gmra.mxu0 %v1193
      %v1303 = vpop.f32.mrf.mxu0
      %v1304 = vadd.f32 0.0, %v1303
      %v1305 = vpop.f32.mrf.mxu0
      %v1306 = vadd.f32 0.0, %v1305
      %1307 = vmatmul.bf16.gmra.mxu0 %v1196
      %v1308 = vpop.f32.mrf.mxu0
      %v1309 = vadd.f32 0.0, %v1308
      %v1310 = vpop.f32.mrf.mxu0
      %v1311 = vadd.f32 0.0, %v1310
      %1312 = vmatmul.bf16.gmra.mxu0 %v1199
      %v1313 = vpop.f32.mrf.mxu0
      %v1314 = vadd.f32 0.0, %v1313
      %v1315 = vpop.f32.mrf.mxu0
      %1316 = vdwg.mxu0
      %v1317 = vld [vmem:[#allocation2] sm:$0xff]
      %v1318 = vld [vmem:[#allocation2 + $0x8] sm:$0xff]
      %v1319 = vld [vmem:[#allocation2 + $0x10] sm:$0xff]
      %v1320 = vld [vmem:[#allocation2 + $0x18] sm:$0xff]
      %v1321 = vld [vmem:[#allocation2 + $0x20] sm:$0xff]
      %v1322 = vld [vmem:[#allocation2 + $0x28] sm:$0xff]
      %v1323 = vld [vmem:[#allocation2 + $0x30] sm:$0xff]
      %v1324 = vld [vmem:[#allocation2 + $0x38] sm:$0xff]
      %v1325 = vld [vmem:[#allocation2 + $0x40] sm:$0xff]
      %v1326 = vld [vmem:[#allocation2 + $0x48] sm:$0xff]
      %v1327 = vld [vmem:[#allocation2 + $0x50] sm:$0xff]
      %v1328 = vld [vmem:[#allocation2 + $0x58] sm:$0xff]
      %v1329 = vld [vmem:[#allocation2 + $0x60] sm:$0xff]
      %v1330 = vld [vmem:[#allocation2 + $0x68] sm:$0xff]
      %v1331 = vld [vmem:[#allocation2 + $0x70] sm:$0xff]
      %v1332 = vld [vmem:[#allocation2 + $0x78] sm:$0xff]
      %v1333 = vld [vmem:[#allocation2 + $0x80] sm:$0xff]
      %v1334 = vld [vmem:[#allocation2 + $0x88] sm:$0xff]
      %v1335 = vld [vmem:[#allocation2 + $0x90] sm:$0xff]
      %v1336 = vld [vmem:[#allocation2 + $0x98] sm:$0xff]
      %v1337 = vld [vmem:[#allocation2 + $0xa0] sm:$0xff]
      %v1338 = vld [vmem:[#allocation2 + $0xa8] sm:$0xff]
      %v1339 = vld [vmem:[#allocation2 + $0xb0] sm:$0xff]
      %v1340 = vld [vmem:[#allocation2 + $0xb8] sm:$0xff]
      %v1341 = vld [vmem:[#allocation2 + $0xc0] sm:$0xff]
      %v1342 = vld [vmem:[#allocation2 + $0xc8] sm:$0xff]
      %v1343 = vld [vmem:[#allocation2 + $0xd0] sm:$0xff]
      %v1344 = vld [vmem:[#allocation2 + $0xd8] sm:$0xff]
      %v1345 = vld [vmem:[#allocation2 + $0xe0] sm:$0xff]
      %v1346 = vld [vmem:[#allocation2 + $0xe8] sm:$0xff]
      %v1347 = vld [vmem:[#allocation2 + $0xf0] sm:$0xff]
      %v1348 = vld [vmem:[#allocation2 + $0xf8] sm:$0xff]
      %v1349 = vld [vmem:[#allocation2 + $0x100] sm:$0xff]
      %v1350 = vld [vmem:[#allocation2 + $0x108] sm:$0xff]
      %v1351 = vld [vmem:[#allocation2 + $0x110] sm:$0xff]
      %v1352 = vld [vmem:[#allocation2 + $0x118] sm:$0xff]
      %v1353 = vld [vmem:[#allocation2 + $0x120] sm:$0xff]
      %v1354 = vld [vmem:[#allocation2 + $0x128] sm:$0xff]
      %v1355 = vld [vmem:[#allocation2 + $0x130] sm:$0xff]
      %v1356 = vld [vmem:[#allocation2 + $0x138] sm:$0xff]
      %v1357 = vld [vmem:[#allocation2 + $0x140] sm:$0xf]
      %v1358 = vadd.f32 %v1317, %v1214
      %v1359 = vadd.f32 %v1318, %v1216
      %v1360 = vadd.f32 %v1319, %v1219
      %v1361 = vadd.f32 %v1320, %v1221
      %v1362 = vadd.f32 %v1321, %v1224
      %v1363 = vadd.f32 %v1322, %v1226
      %v1364 = vadd.f32 %v1323, %v1229
      %v1365 = vadd.f32 %v1324, %v1231
      %v1366 = vadd.f32 %v1325, %v1234
      %v1367 = vadd.f32 %v1326, %v1236
      %v1368 = vadd.f32 %v1327, %v1239
      %v1369 = vadd.f32 %v1328, %v1241
      %v1370 = vadd.f32 %v1329, %v1244
      %v1371 = vadd.f32 %v1330, %v1246
      %v1372 = vadd.f32 %v1331, %v1249
      %v1373 = vadd.f32 %v1332, %v1251
      %v1374 = vadd.f32 %v1333, %v1254
      %v1375 = vadd.f32 %v1334, %v1256
      %v1376 = vadd.f32 %v1335, %v1259
      %v1377 = vadd.f32 %v1336, %v1261
      %v1378 = vadd.f32 %v1337, %v1264
      %v1379 = vadd.f32 %v1338, %v1266
      %v1380 = vadd.f32 %v1339, %v1269
      %v1381 = vadd.f32 %v1340, %v1271
      %v1382 = vadd.f32 %v1341, %v1274
      %v1383 = vadd.f32 %v1342, %v1276
      %v1384 = vadd.f32 %v1343, %v1279
      %v1385 = vadd.f32 %v1344, %v1281
      %v1386 = vadd.f32 %v1345, %v1284
      %v1387 = vadd.f32 %v1346, %v1286
      %v1388 = vadd.f32 %v1347, %v1289
      %v1389 = vadd.f32 %v1348, %v1291
      %v1390 = vadd.f32 %v1349, %v1294
      %v1391 = vadd.f32 %v1350, %v1296
      %v1392 = vadd.f32 %v1351, %v1299
      %v1393 = vadd.f32 %v1352, %v1301
      %v1394 = vadd.f32 %v1353, %v1304
      %v1395 = vadd.f32 %v1354, %v1306
      %v1396 = vadd.f32 %v1355, %v1309
      %v1397 = vadd.f32 %v1356, %v1311
      %v1398 = vadd.f32 %v1357, %v1314
      %1399 = vst.msk [vmem:[#allocation2] sm:$0xff] %vm665, %v1358
      %1400 = vst.msk [vmem:[#allocation2 + $0x8] sm:$0xff] %vm665, %v1359
      %1401 = vst.msk [vmem:[#allocation2 + $0x10] sm:$0xff] %vm665, %v1360
      %1402 = vst.msk [vmem:[#allocation2 + $0x18] sm:$0xff] %vm665, %v1361
      %1403 = vst.msk [vmem:[#allocation2 + $0x20] sm:$0xff] %vm665, %v1362
      %1404 = vst.msk [vmem:[#allocation2 + $0x28] sm:$0xff] %vm665, %v1363
      %1405 = vst.msk [vmem:[#allocation2 + $0x30] sm:$0xff] %vm665, %v1364
      %1406 = vst.msk [vmem:[#allocation2 + $0x38] sm:$0xff] %vm665, %v1365
      %1407 = vst.msk [vmem:[#allocation2 + $0x40] sm:$0xff] %vm665, %v1366
      %1408 = vst.msk [vmem:[#allocation2 + $0x48] sm:$0xff] %vm665, %v1367
      %1409 = vst.msk [vmem:[#allocation2 + $0x50] sm:$0xff] %vm665, %v1368
      %1410 = vst.msk [vmem:[#allocation2 + $0x58] sm:$0xff] %vm665, %v1369
      %1411 = vst.msk [vmem:[#allocation2 + $0x60] sm:$0xff] %vm665, %v1370
      %1412 = vst.msk [vmem:[#allocation2 + $0x68] sm:$0xff] %vm665, %v1371
      %1413 = vst.msk [vmem:[#allocation2 + $0x70] sm:$0xff] %vm665, %v1372
      %1414 = vst.msk [vmem:[#allocation2 + $0x78] sm:$0xff] %vm665, %v1373
      %1415 = vst.msk [vmem:[#allocation2 + $0x80] sm:$0xff] %vm665, %v1374
      %1416 = vst.msk [vmem:[#allocation2 + $0x88] sm:$0xff] %vm665, %v1375
      %1417 = vst.msk [vmem:[#allocation2 + $0x90] sm:$0xff] %vm665, %v1376
      %1418 = vst.msk [vmem:[#allocation2 + $0x98] sm:$0xff] %vm665, %v1377
      %1419 = vst.msk [vmem:[#allocation2 + $0xa0] sm:$0xff] %vm665, %v1378
      %1420 = vst.msk [vmem:[#allocation2 + $0xa8] sm:$0xff] %vm665, %v1379
      %1421 = vst.msk [vmem:[#allocation2 + $0xb0] sm:$0xff] %vm665, %v1380
      %1422 = vst.msk [vmem:[#allocation2 + $0xb8] sm:$0xff] %vm665, %v1381
      %1423 = vst.msk [vmem:[#allocation2 + $0xc0] sm:$0xff] %vm665, %v1382
      %1424 = vst.msk [vmem:[#allocation2 + $0xc8] sm:$0xff] %vm665, %v1383
      %1425 = vst.msk [vmem:[#allocation2 + $0xd0] sm:$0xff] %vm665, %v1384
      %1426 = vst.msk [vmem:[#allocation2 + $0xd8] sm:$0xff] %vm665, %v1385
      %1427 = vst.msk [vmem:[#allocation2 + $0xe0] sm:$0xff] %vm665, %v1386
      %1428 = vst.msk [vmem:[#allocation2 + $0xe8] sm:$0xff] %vm665, %v1387
      %1429 = vst.msk [vmem:[#allocation2 + $0xf0] sm:$0xff] %vm665, %v1388
      %1430 = vst.msk [vmem:[#allocation2 + $0xf8] sm:$0xff] %vm665, %v1389
      %1431 = vst.msk [vmem:[#allocation2 + $0x100] sm:$0xff] %vm665, %v1390
      %1432 = vst.msk [vmem:[#allocation2 + $0x108] sm:$0xff] %vm665, %v1391
      %1433 = vst.msk [vmem:[#allocation2 + $0x110] sm:$0xff] %vm665, %v1392
      %1434 = vst.msk [vmem:[#allocation2 + $0x118] sm:$0xff] %vm665, %v1393
      %1435 = vst.msk [vmem:[#allocation2 + $0x120] sm:$0xff] %vm665, %v1394
      %1436 = vst.msk [vmem:[#allocation2 + $0x128] sm:$0xff] %vm665, %v1395
      %1437 = vst.msk [vmem:[#allocation2 + $0x130] sm:$0xff] %vm665, %v1396
      %1438 = vst.msk [vmem:[#allocation2 + $0x138] sm:$0xff] %vm665, %v1397
      %1439 = vst.msk [vmem:[#allocation2 + $0x140] sm:$0xf] %vm706, %v1398
      %v1440 = vld [vmem:[%s409 + $0x15] sm:$0xff]
      %v1441 = vld [vmem:[%s409 + $0x1d] sm:$0xff]
      %v1442 = vld [vmem:[%s409 + $0x25] sm:$0xff]
      %v1443 = vld [vmem:[%s409 + $0x2d] sm:$0xff]
      %v1444 = vld [vmem:[%s409 + $0x35] sm:$0xff]
      %v1445 = vld [vmem:[%s409 + $0x3d] sm:$0xff]
      %v1446 = vld [vmem:[%s409 + $0x45] sm:$0xff]
      %v1447 = vld [vmem:[%s409 + $0x4d] sm:$0xff]
      %v1448 = vld [vmem:[%s409 + $0x55] sm:$0xff]
      %v1449 = vld [vmem:[%s409 + $0x5d] sm:$0xff]
      %v1450 = vld [vmem:[%s409 + $0x65] sm:$0xff]
      %v1451 = vld [vmem:[%s409 + $0x6d] sm:$0xff]
      %v1452 = vld [vmem:[%s409 + $0x75] sm:$0xff]
      %v1453 = vld [vmem:[%s409 + $0x7d] sm:$0xff]
      %v1454 = vld [vmem:[%s409 + $0x85] sm:$0xff]
      %v1455 = vld [vmem:[%s409 + $0x8d] sm:$0xff]
      %v1456 = vld [vmem:[%s409 + $0x95] sm:$0xff]
      %v1457 = vld [vmem:[%s409 + $0x9d] sm:$0xff]
      %v1458 = vld [vmem:[%s409 + $0xa5] sm:$0xff]
      %v1459 = vld [vmem:[%s409 + $0xad] sm:$0xff]
      %v1460 = vld [vmem:[%s409 + $0xb5] sm:$0xff]
      %v1461 = vld [vmem:[%s409 + $0xbd] sm:$0xff]
      %v1462 = vld [vmem:[%s409 + $0xc5] sm:$0xff]
      %v1463 = vld [vmem:[%s409 + $0xcd] sm:$0xff]
      %v1464 = vld [vmem:[%s409 + $0xd5] sm:$0xff]
      %v1465 = vld [vmem:[%s409 + $0xdd] sm:$0xff]
      %v1466 = vld [vmem:[%s409 + $0xe5] sm:$0xff]
      %v1467 = vld [vmem:[%s409 + $0xed] sm:$0xff]
      %v1468 = vld [vmem:[%s409 + $0xf5] sm:$0xff]
      %v1469 = vld [vmem:[%s409 + $0xfd] sm:$0xff]
      %v1470 = vld [vmem:[%s409 + $0x105] sm:$0xff]
      %v1471 = vld [vmem:[%s409 + $0x10d] sm:$0xff]
      %v1472 = vld [vmem:[%s409 + $0x115] sm:$0xff]
      %v1473 = vld [vmem:[%s409 + $0x11d] sm:$0xff]
      %v1474 = vld [vmem:[%s409 + $0x125] sm:$0xff]
      %v1475 = vld [vmem:[%s409 + $0x12d] sm:$0xff]
      %v1476 = vld [vmem:[%s409 + $0x135] sm:$0xff]
      %v1477 = vld [vmem:[%s409 + $0x13d] sm:$0xff]
      %v1478 = vld [vmem:[%s409 + $0x145] sm:$0xff]
      %v1479 = vld [vmem:[%s409 + $0x14d] sm:$0xff]
      %v1480 = vld [vmem:[%s409 + $0x155] sm:$0xf]
      %v1481 = vpack.c.bf16 %v1441, %v1440
      %v1482 = vpack.c.bf16 %v1443, %v1442
      %v1483 = vpack.c.bf16 %v1445, %v1444
      %v1484 = vpack.c.bf16 %v1447, %v1446
      %v1485 = vpack.c.bf16 %v1449, %v1448
      %v1486 = vpack.c.bf16 %v1451, %v1450
      %v1487 = vpack.c.bf16 %v1453, %v1452
      %v1488 = vpack.c.bf16 %v1455, %v1454
      %v1489 = vpack.c.bf16 %v1457, %v1456
      %v1490 = vpack.c.bf16 %v1459, %v1458
      %v1491 = vpack.c.bf16 %v1461, %v1460
      %v1492 = vpack.c.bf16 %v1463, %v1462
      %v1493 = vpack.c.bf16 %v1465, %v1464
      %v1494 = vpack.c.bf16 %v1467, %v1466
      %v1495 = vpack.c.bf16 %v1469, %v1468
      %v1496 = vpack.c.bf16 %v1471, %v1470
      %v1497 = vpack.c.bf16 %v1473, %v1472
      %v1498 = vpack.c.bf16 %v1475, %v1474
      %v1499 = vpack.c.bf16 %v1477, %v1476
      %v1500 = vpack.c.bf16 %v1479, %v1478
      %v1501 = vpack.c.bf16 %v1480, %v1480
      %s1502 = scalar_lea.vmem %s1, 6
      %v1503 = vld [vmem:[%s1502] sm:$0x3]
      %v1505 = vsel %vm481, %v1481, 0
      %v1508 = vsel %vm481, %v1482, 0
      %v1511 = vsel %vm481, %v1483, 0
      %v1514 = vsel %vm481, %v1484, 0
      %v1517 = vsel %vm481, %v1485, 0
      %v1520 = vsel %vm481, %v1486, 0
      %v1523 = vsel %vm481, %v1487, 0
      %v1526 = vsel %vm481, %v1488, 0
      %v1529 = vsel %vm481, %v1489, 0
      %v1532 = vsel %vm481, %v1490, 0
      %v1535 = vsel %vm481, %v1491, 0
      %v1538 = vsel %vm481, %v1492, 0
      %v1541 = vsel %vm481, %v1493, 0
      %v1544 = vsel %vm481, %v1494, 0
      %v1547 = vsel %vm481, %v1495, 0
      %v1550 = vsel %vm481, %v1496, 0
      %v1553 = vsel %vm481, %v1497, 0
      %v1556 = vsel %vm481, %v1498, 0
      %v1559 = vsel %vm481, %v1499, 0
      %v1562 = vsel %vm481, %v1500, 0
      %v1565 = vsel %vm481, %v1501, 0
      %v1568 = vand.u32 %v1503, %v548
      %1570 = vmatpush.bf16.msra.mxu0 0
      %1571 = vmatpush.bf16.msra.mxu0 0
      %1572 = vmatpush.bf16.msra.mxu0 0
      %1573 = vmatpush.bf16.msra.mxu0 0
      %1574 = vmatpush.bf16.msra.mxu0 0
      %1575 = vmatpush.bf16.msra.mxu0 0
      %1576 = vmatpush.bf16.msra.mxu0 0
      %1577 = vmatpush.bf16.msra.mxu0 %v1568
      %1578 = vmatmul.bf16.gmra.mxu0 %v1505
      %v1579 = vpop.f32.mrf.mxu0
      %v1580 = vadd.f32 0.0, %v1579
      %v1581 = vpop.f32.mrf.mxu0
      %v1582 = vadd.f32 0.0, %v1581
      %1583 = vmatmul.bf16.gmra.mxu0 %v1508
      %v1584 = vpop.f32.mrf.mxu0
      %v1585 = vadd.f32 0.0, %v1584
      %v1586 = vpop.f32.mrf.mxu0
      %v1587 = vadd.f32 0.0, %v1586
      %1588 = vmatmul.bf16.gmra.mxu0 %v1511
      %v1589 = vpop.f32.mrf.mxu0
      %v1590 = vadd.f32 0.0, %v1589
      %v1591 = vpop.f32.mrf.mxu0
      %v1592 = vadd.f32 0.0, %v1591
      %1593 = vmatmul.bf16.gmra.mxu0 %v1514
      %v1594 = vpop.f32.mrf.mxu0
      %v1595 = vadd.f32 0.0, %v1594
      %v1596 = vpop.f32.mrf.mxu0
      %v1597 = vadd.f32 0.0, %v1596
      %1598 = vmatmul.bf16.gmra.mxu0 %v1517
      %v1599 = vpop.f32.mrf.mxu0
      %v1600 = vadd.f32 0.0, %v1599
      %v1601 = vpop.f32.mrf.mxu0
      %v1602 = vadd.f32 0.0, %v1601
      %1603 = vmatmul.bf16.gmra.mxu0 %v1520
      %v1604 = vpop.f32.mrf.mxu0
      %v1605 = vadd.f32 0.0, %v1604
      %v1606 = vpop.f32.mrf.mxu0
      %v1607 = vadd.f32 0.0, %v1606
      %1608 = vmatmul.bf16.gmra.mxu0 %v1523
      %v1609 = vpop.f32.mrf.mxu0
      %v1610 = vadd.f32 0.0, %v1609
      %v1611 = vpop.f32.mrf.mxu0
      %v1612 = vadd.f32 0.0, %v1611
      %1613 = vmatmul.bf16.gmra.mxu0 %v1526
      %v1614 = vpop.f32.mrf.mxu0
      %v1615 = vadd.f32 0.0, %v1614
      %v1616 = vpop.f32.mrf.mxu0
      %v1617 = vadd.f32 0.0, %v1616
      %1618 = vmatmul.bf16.gmra.mxu0 %v1529
      %v1619 = vpop.f32.mrf.mxu0
      %v1620 = vadd.f32 0.0, %v1619
      %v1621 = vpop.f32.mrf.mxu0
      %v1622 = vadd.f32 0.0, %v1621
      %1623 = vmatmul.bf16.gmra.mxu0 %v1532
      %v1624 = vpop.f32.mrf.mxu0
      %v1625 = vadd.f32 0.0, %v1624
      %v1626 = vpop.f32.mrf.mxu0
      %v1627 = vadd.f32 0.0, %v1626
      %1628 = vmatmul.bf16.gmra.mxu0 %v1535
      %v1629 = vpop.f32.mrf.mxu0
      %v1630 = vadd.f32 0.0, %v1629
      %v1631 = vpop.f32.mrf.mxu0
      %v1632 = vadd.f32 0.0, %v1631
      %1633 = vmatmul.bf16.gmra.mxu0 %v1538
      %v1634 = vpop.f32.mrf.mxu0
      %v1635 = vadd.f32 0.0, %v1634
      %v1636 = vpop.f32.mrf.mxu0
      %v1637 = vadd.f32 0.0, %v1636
      %1638 = vmatmul.bf16.gmra.mxu0 %v1541
      %v1639 = vpop.f32.mrf.mxu0
      %v1640 = vadd.f32 0.0, %v1639
      %v1641 = vpop.f32.mrf.mxu0
      %v1642 = vadd.f32 0.0, %v1641
      %1643 = vmatmul.bf16.gmra.mxu0 %v1544
      %v1644 = vpop.f32.mrf.mxu0
      %v1645 = vadd.f32 0.0, %v1644
      %v1646 = vpop.f32.mrf.mxu0
      %v1647 = vadd.f32 0.0, %v1646
      %1648 = vmatmul.bf16.gmra.mxu0 %v1547
      %v1649 = vpop.f32.mrf.mxu0
      %v1650 = vadd.f32 0.0, %v1649
      %v1651 = vpop.f32.mrf.mxu0
      %v1652 = vadd.f32 0.0, %v1651
      %1653 = vmatmul.bf16.gmra.mxu0 %v1550
      %v1654 = vpop.f32.mrf.mxu0
      %v1655 = vadd.f32 0.0, %v1654
      %v1656 = vpop.f32.mrf.mxu0
      %v1657 = vadd.f32 0.0, %v1656
      %1658 = vmatmul.bf16.gmra.mxu0 %v1553
      %v1659 = vpop.f32.mrf.mxu0
      %v1660 = vadd.f32 0.0, %v1659
      %v1661 = vpop.f32.mrf.mxu0
      %v1662 = vadd.f32 0.0, %v1661
      %1663 = vmatmul.bf16.gmra.mxu0 %v1556
      %v1664 = vpop.f32.mrf.mxu0
      %v1665 = vadd.f32 0.0, %v1664
      %v1666 = vpop.f32.mrf.mxu0
      %v1667 = vadd.f32 0.0, %v1666
      %1668 = vmatmul.bf16.gmra.mxu0 %v1559
      %v1669 = vpop.f32.mrf.mxu0
      %v1670 = vadd.f32 0.0, %v1669
      %v1671 = vpop.f32.mrf.mxu0
      %v1672 = vadd.f32 0.0, %v1671
      %1673 = vmatmul.bf16.gmra.mxu0 %v1562
      %v1674 = vpop.f32.mrf.mxu0
      %v1675 = vadd.f32 0.0, %v1674
      %v1676 = vpop.f32.mrf.mxu0
      %v1677 = vadd.f32 0.0, %v1676
      %1678 = vmatmul.bf16.gmra.mxu0 %v1565
      %v1679 = vpop.f32.mrf.mxu0
      %v1680 = vadd.f32 0.0, %v1679
      %v1681 = vpop.f32.mrf.mxu0
      %1682 = vdwg.mxu0
      %v1683 = vld [vmem:[#allocation2] sm:$0xff]
      %v1684 = vld [vmem:[#allocation2 + $0x8] sm:$0xff]
      %v1685 = vld [vmem:[#allocation2 + $0x10] sm:$0xff]
      %v1686 = vld [vmem:[#allocation2 + $0x18] sm:$0xff]
      %v1687 = vld [vmem:[#allocation2 + $0x20] sm:$0xff]
      %v1688 = vld [vmem:[#allocation2 + $0x28] sm:$0xff]
      %v1689 = vld [vmem:[#allocation2 + $0x30] sm:$0xff]
      %v1690 = vld [vmem:[#allocation2 + $0x38] sm:$0xff]
      %v1691 = vld [vmem:[#allocation2 + $0x40] sm:$0xff]
      %v1692 = vld [vmem:[#allocation2 + $0x48] sm:$0xff]
      %v1693 = vld [vmem:[#allocation2 + $0x50] sm:$0xff]
      %v1694 = vld [vmem:[#allocation2 + $0x58] sm:$0xff]
      %v1695 = vld [vmem:[#allocation2 + $0x60] sm:$0xff]
      %v1696 = vld [vmem:[#allocation2 + $0x68] sm:$0xff]
      %v1697 = vld [vmem:[#allocation2 + $0x70] sm:$0xff]
      %v1698 = vld [vmem:[#allocation2 + $0x78] sm:$0xff]
      %v1699 = vld [vmem:[#allocation2 + $0x80] sm:$0xff]
      %v1700 = vld [vmem:[#allocation2 + $0x88] sm:$0xff]
      %v1701 = vld [vmem:[#allocation2 + $0x90] sm:$0xff]
      %v1702 = vld [vmem:[#allocation2 + $0x98] sm:$0xff]
      %v1703 = vld [vmem:[#allocation2 + $0xa0] sm:$0xff]
      %v1704 = vld [vmem:[#allocation2 + $0xa8] sm:$0xff]
      %v1705 = vld [vmem:[#allocation2 + $0xb0] sm:$0xff]
      %v1706 = vld [vmem:[#allocation2 + $0xb8] sm:$0xff]
      %v1707 = vld [vmem:[#allocation2 + $0xc0] sm:$0xff]
      %v1708 = vld [vmem:[#allocation2 + $0xc8] sm:$0xff]
      %v1709 = vld [vmem:[#allocation2 + $0xd0] sm:$0xff]
      %v1710 = vld [vmem:[#allocation2 + $0xd8] sm:$0xff]
      %v1711 = vld [vmem:[#allocation2 + $0xe0] sm:$0xff]
      %v1712 = vld [vmem:[#allocation2 + $0xe8] sm:$0xff]
      %v1713 = vld [vmem:[#allocation2 + $0xf0] sm:$0xff]
      %v1714 = vld [vmem:[#allocation2 + $0xf8] sm:$0xff]
      %v1715 = vld [vmem:[#allocation2 + $0x100] sm:$0xff]
      %v1716 = vld [vmem:[#allocation2 + $0x108] sm:$0xff]
      %v1717 = vld [vmem:[#allocation2 + $0x110] sm:$0xff]
      %v1718 = vld [vmem:[#allocation2 + $0x118] sm:$0xff]
      %v1719 = vld [vmem:[#allocation2 + $0x120] sm:$0xff]
      %v1720 = vld [vmem:[#allocation2 + $0x128] sm:$0xff]
      %v1721 = vld [vmem:[#allocation2 + $0x130] sm:$0xff]
      %v1722 = vld [vmem:[#allocation2 + $0x138] sm:$0xff]
      %v1723 = vld [vmem:[#allocation2 + $0x140] sm:$0xf]
      %v1724 = vadd.f32 %v1683, %v1580
      %v1725 = vadd.f32 %v1684, %v1582
      %v1726 = vadd.f32 %v1685, %v1585
      %v1727 = vadd.f32 %v1686, %v1587
      %v1728 = vadd.f32 %v1687, %v1590
      %v1729 = vadd.f32 %v1688, %v1592
      %v1730 = vadd.f32 %v1689, %v1595
      %v1731 = vadd.f32 %v1690, %v1597
      %v1732 = vadd.f32 %v1691, %v1600
      %v1733 = vadd.f32 %v1692, %v1602
      %v1734 = vadd.f32 %v1693, %v1605
      %v1735 = vadd.f32 %v1694, %v1607
      %v1736 = vadd.f32 %v1695, %v1610
      %v1737 = vadd.f32 %v1696, %v1612
      %v1738 = vadd.f32 %v1697, %v1615
      %v1739 = vadd.f32 %v1698, %v1617
      %v1740 = vadd.f32 %v1699, %v1620
      %v1741 = vadd.f32 %v1700, %v1622
      %v1742 = vadd.f32 %v1701, %v1625
      %v1743 = vadd.f32 %v1702, %v1627
      %v1744 = vadd.f32 %v1703, %v1630
      %v1745 = vadd.f32 %v1704, %v1632
      %v1746 = vadd.f32 %v1705, %v1635
      %v1747 = vadd.f32 %v1706, %v1637
      %v1748 = vadd.f32 %v1707, %v1640
      %v1749 = vadd.f32 %v1708, %v1642
      %v1750 = vadd.f32 %v1709, %v1645
      %v1751 = vadd.f32 %v1710, %v1647
      %v1752 = vadd.f32 %v1711, %v1650
      %v1753 = vadd.f32 %v1712, %v1652
      %v1754 = vadd.f32 %v1713, %v1655
      %v1755 = vadd.f32 %v1714, %v1657
      %v1756 = vadd.f32 %v1715, %v1660
      %v1757 = vadd.f32 %v1716, %v1662
      %v1758 = vadd.f32 %v1717, %v1665
      %v1759 = vadd.f32 %v1718, %v1667
      %v1760 = vadd.f32 %v1719, %v1670
      %v1761 = vadd.f32 %v1720, %v1672
      %v1762 = vadd.f32 %v1721, %v1675
      %v1763 = vadd.f32 %v1722, %v1677
      %v1764 = vadd.f32 %v1723, %v1680
      %1765 = vst.msk [vmem:[#allocation2] sm:$0xff] %vm665, %v1724
      %1766 = vst.msk [vmem:[#allocation2 + $0x8] sm:$0xff] %vm665, %v1725
      %1767 = vst.msk [vmem:[#allocation2 + $0x10] sm:$0xff] %vm665, %v1726
      %1768 = vst.msk [vmem:[#allocation2 + $0x18] sm:$0xff] %vm665, %v1727
      %1769 = vst.msk [vmem:[#allocation2 + $0x20] sm:$0xff] %vm665, %v1728
      %1770 = vst.msk [vmem:[#allocation2 + $0x28] sm:$0xff] %vm665, %v1729
      %1771 = vst.msk [vmem:[#allocation2 + $0x30] sm:$0xff] %vm665, %v1730
      %1772 = vst.msk [vmem:[#allocation2 + $0x38] sm:$0xff] %vm665, %v1731
      %1773 = vst.msk [vmem:[#allocation2 + $0x40] sm:$0xff] %vm665, %v1732
      %1774 = vst.msk [vmem:[#allocation2 + $0x48] sm:$0xff] %vm665, %v1733
      %1775 = vst.msk [vmem:[#allocation2 + $0x50] sm:$0xff] %vm665, %v1734
      %1776 = vst.msk [vmem:[#allocation2 + $0x58] sm:$0xff] %vm665, %v1735
      %1777 = vst.msk [vmem:[#allocation2 + $0x60] sm:$0xff] %vm665, %v1736
      %1778 = vst.msk [vmem:[#allocation2 + $0x68] sm:$0xff] %vm665, %v1737
      %1779 = vst.msk [vmem:[#allocation2 + $0x70] sm:$0xff] %vm665, %v1738
      %1780 = vst.msk [vmem:[#allocation2 + $0x78] sm:$0xff] %vm665, %v1739
      %1781 = vst.msk [vmem:[#allocation2 + $0x80] sm:$0xff] %vm665, %v1740
      %1782 = vst.msk [vmem:[#allocation2 + $0x88] sm:$0xff] %vm665, %v1741
      %1783 = vst.msk [vmem:[#allocation2 + $0x90] sm:$0xff] %vm665, %v1742
      %1784 = vst.msk [vmem:[#allocation2 + $0x98] sm:$0xff] %vm665, %v1743
      %1785 = vst.msk [vmem:[#allocation2 + $0xa0] sm:$0xff] %vm665, %v1744
      %1786 = vst.msk [vmem:[#allocation2 + $0xa8] sm:$0xff] %vm665, %v1745
      %1787 = vst.msk [vmem:[#allocation2 + $0xb0] sm:$0xff] %vm665, %v1746
      %1788 = vst.msk [vmem:[#allocation2 + $0xb8] sm:$0xff] %vm665, %v1747
      %1789 = vst.msk [vmem:[#allocation2 + $0xc0] sm:$0xff] %vm665, %v1748
      %1790 = vst.msk [vmem:[#allocation2 + $0xc8] sm:$0xff] %vm665, %v1749
      %1791 = vst.msk [vmem:[#allocation2 + $0xd0] sm:$0xff] %vm665, %v1750
      %1792 = vst.msk [vmem:[#allocation2 + $0xd8] sm:$0xff] %vm665, %v1751
      %1793 = vst.msk [vmem:[#allocation2 + $0xe0] sm:$0xff] %vm665, %v1752
      %1794 = vst.msk [vmem:[#allocation2 + $0xe8] sm:$0xff] %vm665, %v1753
      %1795 = vst.msk [vmem:[#allocation2 + $0xf0] sm:$0xff] %vm665, %v1754
      %1796 = vst.msk [vmem:[#allocation2 + $0xf8] sm:$0xff] %vm665, %v1755
      %1797 = vst.msk [vmem:[#allocation2 + $0x100] sm:$0xff] %vm665, %v1756
      %1798 = vst.msk [vmem:[#allocation2 + $0x108] sm:$0xff] %vm665, %v1757
      %1799 = vst.msk [vmem:[#allocation2 + $0x110] sm:$0xff] %vm665, %v1758
      %1800 = vst.msk [vmem:[#allocation2 + $0x118] sm:$0xff] %vm665, %v1759
      %1801 = vst.msk [vmem:[#allocation2 + $0x120] sm:$0xff] %vm665, %v1760
      %1802 = vst.msk [vmem:[#allocation2 + $0x128] sm:$0xff] %vm665, %v1761
      %1803 = vst.msk [vmem:[#allocation2 + $0x130] sm:$0xff] %vm665, %v1762
      %1804 = vst.msk [vmem:[#allocation2 + $0x138] sm:$0xff] %vm665, %v1763
      %1805 = vst.msk [vmem:[#allocation2 + $0x140] sm:$0xf] %vm706, %v1764
      %v1806 = vld [vmem:[%s409 + $0x16] sm:$0xff]
      %v1807 = vld [vmem:[%s409 + $0x1e] sm:$0xff]
      %v1808 = vld [vmem:[%s409 + $0x26] sm:$0xff]
      %v1809 = vld [vmem:[%s409 + $0x2e] sm:$0xff]
      %v1810 = vld [vmem:[%s409 + $0x36] sm:$0xff]
      %v1811 = vld [vmem:[%s409 + $0x3e] sm:$0xff]
      %v1812 = vld [vmem:[%s409 + $0x46] sm:$0xff]
      %v1813 = vld [vmem:[%s409 + $0x4e] sm:$0xff]
      %v1814 = vld [vmem:[%s409 + $0x56] sm:$0xff]
      %v1815 = vld [vmem:[%s409 + $0x5e] sm:$0xff]
      %v1816 = vld [vmem:[%s409 + $0x66] sm:$0xff]
      %v1817 = vld [vmem:[%s409 + $0x6e] sm:$0xff]
      %v1818 = vld [vmem:[%s409 + $0x76] sm:$0xff]
      %v1819 = vld [vmem:[%s409 + $0x7e] sm:$0xff]
      %v1820 = vld [vmem:[%s409 + $0x86] sm:$0xff]
      %v1821 = vld [vmem:[%s409 + $0x8e] sm:$0xff]
      %v1822 = vld [vmem:[%s409 + $0x96] sm:$0xff]
      %v1823 = vld [vmem:[%s409 + $0x9e] sm:$0xff]
      %v1824 = vld [vmem:[%s409 + $0xa6] sm:$0xff]
      %v1825 = vld [vmem:[%s409 + $0xae] sm:$0xff]
      %v1826 = vld [vmem:[%s409 + $0xb6] sm:$0xff]
      %v1827 = vld [vmem:[%s409 + $0xbe] sm:$0xff]
      %v1828 = vld [vmem:[%s409 + $0xc6] sm:$0xff]
      %v1829 = vld [vmem:[%s409 + $0xce] sm:$0xff]
      %v1830 = vld [vmem:[%s409 + $0xd6] sm:$0xff]
      %v1831 = vld [vmem:[%s409 + $0xde] sm:$0xff]
      %v1832 = vld [vmem:[%s409 + $0xe6] sm:$0xff]
      %v1833 = vld [vmem:[%s409 + $0xee] sm:$0xff]
      %v1834 = vld [vmem:[%s409 + $0xf6] sm:$0xff]
      %v1835 = vld [vmem:[%s409 + $0xfe] sm:$0xff]
      %v1836 = vld [vmem:[%s409 + $0x106] sm:$0xff]
      %v1837 = vld [vmem:[%s409 + $0x10e] sm:$0xff]
      %v1838 = vld [vmem:[%s409 + $0x116] sm:$0xff]
      %v1839 = vld [vmem:[%s409 + $0x11e] sm:$0xff]
      %v1840 = vld [vmem:[%s409 + $0x126] sm:$0xff]
      %v1841 = vld [vmem:[%s409 + $0x12e] sm:$0xff]
      %v1842 = vld [vmem:[%s409 + $0x136] sm:$0xff]
      %v1843 = vld [vmem:[%s409 + $0x13e] sm:$0xff]
      %v1844 = vld [vmem:[%s409 + $0x146] sm:$0xff]
      %v1845 = vld [vmem:[%s409 + $0x14e] sm:$0xff]
      %v1846 = vld [vmem:[%s409 + $0x156] sm:$0xf]
      %v1847 = vpack.c.bf16 %v1807, %v1806
      %v1848 = vpack.c.bf16 %v1809, %v1808
      %v1849 = vpack.c.bf16 %v1811, %v1810
      %v1850 = vpack.c.bf16 %v1813, %v1812
      %v1851 = vpack.c.bf16 %v1815, %v1814
      %v1852 = vpack.c.bf16 %v1817, %v1816
      %v1853 = vpack.c.bf16 %v1819, %v1818
      %v1854 = vpack.c.bf16 %v1821, %v1820
      %v1855 = vpack.c.bf16 %v1823, %v1822
      %v1856 = vpack.c.bf16 %v1825, %v1824
      %v1857 = vpack.c.bf16 %v1827, %v1826
      %v1858 = vpack.c.bf16 %v1829, %v1828
      %v1859 = vpack.c.bf16 %v1831, %v1830
      %v1860 = vpack.c.bf16 %v1833, %v1832
      %v1861 = vpack.c.bf16 %v1835, %v1834
      %v1862 = vpack.c.bf16 %v1837, %v1836
      %v1863 = vpack.c.bf16 %v1839, %v1838
      %v1864 = vpack.c.bf16 %v1841, %v1840
      %v1865 = vpack.c.bf16 %v1843, %v1842
      %v1866 = vpack.c.bf16 %v1845, %v1844
      %v1867 = vpack.c.bf16 %v1846, %v1846
      %s1868 = scalar_lea.vmem %s1, 8
      %v1869 = vld [vmem:[%s1868] sm:$0x3]
      %v1871 = vsel %vm481, %v1847, 0
      %v1874 = vsel %vm481, %v1848, 0
      %v1877 = vsel %vm481, %v1849, 0
      %v1880 = vsel %vm481, %v1850, 0
      %v1883 = vsel %vm481, %v1851, 0
      %v1886 = vsel %vm481, %v1852, 0
      %v1889 = vsel %vm481, %v1853, 0
      %v1892 = vsel %vm481, %v1854, 0
      %v1895 = vsel %vm481, %v1855, 0
      %v1898 = vsel %vm481, %v1856, 0
      %v1901 = vsel %vm481, %v1857, 0
      %v1904 = vsel %vm481, %v1858, 0
      %v1907 = vsel %vm481, %v1859, 0
      %v1910 = vsel %vm481, %v1860, 0
      %v1913 = vsel %vm481, %v1861, 0
      %v1916 = vsel %vm481, %v1862, 0
      %v1919 = vsel %vm481, %v1863, 0
      %v1922 = vsel %vm481, %v1864, 0
      %v1925 = vsel %vm481, %v1865, 0
      %v1928 = vsel %vm481, %v1866, 0
      %v1931 = vsel %vm481, %v1867, 0
      %v1934 = vand.u32 %v1869, %v548
      %1936 = vmatpush.bf16.msra.mxu0 0
      %1937 = vmatpush.bf16.msra.mxu0 0
      %1938 = vmatpush.bf16.msra.mxu0 0
      %1939 = vmatpush.bf16.msra.mxu0 0
      %1940 = vmatpush.bf16.msra.mxu0 0
      %1941 = vmatpush.bf16.msra.mxu0 0
      %1942 = vmatpush.bf16.msra.mxu0 0
      %1943 = vmatpush.bf16.msra.mxu0 %v1934
      %1944 = vmatmul.bf16.gmra.mxu0 %v1871
      %v1945 = vpop.f32.mrf.mxu0
      %v1946 = vadd.f32 0.0, %v1945
      %v1947 = vpop.f32.mrf.mxu0
      %v1948 = vadd.f32 0.0, %v1947
      %1949 = vmatmul.bf16.gmra.mxu0 %v1874
      %v1950 = vpop.f32.mrf.mxu0
      %v1951 = vadd.f32 0.0, %v1950
      %v1952 = vpop.f32.mrf.mxu0
      %v1953 = vadd.f32 0.0, %v1952
      %1954 = vmatmul.bf16.gmra.mxu0 %v1877
      %v1955 = vpop.f32.mrf.mxu0
      %v1956 = vadd.f32 0.0, %v1955
      %v1957 = vpop.f32.mrf.mxu0
      %v1958 = vadd.f32 0.0, %v1957
      %1959 = vmatmul.bf16.gmra.mxu0 %v1880
      %v1960 = vpop.f32.mrf.mxu0
      %v1961 = vadd.f32 0.0, %v1960
      %v1962 = vpop.f32.mrf.mxu0
      %v1963 = vadd.f32 0.0, %v1962
      %1964 = vmatmul.bf16.gmra.mxu0 %v1883
      %v1965 = vpop.f32.mrf.mxu0
      %v1966 = vadd.f32 0.0, %v1965
      %v1967 = vpop.f32.mrf.mxu0
      %v1968 = vadd.f32 0.0, %v1967
      %1969 = vmatmul.bf16.gmra.mxu0 %v1886
      %v1970 = vpop.f32.mrf.mxu0
      %v1971 = vadd.f32 0.0, %v1970
      %v1972 = vpop.f32.mrf.mxu0
      %v1973 = vadd.f32 0.0, %v1972
      %1974 = vmatmul.bf16.gmra.mxu0 %v1889
      %v1975 = vpop.f32.mrf.mxu0
      %v1976 = vadd.f32 0.0, %v1975
      %v1977 = vpop.f32.mrf.mxu0
      %v1978 = vadd.f32 0.0, %v1977
      %1979 = vmatmul.bf16.gmra.mxu0 %v1892
      %v1980 = vpop.f32.mrf.mxu0
      %v1981 = vadd.f32 0.0, %v1980
      %v1982 = vpop.f32.mrf.mxu0
      %v1983 = vadd.f32 0.0, %v1982
      %1984 = vmatmul.bf16.gmra.mxu0 %v1895
      %v1985 = vpop.f32.mrf.mxu0
      %v1986 = vadd.f32 0.0, %v1985
      %v1987 = vpop.f32.mrf.mxu0
      %v1988 = vadd.f32 0.0, %v1987
      %1989 = vmatmul.bf16.gmra.mxu0 %v1898
      %v1990 = vpop.f32.mrf.mxu0
      %v1991 = vadd.f32 0.0, %v1990
      %v1992 = vpop.f32.mrf.mxu0
      %v1993 = vadd.f32 0.0, %v1992
      %1994 = vmatmul.bf16.gmra.mxu0 %v1901
      %v1995 = vpop.f32.mrf.mxu0
      %v1996 = vadd.f32 0.0, %v1995
      %v1997 = vpop.f32.mrf.mxu0
      %v1998 = vadd.f32 0.0, %v1997
      %1999 = vmatmul.bf16.gmra.mxu0 %v1904
      %v2000 = vpop.f32.mrf.mxu0
      %v2001 = vadd.f32 0.0, %v2000
      %v2002 = vpop.f32.mrf.mxu0
      %v2003 = vadd.f32 0.0, %v2002
      %2004 = vmatmul.bf16.gmra.mxu0 %v1907
      %v2005 = vpop.f32.mrf.mxu0
      %v2006 = vadd.f32 0.0, %v2005
      %v2007 = vpop.f32.mrf.mxu0
      %v2008 = vadd.f32 0.0, %v2007
      %2009 = vmatmul.bf16.gmra.mxu0 %v1910
      %v2010 = vpop.f32.mrf.mxu0
      %v2011 = vadd.f32 0.0, %v2010
      %v2012 = vpop.f32.mrf.mxu0
      %v2013 = vadd.f32 0.0, %v2012
      %2014 = vmatmul.bf16.gmra.mxu0 %v1913
      %v2015 = vpop.f32.mrf.mxu0
      %v2016 = vadd.f32 0.0, %v2015
      %v2017 = vpop.f32.mrf.mxu0
      %v2018 = vadd.f32 0.0, %v2017
      %2019 = vmatmul.bf16.gmra.mxu0 %v1916
      %v2020 = vpop.f32.mrf.mxu0
      %v2021 = vadd.f32 0.0, %v2020
      %v2022 = vpop.f32.mrf.mxu0
      %v2023 = vadd.f32 0.0, %v2022
      %2024 = vmatmul.bf16.gmra.mxu0 %v1919
      %v2025 = vpop.f32.mrf.mxu0
      %v2026 = vadd.f32 0.0, %v2025
      %v2027 = vpop.f32.mrf.mxu0
      %v2028 = vadd.f32 0.0, %v2027
      %2029 = vmatmul.bf16.gmra.mxu0 %v1922
      %v2030 = vpop.f32.mrf.mxu0
      %v2031 = vadd.f32 0.0, %v2030
      %v2032 = vpop.f32.mrf.mxu0
      %v2033 = vadd.f32 0.0, %v2032
      %2034 = vmatmul.bf16.gmra.mxu0 %v1925
      %v2035 = vpop.f32.mrf.mxu0
      %v2036 = vadd.f32 0.0, %v2035
      %v2037 = vpop.f32.mrf.mxu0
      %v2038 = vadd.f32 0.0, %v2037
      %2039 = vmatmul.bf16.gmra.mxu0 %v1928
      %v2040 = vpop.f32.mrf.mxu0
      %v2041 = vadd.f32 0.0, %v2040
      %v2042 = vpop.f32.mrf.mxu0
      %v2043 = vadd.f32 0.0, %v2042
      %2044 = vmatmul.bf16.gmra.mxu0 %v1931
      %v2045 = vpop.f32.mrf.mxu0
      %v2046 = vadd.f32 0.0, %v2045
      %v2047 = vpop.f32.mrf.mxu0
      %2048 = vdwg.mxu0
      %v2049 = vld [vmem:[#allocation2] sm:$0xff]
      %v2050 = vld [vmem:[#allocation2 + $0x8] sm:$0xff]
      %v2051 = vld [vmem:[#allocation2 + $0x10] sm:$0xff]
      %v2052 = vld [vmem:[#allocation2 + $0x18] sm:$0xff]
      %v2053 = vld [vmem:[#allocation2 + $0x20] sm:$0xff]
      %v2054 = vld [vmem:[#allocation2 + $0x28] sm:$0xff]
      %v2055 = vld [vmem:[#allocation2 + $0x30] sm:$0xff]
      %v2056 = vld [vmem:[#allocation2 + $0x38] sm:$0xff]
      %v2057 = vld [vmem:[#allocation2 + $0x40] sm:$0xff]
      %v2058 = vld [vmem:[#allocation2 + $0x48] sm:$0xff]
      %v2059 = vld [vmem:[#allocation2 + $0x50] sm:$0xff]
      %v2060 = vld [vmem:[#allocation2 + $0x58] sm:$0xff]
      %v2061 = vld [vmem:[#allocation2 + $0x60] sm:$0xff]
      %v2062 = vld [vmem:[#allocation2 + $0x68] sm:$0xff]
      %v2063 = vld [vmem:[#allocation2 + $0x70] sm:$0xff]
      %v2064 = vld [vmem:[#allocation2 + $0x78] sm:$0xff]
      %v2065 = vld [vmem:[#allocation2 + $0x80] sm:$0xff]
      %v2066 = vld [vmem:[#allocation2 + $0x88] sm:$0xff]
      %v2067 = vld [vmem:[#allocation2 + $0x90] sm:$0xff]
      %v2068 = vld [vmem:[#allocation2 + $0x98] sm:$0xff]
      %v2069 = vld [vmem:[#allocation2 + $0xa0] sm:$0xff]
      %v2070 = vld [vmem:[#allocation2 + $0xa8] sm:$0xff]
      %v2071 = vld [vmem:[#allocation2 + $0xb0] sm:$0xff]
      %v2072 = vld [vmem:[#allocation2 + $0xb8] sm:$0xff]
      %v2073 = vld [vmem:[#allocation2 + $0xc0] sm:$0xff]
      %v2074 = vld [vmem:[#allocation2 + $0xc8] sm:$0xff]
      %v2075 = vld [vmem:[#allocation2 + $0xd0] sm:$0xff]
      %v2076 = vld [vmem:[#allocation2 + $0xd8] sm:$0xff]
      %v2077 = vld [vmem:[#allocation2 + $0xe0] sm:$0xff]
      %v2078 = vld [vmem:[#allocation2 + $0xe8] sm:$0xff]
      %v2079 = vld [vmem:[#allocation2 + $0xf0] sm:$0xff]
      %v2080 = vld [vmem:[#allocation2 + $0xf8] sm:$0xff]
      %v2081 = vld [vmem:[#allocation2 + $0x100] sm:$0xff]
      %v2082 = vld [vmem:[#allocation2 + $0x108] sm:$0xff]
      %v2083 = vld [vmem:[#allocation2 + $0x110] sm:$0xff]
      %v2084 = vld [vmem:[#allocation2 + $0x118] sm:$0xff]
      %v2085 = vld [vmem:[#allocation2 + $0x120] sm:$0xff]
      %v2086 = vld [vmem:[#allocation2 + $0x128] sm:$0xff]
      %v2087 = vld [vmem:[#allocation2 + $0x130] sm:$0xff]
      %v2088 = vld [vmem:[#allocation2 + $0x138] sm:$0xff]
      %v2089 = vld [vmem:[#allocation2 + $0x140] sm:$0xf]
      %v2090 = vadd.f32 %v2049, %v1946
      %v2091 = vadd.f32 %v2050, %v1948
      %v2092 = vadd.f32 %v2051, %v1951
      %v2093 = vadd.f32 %v2052, %v1953
      %v2094 = vadd.f32 %v2053, %v1956
      %v2095 = vadd.f32 %v2054, %v1958
      %v2096 = vadd.f32 %v2055, %v1961
      %v2097 = vadd.f32 %v2056, %v1963
      %v2098 = vadd.f32 %v2057, %v1966
      %v2099 = vadd.f32 %v2058, %v1968
      %v2100 = vadd.f32 %v2059, %v1971
      %v2101 = vadd.f32 %v2060, %v1973
      %v2102 = vadd.f32 %v2061, %v1976
      %v2103 = vadd.f32 %v2062, %v1978
      %v2104 = vadd.f32 %v2063, %v1981
      %v2105 = vadd.f32 %v2064, %v1983
      %v2106 = vadd.f32 %v2065, %v1986
      %v2107 = vadd.f32 %v2066, %v1988
      %v2108 = vadd.f32 %v2067, %v1991
      %v2109 = vadd.f32 %v2068, %v1993
      %v2110 = vadd.f32 %v2069, %v1996
      %v2111 = vadd.f32 %v2070, %v1998
      %v2112 = vadd.f32 %v2071, %v2001
      %v2113 = vadd.f32 %v2072, %v2003
      %v2114 = vadd.f32 %v2073, %v2006
      %v2115 = vadd.f32 %v2074, %v2008
      %v2116 = vadd.f32 %v2075, %v2011
      %v2117 = vadd.f32 %v2076, %v2013
      %v2118 = vadd.f32 %v2077, %v2016
      %v2119 = vadd.f32 %v2078, %v2018
      %v2120 = vadd.f32 %v2079, %v2021
      %v2121 = vadd.f32 %v2080, %v2023
      %v2122 = vadd.f32 %v2081, %v2026
      %v2123 = vadd.f32 %v2082, %v2028
      %v2124 = vadd.f32 %v2083, %v2031
      %v2125 = vadd.f32 %v2084, %v2033
      %v2126 = vadd.f32 %v2085, %v2036
      %v2127 = vadd.f32 %v2086, %v2038
      %v2128 = vadd.f32 %v2087, %v2041
      %v2129 = vadd.f32 %v2088, %v2043
      %v2130 = vadd.f32 %v2089, %v2046
      %2131 = vst.msk [vmem:[#allocation2] sm:$0xff] %vm665, %v2090
      %2132 = vst.msk [vmem:[#allocation2 + $0x8] sm:$0xff] %vm665, %v2091
      %2133 = vst.msk [vmem:[#allocation2 + $0x10] sm:$0xff] %vm665, %v2092
      %2134 = vst.msk [vmem:[#allocation2 + $0x18] sm:$0xff] %vm665, %v2093
      %2135 = vst.msk [vmem:[#allocation2 + $0x20] sm:$0xff] %vm665, %v2094
      %2136 = vst.msk [vmem:[#allocation2 + $0x28] sm:$0xff] %vm665, %v2095
      %2137 = vst.msk [vmem:[#allocation2 + $0x30] sm:$0xff] %vm665, %v2096
      %2138 = vst.msk [vmem:[#allocation2 + $0x38] sm:$0xff] %vm665, %v2097
      %2139 = vst.msk [vmem:[#allocation2 + $0x40] sm:$0xff] %vm665, %v2098
      %2140 = vst.msk [vmem:[#allocation2 + $0x48] sm:$0xff] %vm665, %v2099
      %2141 = vst.msk [vmem:[#allocation2 + $0x50] sm:$0xff] %vm665, %v2100
      %2142 = vst.msk [vmem:[#allocation2 + $0x58] sm:$0xff] %vm665, %v2101
      %2143 = vst.msk [vmem:[#allocation2 + $0x60] sm:$0xff] %vm665, %v2102
      %2144 = vst.msk [vmem:[#allocation2 + $0x68] sm:$0xff] %vm665, %v2103
      %2145 = vst.msk [vmem:[#allocation2 + $0x70] sm:$0xff] %vm665, %v2104
      %2146 = vst.msk [vmem:[#allocation2 + $0x78] sm:$0xff] %vm665, %v2105
      %2147 = vst.msk [vmem:[#allocation2 + $0x80] sm:$0xff] %vm665, %v2106
      %2148 = vst.msk [vmem:[#allocation2 + $0x88] sm:$0xff] %vm665, %v2107
      %2149 = vst.msk [vmem:[#allocation2 + $0x90] sm:$0xff] %vm665, %v2108
      %2150 = vst.msk [vmem:[#allocation2 + $0x98] sm:$0xff] %vm665, %v2109
      %2151 = vst.msk [vmem:[#allocation2 + $0xa0] sm:$0xff] %vm665, %v2110
      %2152 = vst.msk [vmem:[#allocation2 + $0xa8] sm:$0xff] %vm665, %v2111
      %2153 = vst.msk [vmem:[#allocation2 + $0xb0] sm:$0xff] %vm665, %v2112
      %2154 = vst.msk [vmem:[#allocation2 + $0xb8] sm:$0xff] %vm665, %v2113
      %2155 = vst.msk [vmem:[#allocation2 + $0xc0] sm:$0xff] %vm665, %v2114
      %2156 = vst.msk [vmem:[#allocation2 + $0xc8] sm:$0xff] %vm665, %v2115
      %2157 = vst.msk [vmem:[#allocation2 + $0xd0] sm:$0xff] %vm665, %v2116
      %2158 = vst.msk [vmem:[#allocation2 + $0xd8] sm:$0xff] %vm665, %v2117
      %2159 = vst.msk [vmem:[#allocation2 + $0xe0] sm:$0xff] %vm665, %v2118
      %2160 = vst.msk [vmem:[#allocation2 + $0xe8] sm:$0xff] %vm665, %v2119
      %2161 = vst.msk [vmem:[#allocation2 + $0xf0] sm:$0xff] %vm665, %v2120
      %2162 = vst.msk [vmem:[#allocation2 + $0xf8] sm:$0xff] %vm665, %v2121
      %2163 = vst.msk [vmem:[#allocation2 + $0x100] sm:$0xff] %vm665, %v2122
      %2164 = vst.msk [vmem:[#allocation2 + $0x108] sm:$0xff] %vm665, %v2123
      %2165 = vst.msk [vmem:[#allocation2 + $0x110] sm:$0xff] %vm665, %v2124
      %2166 = vst.msk [vmem:[#allocation2 + $0x118] sm:$0xff] %vm665, %v2125
      %2167 = vst.msk [vmem:[#allocation2 + $0x120] sm:$0xff] %vm665, %v2126
      %2168 = vst.msk [vmem:[#allocation2 + $0x128] sm:$0xff] %vm665, %v2127
      %2169 = vst.msk [vmem:[#allocation2 + $0x130] sm:$0xff] %vm665, %v2128
      %2170 = vst.msk [vmem:[#allocation2 + $0x138] sm:$0xff] %vm665, %v2129
      %2171 = vst.msk [vmem:[#allocation2 + $0x140] sm:$0xf] %vm706, %v2130
      %v2172 = vld [vmem:[%s409 + $0x17] sm:$0xff]
      %v2173 = vld [vmem:[%s409 + $0x1f] sm:$0xff]
      %v2174 = vld [vmem:[%s409 + $0x27] sm:$0xff]
      %v2175 = vld [vmem:[%s409 + $0x2f] sm:$0xff]
      %v2176 = vld [vmem:[%s409 + $0x37] sm:$0xff]
      %v2177 = vld [vmem:[%s409 + $0x3f] sm:$0xff]
      %v2178 = vld [vmem:[%s409 + $0x47] sm:$0xff]
      %v2179 = vld [vmem:[%s409 + $0x4f] sm:$0xff]
      %v2180 = vld [vmem:[%s409 + $0x57] sm:$0xff]
      %v2181 = vld [vmem:[%s409 + $0x5f] sm:$0xff]
      %v2182 = vld [vmem:[%s409 + $0x67] sm:$0xff]
      %v2183 = vld [vmem:[%s409 + $0x6f] sm:$0xff]
      %v2184 = vld [vmem:[%s409 + $0x77] sm:$0xff]
      %v2185 = vld [vmem:[%s409 + $0x7f] sm:$0xff]
      %v2186 = vld [vmem:[%s409 + $0x87] sm:$0xff]
      %v2187 = vld [vmem:[%s409 + $0x8f] sm:$0xff]
      %v2188 = vld [vmem:[%s409 + $0x97] sm:$0xff]
      %v2189 = vld [vmem:[%s409 + $0x9f] sm:$0xff]
      %v2190 = vld [vmem:[%s409 + $0xa7] sm:$0xff]
      %v2191 = vld [vmem:[%s409 + $0xaf] sm:$0xff]
      %v2192 = vld [vmem:[%s409 + $0xb7] sm:$0xff]
      %v2193 = vld [vmem:[%s409 + $0xbf] sm:$0xff]
      %v2194 = vld [vmem:[%s409 + $0xc7] sm:$0xff]
      %v2195 = vld [vmem:[%s409 + $0xcf] sm:$0xff]
      %v2196 = vld [vmem:[%s409 + $0xd7] sm:$0xff]
      %v2197 = vld [vmem:[%s409 + $0xdf] sm:$0xff]
      %v2198 = vld [vmem:[%s409 + $0xe7] sm:$0xff]
      %v2199 = vld [vmem:[%s409 + $0xef] sm:$0xff]
      %v2200 = vld [vmem:[%s409 + $0xf7] sm:$0xff]
      %v2201 = vld [vmem:[%s409 + $0xff] sm:$0xff]
      %v2202 = vld [vmem:[%s409 + $0x107] sm:$0xff]
      %v2203 = vld [vmem:[%s409 + $0x10f] sm:$0xff]
      %v2204 = vld [vmem:[%s409 + $0x117] sm:$0xff]
      %v2205 = vld [vmem:[%s409 + $0x11f] sm:$0xff]
      %v2206 = vld [vmem:[%s409 + $0x127] sm:$0xff]
      %v2207 = vld [vmem:[%s409 + $0x12f] sm:$0xff]
      %v2208 = vld [vmem:[%s409 + $0x137] sm:$0xff]
      %v2209 = vld [vmem:[%s409 + $0x13f] sm:$0xff]
      %v2210 = vld [vmem:[%s409 + $0x147] sm:$0xff]
      %v2211 = vld [vmem:[%s409 + $0x14f] sm:$0xff]
      %v2212 = vld [vmem:[%s409 + $0x157] sm:$0xf]
      %v2213 = vpack.c.bf16 %v2173, %v2172
      %v2214 = vpack.c.bf16 %v2175, %v2174
      %v2215 = vpack.c.bf16 %v2177, %v2176
      %v2216 = vpack.c.bf16 %v2179, %v2178
      %v2217 = vpack.c.bf16 %v2181, %v2180
      %v2218 = vpack.c.bf16 %v2183, %v2182
      %v2219 = vpack.c.bf16 %v2185, %v2184
      %v2220 = vpack.c.bf16 %v2187, %v2186
      %v2221 = vpack.c.bf16 %v2189, %v2188
      %v2222 = vpack.c.bf16 %v2191, %v2190
      %v2223 = vpack.c.bf16 %v2193, %v2192
      %v2224 = vpack.c.bf16 %v2195, %v2194
      %v2225 = vpack.c.bf16 %v2197, %v2196
      %v2226 = vpack.c.bf16 %v2199, %v2198
      %v2227 = vpack.c.bf16 %v2201, %v2200
      %v2228 = vpack.c.bf16 %v2203, %v2202
      %v2229 = vpack.c.bf16 %v2205, %v2204
      %v2230 = vpack.c.bf16 %v2207, %v2206
      %v2231 = vpack.c.bf16 %v2209, %v2208
      %v2232 = vpack.c.bf16 %v2211, %v2210
      %v2233 = vpack.c.bf16 %v2212, %v2212
      %s2234 = scalar_lea.vmem %s1, 10
      %v2235 = vld [vmem:[%s2234] sm:$0x3]
      %v2237 = vsel %vm481, %v2213, 0
      %v2240 = vsel %vm481, %v2214, 0
      %v2243 = vsel %vm481, %v2215, 0
      %v2246 = vsel %vm481, %v2216, 0
      %v2249 = vsel %vm481, %v2217, 0
      %v2252 = vsel %vm481, %v2218, 0
      %v2255 = vsel %vm481, %v2219, 0
      %v2258 = vsel %vm481, %v2220, 0
      %v2261 = vsel %vm481, %v2221, 0
      %v2264 = vsel %vm481, %v2222, 0
      %v2267 = vsel %vm481, %v2223, 0
      %v2270 = vsel %vm481, %v2224, 0
      %v2273 = vsel %vm481, %v2225, 0
      %v2276 = vsel %vm481, %v2226, 0
      %v2279 = vsel %vm481, %v2227, 0
      %v2282 = vsel %vm481, %v2228, 0
      %v2285 = vsel %vm481, %v2229, 0
      %v2288 = vsel %vm481, %v2230, 0
      %v2291 = vsel %vm481, %v2231, 0
      %v2294 = vsel %vm481, %v2232, 0
      %v2297 = vsel %vm481, %v2233, 0
      %v2300 = vand.u32 %v2235, %v548
      %2302 = vmatpush.bf16.msra.mxu0 0
      %2303 = vmatpush.bf16.msra.mxu0 0
      %2304 = vmatpush.bf16.msra.mxu0 0
      %2305 = vmatpush.bf16.msra.mxu0 0
      %2306 = vmatpush.bf16.msra.mxu0 0
      %2307 = vmatpush.bf16.msra.mxu0 0
      %2308 = vmatpush.bf16.msra.mxu0 0
      %2309 = vmatpush.bf16.msra.mxu0 %v2300
      %2310 = vmatmul.bf16.gmra.mxu0 %v2237
      %v2311 = vpop.f32.mrf.mxu0
      %v2312 = vadd.f32 0.0, %v2311
      %v2313 = vpop.f32.mrf.mxu0
      %v2314 = vadd.f32 0.0, %v2313
      %2315 = vmatmul.bf16.gmra.mxu0 %v2240
      %v2316 = vpop.f32.mrf.mxu0
      %v2317 = vadd.f32 0.0, %v2316
      %v2318 = vpop.f32.mrf.mxu0
      %v2319 = vadd.f32 0.0, %v2318
      %2320 = vmatmul.bf16.gmra.mxu0 %v2243
      %v2321 = vpop.f32.mrf.mxu0
      %v2322 = vadd.f32 0.0, %v2321
      %v2323 = vpop.f32.mrf.mxu0
      %v2324 = vadd.f32 0.0, %v2323
      %2325 = vmatmul.bf16.gmra.mxu0 %v2246
      %v2326 = vpop.f32.mrf.mxu0
      %v2327 = vadd.f32 0.0, %v2326
      %v2328 = vpop.f32.mrf.mxu0
      %v2329 = vadd.f32 0.0, %v2328
      %2330 = vmatmul.bf16.gmra.mxu0 %v2249
      %v2331 = vpop.f32.mrf.mxu0
      %v2332 = vadd.f32 0.0, %v2331
      %v2333 = vpop.f32.mrf.mxu0
      %v2334 = vadd.f32 0.0, %v2333
      %2335 = vmatmul.bf16.gmra.mxu0 %v2252
      %v2336 = vpop.f32.mrf.mxu0
      %v2337 = vadd.f32 0.0, %v2336
      %v2338 = vpop.f32.mrf.mxu0
      %v2339 = vadd.f32 0.0, %v2338
      %2340 = vmatmul.bf16.gmra.mxu0 %v2255
      %v2341 = vpop.f32.mrf.mxu0
      %v2342 = vadd.f32 0.0, %v2341
      %v2343 = vpop.f32.mrf.mxu0
      %v2344 = vadd.f32 0.0, %v2343
      %2345 = vmatmul.bf16.gmra.mxu0 %v2258
      %v2346 = vpop.f32.mrf.mxu0
      %v2347 = vadd.f32 0.0, %v2346
      %v2348 = vpop.f32.mrf.mxu0
      %v2349 = vadd.f32 0.0, %v2348
      %2350 = vmatmul.bf16.gmra.mxu0 %v2261
      %v2351 = vpop.f32.mrf.mxu0
      %v2352 = vadd.f32 0.0, %v2351
      %v2353 = vpop.f32.mrf.mxu0
      %v2354 = vadd.f32 0.0, %v2353
      %2355 = vmatmul.bf16.gmra.mxu0 %v2264
      %v2356 = vpop.f32.mrf.mxu0
      %v2357 = vadd.f32 0.0, %v2356
      %v2358 = vpop.f32.mrf.mxu0
      %v2359 = vadd.f32 0.0, %v2358
      %2360 = vmatmul.bf16.gmra.mxu0 %v2267
      %v2361 = vpop.f32.mrf.mxu0
      %v2362 = vadd.f32 0.0, %v2361
      %v2363 = vpop.f32.mrf.mxu0
      %v2364 = vadd.f32 0.0, %v2363
      %2365 = vmatmul.bf16.gmra.mxu0 %v2270
      %v2366 = vpop.f32.mrf.mxu0
      %v2367 = vadd.f32 0.0, %v2366
      %v2368 = vpop.f32.mrf.mxu0
      %v2369 = vadd.f32 0.0, %v2368
      %2370 = vmatmul.bf16.gmra.mxu0 %v2273
      %v2371 = vpop.f32.mrf.mxu0
      %v2372 = vadd.f32 0.0, %v2371
      %v2373 = vpop.f32.mrf.mxu0
      %v2374 = vadd.f32 0.0, %v2373
      %2375 = vmatmul.bf16.gmra.mxu0 %v2276
      %v2376 = vpop.f32.mrf.mxu0
      %v2377 = vadd.f32 0.0, %v2376
      %v2378 = vpop.f32.mrf.mxu0
      %v2379 = vadd.f32 0.0, %v2378
      %2380 = vmatmul.bf16.gmra.mxu0 %v2279
      %v2381 = vpop.f32.mrf.mxu0
      %v2382 = vadd.f32 0.0, %v2381
      %v2383 = vpop.f32.mrf.mxu0
      %v2384 = vadd.f32 0.0, %v2383
      %2385 = vmatmul.bf16.gmra.mxu0 %v2282
      %v2386 = vpop.f32.mrf.mxu0
      %v2387 = vadd.f32 0.0, %v2386
      %v2388 = vpop.f32.mrf.mxu0
      %v2389 = vadd.f32 0.0, %v2388
      %2390 = vmatmul.bf16.gmra.mxu0 %v2285
      %v2391 = vpop.f32.mrf.mxu0
      %v2392 = vadd.f32 0.0, %v2391
      %v2393 = vpop.f32.mrf.mxu0
      %v2394 = vadd.f32 0.0, %v2393
      %2395 = vmatmul.bf16.gmra.mxu0 %v2288
      %v2396 = vpop.f32.mrf.mxu0
      %v2397 = vadd.f32 0.0, %v2396
      %v2398 = vpop.f32.mrf.mxu0
      %v2399 = vadd.f32 0.0, %v2398
      %2400 = vmatmul.bf16.gmra.mxu0 %v2291
      %v2401 = vpop.f32.mrf.mxu0
      %v2402 = vadd.f32 0.0, %v2401
      %v2403 = vpop.f32.mrf.mxu0
      %v2404 = vadd.f32 0.0, %v2403
      %2405 = vmatmul.bf16.gmra.mxu0 %v2294
      %v2406 = vpop.f32.mrf.mxu0
      %v2407 = vadd.f32 0.0, %v2406
      %v2408 = vpop.f32.mrf.mxu0
      %v2409 = vadd.f32 0.0, %v2408
      %2410 = vmatmul.bf16.gmra.mxu0 %v2297
      %v2411 = vpop.f32.mrf.mxu0
      %v2412 = vadd.f32 0.0, %v2411
      %v2413 = vpop.f32.mrf.mxu0
      %2414 = vdwg.mxu0
      %v2415 = vld [vmem:[#allocation2] sm:$0xff]
      %v2416 = vld [vmem:[#allocation2 + $0x8] sm:$0xff]
      %v2417 = vld [vmem:[#allocation2 + $0x10] sm:$0xff]
      %v2418 = vld [vmem:[#allocation2 + $0x18] sm:$0xff]
      %v2419 = vld [vmem:[#allocation2 + $0x20] sm:$0xff]
      %v2420 = vld [vmem:[#allocation2 + $0x28] sm:$0xff]
      %v2421 = vld [vmem:[#allocation2 + $0x30] sm:$0xff]
      %v2422 = vld [vmem:[#allocation2 + $0x38] sm:$0xff]
      %v2423 = vld [vmem:[#allocation2 + $0x40] sm:$0xff]
      %v2424 = vld [vmem:[#allocation2 + $0x48] sm:$0xff]
      %v2425 = vld [vmem:[#allocation2 + $0x50] sm:$0xff]
      %v2426 = vld [vmem:[#allocation2 + $0x58] sm:$0xff]
      %v2427 = vld [vmem:[#allocation2 + $0x60] sm:$0xff]
      %v2428 = vld [vmem:[#allocation2 + $0x68] sm:$0xff]
      %v2429 = vld [vmem:[#allocation2 + $0x70] sm:$0xff]
      %v2430 = vld [vmem:[#allocation2 + $0x78] sm:$0xff]
      %v2431 = vld [vmem:[#allocation2 + $0x80] sm:$0xff]
      %v2432 = vld [vmem:[#allocation2 + $0x88] sm:$0xff]
      %v2433 = vld [vmem:[#allocation2 + $0x90] sm:$0xff]
      %v2434 = vld [vmem:[#allocation2 + $0x98] sm:$0xff]
      %v2435 = vld [vmem:[#allocation2 + $0xa0] sm:$0xff]
      %v2436 = vld [vmem:[#allocation2 + $0xa8] sm:$0xff]
      %v2437 = vld [vmem:[#allocation2 + $0xb0] sm:$0xff]
      %v2438 = vld [vmem:[#allocation2 + $0xb8] sm:$0xff]
      %v2439 = vld [vmem:[#allocation2 + $0xc0] sm:$0xff]
      %v2440 = vld [vmem:[#allocation2 + $0xc8] sm:$0xff]
      %v2441 = vld [vmem:[#allocation2 + $0xd0] sm:$0xff]
      %v2442 = vld [vmem:[#allocation2 + $0xd8] sm:$0xff]
      %v2443 = vld [vmem:[#allocation2 + $0xe0] sm:$0xff]
      %v2444 = vld [vmem:[#allocation2 + $0xe8] sm:$0xff]
      %v2445 = vld [vmem:[#allocation2 + $0xf0] sm:$0xff]
      %v2446 = vld [vmem:[#allocation2 + $0xf8] sm:$0xff]
      %v2447 = vld [vmem:[#allocation2 + $0x100] sm:$0xff]
      %v2448 = vld [vmem:[#allocation2 + $0x108] sm:$0xff]
      %v2449 = vld [vmem:[#allocation2 + $0x110] sm:$0xff]
      %v2450 = vld [vmem:[#allocation2 + $0x118] sm:$0xff]
      %v2451 = vld [vmem:[#allocation2 + $0x120] sm:$0xff]
      %v2452 = vld [vmem:[#allocation2 + $0x128] sm:$0xff]
      %v2453 = vld [vmem:[#allocation2 + $0x130] sm:$0xff]
      %v2454 = vld [vmem:[#allocation2 + $0x138] sm:$0xff]
      %v2455 = vld [vmem:[#allocation2 + $0x140] sm:$0xf]
      %v2456 = vadd.f32 %v2415, %v2312
      %v2457 = vadd.f32 %v2416, %v2314
      %v2458 = vadd.f32 %v2417, %v2317
      %v2459 = vadd.f32 %v2418, %v2319
      %v2460 = vadd.f32 %v2419, %v2322
      %v2461 = vadd.f32 %v2420, %v2324
      %v2462 = vadd.f32 %v2421, %v2327
      %v2463 = vadd.f32 %v2422, %v2329
      %v2464 = vadd.f32 %v2423, %v2332
      %v2465 = vadd.f32 %v2424, %v2334
      %v2466 = vadd.f32 %v2425, %v2337
      %v2467 = vadd.f32 %v2426, %v2339
      %v2468 = vadd.f32 %v2427, %v2342
      %v2469 = vadd.f32 %v2428, %v2344
      %v2470 = vadd.f32 %v2429, %v2347
      %v2471 = vadd.f32 %v2430, %v2349
      %v2472 = vadd.f32 %v2431, %v2352
      %v2473 = vadd.f32 %v2432, %v2354
      %v2474 = vadd.f32 %v2433, %v2357
      %v2475 = vadd.f32 %v2434, %v2359
      %v2476 = vadd.f32 %v2435, %v2362
      %v2477 = vadd.f32 %v2436, %v2364
      %v2478 = vadd.f32 %v2437, %v2367
      %v2479 = vadd.f32 %v2438, %v2369
      %v2480 = vadd.f32 %v2439, %v2372
      %v2481 = vadd.f32 %v2440, %v2374
      %v2482 = vadd.f32 %v2441, %v2377
      %v2483 = vadd.f32 %v2442, %v2379
      %v2484 = vadd.f32 %v2443, %v2382
      %v2485 = vadd.f32 %v2444, %v2384
      %v2486 = vadd.f32 %v2445, %v2387
      %v2487 = vadd.f32 %v2446, %v2389
      %v2488 = vadd.f32 %v2447, %v2392
      %v2489 = vadd.f32 %v2448, %v2394
      %v2490 = vadd.f32 %v2449, %v2397
      %v2491 = vadd.f32 %v2450, %v2399
      %v2492 = vadd.f32 %v2451, %v2402
      %v2493 = vadd.f32 %v2452, %v2404
      %v2494 = vadd.f32 %v2453, %v2407
      %v2495 = vadd.f32 %v2454, %v2409
      %v2496 = vadd.f32 %v2455, %v2412
      %2497 = vst.msk [vmem:[#allocation2] sm:$0xff] %vm665, %v2456
      %2498 = vst.msk [vmem:[#allocation2 + $0x8] sm:$0xff] %vm665, %v2457
      %2499 = vst.msk [vmem:[#allocation2 + $0x10] sm:$0xff] %vm665, %v2458
      %2500 = vst.msk [vmem:[#allocation2 + $0x18] sm:$0xff] %vm665, %v2459
      %2501 = vst.msk [vmem:[#allocation2 + $0x20] sm:$0xff] %vm665, %v2460
      %2502 = vst.msk [vmem:[#allocation2 + $0x28] sm:$0xff] %vm665, %v2461
      %2503 = vst.msk [vmem:[#allocation2 + $0x30] sm:$0xff] %vm665, %v2462
      %2504 = vst.msk [vmem:[#allocation2 + $0x38] sm:$0xff] %vm665, %v2463
      %2505 = vst.msk [vmem:[#allocation2 + $0x40] sm:$0xff] %vm665, %v2464
      %2506 = vst.msk [vmem:[#allocation2 + $0x48] sm:$0xff] %vm665, %v2465
      %2507 = vst.msk [vmem:[#allocation2 + $0x50] sm:$0xff] %vm665, %v2466
      %2508 = vst.msk [vmem:[#allocation2 + $0x58] sm:$0xff] %vm665, %v2467
      %2509 = vst.msk [vmem:[#allocation2 + $0x60] sm:$0xff] %vm665, %v2468
      %2510 = vst.msk [vmem:[#allocation2 + $0x68] sm:$0xff] %vm665, %v2469
      %2511 = vst.msk [vmem:[#allocation2 + $0x70] sm:$0xff] %vm665, %v2470
      %2512 = vst.msk [vmem:[#allocation2 + $0x78] sm:$0xff] %vm665, %v2471
      %2513 = vst.msk [vmem:[#allocation2 + $0x80] sm:$0xff] %vm665, %v2472
      %2514 = vst.msk [vmem:[#allocation2 + $0x88] sm:$0xff] %vm665, %v2473
      %2515 = vst.msk [vmem:[#allocation2 + $0x90] sm:$0xff] %vm665, %v2474
      %2516 = vst.msk [vmem:[#allocation2 + $0x98] sm:$0xff] %vm665, %v2475
      %2517 = vst.msk [vmem:[#allocation2 + $0xa0] sm:$0xff] %vm665, %v2476
      %2518 = vst.msk [vmem:[#allocation2 + $0xa8] sm:$0xff] %vm665, %v2477
      %2519 = vst.msk [vmem:[#allocation2 + $0xb0] sm:$0xff] %vm665, %v2478
      %2520 = vst.msk [vmem:[#allocation2 + $0xb8] sm:$0xff] %vm665, %v2479
      %2521 = vst.msk [vmem:[#allocation2 + $0xc0] sm:$0xff] %vm665, %v2480
      %2522 = vst.msk [vmem:[#allocation2 + $0xc8] sm:$0xff] %vm665, %v2481
      %2523 = vst.msk [vmem:[#allocation2 + $0xd0] sm:$0xff] %vm665, %v2482
      %2524 = vst.msk [vmem:[#allocation2 + $0xd8] sm:$0xff] %vm665, %v2483
      %2525 = vst.msk [vmem:[#allocation2 + $0xe0] sm:$0xff] %vm665, %v2484
      %2526 = vst.msk [vmem:[#allocation2 + $0xe8] sm:$0xff] %vm665, %v2485
      %2527 = vst.msk [vmem:[#allocation2 + $0xf0] sm:$0xff] %vm665, %v2486
      %2528 = vst.msk [vmem:[#allocation2 + $0xf8] sm:$0xff] %vm665, %v2487
      %2529 = vst.msk [vmem:[#allocation2 + $0x100] sm:$0xff] %vm665, %v2488
      %2530 = vst.msk [vmem:[#allocation2 + $0x108] sm:$0xff] %vm665, %v2489
      %2531 = vst.msk [vmem:[#allocation2 + $0x110] sm:$0xff] %vm665, %v2490
      %2532 = vst.msk [vmem:[#allocation2 + $0x118] sm:$0xff] %vm665, %v2491
      %2533 = vst.msk [vmem:[#allocation2 + $0x120] sm:$0xff] %vm665, %v2492
      %2534 = vst.msk [vmem:[#allocation2 + $0x128] sm:$0xff] %vm665, %v2493
      %2535 = vst.msk [vmem:[#allocation2 + $0x130] sm:$0xff] %vm665, %v2494
      %2536 = vst.msk [vmem:[#allocation2 + $0x138] sm:$0xff] %vm665, %v2495
      %2537 = vst.msk [vmem:[#allocation2 + $0x140] sm:$0xf] %vm706, %v2496
      %v2538 = vld [vmem:[%s409 + $0x27] sm:$0xff]
      %v2539 = vld [vmem:[%s409 + $0x2f] sm:$0xff]
      %v2540 = vld [vmem:[%s409 + $0x37] sm:$0xff]
      %v2541 = vld [vmem:[%s409 + $0x3f] sm:$0xff]
      %v2542 = vld [vmem:[%s409 + $0x47] sm:$0xff]
      %v2543 = vld [vmem:[%s409 + $0x4f] sm:$0xff]
      %v2544 = vld [vmem:[%s409 + $0x57] sm:$0xff]
      %v2545 = vld [vmem:[%s409 + $0x5f] sm:$0xff]
      %v2546 = vld [vmem:[%s409 + $0x67] sm:$0xff]
      %v2547 = vld [vmem:[%s409 + $0x6f] sm:$0xff]
      %v2548 = vld [vmem:[%s409 + $0x77] sm:$0xff]
      %v2549 = vld [vmem:[%s409 + $0x7f] sm:$0xff]
      %v2550 = vld [vmem:[%s409 + $0x87] sm:$0xff]
      %v2551 = vld [vmem:[%s409 + $0x8f] sm:$0xff]
      %v2552 = vld [vmem:[%s409 + $0x97] sm:$0xff]
      %v2553 = vld [vmem:[%s409 + $0x9f] sm:$0xff]
      %v2554 = vld [vmem:[%s409 + $0xa7] sm:$0xff]
      %v2555 = vld [vmem:[%s409 + $0xaf] sm:$0xff]
      %v2556 = vld [vmem:[%s409 + $0xb7] sm:$0xff]
      %v2557 = vld [vmem:[%s409 + $0xbf] sm:$0xff]
      %v2558 = vld [vmem:[%s409 + $0xc7] sm:$0xff]
      %v2559 = vld [vmem:[%s409 + $0xcf] sm:$0xff]
      %v2560 = vld [vmem:[%s409 + $0xd7] sm:$0xff]
      %v2561 = vld [vmem:[%s409 + $0xdf] sm:$0xff]
      %v2562 = vld [vmem:[%s409 + $0xe7] sm:$0xff]
      %v2563 = vld [vmem:[%s409 + $0xef] sm:$0xff]
      %v2564 = vld [vmem:[%s409 + $0xf7] sm:$0xff]
      %v2565 = vld [vmem:[%s409 + $0xff] sm:$0xff]
      %v2566 = vld [vmem:[%s409 + $0x107] sm:$0xff]
      %v2567 = vld [vmem:[%s409 + $0x10f] sm:$0xff]
      %v2568 = vld [vmem:[%s409 + $0x117] sm:$0xff]
      %v2569 = vld [vmem:[%s409 + $0x11f] sm:$0xff]
      %v2570 = vld [vmem:[%s409 + $0x127] sm:$0xff]
      %v2571 = vld [vmem:[%s409 + $0x12f] sm:$0xff]
      %v2572 = vld [vmem:[%s409 + $0x137] sm:$0xff]
      %v2573 = vld [vmem:[%s409 + $0x13f] sm:$0xff]
      %v2574 = vld [vmem:[%s409 + $0x147] sm:$0xff]
      %v2575 = vld [vmem:[%s409 + $0x14f] sm:$0xff]
      %v2576 = vld [vmem:[%s409 + $0x157] sm:$0xff]
      %v2577 = vld [vmem:[%s409 + $0x15f] sm:$0xff]
      %v2578 = vld [vmem:[%s409 + $0x167] sm:$0xf]
      %v2579 = vpack.c.bf16 %v2539, %v2538
      %v2580 = vpack.c.bf16 %v2541, %v2540
      %v2581 = vpack.c.bf16 %v2543, %v2542
      %v2582 = vpack.c.bf16 %v2545, %v2544
      %v2583 = vpack.c.bf16 %v2547, %v2546
      %v2584 = vpack.c.bf16 %v2549, %v2548
      %v2585 = vpack.c.bf16 %v2551, %v2550
      %v2586 = vpack.c.bf16 %v2553, %v2552
      %v2587 = vpack.c.bf16 %v2555, %v2554
      %v2588 = vpack.c.bf16 %v2557, %v2556
      %v2589 = vpack.c.bf16 %v2559, %v2558
      %v2590 = vpack.c.bf16 %v2561, %v2560
      %v2591 = vpack.c.bf16 %v2563, %v2562
      %v2592 = vpack.c.bf16 %v2565, %v2564
      %v2593 = vpack.c.bf16 %v2567, %v2566
      %v2594 = vpack.c.bf16 %v2569, %v2568
      %v2595 = vpack.c.bf16 %v2571, %v2570
      %v2596 = vpack.c.bf16 %v2573, %v2572
      %v2597 = vpack.c.bf16 %v2575, %v2574
      %v2598 = vpack.c.bf16 %v2577, %v2576
      %v2599 = vpack.c.bf16 %v2578, %v2578
      %s2600 = scalar_lea.vmem %s1, 12
      %v2601 = vld [vmem:[%s2600] sm:$0x3]
      %v2603 = vsel %vm481, %v2579, 0
      %v2606 = vsel %vm481, %v2580, 0
      %v2609 = vsel %vm481, %v2581, 0
      %v2612 = vsel %vm481, %v2582, 0
      %v2615 = vsel %vm481, %v2583, 0
      %v2618 = vsel %vm481, %v2584, 0
      %v2621 = vsel %vm481, %v2585, 0
      %v2624 = vsel %vm481, %v2586, 0
      %v2627 = vsel %vm481, %v2587, 0
      %v2630 = vsel %vm481, %v2588, 0
      %v2633 = vsel %vm481, %v2589, 0
      %v2636 = vsel %vm481, %v2590, 0
      %v2639 = vsel %vm481, %v2591, 0
      %v2642 = vsel %vm481, %v2592, 0
      %v2645 = vsel %vm481, %v2593, 0
      %v2648 = vsel %vm481, %v2594, 0
      %v2651 = vsel %vm481, %v2595, 0
      %v2654 = vsel %vm481, %v2596, 0
      %v2657 = vsel %vm481, %v2597, 0
      %v2660 = vsel %vm481, %v2598, 0
      %v2663 = vsel %vm481, %v2599, 0
      %v2666 = vand.u32 %v2601, %v548
      %2668 = vmatpush.bf16.msra.mxu0 0
      %2669 = vmatpush.bf16.msra.mxu0 0
      %2670 = vmatpush.bf16.msra.mxu0 0
      %2671 = vmatpush.bf16.msra.mxu0 0
      %2672 = vmatpush.bf16.msra.mxu0 0
      %2673 = vmatpush.bf16.msra.mxu0 0
      %2674 = vmatpush.bf16.msra.mxu0 0
      %2675 = vmatpush.bf16.msra.mxu0 %v2666
      %2676 = vmatmul.bf16.gmra.mxu0 %v2603
      %v2677 = vpop.f32.mrf.mxu0
      %v2678 = vadd.f32 0.0, %v2677
      %v2679 = vpop.f32.mrf.mxu0
      %v2680 = vadd.f32 0.0, %v2679
      %2681 = vmatmul.bf16.gmra.mxu0 %v2606
      %v2682 = vpop.f32.mrf.mxu0
      %v2683 = vadd.f32 0.0, %v2682
      %v2684 = vpop.f32.mrf.mxu0
      %v2685 = vadd.f32 0.0, %v2684
      %2686 = vmatmul.bf16.gmra.mxu0 %v2609
      %v2687 = vpop.f32.mrf.mxu0
      %v2688 = vadd.f32 0.0, %v2687
      %v2689 = vpop.f32.mrf.mxu0
      %v2690 = vadd.f32 0.0, %v2689
      %2691 = vmatmul.bf16.gmra.mxu0 %v2612
      %v2692 = vpop.f32.mrf.mxu0
      %v2693 = vadd.f32 0.0, %v2692
      %v2694 = vpop.f32.mrf.mxu0
      %v2695 = vadd.f32 0.0, %v2694
      %2696 = vmatmul.bf16.gmra.mxu0 %v2615
      %v2697 = vpop.f32.mrf.mxu0
      %v2698 = vadd.f32 0.0, %v2697
      %v2699 = vpop.f32.mrf.mxu0
      %v2700 = vadd.f32 0.0, %v2699
      %2701 = vmatmul.bf16.gmra.mxu0 %v2618
      %v2702 = vpop.f32.mrf.mxu0
      %v2703 = vadd.f32 0.0, %v2702
      %v2704 = vpop.f32.mrf.mxu0
      %v2705 = vadd.f32 0.0, %v2704
      %2706 = vmatmul.bf16.gmra.mxu0 %v2621
      %v2707 = vpop.f32.mrf.mxu0
      %v2708 = vadd.f32 0.0, %v2707
      %v2709 = vpop.f32.mrf.mxu0
      %v2710 = vadd.f32 0.0, %v2709
      %2711 = vmatmul.bf16.gmra.mxu0 %v2624
      %v2712 = vpop.f32.mrf.mxu0
      %v2713 = vadd.f32 0.0, %v2712
      %v2714 = vpop.f32.mrf.mxu0
      %v2715 = vadd.f32 0.0, %v2714
      %2716 = vmatmul.bf16.gmra.mxu0 %v2627
      %v2717 = vpop.f32.mrf.mxu0
      %v2718 = vadd.f32 0.0, %v2717
      %v2719 = vpop.f32.mrf.mxu0
      %v2720 = vadd.f32 0.0, %v2719
      %2721 = vmatmul.bf16.gmra.mxu0 %v2630
      %v2722 = vpop.f32.mrf.mxu0
      %v2723 = vadd.f32 0.0, %v2722
      %v2724 = vpop.f32.mrf.mxu0
      %v2725 = vadd.f32 0.0, %v2724
      %2726 = vmatmul.bf16.gmra.mxu0 %v2633
      %v2727 = vpop.f32.mrf.mxu0
      %v2728 = vadd.f32 0.0, %v2727
      %v2729 = vpop.f32.mrf.mxu0
      %v2730 = vadd.f32 0.0, %v2729
      %2731 = vmatmul.bf16.gmra.mxu0 %v2636
      %v2732 = vpop.f32.mrf.mxu0
      %v2733 = vadd.f32 0.0, %v2732
      %v2734 = vpop.f32.mrf.mxu0
      %v2735 = vadd.f32 0.0, %v2734
      %2736 = vmatmul.bf16.gmra.mxu0 %v2639
      %v2737 = vpop.f32.mrf.mxu0
      %v2738 = vadd.f32 0.0, %v2737
      %v2739 = vpop.f32.mrf.mxu0
      %v2740 = vadd.f32 0.0, %v2739
      %2741 = vmatmul.bf16.gmra.mxu0 %v2642
      %v2742 = vpop.f32.mrf.mxu0
      %v2743 = vadd.f32 0.0, %v2742
      %v2744 = vpop.f32.mrf.mxu0
      %v2745 = vadd.f32 0.0, %v2744
      %2746 = vmatmul.bf16.gmra.mxu0 %v2645
      %v2747 = vpop.f32.mrf.mxu0
      %v2748 = vadd.f32 0.0, %v2747
      %v2749 = vpop.f32.mrf.mxu0
      %v2750 = vadd.f32 0.0, %v2749
      %2751 = vmatmul.bf16.gmra.mxu0 %v2648
      %v2752 = vpop.f32.mrf.mxu0
      %v2753 = vadd.f32 0.0, %v2752
      %v2754 = vpop.f32.mrf.mxu0
      %v2755 = vadd.f32 0.0, %v2754
      %2756 = vmatmul.bf16.gmra.mxu0 %v2651
      %v2757 = vpop.f32.mrf.mxu0
      %v2758 = vadd.f32 0.0, %v2757
      %v2759 = vpop.f32.mrf.mxu0
      %v2760 = vadd.f32 0.0, %v2759
      %2761 = vmatmul.bf16.gmra.mxu0 %v2654
      %v2762 = vpop.f32.mrf.mxu0
      %v2763 = vadd.f32 0.0, %v2762
      %v2764 = vpop.f32.mrf.mxu0
      %v2765 = vadd.f32 0.0, %v2764
      %2766 = vmatmul.bf16.gmra.mxu0 %v2657
      %v2767 = vpop.f32.mrf.mxu0
      %v2768 = vadd.f32 0.0, %v2767
      %v2769 = vpop.f32.mrf.mxu0
      %v2770 = vadd.f32 0.0, %v2769
      %2771 = vmatmul.bf16.gmra.mxu0 %v2660
      %v2772 = vpop.f32.mrf.mxu0
      %v2773 = vadd.f32 0.0, %v2772
      %v2774 = vpop.f32.mrf.mxu0
      %v2775 = vadd.f32 0.0, %v2774
      %2776 = vmatmul.bf16.gmra.mxu0 %v2663
      %v2777 = vpop.f32.mrf.mxu0
      %v2778 = vadd.f32 0.0, %v2777
      %v2779 = vpop.f32.mrf.mxu0
      %2780 = vdwg.mxu0
      %v2781 = vld [vmem:[#allocation2] sm:$0xff]
      %v2782 = vld [vmem:[#allocation2 + $0x8] sm:$0xff]
      %v2783 = vld [vmem:[#allocation2 + $0x10] sm:$0xff]
      %v2784 = vld [vmem:[#allocation2 + $0x18] sm:$0xff]
      %v2785 = vld [vmem:[#allocation2 + $0x20] sm:$0xff]
      %v2786 = vld [vmem:[#allocation2 + $0x28] sm:$0xff]
      %v2787 = vld [vmem:[#allocation2 + $0x30] sm:$0xff]
      %v2788 = vld [vmem:[#allocation2 + $0x38] sm:$0xff]
      %v2789 = vld [vmem:[#allocation2 + $0x40] sm:$0xff]
      %v2790 = vld [vmem:[#allocation2 + $0x48] sm:$0xff]
      %v2791 = vld [vmem:[#allocation2 + $0x50] sm:$0xff]
      %v2792 = vld [vmem:[#allocation2 + $0x58] sm:$0xff]
      %v2793 = vld [vmem:[#allocation2 + $0x60] sm:$0xff]
      %v2794 = vld [vmem:[#allocation2 + $0x68] sm:$0xff]
      %v2795 = vld [vmem:[#allocation2 + $0x70] sm:$0xff]
      %v2796 = vld [vmem:[#allocation2 + $0x78] sm:$0xff]
      %v2797 = vld [vmem:[#allocation2 + $0x80] sm:$0xff]
      %v2798 = vld [vmem:[#allocation2 + $0x88] sm:$0xff]
      %v2799 = vld [vmem:[#allocation2 + $0x90] sm:$0xff]
      %v2800 = vld [vmem:[#allocation2 + $0x98] sm:$0xff]
      %v2801 = vld [vmem:[#allocation2 + $0xa0] sm:$0xff]
      %v2802 = vld [vmem:[#allocation2 + $0xa8] sm:$0xff]
      %v2803 = vld [vmem:[#allocation2 + $0xb0] sm:$0xff]
      %v2804 = vld [vmem:[#allocation2 + $0xb8] sm:$0xff]
      %v2805 = vld [vmem:[#allocation2 + $0xc0] sm:$0xff]
      %v2806 = vld [vmem:[#allocation2 + $0xc8] sm:$0xff]
      %v2807 = vld [vmem:[#allocation2 + $0xd0] sm:$0xff]
      %v2808 = vld [vmem:[#allocation2 + $0xd8] sm:$0xff]
      %v2809 = vld [vmem:[#allocation2 + $0xe0] sm:$0xff]
      %v2810 = vld [vmem:[#allocation2 + $0xe8] sm:$0xff]
      %v2811 = vld [vmem:[#allocation2 + $0xf0] sm:$0xff]
      %v2812 = vld [vmem:[#allocation2 + $0xf8] sm:$0xff]
      %v2813 = vld [vmem:[#allocation2 + $0x100] sm:$0xff]
      %v2814 = vld [vmem:[#allocation2 + $0x108] sm:$0xff]
      %v2815 = vld [vmem:[#allocation2 + $0x110] sm:$0xff]
      %v2816 = vld [vmem:[#allocation2 + $0x118] sm:$0xff]
      %v2817 = vld [vmem:[#allocation2 + $0x120] sm:$0xff]
      %v2818 = vld [vmem:[#allocation2 + $0x128] sm:$0xff]
      %v2819 = vld [vmem:[#allocation2 + $0x130] sm:$0xff]
      %v2820 = vld [vmem:[#allocation2 + $0x138] sm:$0xff]
      %v2821 = vld [vmem:[#allocation2 + $0x140] sm:$0xf]
      %v2822 = vadd.f32 %v2781, %v2678
      %v2823 = vadd.f32 %v2782, %v2680
      %v2824 = vadd.f32 %v2783, %v2683
      %v2825 = vadd.f32 %v2784, %v2685
      %v2826 = vadd.f32 %v2785, %v2688
      %v2827 = vadd.f32 %v2786, %v2690
      %v2828 = vadd.f32 %v2787, %v2693
      %v2829 = vadd.f32 %v2788, %v2695
      %v2830 = vadd.f32 %v2789, %v2698
      %v2831 = vadd.f32 %v2790, %v2700
      %v2832 = vadd.f32 %v2791, %v2703
      %v2833 = vadd.f32 %v2792, %v2705
      %v2834 = vadd.f32 %v2793, %v2708
      %v2835 = vadd.f32 %v2794, %v2710
      %v2836 = vadd.f32 %v2795, %v2713
      %v2837 = vadd.f32 %v2796, %v2715
      %v2838 = vadd.f32 %v2797, %v2718
      %v2839 = vadd.f32 %v2798, %v2720
      %v2840 = vadd.f32 %v2799, %v2723
      %v2841 = vadd.f32 %v2800, %v2725
      %v2842 = vadd.f32 %v2801, %v2728
      %v2843 = vadd.f32 %v2802, %v2730
      %v2844 = vadd.f32 %v2803, %v2733
      %v2845 = vadd.f32 %v2804, %v2735
      %v2846 = vadd.f32 %v2805, %v2738
      %v2847 = vadd.f32 %v2806, %v2740
      %v2848 = vadd.f32 %v2807, %v2743
      %v2849 = vadd.f32 %v2808, %v2745
      %v2850 = vadd.f32 %v2809, %v2748
      %v2851 = vadd.f32 %v2810, %v2750
      %v2852 = vadd.f32 %v2811, %v2753
      %v2853 = vadd.f32 %v2812, %v2755
      %v2854 = vadd.f32 %v2813, %v2758
      %v2855 = vadd.f32 %v2814, %v2760
      %v2856 = vadd.f32 %v2815, %v2763
      %v2857 = vadd.f32 %v2816, %v2765
      %v2858 = vadd.f32 %v2817, %v2768
      %v2859 = vadd.f32 %v2818, %v2770
      %v2860 = vadd.f32 %v2819, %v2773
      %v2861 = vadd.f32 %v2820, %v2775
      %v2862 = vadd.f32 %v2821, %v2778
      %2863 = vst.msk [vmem:[#allocation2] sm:$0xff] %vm665, %v2822
      %2864 = vst.msk [vmem:[#allocation2 + $0x8] sm:$0xff] %vm665, %v2823
      %2865 = vst.msk [vmem:[#allocation2 + $0x10] sm:$0xff] %vm665, %v2824
      %2866 = vst.msk [vmem:[#allocation2 + $0x18] sm:$0xff] %vm665, %v2825
      %2867 = vst.msk [vmem:[#allocation2 + $0x20] sm:$0xff] %vm665, %v2826
      %2868 = vst.msk [vmem:[#allocation2 + $0x28] sm:$0xff] %vm665, %v2827
      %2869 = vst.msk [vmem:[#allocation2 + $0x30] sm:$0xff] %vm665, %v2828
      %2870 = vst.msk [vmem:[#allocation2 + $0x38] sm:$0xff] %vm665, %v2829
      %2871 = vst.msk [vmem:[#allocation2 + $0x40] sm:$0xff] %vm665, %v2830
      %2872 = vst.msk [vmem:[#allocation2 + $0x48] sm:$0xff] %vm665, %v2831
      %2873 = vst.msk [vmem:[#allocation2 + $0x50] sm:$0xff] %vm665, %v2832
      %2874 = vst.msk [vmem:[#allocation2 + $0x58] sm:$0xff] %vm665, %v2833
      %2875 = vst.msk [vmem:[#allocation2 + $0x60] sm:$0xff] %vm665, %v2834
      %2876 = vst.msk [vmem:[#allocation2 + $0x68] sm:$0xff] %vm665, %v2835
      %2877 = vst.msk [vmem:[#allocation2 + $0x70] sm:$0xff] %vm665, %v2836
      %2878 = vst.msk [vmem:[#allocation2 + $0x78] sm:$0xff] %vm665, %v2837
      %2879 = vst.msk [vmem:[#allocation2 + $0x80] sm:$0xff] %vm665, %v2838
      %2880 = vst.msk [vmem:[#allocation2 + $0x88] sm:$0xff] %vm665, %v2839
      %2881 = vst.msk [vmem:[#allocation2 + $0x90] sm:$0xff] %vm665, %v2840
      %2882 = vst.msk [vmem:[#allocation2 + $0x98] sm:$0xff] %vm665, %v2841
      %2883 = vst.msk [vmem:[#allocation2 + $0xa0] sm:$0xff] %vm665, %v2842
      %2884 = vst.msk [vmem:[#allocation2 + $0xa8] sm:$0xff] %vm665, %v2843
      %2885 = vst.msk [vmem:[#allocation2 + $0xb0] sm:$0xff] %vm665, %v2844
      %2886 = vst.msk [vmem:[#allocation2 + $0xb8] sm:$0xff] %vm665, %v2845
      %2887 = vst.msk [vmem:[#allocation2 + $0xc0] sm:$0xff] %vm665, %v2846
      %2888 = vst.msk [vmem:[#allocation2 + $0xc8] sm:$0xff] %vm665, %v2847
      %2889 = vst.msk [vmem:[#allocation2 + $0xd0] sm:$0xff] %vm665, %v2848
      %2890 = vst.msk [vmem:[#allocation2 + $0xd8] sm:$0xff] %vm665, %v2849
      %2891 = vst.msk [vmem:[#allocation2 + $0xe0] sm:$0xff] %vm665, %v2850
      %2892 = vst.msk [vmem:[#allocation2 + $0xe8] sm:$0xff] %vm665, %v2851
      %2893 = vst.msk [vmem:[#allocation2 + $0xf0] sm:$0xff] %vm665, %v2852
      %2894 = vst.msk [vmem:[#allocation2 + $0xf8] sm:$0xff] %vm665, %v2853
      %2895 = vst.msk [vmem:[#allocation2 + $0x100] sm:$0xff] %vm665, %v2854
      %2896 = vst.msk [vmem:[#allocation2 + $0x108] sm:$0xff] %vm665, %v2855
      %2897 = vst.msk [vmem:[#allocation2 + $0x110] sm:$0xff] %vm665, %v2856
      %2898 = vst.msk [vmem:[#allocation2 + $0x118] sm:$0xff] %vm665, %v2857
      %2899 = vst.msk [vmem:[#allocation2 + $0x120] sm:$0xff] %vm665, %v2858
      %2900 = vst.msk [vmem:[#allocation2 + $0x128] sm:$0xff] %vm665, %v2859
      %2901 = vst.msk [vmem:[#allocation2 + $0x130] sm:$0xff] %vm665, %v2860
      %2902 = vst.msk [vmem:[#allocation2 + $0x138] sm:$0xff] %vm665, %v2861
      %2903 = vst.msk [vmem:[#allocation2 + $0x140] sm:$0xf] %vm706, %v2862
      %v2904 = vld [vmem:[%s409 + $0x28] sm:$0xff]
      %v2905 = vld [vmem:[%s409 + $0x30] sm:$0xff]
      %v2906 = vld [vmem:[%s409 + $0x38] sm:$0xff]
      %v2907 = vld [vmem:[%s409 + $0x40] sm:$0xff]
      %v2908 = vld [vmem:[%s409 + $0x48] sm:$0xff]
      %v2909 = vld [vmem:[%s409 + $0x50] sm:$0xff]
      %v2910 = vld [vmem:[%s409 + $0x58] sm:$0xff]
      %v2911 = vld [vmem:[%s409 + $0x60] sm:$0xff]
      %v2912 = vld [vmem:[%s409 + $0x68] sm:$0xff]
      %v2913 = vld [vmem:[%s409 + $0x70] sm:$0xff]
      %v2914 = vld [vmem:[%s409 + $0x78] sm:$0xff]
      %v2915 = vld [vmem:[%s409 + $0x80] sm:$0xff]
      %v2916 = vld [vmem:[%s409 + $0x88] sm:$0xff]
      %v2917 = vld [vmem:[%s409 + $0x90] sm:$0xff]
      %v2918 = vld [vmem:[%s409 + $0x98] sm:$0xff]
      %v2919 = vld [vmem:[%s409 + $0xa0] sm:$0xff]
      %v2920 = vld [vmem:[%s409 + $0xa8] sm:$0xff]
      %v2921 = vld [vmem:[%s409 + $0xb0] sm:$0xff]
      %v2922 = vld [vmem:[%s409 + $0xb8] sm:$0xff]
      %v2923 = vld [vmem:[%s409 + $0xc0] sm:$0xff]
      %v2924 = vld [vmem:[%s409 + $0xc8] sm:$0xff]
      %v2925 = vld [vmem:[%s409 + $0xd0] sm:$0xff]
      %v2926 = vld [vmem:[%s409 + $0xd8] sm:$0xff]
      %v2927 = vld [vmem:[%s409 + $0xe0] sm:$0xff]
      %v2928 = vld [vmem:[%s409 + $0xe8] sm:$0xff]
      %v2929 = vld [vmem:[%s409 + $0xf0] sm:$0xff]
      %v2930 = vld [vmem:[%s409 + $0xf8] sm:$0xff]
      %v2931 = vld [vmem:[%s409 + $0x100] sm:$0xff]
      %v2932 = vld [vmem:[%s409 + $0x108] sm:$0xff]
      %v2933 = vld [vmem:[%s409 + $0x110] sm:$0xff]
      %v2934 = vld [vmem:[%s409 + $0x118] sm:$0xff]
      %v2935 = vld [vmem:[%s409 + $0x120] sm:$0xff]
      %v2936 = vld [vmem:[%s409 + $0x128] sm:$0xff]
      %v2937 = vld [vmem:[%s409 + $0x130] sm:$0xff]
      %v2938 = vld [vmem:[%s409 + $0x138] sm:$0xff]
      %v2939 = vld [vmem:[%s409 + $0x140] sm:$0xff]
      %v2940 = vld [vmem:[%s409 + $0x148] sm:$0xff]
      %v2941 = vld [vmem:[%s409 + $0x150] sm:$0xff]
      %v2942 = vld [vmem:[%s409 + $0x158] sm:$0xff]
      %v2943 = vld [vmem:[%s409 + $0x160] sm:$0xff]
      %v2944 = vld [vmem:[%s409 + $0x168] sm:$0xf]
      %v2945 = vpack.c.bf16 %v2905, %v2904
      %v2946 = vpack.c.bf16 %v2907, %v2906
      %v2947 = vpack.c.bf16 %v2909, %v2908
      %v2948 = vpack.c.bf16 %v2911, %v2910
      %v2949 = vpack.c.bf16 %v2913, %v2912
      %v2950 = vpack.c.bf16 %v2915, %v2914
      %v2951 = vpack.c.bf16 %v2917, %v2916
      %v2952 = vpack.c.bf16 %v2919, %v2918
      %v2953 = vpack.c.bf16 %v2921, %v2920
      %v2954 = vpack.c.bf16 %v2923, %v2922
      %v2955 = vpack.c.bf16 %v2925, %v2924
      %v2956 = vpack.c.bf16 %v2927, %v2926
      %v2957 = vpack.c.bf16 %v2929, %v2928
      %v2958 = vpack.c.bf16 %v2931, %v2930
      %v2959 = vpack.c.bf16 %v2933, %v2932
      %v2960 = vpack.c.bf16 %v2935, %v2934
      %v2961 = vpack.c.bf16 %v2937, %v2936
      %v2962 = vpack.c.bf16 %v2939, %v2938
      %v2963 = vpack.c.bf16 %v2941, %v2940
      %v2964 = vpack.c.bf16 %v2943, %v2942
      %v2965 = vpack.c.bf16 %v2944, %v2944
      %s2966 = scalar_lea.vmem %s1, 14
      %v2967 = vld [vmem:[%s2966] sm:$0x3]
      %v2969 = vsel %vm481, %v2945, 0
      %v2972 = vsel %vm481, %v2946, 0
      %v2975 = vsel %vm481, %v2947, 0
      %v2978 = vsel %vm481, %v2948, 0
      %v2981 = vsel %vm481, %v2949, 0
      %v2984 = vsel %vm481, %v2950, 0
      %v2987 = vsel %vm481, %v2951, 0
      %v2990 = vsel %vm481, %v2952, 0
      %v2993 = vsel %vm481, %v2953, 0
      %v2996 = vsel %vm481, %v2954, 0
      %v2999 = vsel %vm481, %v2955, 0
      %v3002 = vsel %vm481, %v2956, 0
      %v3005 = vsel %vm481, %v2957, 0
      %v3008 = vsel %vm481, %v2958, 0
      %v3011 = vsel %vm481, %v2959, 0
      %v3014 = vsel %vm481, %v2960, 0
      %v3017 = vsel %vm481, %v2961, 0
      %v3020 = vsel %vm481, %v2962, 0
      %v3023 = vsel %vm481, %v2963, 0
      %v3026 = vsel %vm481, %v2964, 0
      %v3029 = vsel %vm481, %v2965, 0
      %v3032 = vand.u32 %v2967, %v548
      %3034 = vmatpush.bf16.msra.mxu0 0
      %3035 = vmatpush.bf16.msra.mxu0 0
      %3036 = vmatpush.bf16.msra.mxu0 0
      %3037 = vmatpush.bf16.msra.mxu0 0
      %3038 = vmatpush.bf16.msra.mxu0 0
      %3039 = vmatpush.bf16.msra.mxu0 0
      %3040 = vmatpush.bf16.msra.mxu0 0
      %3041 = vmatpush.bf16.msra.mxu0 %v3032
      %3042 = vmatmul.bf16.gmra.mxu0 %v2969
      %v3043 = vpop.f32.mrf.mxu0
      %v3044 = vadd.f32 0.0, %v3043
      %v3045 = vpop.f32.mrf.mxu0
      %v3046 = vadd.f32 0.0, %v3045
      %3047 = vmatmul.bf16.gmra.mxu0 %v2972
      %v3048 = vpop.f32.mrf.mxu0
      %v3049 = vadd.f32 0.0, %v3048
      %v3050 = vpop.f32.mrf.mxu0
      %v3051 = vadd.f32 0.0, %v3050
      %3052 = vmatmul.bf16.gmra.mxu0 %v2975
      %v3053 = vpop.f32.mrf.mxu0
      %v3054 = vadd.f32 0.0, %v3053
      %v3055 = vpop.f32.mrf.mxu0
      %v3056 = vadd.f32 0.0, %v3055
      %3057 = vmatmul.bf16.gmra.mxu0 %v2978
      %v3058 = vpop.f32.mrf.mxu0
      %v3059 = vadd.f32 0.0, %v3058
      %v3060 = vpop.f32.mrf.mxu0
      %v3061 = vadd.f32 0.0, %v3060
      %3062 = vmatmul.bf16.gmra.mxu0 %v2981
      %v3063 = vpop.f32.mrf.mxu0
      %v3064 = vadd.f32 0.0, %v3063
      %v3065 = vpop.f32.mrf.mxu0
      %v3066 = vadd.f32 0.0, %v3065
      %3067 = vmatmul.bf16.gmra.mxu0 %v2984
      %v3068 = vpop.f32.mrf.mxu0
      %v3069 = vadd.f32 0.0, %v3068
      %v3070 = vpop.f32.mrf.mxu0
      %v3071 = vadd.f32 0.0, %v3070
      %3072 = vmatmul.bf16.gmra.mxu0 %v2987
      %v3073 = vpop.f32.mrf.mxu0
      %v3074 = vadd.f32 0.0, %v3073
      %v3075 = vpop.f32.mrf.mxu0
      %v3076 = vadd.f32 0.0, %v3075
      %3077 = vmatmul.bf16.gmra.mxu0 %v2990
      %v3078 = vpop.f32.mrf.mxu0
      %v3079 = vadd.f32 0.0, %v3078
      %v3080 = vpop.f32.mrf.mxu0
      %v3081 = vadd.f32 0.0, %v3080
      %3082 = vmatmul.bf16.gmra.mxu0 %v2993
      %v3083 = vpop.f32.mrf.mxu0
      %v3084 = vadd.f32 0.0, %v3083
      %v3085 = vpop.f32.mrf.mxu0
      %v3086 = vadd.f32 0.0, %v3085
      %3087 = vmatmul.bf16.gmra.mxu0 %v2996
      %v3088 = vpop.f32.mrf.mxu0
      %v3089 = vadd.f32 0.0, %v3088
      %v3090 = vpop.f32.mrf.mxu0
      %v3091 = vadd.f32 0.0, %v3090
      %3092 = vmatmul.bf16.gmra.mxu0 %v2999
      %v3093 = vpop.f32.mrf.mxu0
      %v3094 = vadd.f32 0.0, %v3093
      %v3095 = vpop.f32.mrf.mxu0
      %v3096 = vadd.f32 0.0, %v3095
      %3097 = vmatmul.bf16.gmra.mxu0 %v3002
      %v3098 = vpop.f32.mrf.mxu0
      %v3099 = vadd.f32 0.0, %v3098
      %v3100 = vpop.f32.mrf.mxu0
      %v3101 = vadd.f32 0.0, %v3100
      %3102 = vmatmul.bf16.gmra.mxu0 %v3005
      %v3103 = vpop.f32.mrf.mxu0
      %v3104 = vadd.f32 0.0, %v3103
      %v3105 = vpop.f32.mrf.mxu0
      %v3106 = vadd.f32 0.0, %v3105
      %3107 = vmatmul.bf16.gmra.mxu0 %v3008
      %v3108 = vpop.f32.mrf.mxu0
      %v3109 = vadd.f32 0.0, %v3108
      %v3110 = vpop.f32.mrf.mxu0
      %v3111 = vadd.f32 0.0, %v3110
      %3112 = vmatmul.bf16.gmra.mxu0 %v3011
      %v3113 = vpop.f32.mrf.mxu0
      %v3114 = vadd.f32 0.0, %v3113
      %v3115 = vpop.f32.mrf.mxu0
      %v3116 = vadd.f32 0.0, %v3115
      %3117 = vmatmul.bf16.gmra.mxu0 %v3014
      %v3118 = vpop.f32.mrf.mxu0
      %v3119 = vadd.f32 0.0, %v3118
      %v3120 = vpop.f32.mrf.mxu0
      %v3121 = vadd.f32 0.0, %v3120
      %3122 = vmatmul.bf16.gmra.mxu0 %v3017
      %v3123 = vpop.f32.mrf.mxu0
      %v3124 = vadd.f32 0.0, %v3123
      %v3125 = vpop.f32.mrf.mxu0
      %v3126 = vadd.f32 0.0, %v3125
      %3127 = vmatmul.bf16.gmra.mxu0 %v3020
      %v3128 = vpop.f32.mrf.mxu0
      %v3129 = vadd.f32 0.0, %v3128
      %v3130 = vpop.f32.mrf.mxu0
      %v3131 = vadd.f32 0.0, %v3130
      %3132 = vmatmul.bf16.gmra.mxu0 %v3023
      %v3133 = vpop.f32.mrf.mxu0
      %v3134 = vadd.f32 0.0, %v3133
      %v3135 = vpop.f32.mrf.mxu0
      %v3136 = vadd.f32 0.0, %v3135
      %3137 = vmatmul.bf16.gmra.mxu0 %v3026
      %v3138 = vpop.f32.mrf.mxu0
      %v3139 = vadd.f32 0.0, %v3138
      %v3140 = vpop.f32.mrf.mxu0
      %v3141 = vadd.f32 0.0, %v3140
      %3142 = vmatmul.bf16.gmra.mxu0 %v3029
      %v3143 = vpop.f32.mrf.mxu0
      %v3144 = vadd.f32 0.0, %v3143
      %v3145 = vpop.f32.mrf.mxu0
      %3146 = vdwg.mxu0
      %v3147 = vld [vmem:[#allocation2] sm:$0xff]
      %v3148 = vld [vmem:[#allocation2 + $0x8] sm:$0xff]
      %v3149 = vld [vmem:[#allocation2 + $0x10] sm:$0xff]
      %v3150 = vld [vmem:[#allocation2 + $0x18] sm:$0xff]
      %v3151 = vld [vmem:[#allocation2 + $0x20] sm:$0xff]
      %v3152 = vld [vmem:[#allocation2 + $0x28] sm:$0xff]
      %v3153 = vld [vmem:[#allocation2 + $0x30] sm:$0xff]
      %v3154 = vld [vmem:[#allocation2 + $0x38] sm:$0xff]
      %v3155 = vld [vmem:[#allocation2 + $0x40] sm:$0xff]
      %v3156 = vld [vmem:[#allocation2 + $0x48] sm:$0xff]
      %v3157 = vld [vmem:[#allocation2 + $0x50] sm:$0xff]
      %v3158 = vld [vmem:[#allocation2 + $0x58] sm:$0xff]
      %v3159 = vld [vmem:[#allocation2 + $0x60] sm:$0xff]
      %v3160 = vld [vmem:[#allocation2 + $0x68] sm:$0xff]
      %v3161 = vld [vmem:[#allocation2 + $0x70] sm:$0xff]
      %v3162 = vld [vmem:[#allocation2 + $0x78] sm:$0xff]
      %v3163 = vld [vmem:[#allocation2 + $0x80] sm:$0xff]
      %v3164 = vld [vmem:[#allocation2 + $0x88] sm:$0xff]
      %v3165 = vld [vmem:[#allocation2 + $0x90] sm:$0xff]
      %v3166 = vld [vmem:[#allocation2 + $0x98] sm:$0xff]
      %v3167 = vld [vmem:[#allocation2 + $0xa0] sm:$0xff]
      %v3168 = vld [vmem:[#allocation2 + $0xa8] sm:$0xff]
      %v3169 = vld [vmem:[#allocation2 + $0xb0] sm:$0xff]
      %v3170 = vld [vmem:[#allocation2 + $0xb8] sm:$0xff]
      %v3171 = vld [vmem:[#allocation2 + $0xc0] sm:$0xff]
      %v3172 = vld [vmem:[#allocation2 + $0xc8] sm:$0xff]
      %v3173 = vld [vmem:[#allocation2 + $0xd0] sm:$0xff]
      %v3174 = vld [vmem:[#allocation2 + $0xd8] sm:$0xff]
      %v3175 = vld [vmem:[#allocation2 + $0xe0] sm:$0xff]
      %v3176 = vld [vmem:[#allocation2 + $0xe8] sm:$0xff]
      %v3177 = vld [vmem:[#allocation2 + $0xf0] sm:$0xff]
      %v3178 = vld [vmem:[#allocation2 + $0xf8] sm:$0xff]
      %v3179 = vld [vmem:[#allocation2 + $0x100] sm:$0xff]
      %v3180 = vld [vmem:[#allocation2 + $0x108] sm:$0xff]
      %v3181 = vld [vmem:[#allocation2 + $0x110] sm:$0xff]
      %v3182 = vld [vmem:[#allocation2 + $0x118] sm:$0xff]
      %v3183 = vld [vmem:[#allocation2 + $0x120] sm:$0xff]
      %v3184 = vld [vmem:[#allocation2 + $0x128] sm:$0xff]
      %v3185 = vld [vmem:[#allocation2 + $0x130] sm:$0xff]
      %v3186 = vld [vmem:[#allocation2 + $0x138] sm:$0xff]
      %v3187 = vld [vmem:[#allocation2 + $0x140] sm:$0xf]
      %v3188 = vadd.f32 %v3147, %v3044
      %v3189 = vadd.f32 %v3148, %v3046
      %v3190 = vadd.f32 %v3149, %v3049
      %v3191 = vadd.f32 %v3150, %v3051
      %v3192 = vadd.f32 %v3151, %v3054
      %v3193 = vadd.f32 %v3152, %v3056
      %v3194 = vadd.f32 %v3153, %v3059
      %v3195 = vadd.f32 %v3154, %v3061
      %v3196 = vadd.f32 %v3155, %v3064
      %v3197 = vadd.f32 %v3156, %v3066
      %v3198 = vadd.f32 %v3157, %v3069
      %v3199 = vadd.f32 %v3158, %v3071
      %v3200 = vadd.f32 %v3159, %v3074
      %v3201 = vadd.f32 %v3160, %v3076
      %v3202 = vadd.f32 %v3161, %v3079
      %v3203 = vadd.f32 %v3162, %v3081
      %v3204 = vadd.f32 %v3163, %v3084
      %v3205 = vadd.f32 %v3164, %v3086
      %v3206 = vadd.f32 %v3165, %v3089
      %v3207 = vadd.f32 %v3166, %v3091
      %v3208 = vadd.f32 %v3167, %v3094
      %v3209 = vadd.f32 %v3168, %v3096
      %v3210 = vadd.f32 %v3169, %v3099
      %v3211 = vadd.f32 %v3170, %v3101
      %v3212 = vadd.f32 %v3171, %v3104
      %v3213 = vadd.f32 %v3172, %v3106
      %v3214 = vadd.f32 %v3173, %v3109
      %v3215 = vadd.f32 %v3174, %v3111
      %v3216 = vadd.f32 %v3175, %v3114
      %v3217 = vadd.f32 %v3176, %v3116
      %v3218 = vadd.f32 %v3177, %v3119
      %v3219 = vadd.f32 %v3178, %v3121
      %v3220 = vadd.f32 %v3179, %v3124
      %v3221 = vadd.f32 %v3180, %v3126
      %v3222 = vadd.f32 %v3181, %v3129
      %v3223 = vadd.f32 %v3182, %v3131
      %v3224 = vadd.f32 %v3183, %v3134
      %v3225 = vadd.f32 %v3184, %v3136
      %v3226 = vadd.f32 %v3185, %v3139
      %v3227 = vadd.f32 %v3186, %v3141
      %v3228 = vadd.f32 %v3187, %v3144
      %3229 = vst.msk [vmem:[#allocation2] sm:$0xff] %vm665, %v3188
      %3230 = vst.msk [vmem:[#allocation2 + $0x8] sm:$0xff] %vm665, %v3189
      %3231 = vst.msk [vmem:[#allocation2 + $0x10] sm:$0xff] %vm665, %v3190
      %3232 = vst.msk [vmem:[#allocation2 + $0x18] sm:$0xff] %vm665, %v3191
      %3233 = vst.msk [vmem:[#allocation2 + $0x20] sm:$0xff] %vm665, %v3192
      %3234 = vst.msk [vmem:[#allocation2 + $0x28] sm:$0xff] %vm665, %v3193
      %3235 = vst.msk [vmem:[#allocation2 + $0x30] sm:$0xff] %vm665, %v3194
      %3236 = vst.msk [vmem:[#allocation2 + $0x38] sm:$0xff] %vm665, %v3195
      %3237 = vst.msk [vmem:[#allocation2 + $0x40] sm:$0xff] %vm665, %v3196
      %3238 = vst.msk [vmem:[#allocation2 + $0x48] sm:$0xff] %vm665, %v3197
      %3239 = vst.msk [vmem:[#allocation2 + $0x50] sm:$0xff] %vm665, %v3198
      %3240 = vst.msk [vmem:[#allocation2 + $0x58] sm:$0xff] %vm665, %v3199
      %3241 = vst.msk [vmem:[#allocation2 + $0x60] sm:$0xff] %vm665, %v3200
      %3242 = vst.msk [vmem:[#allocation2 + $0x68] sm:$0xff] %vm665, %v3201
      %3243 = vst.msk [vmem:[#allocation2 + $0x70] sm:$0xff] %vm665, %v3202
      %3244 = vst.msk [vmem:[#allocation2 + $0x78] sm:$0xff] %vm665, %v3203
      %3245 = vst.msk [vmem:[#allocation2 + $0x80] sm:$0xff] %vm665, %v3204
      %3246 = vst.msk [vmem:[#allocation2 + $0x88] sm:$0xff] %vm665, %v3205
      %3247 = vst.msk [vmem:[#allocation2 + $0x90] sm:$0xff] %vm665, %v3206
      %3248 = vst.msk [vmem:[#allocation2 + $0x98] sm:$0xff] %vm665, %v3207
      %3249 = vst.msk [vmem:[#allocation2 + $0xa0] sm:$0xff] %vm665, %v3208
      %3250 = vst.msk [vmem:[#allocation2 + $0xa8] sm:$0xff] %vm665, %v3209
      %3251 = vst.msk [vmem:[#allocation2 + $0xb0] sm:$0xff] %vm665, %v3210
      %3252 = vst.msk [vmem:[#allocation2 + $0xb8] sm:$0xff] %vm665, %v3211
      %3253 = vst.msk [vmem:[#allocation2 + $0xc0] sm:$0xff] %vm665, %v3212
      %3254 = vst.msk [vmem:[#allocation2 + $0xc8] sm:$0xff] %vm665, %v3213
      %3255 = vst.msk [vmem:[#allocation2 + $0xd0] sm:$0xff] %vm665, %v3214
      %3256 = vst.msk [vmem:[#allocation2 + $0xd8] sm:$0xff] %vm665, %v3215
      %3257 = vst.msk [vmem:[#allocation2 + $0xe0] sm:$0xff] %vm665, %v3216
      %3258 = vst.msk [vmem:[#allocation2 + $0xe8] sm:$0xff] %vm665, %v3217
      %3259 = vst.msk [vmem:[#allocation2 + $0xf0] sm:$0xff] %vm665, %v3218
      %3260 = vst.msk [vmem:[#allocation2 + $0xf8] sm:$0xff] %vm665, %v3219
      %3261 = vst.msk [vmem:[#allocation2 + $0x100] sm:$0xff] %vm665, %v3220
      %3262 = vst.msk [vmem:[#allocation2 + $0x108] sm:$0xff] %vm665, %v3221
      %3263 = vst.msk [vmem:[#allocation2 + $0x110] sm:$0xff] %vm665, %v3222
      %3264 = vst.msk [vmem:[#allocation2 + $0x118] sm:$0xff] %vm665, %v3223
      %3265 = vst.msk [vmem:[#allocation2 + $0x120] sm:$0xff] %vm665, %v3224
      %3266 = vst.msk [vmem:[#allocation2 + $0x128] sm:$0xff] %vm665, %v3225
      %3267 = vst.msk [vmem:[#allocation2 + $0x130] sm:$0xff] %vm665, %v3226
      %3268 = vst.msk [vmem:[#allocation2 + $0x138] sm:$0xff] %vm665, %v3227
      %3269 = vst.msk [vmem:[#allocation2 + $0x140] sm:$0xf] %vm706, %v3228
      %v3270 = vld [vmem:[%s409 + $0x29] sm:$0xff]
      %v3271 = vld [vmem:[%s409 + $0x31] sm:$0xff]
      %v3272 = vld [vmem:[%s409 + $0x39] sm:$0xff]
      %v3273 = vld [vmem:[%s409 + $0x41] sm:$0xff]
      %v3274 = vld [vmem:[%s409 + $0x49] sm:$0xff]
      %v3275 = vld [vmem:[%s409 + $0x51] sm:$0xff]
      %v3276 = vld [vmem:[%s409 + $0x59] sm:$0xff]
      %v3277 = vld [vmem:[%s409 + $0x61] sm:$0xff]
      %v3278 = vld [vmem:[%s409 + $0x69] sm:$0xff]
      %v3279 = vld [vmem:[%s409 + $0x71] sm:$0xff]
      %v3280 = vld [vmem:[%s409 + $0x79] sm:$0xff]
      %v3281 = vld [vmem:[%s409 + $0x81] sm:$0xff]
      %v3282 = vld [vmem:[%s409 + $0x89] sm:$0xff]
      %v3283 = vld [vmem:[%s409 + $0x91] sm:$0xff]
      %v3284 = vld [vmem:[%s409 + $0x99] sm:$0xff]
      %v3285 = vld [vmem:[%s409 + $0xa1] sm:$0xff]
      %v3286 = vld [vmem:[%s409 + $0xa9] sm:$0xff]
      %v3287 = vld [vmem:[%s409 + $0xb1] sm:$0xff]
      %v3288 = vld [vmem:[%s409 + $0xb9] sm:$0xff]
      %v3289 = vld [vmem:[%s409 + $0xc1] sm:$0xff]
      %v3290 = vld [vmem:[%s409 + $0xc9] sm:$0xff]
      %v3291 = vld [vmem:[%s409 + $0xd1] sm:$0xff]
      %v3292 = vld [vmem:[%s409 + $0xd9] sm:$0xff]
      %v3293 = vld [vmem:[%s409 + $0xe1] sm:$0xff]
      %v3294 = vld [vmem:[%s409 + $0xe9] sm:$0xff]
      %v3295 = vld [vmem:[%s409 + $0xf1] sm:$0xff]
      %v3296 = vld [vmem:[%s409 + $0xf9] sm:$0xff]
      %v3297 = vld [vmem:[%s409 + $0x101] sm:$0xff]
      %v3298 = vld [vmem:[%s409 + $0x109] sm:$0xff]
      %v3299 = vld [vmem:[%s409 + $0x111] sm:$0xff]
      %v3300 = vld [vmem:[%s409 + $0x119] sm:$0xff]
      %v3301 = vld [vmem:[%s409 + $0x121] sm:$0xff]
      %v3302 = vld [vmem:[%s409 + $0x129] sm:$0xff]
      %v3303 = vld [vmem:[%s409 + $0x131] sm:$0xff]
      %v3304 = vld [vmem:[%s409 + $0x139] sm:$0xff]
      %v3305 = vld [vmem:[%s409 + $0x141] sm:$0xff]
      %v3306 = vld [vmem:[%s409 + $0x149] sm:$0xff]
      %v3307 = vld [vmem:[%s409 + $0x151] sm:$0xff]
      %v3308 = vld [vmem:[%s409 + $0x159] sm:$0xff]
      %v3309 = vld [vmem:[%s409 + $0x161] sm:$0xff]
      %v3310 = vld [vmem:[%s409 + $0x169] sm:$0xf]
      %v3311 = vpack.c.bf16 %v3271, %v3270
      %v3312 = vpack.c.bf16 %v3273, %v3272
      %v3313 = vpack.c.bf16 %v3275, %v3274
      %v3314 = vpack.c.bf16 %v3277, %v3276
      %v3315 = vpack.c.bf16 %v3279, %v3278
      %v3316 = vpack.c.bf16 %v3281, %v3280
      %v3317 = vpack.c.bf16 %v3283, %v3282
      %v3318 = vpack.c.bf16 %v3285, %v3284
      %v3319 = vpack.c.bf16 %v3287, %v3286
      %v3320 = vpack.c.bf16 %v3289, %v3288
      %v3321 = vpack.c.bf16 %v3291, %v3290
      %v3322 = vpack.c.bf16 %v3293, %v3292
      %v3323 = vpack.c.bf16 %v3295, %v3294
      %v3324 = vpack.c.bf16 %v3297, %v3296
      %v3325 = vpack.c.bf16 %v3299, %v3298
      %v3326 = vpack.c.bf16 %v3301, %v3300
      %v3327 = vpack.c.bf16 %v3303, %v3302
      %v3328 = vpack.c.bf16 %v3305, %v3304
      %v3329 = vpack.c.bf16 %v3307, %v3306
      %v3330 = vpack.c.bf16 %v3309, %v3308
      %v3331 = vpack.c.bf16 %v3310, %v3310
      %s3332 = scalar_lea.vmem %s1, 16
      %v3333 = vld [vmem:[%s3332] sm:$0x3]
      %v3335 = vsel %vm481, %v3311, 0
      %v3338 = vsel %vm481, %v3312, 0
      %v3341 = vsel %vm481, %v3313, 0
      %v3344 = vsel %vm481, %v3314, 0
      %v3347 = vsel %vm481, %v3315, 0
      %v3350 = vsel %vm481, %v3316, 0
      %v3353 = vsel %vm481, %v3317, 0
      %v3356 = vsel %vm481, %v3318, 0
      %v3359 = vsel %vm481, %v3319, 0
      %v3362 = vsel %vm481, %v3320, 0
      %v3365 = vsel %vm481, %v3321, 0
      %v3368 = vsel %vm481, %v3322, 0
      %v3371 = vsel %vm481, %v3323, 0
      %v3374 = vsel %vm481, %v3324, 0
      %v3377 = vsel %vm481, %v3325, 0
      %v3380 = vsel %vm481, %v3326, 0
      %v3383 = vsel %vm481, %v3327, 0
      %v3386 = vsel %vm481, %v3328, 0
      %v3389 = vsel %vm481, %v3329, 0
      %v3392 = vsel %vm481, %v3330, 0
      %v3395 = vsel %vm481, %v3331, 0
      %v3398 = vand.u32 %v3333, %v548
      %3400 = vmatpush.bf16.msra.mxu0 0
      %3401 = vmatpush.bf16.msra.mxu0 0
      %3402 = vmatpush.bf16.msra.mxu0 0
      %3403 = vmatpush.bf16.msra.mxu0 0
      %3404 = vmatpush.bf16.msra.mxu0 0
      %3405 = vmatpush.bf16.msra.mxu0 0
      %3406 = vmatpush.bf16.msra.mxu0 0
      %3407 = vmatpush.bf16.msra.mxu0 %v3398
      %3408 = vmatmul.bf16.gmra.mxu0 %v3335
      %v3409 = vpop.f32.mrf.mxu0
      %v3410 = vadd.f32 0.0, %v3409
      %v3411 = vpop.f32.mrf.mxu0
      %v3412 = vadd.f32 0.0, %v3411
      %3413 = vmatmul.bf16.gmra.mxu0 %v3338
      %v3414 = vpop.f32.mrf.mxu0
      %v3415 = vadd.f32 0.0, %v3414
      %v3416 = vpop.f32.mrf.mxu0
      %v3417 = vadd.f32 0.0, %v3416
      %3418 = vmatmul.bf16.gmra.mxu0 %v3341
      %v3419 = vpop.f32.mrf.mxu0
      %v3420 = vadd.f32 0.0, %v3419
      %v3421 = vpop.f32.mrf.mxu0
      %v3422 = vadd.f32 0.0, %v3421
      %3423 = vmatmul.bf16.gmra.mxu0 %v3344
      %v3424 = vpop.f32.mrf.mxu0
      %v3425 = vadd.f32 0.0, %v3424
      %v3426 = vpop.f32.mrf.mxu0
      %v3427 = vadd.f32 0.0, %v3426
      %3428 = vmatmul.bf16.gmra.mxu0 %v3347
      %v3429 = vpop.f32.mrf.mxu0
      %v3430 = vadd.f32 0.0, %v3429
      %v3431 = vpop.f32.mrf.mxu0
      %v3432 = vadd.f32 0.0, %v3431
      %3433 = vmatmul.bf16.gmra.mxu0 %v3350
      %v3434 = vpop.f32.mrf.mxu0
      %v3435 = vadd.f32 0.0, %v3434
      %v3436 = vpop.f32.mrf.mxu0
      %v3437 = vadd.f32 0.0, %v3436
      %3438 = vmatmul.bf16.gmra.mxu0 %v3353
      %v3439 = vpop.f32.mrf.mxu0
      %v3440 = vadd.f32 0.0, %v3439
      %v3441 = vpop.f32.mrf.mxu0
      %v3442 = vadd.f32 0.0, %v3441
      %3443 = vmatmul.bf16.gmra.mxu0 %v3356
      %v3444 = vpop.f32.mrf.mxu0
      %v3445 = vadd.f32 0.0, %v3444
      %v3446 = vpop.f32.mrf.mxu0
      %v3447 = vadd.f32 0.0, %v3446
      %3448 = vmatmul.bf16.gmra.mxu0 %v3359
      %v3449 = vpop.f32.mrf.mxu0
      %v3450 = vadd.f32 0.0, %v3449
      %v3451 = vpop.f32.mrf.mxu0
      %v3452 = vadd.f32 0.0, %v3451
      %3453 = vmatmul.bf16.gmra.mxu0 %v3362
      %v3454 = vpop.f32.mrf.mxu0
      %v3455 = vadd.f32 0.0, %v3454
      %v3456 = vpop.f32.mrf.mxu0
      %v3457 = vadd.f32 0.0, %v3456
      %3458 = vmatmul.bf16.gmra.mxu0 %v3365
      %v3459 = vpop.f32.mrf.mxu0
      %v3460 = vadd.f32 0.0, %v3459
      %v3461 = vpop.f32.mrf.mxu0
      %v3462 = vadd.f32 0.0, %v3461
      %3463 = vmatmul.bf16.gmra.mxu0 %v3368
      %v3464 = vpop.f32.mrf.mxu0
      %v3465 = vadd.f32 0.0, %v3464
      %v3466 = vpop.f32.mrf.mxu0
      %v3467 = vadd.f32 0.0, %v3466
      %3468 = vmatmul.bf16.gmra.mxu0 %v3371
      %v3469 = vpop.f32.mrf.mxu0
      %v3470 = vadd.f32 0.0, %v3469
      %v3471 = vpop.f32.mrf.mxu0
      %v3472 = vadd.f32 0.0, %v3471
      %3473 = vmatmul.bf16.gmra.mxu0 %v3374
      %v3474 = vpop.f32.mrf.mxu0
      %v3475 = vadd.f32 0.0, %v3474
      %v3476 = vpop.f32.mrf.mxu0
      %v3477 = vadd.f32 0.0, %v3476
      %3478 = vmatmul.bf16.gmra.mxu0 %v3377
      %v3479 = vpop.f32.mrf.mxu0
      %v3480 = vadd.f32 0.0, %v3479
      %v3481 = vpop.f32.mrf.mxu0
      %v3482 = vadd.f32 0.0, %v3481
      %3483 = vmatmul.bf16.gmra.mxu0 %v3380
      %v3484 = vpop.f32.mrf.mxu0
      %v3485 = vadd.f32 0.0, %v3484
      %v3486 = vpop.f32.mrf.mxu0
      %v3487 = vadd.f32 0.0, %v3486
      %3488 = vmatmul.bf16.gmra.mxu0 %v3383
      %v3489 = vpop.f32.mrf.mxu0
      %v3490 = vadd.f32 0.0, %v3489
      %v3491 = vpop.f32.mrf.mxu0
      %v3492 = vadd.f32 0.0, %v3491
      %3493 = vmatmul.bf16.gmra.mxu0 %v3386
      %v3494 = vpop.f32.mrf.mxu0
      %v3495 = vadd.f32 0.0, %v3494
      %v3496 = vpop.f32.mrf.mxu0
      %v3497 = vadd.f32 0.0, %v3496
      %3498 = vmatmul.bf16.gmra.mxu0 %v3389
      %v3499 = vpop.f32.mrf.mxu0
      %v3500 = vadd.f32 0.0, %v3499
      %v3501 = vpop.f32.mrf.mxu0
      %v3502 = vadd.f32 0.0, %v3501
      %3503 = vmatmul.bf16.gmra.mxu0 %v3392
      %v3504 = vpop.f32.mrf.mxu0
      %v3505 = vadd.f32 0.0, %v3504
      %v3506 = vpop.f32.mrf.mxu0
      %v3507 = vadd.f32 0.0, %v3506
      %3508 = vmatmul.bf16.gmra.mxu0 %v3395
      %v3509 = vpop.f32.mrf.mxu0
      %v3510 = vadd.f32 0.0, %v3509
      %v3511 = vpop.f32.mrf.mxu0
      %3512 = vdwg.mxu0
      %v3513 = vld [vmem:[#allocation2] sm:$0xff]
      %v3514 = vld [vmem:[#allocation2 + $0x8] sm:$0xff]
      %v3515 = vld [vmem:[#allocation2 + $0x10] sm:$0xff]
      %v3516 = vld [vmem:[#allocation2 + $0x18] sm:$0xff]
      %v3517 = vld [vmem:[#allocation2 + $0x20] sm:$0xff]
      %v3518 = vld [vmem:[#allocation2 + $0x28] sm:$0xff]
      %v3519 = vld [vmem:[#allocation2 + $0x30] sm:$0xff]
      %v3520 = vld [vmem:[#allocation2 + $0x38] sm:$0xff]
      %v3521 = vld [vmem:[#allocation2 + $0x40] sm:$0xff]
      %v3522 = vld [vmem:[#allocation2 + $0x48] sm:$0xff]
      %v3523 = vld [vmem:[#allocation2 + $0x50] sm:$0xff]
      %v3524 = vld [vmem:[#allocation2 + $0x58] sm:$0xff]
      %v3525 = vld [vmem:[#allocation2 + $0x60] sm:$0xff]
      %v3526 = vld [vmem:[#allocation2 + $0x68] sm:$0xff]
      %v3527 = vld [vmem:[#allocation2 + $0x70] sm:$0xff]
      %v3528 = vld [vmem:[#allocation2 + $0x78] sm:$0xff]
      %v3529 = vld [vmem:[#allocation2 + $0x80] sm:$0xff]
      %v3530 = vld [vmem:[#allocation2 + $0x88] sm:$0xff]
      %v3531 = vld [vmem:[#allocation2 + $0x90] sm:$0xff]
      %v3532 = vld [vmem:[#allocation2 + $0x98] sm:$0xff]
      %v3533 = vld [vmem:[#allocation2 + $0xa0] sm:$0xff]
      %v3534 = vld [vmem:[#allocation2 + $0xa8] sm:$0xff]
      %v3535 = vld [vmem:[#allocation2 + $0xb0] sm:$0xff]
      %v3536 = vld [vmem:[#allocation2 + $0xb8] sm:$0xff]
      %v3537 = vld [vmem:[#allocation2 + $0xc0] sm:$0xff]
      %v3538 = vld [vmem:[#allocation2 + $0xc8] sm:$0xff]
      %v3539 = vld [vmem:[#allocation2 + $0xd0] sm:$0xff]
      %v3540 = vld [vmem:[#allocation2 + $0xd8] sm:$0xff]
      %v3541 = vld [vmem:[#allocation2 + $0xe0] sm:$0xff]
      %v3542 = vld [vmem:[#allocation2 + $0xe8] sm:$0xff]
      %v3543 = vld [vmem:[#allocation2 + $0xf0] sm:$0xff]
      %v3544 = vld [vmem:[#allocation2 + $0xf8] sm:$0xff]
      %v3545 = vld [vmem:[#allocation2 + $0x100] sm:$0xff]
      %v3546 = vld [vmem:[#allocation2 + $0x108] sm:$0xff]
      %v3547 = vld [vmem:[#allocation2 + $0x110] sm:$0xff]
      %v3548 = vld [vmem:[#allocation2 + $0x118] sm:$0xff]
      %v3549 = vld [vmem:[#allocation2 + $0x120] sm:$0xff]
      %v3550 = vld [vmem:[#allocation2 + $0x128] sm:$0xff]
      %v3551 = vld [vmem:[#allocation2 + $0x130] sm:$0xff]
      %v3552 = vld [vmem:[#allocation2 + $0x138] sm:$0xff]
      %v3553 = vld [vmem:[#allocation2 + $0x140] sm:$0xf]
      %v3554 = vadd.f32 %v3513, %v3410
      %v3555 = vadd.f32 %v3514, %v3412
      %v3556 = vadd.f32 %v3515, %v3415
      %v3557 = vadd.f32 %v3516, %v3417
      %v3558 = vadd.f32 %v3517, %v3420
      %v3559 = vadd.f32 %v3518, %v3422
      %v3560 = vadd.f32 %v3519, %v3425
      %v3561 = vadd.f32 %v3520, %v3427
      %v3562 = vadd.f32 %v3521, %v3430
      %v3563 = vadd.f32 %v3522, %v3432
      %v3564 = vadd.f32 %v3523, %v3435
      %v3565 = vadd.f32 %v3524, %v3437
      %v3566 = vadd.f32 %v3525, %v3440
      %v3567 = vadd.f32 %v3526, %v3442
      %v3568 = vadd.f32 %v3527, %v3445
      %v3569 = vadd.f32 %v3528, %v3447
      %v3570 = vadd.f32 %v3529, %v3450
      %v3571 = vadd.f32 %v3530, %v3452
      %v3572 = vadd.f32 %v3531, %v3455
      %v3573 = vadd.f32 %v3532, %v3457
      %v3574 = vadd.f32 %v3533, %v3460
      %v3575 = vadd.f32 %v3534, %v3462
      %v3576 = vadd.f32 %v3535, %v3465
      %v3577 = vadd.f32 %v3536, %v3467
      %v3578 = vadd.f32 %v3537, %v3470
      %v3579 = vadd.f32 %v3538, %v3472
      %v3580 = vadd.f32 %v3539, %v3475
      %v3581 = vadd.f32 %v3540, %v3477
      %v3582 = vadd.f32 %v3541, %v3480
      %v3583 = vadd.f32 %v3542, %v3482
      %v3584 = vadd.f32 %v3543, %v3485
      %v3585 = vadd.f32 %v3544, %v3487
      %v3586 = vadd.f32 %v3545, %v3490
      %v3587 = vadd.f32 %v3546, %v3492
      %v3588 = vadd.f32 %v3547, %v3495
      %v3589 = vadd.f32 %v3548, %v3497
      %v3590 = vadd.f32 %v3549, %v3500
      %v3591 = vadd.f32 %v3550, %v3502
      %v3592 = vadd.f32 %v3551, %v3505
      %v3593 = vadd.f32 %v3552, %v3507
      %v3594 = vadd.f32 %v3553, %v3510
      %3595 = vst.msk [vmem:[#allocation2] sm:$0xff] %vm665, %v3554
      %3596 = vst.msk [vmem:[#allocation2 + $0x8] sm:$0xff] %vm665, %v3555
      %3597 = vst.msk [vmem:[#allocation2 + $0x10] sm:$0xff] %vm665, %v3556
      %3598 = vst.msk [vmem:[#allocation2 + $0x18] sm:$0xff] %vm665, %v3557
      %3599 = vst.msk [vmem:[#allocation2 + $0x20] sm:$0xff] %vm665, %v3558
      %3600 = vst.msk [vmem:[#allocation2 + $0x28] sm:$0xff] %vm665, %v3559
      %3601 = vst.msk [vmem:[#allocation2 + $0x30] sm:$0xff] %vm665, %v3560
      %3602 = vst.msk [vmem:[#allocation2 + $0x38] sm:$0xff] %vm665, %v3561
      %3603 = vst.msk [vmem:[#allocation2 + $0x40] sm:$0xff] %vm665, %v3562
      %3604 = vst.msk [vmem:[#allocation2 + $0x48] sm:$0xff] %vm665, %v3563
      %3605 = vst.msk [vmem:[#allocation2 + $0x50] sm:$0xff] %vm665, %v3564
      %3606 = vst.msk [vmem:[#allocation2 + $0x58] sm:$0xff] %vm665, %v3565
      %3607 = vst.msk [vmem:[#allocation2 + $0x60] sm:$0xff] %vm665, %v3566
      %3608 = vst.msk [vmem:[#allocation2 + $0x68] sm:$0xff] %vm665, %v3567
      %3609 = vst.msk [vmem:[#allocation2 + $0x70] sm:$0xff] %vm665, %v3568
      %3610 = vst.msk [vmem:[#allocation2 + $0x78] sm:$0xff] %vm665, %v3569
      %3611 = vst.msk [vmem:[#allocation2 + $0x80] sm:$0xff] %vm665, %v3570
      %3612 = vst.msk [vmem:[#allocation2 + $0x88] sm:$0xff] %vm665, %v3571
      %3613 = vst.msk [vmem:[#allocation2 + $0x90] sm:$0xff] %vm665, %v3572
      %3614 = vst.msk [vmem:[#allocation2 + $0x98] sm:$0xff] %vm665, %v3573
      %3615 = vst.msk [vmem:[#allocation2 + $0xa0] sm:$0xff] %vm665, %v3574
      %3616 = vst.msk [vmem:[#allocation2 + $0xa8] sm:$0xff] %vm665, %v3575
      %3617 = vst.msk [vmem:[#allocation2 + $0xb0] sm:$0xff] %vm665, %v3576
      %3618 = vst.msk [vmem:[#allocation2 + $0xb8] sm:$0xff] %vm665, %v3577
      %3619 = vst.msk [vmem:[#allocation2 + $0xc0] sm:$0xff] %vm665, %v3578
      %3620 = vst.msk [vmem:[#allocation2 + $0xc8] sm:$0xff] %vm665, %v3579
      %3621 = vst.msk [vmem:[#allocation2 + $0xd0] sm:$0xff] %vm665, %v3580
      %3622 = vst.msk [vmem:[#allocation2 + $0xd8] sm:$0xff] %vm665, %v3581
      %3623 = vst.msk [vmem:[#allocation2 + $0xe0] sm:$0xff] %vm665, %v3582
      %3624 = vst.msk [vmem:[#allocation2 + $0xe8] sm:$0xff] %vm665, %v3583
      %3625 = vst.msk [vmem:[#allocation2 + $0xf0] sm:$0xff] %vm665, %v3584
      %3626 = vst.msk [vmem:[#allocation2 + $0xf8] sm:$0xff] %vm665, %v3585
      %3627 = vst.msk [vmem:[#allocation2 + $0x100] sm:$0xff] %vm665, %v3586
      %3628 = vst.msk [vmem:[#allocation2 + $0x108] sm:$0xff] %vm665, %v3587
      %3629 = vst.msk [vmem:[#allocation2 + $0x110] sm:$0xff] %vm665, %v3588
      %3630 = vst.msk [vmem:[#allocation2 + $0x118] sm:$0xff] %vm665, %v3589
      %3631 = vst.msk [vmem:[#allocation2 + $0x120] sm:$0xff] %vm665, %v3590
      %3632 = vst.msk [vmem:[#allocation2 + $0x128] sm:$0xff] %vm665, %v3591
      %3633 = vst.msk [vmem:[#allocation2 + $0x130] sm:$0xff] %vm665, %v3592
      %3634 = vst.msk [vmem:[#allocation2 + $0x138] sm:$0xff] %vm665, %v3593
      %3635 = vst.msk [vmem:[#allocation2 + $0x140] sm:$0xf] %vm706, %v3594
      %v3636 = vld [vmem:[#allocation2] sm:$0xff]
      %v3637 = vld [vmem:[#allocation2 + $0x8] sm:$0xff]
      %v3638 = vld [vmem:[#allocation2 + $0x10] sm:$0xff]
      %v3639 = vld [vmem:[#allocation2 + $0x18] sm:$0xff]
      %v3640 = vld [vmem:[#allocation2 + $0x20] sm:$0xff]
      %v3641 = vld [vmem:[#allocation2 + $0x28] sm:$0xff]
      %v3642 = vld [vmem:[#allocation2 + $0x30] sm:$0xff]
      %v3643 = vld [vmem:[#allocation2 + $0x38] sm:$0xff]
      %v3644 = vld [vmem:[#allocation2 + $0x40] sm:$0xff]
      %v3645 = vld [vmem:[#allocation2 + $0x48] sm:$0xff]
      %v3646 = vld [vmem:[#allocation2 + $0x50] sm:$0xff]
      %v3647 = vld [vmem:[#allocation2 + $0x58] sm:$0xff]
      %v3648 = vld [vmem:[#allocation2 + $0x60] sm:$0xff]
      %v3649 = vld [vmem:[#allocation2 + $0x68] sm:$0xff]
      %v3650 = vld [vmem:[#allocation2 + $0x70] sm:$0xff]
      %v3651 = vld [vmem:[#allocation2 + $0x78] sm:$0xff]
      %v3652 = vld [vmem:[#allocation2 + $0x80] sm:$0xff]
      %v3653 = vld [vmem:[#allocation2 + $0x88] sm:$0xff]
      %v3654 = vld [vmem:[#allocation2 + $0x90] sm:$0xff]
      %v3655 = vld [vmem:[#allocation2 + $0x98] sm:$0xff]
      %v3656 = vld [vmem:[#allocation2 + $0xa0] sm:$0xff]
      %v3657 = vld [vmem:[#allocation2 + $0xa8] sm:$0xff]
      %v3658 = vld [vmem:[#allocation2 + $0xb0] sm:$0xff]
      %v3659 = vld [vmem:[#allocation2 + $0xb8] sm:$0xff]
      %v3660 = vld [vmem:[#allocation2 + $0xc0] sm:$0xff]
      %v3661 = vld [vmem:[#allocation2 + $0xc8] sm:$0xff]
      %v3662 = vld [vmem:[#allocation2 + $0xd0] sm:$0xff]
      %v3663 = vld [vmem:[#allocation2 + $0xd8] sm:$0xff]
      %v3664 = vld [vmem:[#allocation2 + $0xe0] sm:$0xff]
      %v3665 = vld [vmem:[#allocation2 + $0xe8] sm:$0xff]
      %v3666 = vld [vmem:[#allocation2 + $0xf0] sm:$0xff]
      %v3667 = vld [vmem:[#allocation2 + $0xf8] sm:$0xff]
      %v3668 = vld [vmem:[#allocation2 + $0x100] sm:$0xff]
      %v3669 = vld [vmem:[#allocation2 + $0x108] sm:$0xff]
      %v3670 = vld [vmem:[#allocation2 + $0x110] sm:$0xff]
      %v3671 = vld [vmem:[#allocation2 + $0x118] sm:$0xff]
      %v3672 = vld [vmem:[#allocation2 + $0x120] sm:$0xff]
      %v3673 = vld [vmem:[#allocation2 + $0x128] sm:$0xff]
      %v3674 = vld [vmem:[#allocation2 + $0x130] sm:$0xff]
      %v3675 = vld [vmem:[#allocation2 + $0x138] sm:$0xff]
      %v3676 = vld [vmem:[#allocation2 + $0x140] sm:$0xf]
      %v3677 = vld [vmem:[%s2] sm:$0x1]
      %v3679 = vperm.slane %v3677, 0
      %v3681 = vadd.f32 %v3636, %v3679
      %v3682 = vadd.f32 %v3637, %v3679
      %v3683 = vadd.f32 %v3638, %v3679
      %v3684 = vadd.f32 %v3639, %v3679
      %v3685 = vadd.f32 %v3640, %v3679
      %v3686 = vadd.f32 %v3641, %v3679
      %v3687 = vadd.f32 %v3642, %v3679
      %v3688 = vadd.f32 %v3643, %v3679
      %v3689 = vadd.f32 %v3644, %v3679
      %v3690 = vadd.f32 %v3645, %v3679
      %v3691 = vadd.f32 %v3646, %v3679
      %v3692 = vadd.f32 %v3647, %v3679
      %v3693 = vadd.f32 %v3648, %v3679
      %v3694 = vadd.f32 %v3649, %v3679
      %v3695 = vadd.f32 %v3650, %v3679
      %v3696 = vadd.f32 %v3651, %v3679
      %v3697 = vadd.f32 %v3652, %v3679
      %v3698 = vadd.f32 %v3653, %v3679
      %v3699 = vadd.f32 %v3654, %v3679
      %v3700 = vadd.f32 %v3655, %v3679
      %v3701 = vadd.f32 %v3656, %v3679
      %v3702 = vadd.f32 %v3657, %v3679
      %v3703 = vadd.f32 %v3658, %v3679
      %v3704 = vadd.f32 %v3659, %v3679
      %v3705 = vadd.f32 %v3660, %v3679
      %v3706 = vadd.f32 %v3661, %v3679
      %v3707 = vadd.f32 %v3662, %v3679
      %v3708 = vadd.f32 %v3663, %v3679
      %v3709 = vadd.f32 %v3664, %v3679
      %v3710 = vadd.f32 %v3665, %v3679
      %v3711 = vadd.f32 %v3666, %v3679
      %v3712 = vadd.f32 %v3667, %v3679
      %v3713 = vadd.f32 %v3668, %v3679
      %v3714 = vadd.f32 %v3669, %v3679
      %v3715 = vadd.f32 %v3670, %v3679
      %v3716 = vadd.f32 %v3671, %v3679
      %v3717 = vadd.f32 %v3672, %v3679
      %v3718 = vadd.f32 %v3673, %v3679
      %v3719 = vadd.f32 %v3674, %v3679
      %v3720 = vadd.f32 %v3675, %v3679
      %v3721 = vadd.f32 %v3676, %v3679
      %v3722 = vmax.f32 %v3681, 0.0
      %v3723 = vmax.f32 %v3682, 0.0
      %v3724 = vmax.f32 %v3683, 0.0
      %v3725 = vmax.f32 %v3684, 0.0
      %v3726 = vmax.f32 %v3685, 0.0
      %v3727 = vmax.f32 %v3686, 0.0
      %v3728 = vmax.f32 %v3687, 0.0
      %v3729 = vmax.f32 %v3688, 0.0
      %v3730 = vmax.f32 %v3689, 0.0
      %v3731 = vmax.f32 %v3690, 0.0
      %v3732 = vmax.f32 %v3691, 0.0
      %v3733 = vmax.f32 %v3692, 0.0
      %v3734 = vmax.f32 %v3693, 0.0
      %v3735 = vmax.f32 %v3694, 0.0
      %v3736 = vmax.f32 %v3695, 0.0
      %v3737 = vmax.f32 %v3696, 0.0
      %v3738 = vmax.f32 %v3697, 0.0
      %v3739 = vmax.f32 %v3698, 0.0
      %v3740 = vmax.f32 %v3699, 0.0
      %v3741 = vmax.f32 %v3700, 0.0
      %v3742 = vmax.f32 %v3701, 0.0
      %v3743 = vmax.f32 %v3702, 0.0
      %v3744 = vmax.f32 %v3703, 0.0
      %v3745 = vmax.f32 %v3704, 0.0
      %v3746 = vmax.f32 %v3705, 0.0
      %v3747 = vmax.f32 %v3706, 0.0
      %v3748 = vmax.f32 %v3707, 0.0
      %v3749 = vmax.f32 %v3708, 0.0
      %v3750 = vmax.f32 %v3709, 0.0
      %v3751 = vmax.f32 %v3710, 0.0
      %v3752 = vmax.f32 %v3711, 0.0
      %v3753 = vmax.f32 %v3712, 0.0
      %v3754 = vmax.f32 %v3713, 0.0
      %v3755 = vmax.f32 %v3714, 0.0
      %v3756 = vmax.f32 %v3715, 0.0
      %v3757 = vmax.f32 %v3716, 0.0
      %v3758 = vmax.f32 %v3717, 0.0
      %v3759 = vmax.f32 %v3718, 0.0
      %v3760 = vmax.f32 %v3719, 0.0
      %v3761 = vmax.f32 %v3720, 0.0
      %v3762 = vmax.f32 %v3721, 0.0
      %3763 = vst.msk [vmem:[#allocation2] sm:$0xff] %vm665, %v3722
      %3764 = vst.msk [vmem:[#allocation2 + $0x8] sm:$0xff] %vm665, %v3723
      %3765 = vst.msk [vmem:[#allocation2 + $0x10] sm:$0xff] %vm665, %v3724
      %3766 = vst.msk [vmem:[#allocation2 + $0x18] sm:$0xff] %vm665, %v3725
      %3767 = vst.msk [vmem:[#allocation2 + $0x20] sm:$0xff] %vm665, %v3726
      %3768 = vst.msk [vmem:[#allocation2 + $0x28] sm:$0xff] %vm665, %v3727
      %3769 = vst.msk [vmem:[#allocation2 + $0x30] sm:$0xff] %vm665, %v3728
      %3770 = vst.msk [vmem:[#allocation2 + $0x38] sm:$0xff] %vm665, %v3729
      %3771 = vst.msk [vmem:[#allocation2 + $0x40] sm:$0xff] %vm665, %v3730
      %3772 = vst.msk [vmem:[#allocation2 + $0x48] sm:$0xff] %vm665, %v3731
      %3773 = vst.msk [vmem:[#allocation2 + $0x50] sm:$0xff] %vm665, %v3732
      %3774 = vst.msk [vmem:[#allocation2 + $0x58] sm:$0xff] %vm665, %v3733
      %3775 = vst.msk [vmem:[#allocation2 + $0x60] sm:$0xff] %vm665, %v3734
      %3776 = vst.msk [vmem:[#allocation2 + $0x68] sm:$0xff] %vm665, %v3735
      %3777 = vst.msk [vmem:[#allocation2 + $0x70] sm:$0xff] %vm665, %v3736
      %3778 = vst.msk [vmem:[#allocation2 + $0x78] sm:$0xff] %vm665, %v3737
      %3779 = vst.msk [vmem:[#allocation2 + $0x80] sm:$0xff] %vm665, %v3738
      %3780 = vst.msk [vmem:[#allocation2 + $0x88] sm:$0xff] %vm665, %v3739
      %3781 = vst.msk [vmem:[#allocation2 + $0x90] sm:$0xff] %vm665, %v3740
      %3782 = vst.msk [vmem:[#allocation2 + $0x98] sm:$0xff] %vm665, %v3741
      %3783 = vst.msk [vmem:[#allocation2 + $0xa0] sm:$0xff] %vm665, %v3742
      %3784 = vst.msk [vmem:[#allocation2 + $0xa8] sm:$0xff] %vm665, %v3743
      %3785 = vst.msk [vmem:[#allocation2 + $0xb0] sm:$0xff] %vm665, %v3744
      %3786 = vst.msk [vmem:[#allocation2 + $0xb8] sm:$0xff] %vm665, %v3745
      %3787 = vst.msk [vmem:[#allocation2 + $0xc0] sm:$0xff] %vm665, %v3746
      %3788 = vst.msk [vmem:[#allocation2 + $0xc8] sm:$0xff] %vm665, %v3747
      %3789 = vst.msk [vmem:[#allocation2 + $0xd0] sm:$0xff] %vm665, %v3748
      %3790 = vst.msk [vmem:[#allocation2 + $0xd8] sm:$0xff] %vm665, %v3749
      %3791 = vst.msk [vmem:[#allocation2 + $0xe0] sm:$0xff] %vm665, %v3750
      %3792 = vst.msk [vmem:[#allocation2 + $0xe8] sm:$0xff] %vm665, %v3751
      %3793 = vst.msk [vmem:[#allocation2 + $0xf0] sm:$0xff] %vm665, %v3752
      %3794 = vst.msk [vmem:[#allocation2 + $0xf8] sm:$0xff] %vm665, %v3753
      %3795 = vst.msk [vmem:[#allocation2 + $0x100] sm:$0xff] %vm665, %v3754
      %3796 = vst.msk [vmem:[#allocation2 + $0x108] sm:$0xff] %vm665, %v3755
      %3797 = vst.msk [vmem:[#allocation2 + $0x110] sm:$0xff] %vm665, %v3756
      %3798 = vst.msk [vmem:[#allocation2 + $0x118] sm:$0xff] %vm665, %v3757
      %3799 = vst.msk [vmem:[#allocation2 + $0x120] sm:$0xff] %vm665, %v3758
      %3800 = vst.msk [vmem:[#allocation2 + $0x128] sm:$0xff] %vm665, %v3759
      %3801 = vst.msk [vmem:[#allocation2 + $0x130] sm:$0xff] %vm665, %v3760
      %3802 = vst.msk [vmem:[#allocation2 + $0x138] sm:$0xff] %vm665, %v3761
      %3803 = vst.msk [vmem:[#allocation2 + $0x140] sm:$0xf] %vm706, %v3762
      %v3804 = vld [vmem:[#allocation2] sm:$0xff]
      %v3805 = vld [vmem:[#allocation2 + $0x8] sm:$0xff]
      %v3806 = vld [vmem:[#allocation2 + $0x10] sm:$0xff]
      %v3807 = vld [vmem:[#allocation2 + $0x18] sm:$0xff]
      %v3808 = vld [vmem:[#allocation2 + $0x20] sm:$0xff]
      %v3809 = vld [vmem:[#allocation2 + $0x28] sm:$0xff]
      %v3810 = vld [vmem:[#allocation2 + $0x30] sm:$0xff]
      %v3811 = vld [vmem:[#allocation2 + $0x38] sm:$0xff]
      %v3812 = vld [vmem:[#allocation2 + $0x40] sm:$0xff]
      %v3813 = vld [vmem:[#allocation2 + $0x48] sm:$0xff]
      %v3814 = vld [vmem:[#allocation2 + $0x50] sm:$0xff]
      %v3815 = vld [vmem:[#allocation2 + $0x58] sm:$0xff]
      %v3816 = vld [vmem:[#allocation2 + $0x60] sm:$0xff]
      %v3817 = vld [vmem:[#allocation2 + $0x68] sm:$0xff]
      %v3818 = vld [vmem:[#allocation2 + $0x70] sm:$0xff]
      %v3819 = vld [vmem:[#allocation2 + $0x78] sm:$0xff]
      %v3820 = vld [vmem:[#allocation2 + $0x80] sm:$0xff]
      %v3821 = vld [vmem:[#allocation2 + $0x88] sm:$0xff]
      %v3822 = vld [vmem:[#allocation2 + $0x90] sm:$0xff]
      %v3823 = vld [vmem:[#allocation2 + $0x98] sm:$0xff]
      %v3824 = vld [vmem:[#allocation2 + $0xa0] sm:$0xff]
      %v3825 = vld [vmem:[#allocation2 + $0xa8] sm:$0xff]
      %v3826 = vld [vmem:[#allocation2 + $0xb0] sm:$0xff]
      %v3827 = vld [vmem:[#allocation2 + $0xb8] sm:$0xff]
      %v3828 = vld [vmem:[#allocation2 + $0xc0] sm:$0xff]
      %v3829 = vld [vmem:[#allocation2 + $0xc8] sm:$0xff]
      %v3830 = vld [vmem:[#allocation2 + $0xd0] sm:$0xff]
      %v3831 = vld [vmem:[#allocation2 + $0xd8] sm:$0xff]
      %v3832 = vld [vmem:[#allocation2 + $0xe0] sm:$0xff]
      %v3833 = vld [vmem:[#allocation2 + $0xe8] sm:$0xff]
      %v3834 = vld [vmem:[#allocation2 + $0xf0] sm:$0xff]
      %v3835 = vld [vmem:[#allocation2 + $0xf8] sm:$0xff]
      %v3836 = vld [vmem:[#allocation2 + $0x100] sm:$0xff]
      %v3837 = vld [vmem:[#allocation2 + $0x108] sm:$0xff]
      %v3838 = vld [vmem:[#allocation2 + $0x110] sm:$0xff]
      %v3839 = vld [vmem:[#allocation2 + $0x118] sm:$0xff]
      %v3840 = vld [vmem:[#allocation2 + $0x120] sm:$0xff]
      %v3841 = vld [vmem:[#allocation2 + $0x128] sm:$0xff]
      %v3842 = vld [vmem:[#allocation2 + $0x130] sm:$0x1]
      %v3843 = vld [vmem:[#allocation2 + $0x1] sm:$0xff]
      %v3844 = vld [vmem:[#allocation2 + $0x9] sm:$0xff]
      %v3845 = vld [vmem:[#allocation2 + $0x11] sm:$0xff]
      %v3846 = vld [vmem:[#allocation2 + $0x19] sm:$0xff]
      %v3847 = vld [vmem:[#allocation2 + $0x21] sm:$0xff]
      %v3848 = vld [vmem:[#allocation2 + $0x29] sm:$0xff]
      %v3849 = vld [vmem:[#allocation2 + $0x31] sm:$0xff]
      %v3850 = vld [vmem:[#allocation2 + $0x39] sm:$0xff]
      %v3851 = vld [vmem:[#allocation2 + $0x41] sm:$0xff]
      %v3852 = vld [vmem:[#allocation2 + $0x49] sm:$0xff]
      %v3853 = vld [vmem:[#allocation2 + $0x51] sm:$0xff]
      %v3854 = vld [vmem:[#allocation2 + $0x59] sm:$0xff]
      %v3855 = vld [vmem:[#allocation2 + $0x61] sm:$0xff]
      %v3856 = vld [vmem:[#allocation2 + $0x69] sm:$0xff]
      %v3857 = vld [vmem:[#allocation2 + $0x71] sm:$0xff]
      %v3858 = vld [vmem:[#allocation2 + $0x79] sm:$0xff]
      %v3859 = vld [vmem:[#allocation2 + $0x81] sm:$0xff]
      %v3860 = vld [vmem:[#allocation2 + $0x89] sm:$0xff]
      %v3861 = vld [vmem:[#allocation2 + $0x91] sm:$0xff]
      %v3862 = vld [vmem:[#allocation2 + $0x99] sm:$0xff]
      %v3863 = vld [vmem:[#allocation2 + $0xa1] sm:$0xff]
      %v3864 = vld [vmem:[#allocation2 + $0xa9] sm:$0xff]
      %v3865 = vld [vmem:[#allocation2 + $0xb1] sm:$0xff]
      %v3866 = vld [vmem:[#allocation2 + $0xb9] sm:$0xff]
      %v3867 = vld [vmem:[#allocation2 + $0xc1] sm:$0xff]
      %v3868 = vld [vmem:[#allocation2 + $0xc9] sm:$0xff]
      %v3869 = vld [vmem:[#allocation2 + $0xd1] sm:$0xff]
      %v3870 = vld [vmem:[#allocation2 + $0xd9] sm:$0xff]
      %v3871 = vld [vmem:[#allocation2 + $0xe1] sm:$0xff]
      %v3872 = vld [vmem:[#allocation2 + $0xe9] sm:$0xff]
      %v3873 = vld [vmem:[#allocation2 + $0xf1] sm:$0xff]
      %v3874 = vld [vmem:[#allocation2 + $0xf9] sm:$0xff]
      %v3875 = vld [vmem:[#allocation2 + $0x101] sm:$0xff]
      %v3876 = vld [vmem:[#allocation2 + $0x109] sm:$0xff]
      %v3877 = vld [vmem:[#allocation2 + $0x111] sm:$0xff]
      %v3878 = vld [vmem:[#allocation2 + $0x119] sm:$0xff]
      %v3879 = vld [vmem:[#allocation2 + $0x121] sm:$0xff]
      %v3880 = vld [vmem:[#allocation2 + $0x129] sm:$0xff]
      %v3881 = vld [vmem:[#allocation2 + $0x131] sm:$0x1]
      %v3882 = vmax.f32 %v3804, %v3843
      %v3883 = vmax.f32 %v3805, %v3844
      %v3884 = vmax.f32 %v3806, %v3845
      %v3885 = vmax.f32 %v3807, %v3846
      %v3886 = vmax.f32 %v3808, %v3847
      %v3887 = vmax.f32 %v3809, %v3848
      %v3888 = vmax.f32 %v3810, %v3849
      %v3889 = vmax.f32 %v3811, %v3850
      %v3890 = vmax.f32 %v3812, %v3851
      %v3891 = vmax.f32 %v3813, %v3852
      %v3892 = vmax.f32 %v3814, %v3853
      %v3893 = vmax.f32 %v3815, %v3854
      %v3894 = vmax.f32 %v3816, %v3855
      %v3895 = vmax.f32 %v3817, %v3856
      %v3896 = vmax.f32 %v3818, %v3857
      %v3897 = vmax.f32 %v3819, %v3858
      %v3898 = vmax.f32 %v3820, %v3859
      %v3899 = vmax.f32 %v3821, %v3860
      %v3900 = vmax.f32 %v3822, %v3861
      %v3901 = vmax.f32 %v3823, %v3862
      %v3902 = vmax.f32 %v3824, %v3863
      %v3903 = vmax.f32 %v3825, %v3864
      %v3904 = vmax.f32 %v3826, %v3865
      %v3905 = vmax.f32 %v3827, %v3866
      %v3906 = vmax.f32 %v3828, %v3867
      %v3907 = vmax.f32 %v3829, %v3868
      %v3908 = vmax.f32 %v3830, %v3869
      %v3909 = vmax.f32 %v3831, %v3870
      %v3910 = vmax.f32 %v3832, %v3871
      %v3911 = vmax.f32 %v3833, %v3872
      %v3912 = vmax.f32 %v3834, %v3873
      %v3913 = vmax.f32 %v3835, %v3874
      %v3914 = vmax.f32 %v3836, %v3875
      %v3915 = vmax.f32 %v3837, %v3876
      %v3916 = vmax.f32 %v3838, %v3877
      %v3917 = vmax.f32 %v3839, %v3878
      %v3918 = vmax.f32 %v3840, %v3879
      %v3919 = vmax.f32 %v3841, %v3880
      %v3920 = vmax.f32 %v3842, %v3881
      %v3921 = vld [vmem:[#allocation2 + $0x12] sm:$0xff]
      %v3922 = vld [vmem:[#allocation2 + $0x1a] sm:$0xff]
      %v3923 = vld [vmem:[#allocation2 + $0x22] sm:$0xff]
      %v3924 = vld [vmem:[#allocation2 + $0x2a] sm:$0xff]
      %v3925 = vld [vmem:[#allocation2 + $0x32] sm:$0xff]
      %v3926 = vld [vmem:[#allocation2 + $0x3a] sm:$0xff]
      %v3927 = vld [vmem:[#allocation2 + $0x42] sm:$0xff]
      %v3928 = vld [vmem:[#allocation2 + $0x4a] sm:$0xff]
      %v3929 = vld [vmem:[#allocation2 + $0x52] sm:$0xff]
      %v3930 = vld [vmem:[#allocation2 + $0x5a] sm:$0xff]
      %v3931 = vld [vmem:[#allocation2 + $0x62] sm:$0xff]
      %v3932 = vld [vmem:[#allocation2 + $0x6a] sm:$0xff]
      %v3933 = vld [vmem:[#allocation2 + $0x72] sm:$0xff]
      %v3934 = vld [vmem:[#allocation2 + $0x7a] sm:$0xff]
      %v3935 = vld [vmem:[#allocation2 + $0x82] sm:$0xff]
      %v3936 = vld [vmem:[#allocation2 + $0x8a] sm:$0xff]
      %v3937 = vld [vmem:[#allocation2 + $0x92] sm:$0xff]
      %v3938 = vld [vmem:[#allocation2 + $0x9a] sm:$0xff]
      %v3939 = vld [vmem:[#allocation2 + $0xa2] sm:$0xff]
      %v3940 = vld [vmem:[#allocation2 + $0xaa] sm:$0xff]
      %v3941 = vld [vmem:[#allocation2 + $0xb2] sm:$0xff]
      %v3942 = vld [vmem:[#allocation2 + $0xba] sm:$0xff]
      %v3943 = vld [vmem:[#allocation2 + $0xc2] sm:$0xff]
      %v3944 = vld [vmem:[#allocation2 + $0xca] sm:$0xff]
      %v3945 = vld [vmem:[#allocation2 + $0xd2] sm:$0xff]
      %v3946 = vld [vmem:[#allocation2 + $0xda] sm:$0xff]
      %v3947 = vld [vmem:[#allocation2 + $0xe2] sm:$0xff]
      %v3948 = vld [vmem:[#allocation2 + $0xea] sm:$0xff]
      %v3949 = vld [vmem:[#allocation2 + $0xf2] sm:$0xff]
      %v3950 = vld [vmem:[#allocation2 + $0xfa] sm:$0xff]
      %v3951 = vld [vmem:[#allocation2 + $0x102] sm:$0xff]
      %v3952 = vld [vmem:[#allocation2 + $0x10a] sm:$0xff]
      %v3953 = vld [vmem:[#allocation2 + $0x112] sm:$0xff]
      %v3954 = vld [vmem:[#allocation2 + $0x11a] sm:$0xff]
      %v3955 = vld [vmem:[#allocation2 + $0x122] sm:$0xff]
      %v3956 = vld [vmem:[#allocation2 + $0x12a] sm:$0xff]
      %v3957 = vld [vmem:[#allocation2 + $0x132] sm:$0xff]
      %v3958 = vld [vmem:[#allocation2 + $0x13a] sm:$0xff]
      %v3959 = vld [vmem:[#allocation2 + $0x142] sm:$0x1]
      %v3960 = vld [vmem:[#allocation2 + $0x13] sm:$0xff]
      %v3961 = vld [vmem:[#allocation2 + $0x1b] sm:$0xff]
      %v3962 = vld [vmem:[#allocation2 + $0x23] sm:$0xff]
      %v3963 = vld [vmem:[#allocation2 + $0x2b] sm:$0xff]
      %v3964 = vld [vmem:[#allocation2 + $0x33] sm:$0xff]
      %v3965 = vld [vmem:[#allocation2 + $0x3b] sm:$0xff]
      %v3966 = vld [vmem:[#allocation2 + $0x43] sm:$0xff]
      %v3967 = vld [vmem:[#allocation2 + $0x4b] sm:$0xff]
      %v3968 = vld [vmem:[#allocation2 + $0x53] sm:$0xff]
      %v3969 = vld [vmem:[#allocation2 + $0x5b] sm:$0xff]
      %v3970 = vld [vmem:[#allocation2 + $0x63] sm:$0xff]
      %v3971 = vld [vmem:[#allocation2 + $0x6b] sm:$0xff]
      %v3972 = vld [vmem:[#allocation2 + $0x73] sm:$0xff]
      %v3973 = vld [vmem:[#allocation2 + $0x7b] sm:$0xff]
      %v3974 = vld [vmem:[#allocation2 + $0x83] sm:$0xff]
      %v3975 = vld [vmem:[#allocation2 + $0x8b] sm:$0xff]
      %v3976 = vld [vmem:[#allocation2 + $0x93] sm:$0xff]
      %v3977 = vld [vmem:[#allocation2 + $0x9b] sm:$0xff]
      %v3978 = vld [vmem:[#allocation2 + $0xa3] sm:$0xff]
      %v3979 = vld [vmem:[#allocation2 + $0xab] sm:$0xff]
      %v3980 = vld [vmem:[#allocation2 + $0xb3] sm:$0xff]
      %v3981 = vld [vmem:[#allocation2 + $0xbb] sm:$0xff]
      %v3982 = vld [vmem:[#allocation2 + $0xc3] sm:$0xff]
      %v3983 = vld [vmem:[#allocation2 + $0xcb] sm:$0xff]
      %v3984 = vld [vmem:[#allocation2 + $0xd3] sm:$0xff]
      %v3985 = vld [vmem:[#allocation2 + $0xdb] sm:$0xff]
      %v3986 = vld [vmem:[#allocation2 + $0xe3] sm:$0xff]
      %v3987 = vld [vmem:[#allocation2 + $0xeb] sm:$0xff]
      %v3988 = vld [vmem:[#allocation2 + $0xf3] sm:$0xff]
      %v3989 = vld [vmem:[#allocation2 + $0xfb] sm:$0xff]
      %v3990 = vld [vmem:[#allocation2 + $0x103] sm:$0xff]
      %v3991 = vld [vmem:[#allocation2 + $0x10b] sm:$0xff]
      %v3992 = vld [vmem:[#allocation2 + $0x113] sm:$0xff]
      %v3993 = vld [vmem:[#allocation2 + $0x11b] sm:$0xff]
      %v3994 = vld [vmem:[#allocation2 + $0x123] sm:$0xff]
      %v3995 = vld [vmem:[#allocation2 + $0x12b] sm:$0xff]
      %v3996 = vld [vmem:[#allocation2 + $0x133] sm:$0xff]
      %v3997 = vld [vmem:[#allocation2 + $0x13b] sm:$0xff]
      %v3998 = vld [vmem:[#allocation2 + $0x143] sm:$0x1]
      %v3999 = vmax.f32 %v3921, %v3960
      %v4000 = vmax.f32 %v3922, %v3961
      %v4001 = vmax.f32 %v3923, %v3962
      %v4002 = vmax.f32 %v3924, %v3963
      %v4003 = vmax.f32 %v3925, %v3964
      %v4004 = vmax.f32 %v3926, %v3965
      %v4005 = vmax.f32 %v3927, %v3966
      %v4006 = vmax.f32 %v3928, %v3967
      %v4007 = vmax.f32 %v3929, %v3968
      %v4008 = vmax.f32 %v3930, %v3969
      %v4009 = vmax.f32 %v3931, %v3970
      %v4010 = vmax.f32 %v3932, %v3971
      %v4011 = vmax.f32 %v3933, %v3972
      %v4012 = vmax.f32 %v3934, %v3973
      %v4013 = vmax.f32 %v3935, %v3974
      %v4014 = vmax.f32 %v3936, %v3975
      %v4015 = vmax.f32 %v3937, %v3976
      %v4016 = vmax.f32 %v3938, %v3977
      %v4017 = vmax.f32 %v3939, %v3978
      %v4018 = vmax.f32 %v3940, %v3979
      %v4019 = vmax.f32 %v3941, %v3980
      %v4020 = vmax.f32 %v3942, %v3981
      %v4021 = vmax.f32 %v3943, %v3982
      %v4022 = vmax.f32 %v3944, %v3983
      %v4023 = vmax.f32 %v3945, %v3984
      %v4024 = vmax.f32 %v3946, %v3985
      %v4025 = vmax.f32 %v3947, %v3986
      %v4026 = vmax.f32 %v3948, %v3987
      %v4027 = vmax.f32 %v3949, %v3988
      %v4028 = vmax.f32 %v3950, %v3989
      %v4029 = vmax.f32 %v3951, %v3990
      %v4030 = vmax.f32 %v3952, %v3991
      %v4031 = vmax.f32 %v3953, %v3992
      %v4032 = vmax.f32 %v3954, %v3993
      %v4033 = vmax.f32 %v3955, %v3994
      %v4034 = vmax.f32 %v3956, %v3995
      %v4035 = vmax.f32 %v3957, %v3996
      %v4036 = vmax.f32 %v3958, %v3997
      %v4037 = vmax.f32 %v3959, %v3998
      %v4038 = vmax.f32 %v3882, %v3999
      %v4039 = vmax.f32 %v3883, %v4000
      %v4040 = vmax.f32 %v3884, %v4001
      %v4041 = vmax.f32 %v3885, %v4002
      %v4042 = vmax.f32 %v3886, %v4003
      %v4043 = vmax.f32 %v3887, %v4004
      %v4044 = vmax.f32 %v3888, %v4005
      %v4045 = vmax.f32 %v3889, %v4006
      %v4046 = vmax.f32 %v3890, %v4007
      %v4047 = vmax.f32 %v3891, %v4008
      %v4048 = vmax.f32 %v3892, %v4009
      %v4049 = vmax.f32 %v3893, %v4010
      %v4050 = vmax.f32 %v3894, %v4011
      %v4051 = vmax.f32 %v3895, %v4012
      %v4052 = vmax.f32 %v3896, %v4013
      %v4053 = vmax.f32 %v3897, %v4014
      %v4054 = vmax.f32 %v3898, %v4015
      %v4055 = vmax.f32 %v3899, %v4016
      %v4056 = vmax.f32 %v3900, %v4017
      %v4057 = vmax.f32 %v3901, %v4018
      %v4058 = vmax.f32 %v3902, %v4019
      %v4059 = vmax.f32 %v3903, %v4020
      %v4060 = vmax.f32 %v3904, %v4021
      %v4061 = vmax.f32 %v3905, %v4022
      %v4062 = vmax.f32 %v3906, %v4023
      %v4063 = vmax.f32 %v3907, %v4024
      %v4064 = vmax.f32 %v3908, %v4025
      %v4065 = vmax.f32 %v3909, %v4026
      %v4066 = vmax.f32 %v3910, %v4027
      %v4067 = vmax.f32 %v3911, %v4028
      %v4068 = vmax.f32 %v3912, %v4029
      %v4069 = vmax.f32 %v3913, %v4030
      %v4070 = vmax.f32 %v3914, %v4031
      %v4071 = vmax.f32 %v3915, %v4032
      %v4072 = vmax.f32 %v3916, %v4033
      %v4073 = vmax.f32 %v3917, %v4034
      %v4074 = vmax.f32 %v3918, %v4035
      %v4075 = vmax.f32 %v3919, %v4036
      %v4076 = vmax.f32 %v3920, %v4037
      %v4077 = vld [vmem:[%s3] sm:$0xff]
      %v4078 = vld [vmem:[%s3 + $0x8] sm:$0xf]
      %v4079 = vld [vmem:[%s3 + $0xc] sm:$0xff]
      %v4080 = vld [vmem:[%s3 + $0x14] sm:$0xf]
      %v4081 = vld [vmem:[%s3 + $0x18] sm:$0xff]
      %v4082 = vld [vmem:[%s3 + $0x20] sm:$0xf]
      %v4083 = vld [vmem:[%s3 + $0x24] sm:$0xff]
      %v4084 = vld [vmem:[%s3 + $0x2c] sm:$0xf]
      %v4085 = vld [vmem:[%s3 + $0x30] sm:$0xff]
      %v4086 = vld [vmem:[%s3 + $0x38] sm:$0xf]
      %v4087 = vld [vmem:[%s3 + $0x3c] sm:$0xff]
      %v4088 = vld [vmem:[%s3 + $0x44] sm:$0xf]
      %v4089 = vld [vmem:[%s3 + $0x48] sm:$0xff]
      %v4090 = vld [vmem:[%s3 + $0x50] sm:$0xf]
      %v4091 = vld [vmem:[%s3 + $0x54] sm:$0xff]
      %v4092 = vld [vmem:[%s3 + $0x5c] sm:$0xf]
      %v4093 = vld [vmem:[%s3 + $0x60] sm:$0xff]
      %v4094 = vld [vmem:[%s3 + $0x68] sm:$0xf]
      %v4095 = vld [vmem:[%s3 + $0x6c] sm:$0xff]
      %v4096 = vld [vmem:[%s3 + $0x74] sm:$0xf]
      %v4097 = vld [vmem:[%s3 + $0x78] sm:$0xff]
      %v4098 = vld [vmem:[%s3 + $0x80] sm:$0xf]
      %v4099 = vld [vmem:[%s3 + $0x84] sm:$0xff]
      %v4100 = vld [vmem:[%s3 + $0x8c] sm:$0xf]
      %v4101 = vld [vmem:[%s3 + $0x90] sm:$0xff]
      %v4102 = vld [vmem:[%s3 + $0x98] sm:$0xf]
      %v4103 = vld [vmem:[%s3 + $0x9c] sm:$0xff]
      %v4104 = vld [vmem:[%s3 + $0xa4] sm:$0xf]
      %v4105 = vld [vmem:[%s3 + $0xa8] sm:$0xff]
      %v4106 = vld [vmem:[%s3 + $0xb0] sm:$0xf]
      %v4107 = vld [vmem:[%s3 + $0xb4] sm:$0x33]
      %v4108 = vld [vmem:[%s3 + $0xbc] sm:$0x3]
      %v4109 = vpack.c.bf16 %v4039, %v4038
      %v4110 = vpack.c.bf16 %v4041, %v4040
      %v4111 = vpack.c.bf16 %v4043, %v4042
      %v4112 = vpack.c.bf16 %v4045, %v4044
      %v4113 = vpack.c.bf16 %v4047, %v4046
      %v4114 = vpack.c.bf16 %v4049, %v4048
      %v4115 = vpack.c.bf16 %v4051, %v4050
      %v4116 = vpack.c.bf16 %v4053, %v4052
      %v4117 = vpack.c.bf16 %v4055, %v4054
      %v4118 = vpack.c.bf16 %v4057, %v4056
      %v4119 = vpack.c.bf16 %v4059, %v4058
      %v4120 = vpack.c.bf16 %v4061, %v4060
      %v4121 = vpack.c.bf16 %v4063, %v4062
      %v4122 = vpack.c.bf16 %v4065, %v4064
      %v4123 = vpack.c.bf16 %v4067, %v4066
      %v4124 = vpack.c.bf16 %v4069, %v4068
      %v4125 = vpack.c.bf16 %v4071, %v4070
      %v4126 = vpack.c.bf16 %v4073, %v4072
      %v4127 = vpack.c.bf16 %v4075, %v4074
      %v4128 = vpack.c.bf16 %v4076, %v4076
      %v4161 = vunpack.c.l.b16 %v4077
      %v4162 = vunpack.c.h.b16 %v4077
      %v4163 = vunpack.c.l.b16 %v4078
      %v4164 = vunpack.c.l.b16 %v4079
      %v4165 = vunpack.c.h.b16 %v4079
      %v4166 = vunpack.c.l.b16 %v4080
      %v4167 = vunpack.c.l.b16 %v4081
      %v4168 = vunpack.c.h.b16 %v4081
      %v4169 = vunpack.c.l.b16 %v4082
      %v4170 = vunpack.c.l.b16 %v4083
      %v4171 = vunpack.c.h.b16 %v4083
      %v4172 = vunpack.c.l.b16 %v4084
      %v4173 = vunpack.c.l.b16 %v4085
      %v4174 = vunpack.c.h.b16 %v4085
      %v4175 = vunpack.c.l.b16 %v4086
      %v4176 = vunpack.c.l.b16 %v4087
      %v4177 = vunpack.c.h.b16 %v4087
      %v4178 = vunpack.c.l.b16 %v4088
      %v4179 = vunpack.c.l.b16 %v4089
      %v4180 = vunpack.c.h.b16 %v4089
      %v4181 = vunpack.c.l.b16 %v4090
      %v4182 = vunpack.c.l.b16 %v4091
      %v4183 = vunpack.c.h.b16 %v4091
      %v4184 = vunpack.c.l.b16 %v4092
      %v4185 = vunpack.c.l.b16 %v4093
      %v4186 = vunpack.c.h.b16 %v4093
      %v4187 = vunpack.c.l.b16 %v4094
      %v4188 = vunpack.c.l.b16 %v4095
      %v4189 = vunpack.c.h.b16 %v4095
      %v4190 = vunpack.c.l.b16 %v4096
      %v4191 = vunpack.c.l.b16 %v4097
      %v4192 = vunpack.c.h.b16 %v4097
      %v4193 = vunpack.c.l.b16 %v4098
      %v4194 = vunpack.c.l.b16 %v4099
      %v4195 = vunpack.c.h.b16 %v4099
      %v4196 = vunpack.c.l.b16 %v4100
      %v4197 = vunpack.c.l.b16 %v4101
      %v4198 = vunpack.c.h.b16 %v4101
      %v4199 = vunpack.c.l.b16 %v4102
      %v4200 = vunpack.c.l.b16 %v4103
      %v4201 = vunpack.c.h.b16 %v4103
      %v4202 = vunpack.c.l.b16 %v4104
      %v4203 = vunpack.c.l.b16 %v4105
      %v4204 = vunpack.c.h.b16 %v4105
      %v4205 = vunpack.c.l.b16 %v4106
      %v4206 = vunpack.c.l.b16 %v4107
      %v4207 = vunpack.c.h.b16 %v4107
      %v4208 = vunpack.c.l.b16 %v4108
      %v4209 = vpack.c.b16 %v4164, %v4161
      %v4210 = vpack.c.b16 %v4165, %v4162
      %v4211 = vpack.c.b16 %v4166, %v4163
      %v4212 = vpack.c.b16 %v4170, %v4167
      %v4213 = vpack.c.b16 %v4171, %v4168
      %v4214 = vpack.c.b16 %v4172, %v4169
      %v4215 = vpack.c.b16 %v4176, %v4173
      %v4216 = vpack.c.b16 %v4177, %v4174
      %v4217 = vpack.c.b16 %v4178, %v4175
      %v4218 = vpack.c.b16 %v4182, %v4179
      %v4219 = vpack.c.b16 %v4183, %v4180
      %v4220 = vpack.c.b16 %v4184, %v4181
      %v4221 = vpack.c.b16 %v4188, %v4185
      %v4222 = vpack.c.b16 %v4189, %v4186
      %v4223 = vpack.c.b16 %v4190, %v4187
      %v4224 = vpack.c.b16 %v4194, %v4191
      %v4225 = vpack.c.b16 %v4195, %v4192
      %v4226 = vpack.c.b16 %v4196, %v4193
      %v4227 = vpack.c.b16 %v4200, %v4197
      %v4228 = vpack.c.b16 %v4201, %v4198
      %v4229 = vpack.c.b16 %v4202, %v4199
      %v4230 = vpack.c.b16 %v4206, %v4203
      %v4231 = vpack.c.b16 %v4207, %v4204
      %v4232 = vpack.c.b16 %v4208, %v4205
      %vm4249 = vcmask 400384
      %v4251 = vsel %vm4249, %v4211, 0
      %v4254 = vsel %vm4249, %v4214, 0
      %v4257 = vsel %vm4249, %v4217, 0
      %v4260 = vsel %vm4249, %v4220, 0
      %v4263 = vsel %vm4249, %v4223, 0
      %v4266 = vsel %vm4249, %v4226, 0
      %v4269 = vsel %vm4249, %v4229, 0
      %v4272 = vsel %vm4249, %v4232, 0
      %v4274 = vsel 0, 4294967295, 65535
      %v4275 = vsel %vm545, %v4274, 0
      %v4277 = vand.u32 %v4128, %v4275
      %4279 = vmatpush.bf16.msra.mxu0 %v4116
      %4280 = vmatpush.bf16.msra.mxu0 %v4115
      %4281 = vmatpush.bf16.msra.mxu0 %v4114
      %4282 = vmatpush.bf16.msra.mxu0 %v4113
      %4283 = vmatpush.bf16.msra.mxu0 %v4112
      %4284 = vmatpush.bf16.msra.mxu0 %v4111
      %4285 = vmatpush.bf16.msra.mxu0 %v4110
      %4286 = vmatpush.bf16.msra.mxu0 %v4109
      %4287 = vmatmul.bf16.gmra.mxu0 %v4209
      %v4288 = vpop.f32.mrf.mxu0
      %v4289 = vadd.f32 0.0, %v4288
      %v4290 = vpop.f32.mrf.mxu0
      %v4291 = vadd.f32 0.0, %v4290
      %4292 = vmatmul.bf16.gmra.mxu0 %v4212
      %v4293 = vpop.f32.mrf.mxu0
      %v4294 = vadd.f32 0.0, %v4293
      %v4295 = vpop.f32.mrf.mxu0
      %v4296 = vadd.f32 0.0, %v4295
      %4297 = vmatmul.bf16.gmra.mxu0 %v4215
      %v4298 = vpop.f32.mrf.mxu0
      %v4299 = vadd.f32 0.0, %v4298
      %v4300 = vpop.f32.mrf.mxu0
      %v4301 = vadd.f32 0.0, %v4300
      %4302 = vmatmul.bf16.gmra.mxu0 %v4218
      %v4303 = vpop.f32.mrf.mxu0
      %v4304 = vadd.f32 0.0, %v4303
      %v4305 = vpop.f32.mrf.mxu0
      %v4306 = vadd.f32 0.0, %v4305
      %4307 = vmatmul.bf16.gmra.mxu0 %v4221
      %v4308 = vpop.f32.mrf.mxu0
      %v4309 = vadd.f32 0.0, %v4308
      %v4310 = vpop.f32.mrf.mxu0
      %v4311 = vadd.f32 0.0, %v4310
      %4312 = vmatmul.bf16.gmra.mxu0 %v4224
      %v4313 = vpop.f32.mrf.mxu0
      %v4314 = vadd.f32 0.0, %v4313
      %v4315 = vpop.f32.mrf.mxu0
      %v4316 = vadd.f32 0.0, %v4315
      %4317 = vmatmul.bf16.gmra.mxu0 %v4227
      %v4318 = vpop.f32.mrf.mxu0
      %v4319 = vadd.f32 0.0, %v4318
      %v4320 = vpop.f32.mrf.mxu0
      %v4321 = vadd.f32 0.0, %v4320
      %4322 = vmatmul.bf16.gmra.mxu0 %v4230
      %v4323 = vpop.f32.mrf.mxu0
      %v4324 = vadd.f32 0.0, %v4323
      %v4325 = vpop.f32.mrf.mxu0
      %v4326 = vadd.f32 0.0, %v4325
      %4327 = vdwg.mxu0
      %4328 = vmatpush.bf16.msra.mxu0 %v4124
      %4329 = vmatpush.bf16.msra.mxu0 %v4123
      %4330 = vmatpush.bf16.msra.mxu0 %v4122
      %4331 = vmatpush.bf16.msra.mxu0 %v4121
      %4332 = vmatpush.bf16.msra.mxu0 %v4120
      %4333 = vmatpush.bf16.msra.mxu0 %v4119
      %4334 = vmatpush.bf16.msra.mxu0 %v4118
      %4335 = vmatpush.bf16.msra.mxu0 %v4117
      %4336 = vmatmul.bf16.gmra.mxu0 %v4210
      %v4337 = vpop.f32.mrf.mxu0
      %v4338 = vadd.f32 %v4289, %v4337
      %v4339 = vpop.f32.mrf.mxu0
      %v4340 = vadd.f32 %v4291, %v4339
      %4341 = vmatmul.bf16.gmra.mxu0 %v4213
      %v4342 = vpop.f32.mrf.mxu0
      %v4343 = vadd.f32 %v4294, %v4342
      %v4344 = vpop.f32.mrf.mxu0
      %v4345 = vadd.f32 %v4296, %v4344
      %4346 = vmatmul.bf16.gmra.mxu0 %v4216
      %v4347 = vpop.f32.mrf.mxu0
      %v4348 = vadd.f32 %v4299, %v4347
      %v4349 = vpop.f32.mrf.mxu0
      %v4350 = vadd.f32 %v4301, %v4349
      %4351 = vmatmul.bf16.gmra.mxu0 %v4219
      %v4352 = vpop.f32.mrf.mxu0
      %v4353 = vadd.f32 %v4304, %v4352
      %v4354 = vpop.f32.mrf.mxu0
      %v4355 = vadd.f32 %v4306, %v4354
      %4356 = vmatmul.bf16.gmra.mxu0 %v4222
      %v4357 = vpop.f32.mrf.mxu0
      %v4358 = vadd.f32 %v4309, %v4357
      %v4359 = vpop.f32.mrf.mxu0
      %v4360 = vadd.f32 %v4311, %v4359
      %4361 = vmatmul.bf16.gmra.mxu0 %v4225
      %v4362 = vpop.f32.mrf.mxu0
      %v4363 = vadd.f32 %v4314, %v4362
      %v4364 = vpop.f32.mrf.mxu0
      %v4365 = vadd.f32 %v4316, %v4364
      %4366 = vmatmul.bf16.gmra.mxu0 %v4228
      %v4367 = vpop.f32.mrf.mxu0
      %v4368 = vadd.f32 %v4319, %v4367
      %v4369 = vpop.f32.mrf.mxu0
      %v4370 = vadd.f32 %v4321, %v4369
      %4371 = vmatmul.bf16.gmra.mxu0 %v4231
      %v4372 = vpop.f32.mrf.mxu0
      %v4373 = vadd.f32 %v4324, %v4372
      %v4374 = vpop.f32.mrf.mxu0
      %v4375 = vadd.f32 %v4326, %v4374
      %4376 = vdwg.mxu0
      %4377 = vmatpush.bf16.msra.mxu0 0
      %4378 = vmatpush.bf16.msra.mxu0 0
      %4379 = vmatpush.bf16.msra.mxu0 0
      %4380 = vmatpush.bf16.msra.mxu0 0
      %4381 = vmatpush.bf16.msra.mxu0 %v4277
      %4382 = vmatpush.bf16.msra.mxu0 %v4127
      %4383 = vmatpush.bf16.msra.mxu0 %v4126
      %4384 = vmatpush.bf16.msra.mxu0 %v4125
      %4385 = vmatmul.bf16.gmra.mxu0 %v4251
      %v4386 = vpop.f32.mrf.mxu0
      %v4387 = vadd.f32 %v4338, %v4386
      %v4388 = vpop.f32.mrf.mxu0
      %v4389 = vadd.f32 %v4340, %v4388
      %4390 = vmatmul.bf16.gmra.mxu0 %v4254
      %v4391 = vpop.f32.mrf.mxu0
      %v4392 = vadd.f32 %v4343, %v4391
      %v4393 = vpop.f32.mrf.mxu0
      %v4394 = vadd.f32 %v4345, %v4393
      %4395 = vmatmul.bf16.gmra.mxu0 %v4257
      %v4396 = vpop.f32.mrf.mxu0
      %v4397 = vadd.f32 %v4348, %v4396
      %v4398 = vpop.f32.mrf.mxu0
      %v4399 = vadd.f32 %v4350, %v4398
      %4400 = vmatmul.bf16.gmra.mxu0 %v4260
      %v4401 = vpop.f32.mrf.mxu0
      %v4402 = vadd.f32 %v4353, %v4401
      %v4403 = vpop.f32.mrf.mxu0
      %v4404 = vadd.f32 %v4355, %v4403
      %4405 = vmatmul.bf16.gmra.mxu0 %v4263
      %v4406 = vpop.f32.mrf.mxu0
      %v4407 = vadd.f32 %v4358, %v4406
      %v4408 = vpop.f32.mrf.mxu0
      %v4409 = vadd.f32 %v4360, %v4408
      %4410 = vmatmul.bf16.gmra.mxu0 %v4266
      %v4411 = vpop.f32.mrf.mxu0
      %v4412 = vadd.f32 %v4363, %v4411
      %v4413 = vpop.f32.mrf.mxu0
      %v4414 = vadd.f32 %v4365, %v4413
      %4415 = vmatmul.bf16.gmra.mxu0 %v4269
      %v4416 = vpop.f32.mrf.mxu0
      %v4417 = vadd.f32 %v4368, %v4416
      %v4418 = vpop.f32.mrf.mxu0
      %v4419 = vadd.f32 %v4370, %v4418
      %4420 = vmatmul.bf16.gmra.mxu0 %v4272
      %v4421 = vpop.f32.mrf.mxu0
      %v4422 = vadd.f32 %v4373, %v4421
      %v4423 = vpop.f32.mrf.mxu0
      %v4424 = vadd.f32 %v4375, %v4423
      %4425 = vdwg.mxu0
      %4426 = vst.msk [vmem:[#allocation3] sm:$0xff] %vm665, %v4387
      %4427 = vst.msk [vmem:[#allocation3 + $0x8] sm:$0xff] %vm665, %v4389
      %4428 = vst.msk [vmem:[#allocation3 + $0x10] sm:$0xff] %vm665, %v4392
      %4429 = vst.msk [vmem:[#allocation3 + $0x18] sm:$0xff] %vm665, %v4394
      %4430 = vst.msk [vmem:[#allocation3 + $0x20] sm:$0xff] %vm665, %v4397
      %4431 = vst.msk [vmem:[#allocation3 + $0x28] sm:$0xff] %vm665, %v4399
      %4432 = vst.msk [vmem:[#allocation3 + $0x30] sm:$0xff] %vm665, %v4402
      %4433 = vst.msk [vmem:[#allocation3 + $0x38] sm:$0xff] %vm665, %v4404
      %4434 = vst.msk [vmem:[#allocation3 + $0x40] sm:$0xff] %vm665, %v4407
      %4435 = vst.msk [vmem:[#allocation3 + $0x48] sm:$0xff] %vm665, %v4409
      %4436 = vst.msk [vmem:[#allocation3 + $0x50] sm:$0xff] %vm665, %v4412
      %4437 = vst.msk [vmem:[#allocation3 + $0x58] sm:$0xff] %vm665, %v4414
      %4438 = vst.msk [vmem:[#allocation3 + $0x60] sm:$0xff] %vm665, %v4417
      %4439 = vst.msk [vmem:[#allocation3 + $0x68] sm:$0xff] %vm665, %v4419
      %4440 = vst.msk [vmem:[#allocation3 + $0x70] sm:$0xff] %vm665, %v4422
      %4441 = vst.msk [vmem:[#allocation3 + $0x78] sm:$0xf] %vm706, %v4424
      %v4442 = vld [vmem:[#allocation3 + $0x1] sm:$0xff]
      %v4443 = vld [vmem:[#allocation3 + $0x9] sm:$0xff]
      %v4444 = vld [vmem:[#allocation3 + $0x11] sm:$0xff]
      %v4445 = vld [vmem:[#allocation3 + $0x19] sm:$0xff]
      %v4446 = vld [vmem:[#allocation3 + $0x21] sm:$0xff]
      %v4447 = vld [vmem:[#allocation3 + $0x29] sm:$0xff]
      %v4448 = vld [vmem:[#allocation3 + $0x31] sm:$0xff]
      %v4449 = vld [vmem:[#allocation3 + $0x39] sm:$0xff]
      %v4450 = vld [vmem:[#allocation3 + $0x41] sm:$0xff]
      %v4451 = vld [vmem:[#allocation3 + $0x49] sm:$0xff]
      %v4452 = vld [vmem:[#allocation3 + $0x51] sm:$0xff]
      %v4453 = vld [vmem:[#allocation3 + $0x59] sm:$0xff]
      %v4454 = vld [vmem:[#allocation3 + $0x61] sm:$0xf]
      %v4455 = vpack.c.bf16 %v4443, %v4442
      %v4456 = vpack.c.bf16 %v4445, %v4444
      %v4457 = vpack.c.bf16 %v4447, %v4446
      %v4458 = vpack.c.bf16 %v4449, %v4448
      %v4459 = vpack.c.bf16 %v4451, %v4450
      %v4460 = vpack.c.bf16 %v4453, %v4452
      %v4461 = vpack.c.bf16 %v4454, %v4454
      %v4462 = vld [vmem:[%s4] sm:$0xf]
      %v4463 = vld [vmem:[%s4 + $0x4] sm:$0xf]
      %v4464 = vld [vmem:[#allocation3 + $0x2] sm:$0xff]
      %v4465 = vld [vmem:[#allocation3 + $0xa] sm:$0xff]
      %v4466 = vld [vmem:[#allocation3 + $0x12] sm:$0xff]
      %v4467 = vld [vmem:[#allocation3 + $0x1a] sm:$0xff]
      %v4468 = vld [vmem:[#allocation3 + $0x22] sm:$0xff]
      %v4469 = vld [vmem:[#allocation3 + $0x2a] sm:$0xff]
      %v4470 = vld [vmem:[#allocation3 + $0x32] sm:$0xff]
      %v4471 = vld [vmem:[#allocation3 + $0x3a] sm:$0xff]
      %v4472 = vld [vmem:[#allocation3 + $0x42] sm:$0xff]
      %v4473 = vld [vmem:[#allocation3 + $0x4a] sm:$0xff]
      %v4474 = vld [vmem:[#allocation3 + $0x52] sm:$0xff]
      %v4475 = vld [vmem:[#allocation3 + $0x5a] sm:$0xff]
      %v4476 = vld [vmem:[#allocation3 + $0x62] sm:$0xf]
      %v4477 = vpack.c.bf16 %v4465, %v4464
      %v4478 = vpack.c.bf16 %v4467, %v4466
      %v4479 = vpack.c.bf16 %v4469, %v4468
      %v4480 = vpack.c.bf16 %v4471, %v4470
      %v4481 = vpack.c.bf16 %v4473, %v4472
      %v4482 = vpack.c.bf16 %v4475, %v4474
      %v4483 = vpack.c.bf16 %v4476, %v4476
      %s4484 = scalar_lea.vmem %s4, 8
      %v4485 = vld [vmem:[%s4484] sm:$0xf]
      %v4486 = vld [vmem:[%s4484 + $0x4] sm:$0xf]
      %v4489 = vunpack.c.l.b16 %v4485
      %v4490 = vunpack.c.l.b16 %v4486
      %v4491 = vpack.c.b16 %v4490, %v4489
      %v4494 = vsel %vm665, %v4477, 0
      %v4497 = vsel %vm665, %v4478, 0
      %v4500 = vsel %vm665, %v4479, 0
      %v4503 = vsel %vm665, %v4480, 0
      %v4506 = vsel %vm665, %v4481, 0
      %v4509 = vsel %vm665, %v4482, 0
      %v4512 = vsel %vm665, %v4483, 0
      %4514 = vmatpush.bf16.msra.mxu0 0
      %4515 = vmatpush.bf16.msra.mxu0 0
      %4516 = vmatpush.bf16.msra.mxu0 0
      %4517 = vmatpush.bf16.msra.mxu0 0
      %4518 = vmatpush.bf16.msra.mxu0 0
      %4519 = vmatpush.bf16.msra.mxu0 0
      %4520 = vmatpush.bf16.msra.mxu0 0
      %4521 = vmatpush.bf16.msra.mxu0 %v4491
      %4522 = vmatmul.bf16.gmra.mxu0 %v4494
      %v4523 = vpop.f32.mrf.mxu0
      %v4524 = vadd.f32 0.0, %v4523
      %v4525 = vpop.f32.mrf.mxu0
      %v4526 = vadd.f32 0.0, %v4525
      %4527 = vmatmul.bf16.gmra.mxu0 %v4497
      %v4528 = vpop.f32.mrf.mxu0
      %v4529 = vadd.f32 0.0, %v4528
      %v4530 = vpop.f32.mrf.mxu0
      %v4531 = vadd.f32 0.0, %v4530
      %4532 = vmatmul.bf16.gmra.mxu0 %v4500
      %v4533 = vpop.f32.mrf.mxu0
      %v4534 = vadd.f32 0.0, %v4533
      %v4535 = vpop.f32.mrf.mxu0
      %v4536 = vadd.f32 0.0, %v4535
      %4537 = vmatmul.bf16.gmra.mxu0 %v4503
      %v4538 = vpop.f32.mrf.mxu0
      %v4539 = vadd.f32 0.0, %v4538
      %v4540 = vpop.f32.mrf.mxu0
      %v4541 = vadd.f32 0.0, %v4540
      %4542 = vmatmul.bf16.gmra.mxu0 %v4506
      %v4543 = vpop.f32.mrf.mxu0
      %v4544 = vadd.f32 0.0, %v4543
      %v4545 = vpop.f32.mrf.mxu0
      %v4546 = vadd.f32 0.0, %v4545
      %4547 = vmatmul.bf16.gmra.mxu0 %v4509
      %v4548 = vpop.f32.mrf.mxu0
      %v4549 = vadd.f32 0.0, %v4548
      %v4550 = vpop.f32.mrf.mxu0
      %v4551 = vadd.f32 0.0, %v4550
      %4552 = vmatmul.bf16.gmra.mxu0 %v4512
      %v4553 = vpop.f32.mrf.mxu0
      %v4554 = vadd.f32 0.0, %v4553
      %v4555 = vpop.f32.mrf.mxu0
      %4556 = vdwg.mxu0
      %v4559 = vunpack.c.l.b16 %v4462
      %v4560 = vunpack.c.l.b16 %v4463
      %v4561 = vpack.c.b16 %v4560, %v4559
      %v4564 = vsel %vm665, %v4455, 0
      %v4567 = vsel %vm665, %v4456, 0
      %v4570 = vsel %vm665, %v4457, 0
      %v4573 = vsel %vm665, %v4458, 0
      %v4576 = vsel %vm665, %v4459, 0
      %v4579 = vsel %vm665, %v4460, 0
      %v4582 = vsel %vm665, %v4461, 0
      %4584 = vmatpush.bf16.msra.mxu0 0
      %4585 = vmatpush.bf16.msra.mxu0 0
      %4586 = vmatpush.bf16.msra.mxu0 0
      %4587 = vmatpush.bf16.msra.mxu0 0
      %4588 = vmatpush.bf16.msra.mxu0 0
      %4589 = vmatpush.bf16.msra.mxu0 0
      %4590 = vmatpush.bf16.msra.mxu0 0
      %4591 = vmatpush.bf16.msra.mxu0 %v4561
      %4592 = vmatmul.bf16.gmra.mxu0 %v4564
      %v4593 = vpop.f32.mrf.mxu0
      %v4594 = vadd.f32 %v4524, %v4593
      %v4595 = vpop.f32.mrf.mxu0
      %v4596 = vadd.f32 %v4526, %v4595
      %4597 = vmatmul.bf16.gmra.mxu0 %v4567
      %v4598 = vpop.f32.mrf.mxu0
      %v4599 = vadd.f32 %v4529, %v4598
      %v4600 = vpop.f32.mrf.mxu0
      %v4601 = vadd.f32 %v4531, %v4600
      %4602 = vmatmul.bf16.gmra.mxu0 %v4570
      %v4603 = vpop.f32.mrf.mxu0
      %v4604 = vadd.f32 %v4534, %v4603
      %v4605 = vpop.f32.mrf.mxu0
      %v4606 = vadd.f32 %v4536, %v4605
      %4607 = vmatmul.bf16.gmra.mxu0 %v4573
      %v4608 = vpop.f32.mrf.mxu0
      %v4609 = vadd.f32 %v4539, %v4608
      %v4610 = vpop.f32.mrf.mxu0
      %v4611 = vadd.f32 %v4541, %v4610
      %4612 = vmatmul.bf16.gmra.mxu0 %v4576
      %v4613 = vpop.f32.mrf.mxu0
      %v4614 = vadd.f32 %v4544, %v4613
      %v4615 = vpop.f32.mrf.mxu0
      %v4616 = vadd.f32 %v4546, %v4615
      %4617 = vmatmul.bf16.gmra.mxu0 %v4579
      %v4618 = vpop.f32.mrf.mxu0
      %v4619 = vadd.f32 %v4549, %v4618
      %v4620 = vpop.f32.mrf.mxu0
      %v4621 = vadd.f32 %v4551, %v4620
      %4622 = vmatmul.bf16.gmra.mxu0 %v4582
      %v4623 = vpop.f32.mrf.mxu0
      %v4624 = vadd.f32 %v4554, %v4623
      %v4625 = vpop.f32.mrf.mxu0
      %4626 = vdwg.mxu0
      %v4627 = vld [vmem:[#allocation3 + $0x3] sm:$0xff]
      %v4628 = vld [vmem:[#allocation3 + $0xb] sm:$0xff]
      %v4629 = vld [vmem:[#allocation3 + $0x13] sm:$0xff]
      %v4630 = vld [vmem:[#allocation3 + $0x1b] sm:$0xff]
      %v4631 = vld [vmem:[#allocation3 + $0x23] sm:$0xff]
      %v4632 = vld [vmem:[#allocation3 + $0x2b] sm:$0xff]
      %v4633 = vld [vmem:[#allocation3 + $0x33] sm:$0xff]
      %v4634 = vld [vmem:[#allocation3 + $0x3b] sm:$0xff]
      %v4635 = vld [vmem:[#allocation3 + $0x43] sm:$0xff]
      %v4636 = vld [vmem:[#allocation3 + $0x4b] sm:$0xff]
      %v4637 = vld [vmem:[#allocation3 + $0x53] sm:$0xff]
      %v4638 = vld [vmem:[#allocation3 + $0x5b] sm:$0xff]
      %v4639 = vld [vmem:[#allocation3 + $0x63] sm:$0xf]
      %v4640 = vpack.c.bf16 %v4628, %v4627
      %v4641 = vpack.c.bf16 %v4630, %v4629
      %v4642 = vpack.c.bf16 %v4632, %v4631
      %v4643 = vpack.c.bf16 %v4634, %v4633
      %v4644 = vpack.c.bf16 %v4636, %v4635
      %v4645 = vpack.c.bf16 %v4638, %v4637
      %v4646 = vpack.c.bf16 %v4639, %v4639
      %s4647 = scalar_lea.vmem %s4, 16
      %v4648 = vld [vmem:[%s4647] sm:$0xf]
      %v4649 = vld [vmem:[%s4647 + $0x4] sm:$0xf]
      %v4652 = vunpack.c.l.b16 %v4648
      %v4653 = vunpack.c.l.b16 %v4649
      %v4654 = vpack.c.b16 %v4653, %v4652
      %v4657 = vsel %vm665, %v4640, 0
      %v4660 = vsel %vm665, %v4641, 0
      %v4663 = vsel %vm665, %v4642, 0
      %v4666 = vsel %vm665, %v4643, 0
      %v4669 = vsel %vm665, %v4644, 0
      %v4672 = vsel %vm665, %v4645, 0
      %v4675 = vsel %vm665, %v4646, 0
      %4677 = vmatpush.bf16.msra.mxu0 0
      %4678 = vmatpush.bf16.msra.mxu0 0
      %4679 = vmatpush.bf16.msra.mxu0 0
      %4680 = vmatpush.bf16.msra.mxu0 0
      %4681 = vmatpush.bf16.msra.mxu0 0
      %4682 = vmatpush.bf16.msra.mxu0 0
      %4683 = vmatpush.bf16.msra.mxu0 0
      %4684 = vmatpush.bf16.msra.mxu0 %v4654
      %4685 = vmatmul.bf16.gmra.mxu0 %v4657
      %v4686 = vpop.f32.mrf.mxu0
      %v4687 = vadd.f32 0.0, %v4686
      %v4688 = vpop.f32.mrf.mxu0
      %v4689 = vadd.f32 0.0, %v4688
      %4690 = vmatmul.bf16.gmra.mxu0 %v4660
      %v4691 = vpop.f32.mrf.mxu0
      %v4692 = vadd.f32 0.0, %v4691
      %v4693 = vpop.f32.mrf.mxu0
      %v4694 = vadd.f32 0.0, %v4693
      %4695 = vmatmul.bf16.gmra.mxu0 %v4663
      %v4696 = vpop.f32.mrf.mxu0
      %v4697 = vadd.f32 0.0, %v4696
      %v4698 = vpop.f32.mrf.mxu0
      %v4699 = vadd.f32 0.0, %v4698
      %4700 = vmatmul.bf16.gmra.mxu0 %v4666
      %v4701 = vpop.f32.mrf.mxu0
      %v4702 = vadd.f32 0.0, %v4701
      %v4703 = vpop.f32.mrf.mxu0
      %v4704 = vadd.f32 0.0, %v4703
      %4705 = vmatmul.bf16.gmra.mxu0 %v4669
      %v4706 = vpop.f32.mrf.mxu0
      %v4707 = vadd.f32 0.0, %v4706
      %v4708 = vpop.f32.mrf.mxu0
      %v4709 = vadd.f32 0.0, %v4708
      %4710 = vmatmul.bf16.gmra.mxu0 %v4672
      %v4711 = vpop.f32.mrf.mxu0
      %v4712 = vadd.f32 0.0, %v4711
      %v4713 = vpop.f32.mrf.mxu0
      %v4714 = vadd.f32 0.0, %v4713
      %4715 = vmatmul.bf16.gmra.mxu0 %v4675
      %v4716 = vpop.f32.mrf.mxu0
      %v4717 = vadd.f32 0.0, %v4716
      %v4718 = vpop.f32.mrf.mxu0
      %4719 = vdwg.mxu0
      %v4720 = vadd.f32 %v4594, %v4687
      %v4721 = vadd.f32 %v4596, %v4689
      %v4722 = vadd.f32 %v4599, %v4692
      %v4723 = vadd.f32 %v4601, %v4694
      %v4724 = vadd.f32 %v4604, %v4697
      %v4725 = vadd.f32 %v4606, %v4699
      %v4726 = vadd.f32 %v4609, %v4702
      %v4727 = vadd.f32 %v4611, %v4704
      %v4728 = vadd.f32 %v4614, %v4707
      %v4729 = vadd.f32 %v4616, %v4709
      %v4730 = vadd.f32 %v4619, %v4712
      %v4731 = vadd.f32 %v4621, %v4714
      %v4732 = vadd.f32 %v4624, %v4717
      %v4733 = vld [vmem:[#allocation3 + $0xb] sm:$0xff]
      %v4734 = vld [vmem:[#allocation3 + $0x13] sm:$0xff]
      %v4735 = vld [vmem:[#allocation3 + $0x1b] sm:$0xff]
      %v4736 = vld [vmem:[#allocation3 + $0x23] sm:$0xff]
      %v4737 = vld [vmem:[#allocation3 + $0x2b] sm:$0xff]
      %v4738 = vld [vmem:[#allocation3 + $0x33] sm:$0xff]
      %v4739 = vld [vmem:[#allocation3 + $0x3b] sm:$0xff]
      %v4740 = vld [vmem:[#allocation3 + $0x43] sm:$0xff]
      %v4741 = vld [vmem:[#allocation3 + $0x4b] sm:$0xff]
      %v4742 = vld [vmem:[#allocation3 + $0x53] sm:$0xff]
      %v4743 = vld [vmem:[#allocation3 + $0x5b] sm:$0xff]
      %v4744 = vld [vmem:[#allocation3 + $0x63] sm:$0xff]
      %v4745 = vld [vmem:[#allocation3 + $0x6b] sm:$0xf]
      %v4746 = vpack.c.bf16 %v4734, %v4733
      %v4747 = vpack.c.bf16 %v4736, %v4735
      %v4748 = vpack.c.bf16 %v4738, %v4737
      %v4749 = vpack.c.bf16 %v4740, %v4739
      %v4750 = vpack.c.bf16 %v4742, %v4741
      %v4751 = vpack.c.bf16 %v4744, %v4743
      %v4752 = vpack.c.bf16 %v4745, %v4745
      %s4753 = scalar_lea.vmem %s4, 24
      %v4754 = vld [vmem:[%s4753] sm:$0xf]
      %v4755 = vld [vmem:[%s4753 + $0x4] sm:$0xf]
      %v4758 = vunpack.c.l.b16 %v4754
      %v4759 = vunpack.c.l.b16 %v4755
      %v4760 = vpack.c.b16 %v4759, %v4758
      %v4763 = vsel %vm665, %v4746, 0
      %v4766 = vsel %vm665, %v4747, 0
      %v4769 = vsel %vm665, %v4748, 0
      %v4772 = vsel %vm665, %v4749, 0
      %v4775 = vsel %vm665, %v4750, 0
      %v4778 = vsel %vm665, %v4751, 0
      %v4781 = vsel %vm665, %v4752, 0
      %4783 = vmatpush.bf16.msra.mxu0 0
      %4784 = vmatpush.bf16.msra.mxu0 0
      %4785 = vmatpush.bf16.msra.mxu0 0
      %4786 = vmatpush.bf16.msra.mxu0 0
      %4787 = vmatpush.bf16.msra.mxu0 0
      %4788 = vmatpush.bf16.msra.mxu0 0
      %4789 = vmatpush.bf16.msra.mxu0 0
      %4790 = vmatpush.bf16.msra.mxu0 %v4760
      %4791 = vmatmul.bf16.gmra.mxu0 %v4763
      %v4792 = vpop.f32.mrf.mxu0
      %v4793 = vadd.f32 0.0, %v4792
      %v4794 = vpop.f32.mrf.mxu0
      %v4795 = vadd.f32 0.0, %v4794
      %4796 = vmatmul.bf16.gmra.mxu0 %v4766
      %v4797 = vpop.f32.mrf.mxu0
      %v4798 = vadd.f32 0.0, %v4797
      %v4799 = vpop.f32.mrf.mxu0
      %v4800 = vadd.f32 0.0, %v4799
      %4801 = vmatmul.bf16.gmra.mxu0 %v4769
      %v4802 = vpop.f32.mrf.mxu0
      %v4803 = vadd.f32 0.0, %v4802
      %v4804 = vpop.f32.mrf.mxu0
      %v4805 = vadd.f32 0.0, %v4804
      %4806 = vmatmul.bf16.gmra.mxu0 %v4772
      %v4807 = vpop.f32.mrf.mxu0
      %v4808 = vadd.f32 0.0, %v4807
      %v4809 = vpop.f32.mrf.mxu0
      %v4810 = vadd.f32 0.0, %v4809
      %4811 = vmatmul.bf16.gmra.mxu0 %v4775
      %v4812 = vpop.f32.mrf.mxu0
      %v4813 = vadd.f32 0.0, %v4812
      %v4814 = vpop.f32.mrf.mxu0
      %v4815 = vadd.f32 0.0, %v4814
      %4816 = vmatmul.bf16.gmra.mxu0 %v4778
      %v4817 = vpop.f32.mrf.mxu0
      %v4818 = vadd.f32 0.0, %v4817
      %v4819 = vpop.f32.mrf.mxu0
      %v4820 = vadd.f32 0.0, %v4819
      %4821 = vmatmul.bf16.gmra.mxu0 %v4781
      %v4822 = vpop.f32.mrf.mxu0
      %v4823 = vadd.f32 0.0, %v4822
      %v4824 = vpop.f32.mrf.mxu0
      %4825 = vdwg.mxu0
      %v4826 = vadd.f32 %v4720, %v4793
      %v4827 = vadd.f32 %v4721, %v4795
      %v4828 = vadd.f32 %v4722, %v4798
      %v4829 = vadd.f32 %v4723, %v4800
      %v4830 = vadd.f32 %v4724, %v4803
      %v4831 = vadd.f32 %v4725, %v4805
      %v4832 = vadd.f32 %v4726, %v4808
      %v4833 = vadd.f32 %v4727, %v4810
      %v4834 = vadd.f32 %v4728, %v4813
      %v4835 = vadd.f32 %v4729, %v4815
      %v4836 = vadd.f32 %v4730, %v4818
      %v4837 = vadd.f32 %v4731, %v4820
      %v4838 = vadd.f32 %v4732, %v4823
      %v4839 = vld [vmem:[#allocation3 + $0xc] sm:$0xff]
      %v4840 = vld [vmem:[#allocation3 + $0x14] sm:$0xff]
      %v4841 = vld [vmem:[#allocation3 + $0x1c] sm:$0xff]
      %v4842 = vld [vmem:[#allocation3 + $0x24] sm:$0xff]
      %v4843 = vld [vmem:[#allocation3 + $0x2c] sm:$0xff]
      %v4844 = vld [vmem:[#allocation3 + $0x34] sm:$0xff]
      %v4845 = vld [vmem:[#allocation3 + $0x3c] sm:$0xff]
      %v4846 = vld [vmem:[#allocation3 + $0x44] sm:$0xff]
      %v4847 = vld [vmem:[#allocation3 + $0x4c] sm:$0xff]
      %v4848 = vld [vmem:[#allocation3 + $0x54] sm:$0xff]
      %v4849 = vld [vmem:[#allocation3 + $0x5c] sm:$0xff]
      %v4850 = vld [vmem:[#allocation3 + $0x64] sm:$0xff]
      %v4851 = vld [vmem:[#allocation3 + $0x6c] sm:$0xf]
      %v4852 = vpack.c.bf16 %v4840, %v4839
      %v4853 = vpack.c.bf16 %v4842, %v4841
      %v4854 = vpack.c.bf16 %v4844, %v4843
      %v4855 = vpack.c.bf16 %v4846, %v4845
      %v4856 = vpack.c.bf16 %v4848, %v4847
      %v4857 = vpack.c.bf16 %v4850, %v4849
      %v4858 = vpack.c.bf16 %v4851, %v4851
      %s4859 = scalar_lea.vmem %s4, 32
      %v4860 = vld [vmem:[%s4859] sm:$0xf]
      %v4861 = vld [vmem:[%s4859 + $0x4] sm:$0xf]
      %v4864 = vunpack.c.l.b16 %v4860
      %v4865 = vunpack.c.l.b16 %v4861
      %v4866 = vpack.c.b16 %v4865, %v4864
      %v4869 = vsel %vm665, %v4852, 0
      %v4872 = vsel %vm665, %v4853, 0
      %v4875 = vsel %vm665, %v4854, 0
      %v4878 = vsel %vm665, %v4855, 0
      %v4881 = vsel %vm665, %v4856, 0
      %v4884 = vsel %vm665, %v4857, 0
      %v4887 = vsel %vm665, %v4858, 0
      %4889 = vmatpush.bf16.msra.mxu0 0
      %4890 = vmatpush.bf16.msra.mxu0 0
      %4891 = vmatpush.bf16.msra.mxu0 0
      %4892 = vmatpush.bf16.msra.mxu0 0
      %4893 = vmatpush.bf16.msra.mxu0 0
      %4894 = vmatpush.bf16.msra.mxu0 0
      %4895 = vmatpush.bf16.msra.mxu0 0
      %4896 = vmatpush.bf16.msra.mxu0 %v4866
      %4897 = vmatmul.bf16.gmra.mxu0 %v4869
      %v4898 = vpop.f32.mrf.mxu0
      %v4899 = vadd.f32 0.0, %v4898
      %v4900 = vpop.f32.mrf.mxu0
      %v4901 = vadd.f32 0.0, %v4900
      %4902 = vmatmul.bf16.gmra.mxu0 %v4872
      %v4903 = vpop.f32.mrf.mxu0
      %v4904 = vadd.f32 0.0, %v4903
      %v4905 = vpop.f32.mrf.mxu0
      %v4906 = vadd.f32 0.0, %v4905
      %4907 = vmatmul.bf16.gmra.mxu0 %v4875
      %v4908 = vpop.f32.mrf.mxu0
      %v4909 = vadd.f32 0.0, %v4908
      %v4910 = vpop.f32.mrf.mxu0
      %v4911 = vadd.f32 0.0, %v4910
      %4912 = vmatmul.bf16.gmra.mxu0 %v4878
      %v4913 = vpop.f32.mrf.mxu0
      %v4914 = vadd.f32 0.0, %v4913
      %v4915 = vpop.f32.mrf.mxu0
      %v4916 = vadd.f32 0.0, %v4915
      %4917 = vmatmul.bf16.gmra.mxu0 %v4881
      %v4918 = vpop.f32.mrf.mxu0
      %v4919 = vadd.f32 0.0, %v4918
      %v4920 = vpop.f32.mrf.mxu0
      %v4921 = vadd.f32 0.0, %v4920
      %4922 = vmatmul.bf16.gmra.mxu0 %v4884
      %v4923 = vpop.f32.mrf.mxu0
      %v4924 = vadd.f32 0.0, %v4923
      %v4925 = vpop.f32.mrf.mxu0
      %v4926 = vadd.f32 0.0, %v4925
      %4927 = vmatmul.bf16.gmra.mxu0 %v4887
      %v4928 = vpop.f32.mrf.mxu0
      %v4929 = vadd.f32 0.0, %v4928
      %v4930 = vpop.f32.mrf.mxu0
      %4931 = vdwg.mxu0
      %v4932 = vadd.f32 %v4826, %v4899
      %v4933 = vadd.f32 %v4827, %v4901
      %v4934 = vadd.f32 %v4828, %v4904
      %v4935 = vadd.f32 %v4829, %v4906
      %v4936 = vadd.f32 %v4830, %v4909
      %v4937 = vadd.f32 %v4831, %v4911
      %v4938 = vadd.f32 %v4832, %v4914
      %v4939 = vadd.f32 %v4833, %v4916
      %v4940 = vadd.f32 %v4834, %v4919
      %v4941 = vadd.f32 %v4835, %v4921
      %v4942 = vadd.f32 %v4836, %v4924
      %v4943 = vadd.f32 %v4837, %v4926
      %v4944 = vadd.f32 %v4838, %v4929
      %v4945 = vld [vmem:[#allocation3 + $0xd] sm:$0xff]
      %v4946 = vld [vmem:[#allocation3 + $0x15] sm:$0xff]
      %v4947 = vld [vmem:[#allocation3 + $0x1d] sm:$0xff]
      %v4948 = vld [vmem:[#allocation3 + $0x25] sm:$0xff]
      %v4949 = vld [vmem:[#allocation3 + $0x2d] sm:$0xff]
      %v4950 = vld [vmem:[#allocation3 + $0x35] sm:$0xff]
      %v4951 = vld [vmem:[#allocation3 + $0x3d] sm:$0xff]
      %v4952 = vld [vmem:[#allocation3 + $0x45] sm:$0xff]
      %v4953 = vld [vmem:[#allocation3 + $0x4d] sm:$0xff]
      %v4954 = vld [vmem:[#allocation3 + $0x55] sm:$0xff]
      %v4955 = vld [vmem:[#allocation3 + $0x5d] sm:$0xff]
      %v4956 = vld [vmem:[#allocation3 + $0x65] sm:$0xff]
      %v4957 = vld [vmem:[#allocation3 + $0x6d] sm:$0xf]
      %v4958 = vpack.c.bf16 %v4946, %v4945
      %v4959 = vpack.c.bf16 %v4948, %v4947
      %v4960 = vpack.c.bf16 %v4950, %v4949
      %v4961 = vpack.c.bf16 %v4952, %v4951
      %v4962 = vpack.c.bf16 %v4954, %v4953
      %v4963 = vpack.c.bf16 %v4956, %v4955
      %v4964 = vpack.c.bf16 %v4957, %v4957
      %s4965 = scalar_lea.vmem %s4, 40
      %v4966 = vld [vmem:[%s4965] sm:$0xf]
      %v4967 = vld [vmem:[%s4965 + $0x4] sm:$0xf]
      %v4970 = vunpack.c.l.b16 %v4966
      %v4971 = vunpack.c.l.b16 %v4967
      %v4972 = vpack.c.b16 %v4971, %v4970
      %v4975 = vsel %vm665, %v4958, 0
      %v4978 = vsel %vm665, %v4959, 0
      %v4981 = vsel %vm665, %v4960, 0
      %v4984 = vsel %vm665, %v4961, 0
      %v4987 = vsel %vm665, %v4962, 0
      %v4990 = vsel %vm665, %v4963, 0
      %v4993 = vsel %vm665, %v4964, 0
      %4995 = vmatpush.bf16.msra.mxu0 0
      %4996 = vmatpush.bf16.msra.mxu0 0
      %4997 = vmatpush.bf16.msra.mxu0 0
      %4998 = vmatpush.bf16.msra.mxu0 0
      %4999 = vmatpush.bf16.msra.mxu0 0
      %5000 = vmatpush.bf16.msra.mxu0 0
      %5001 = vmatpush.bf16.msra.mxu0 0
      %5002 = vmatpush.bf16.msra.mxu0 %v4972
      %5003 = vmatmul.bf16.gmra.mxu0 %v4975
      %v5004 = vpop.f32.mrf.mxu0
      %v5005 = vadd.f32 0.0, %v5004
      %v5006 = vpop.f32.mrf.mxu0
      %v5007 = vadd.f32 0.0, %v5006
      %5008 = vmatmul.bf16.gmra.mxu0 %v4978
      %v5009 = vpop.f32.mrf.mxu0
      %v5010 = vadd.f32 0.0, %v5009
      %v5011 = vpop.f32.mrf.mxu0
      %v5012 = vadd.f32 0.0, %v5011
      %5013 = vmatmul.bf16.gmra.mxu0 %v4981
      %v5014 = vpop.f32.mrf.mxu0
      %v5015 = vadd.f32 0.0, %v5014
      %v5016 = vpop.f32.mrf.mxu0
      %v5017 = vadd.f32 0.0, %v5016
      %5018 = vmatmul.bf16.gmra.mxu0 %v4984
      %v5019 = vpop.f32.mrf.mxu0
      %v5020 = vadd.f32 0.0, %v5019
      %v5021 = vpop.f32.mrf.mxu0
      %v5022 = vadd.f32 0.0, %v5021
      %5023 = vmatmul.bf16.gmra.mxu0 %v4987
      %v5024 = vpop.f32.mrf.mxu0
      %v5025 = vadd.f32 0.0, %v5024
      %v5026 = vpop.f32.mrf.mxu0
      %v5027 = vadd.f32 0.0, %v5026
      %5028 = vmatmul.bf16.gmra.mxu0 %v4990
      %v5029 = vpop.f32.mrf.mxu0
      %v5030 = vadd.f32 0.0, %v5029
      %v5031 = vpop.f32.mrf.mxu0
      %v5032 = vadd.f32 0.0, %v5031
      %5033 = vmatmul.bf16.gmra.mxu0 %v4993
      %v5034 = vpop.f32.mrf.mxu0
      %v5035 = vadd.f32 0.0, %v5034
      %v5036 = vpop.f32.mrf.mxu0
      %5037 = vdwg.mxu0
      %v5038 = vadd.f32 %v4932, %v5005
      %v5039 = vadd.f32 %v4933, %v5007
      %v5040 = vadd.f32 %v4934, %v5010
      %v5041 = vadd.f32 %v4935, %v5012
      %v5042 = vadd.f32 %v4936, %v5015
      %v5043 = vadd.f32 %v4937, %v5017
      %v5044 = vadd.f32 %v4938, %v5020
      %v5045 = vadd.f32 %v4939, %v5022
      %v5046 = vadd.f32 %v4940, %v5025
      %v5047 = vadd.f32 %v4941, %v5027
      %v5048 = vadd.f32 %v4942, %v5030
      %v5049 = vadd.f32 %v4943, %v5032
      %v5050 = vadd.f32 %v4944, %v5035
      %v5051 = vld [vmem:[#allocation3 + $0x15] sm:$0xff]
      %v5052 = vld [vmem:[#allocation3 + $0x1d] sm:$0xff]
      %v5053 = vld [vmem:[#allocation3 + $0x25] sm:$0xff]
      %v5054 = vld [vmem:[#allocation3 + $0x2d] sm:$0xff]
      %v5055 = vld [vmem:[#allocation3 + $0x35] sm:$0xff]
      %v5056 = vld [vmem:[#allocation3 + $0x3d] sm:$0xff]
      %v5057 = vld [vmem:[#allocation3 + $0x45] sm:$0xff]
      %v5058 = vld [vmem:[#allocation3 + $0x4d] sm:$0xff]
      %v5059 = vld [vmem:[#allocation3 + $0x55] sm:$0xff]
      %v5060 = vld [vmem:[#allocation3 + $0x5d] sm:$0xff]
      %v5061 = vld [vmem:[#allocation3 + $0x65] sm:$0xff]
      %v5062 = vld [vmem:[#allocation3 + $0x6d] sm:$0xff]
      %v5063 = vld [vmem:[#allocation3 + $0x75] sm:$0xf]
      %v5064 = vpack.c.bf16 %v5052, %v5051
      %v5065 = vpack.c.bf16 %v5054, %v5053
      %v5066 = vpack.c.bf16 %v5056, %v5055
      %v5067 = vpack.c.bf16 %v5058, %v5057
      %v5068 = vpack.c.bf16 %v5060, %v5059
      %v5069 = vpack.c.bf16 %v5062, %v5061
      %v5070 = vpack.c.bf16 %v5063, %v5063
      %s5071 = scalar_lea.vmem %s4, 48
      %v5072 = vld [vmem:[%s5071] sm:$0xf]
      %v5073 = vld [vmem:[%s5071 + $0x4] sm:$0xf]
      %v5076 = vunpack.c.l.b16 %v5072
      %v5077 = vunpack.c.l.b16 %v5073
      %v5078 = vpack.c.b16 %v5077, %v5076
      %v5081 = vsel %vm665, %v5064, 0
      %v5084 = vsel %vm665, %v5065, 0
      %v5087 = vsel %vm665, %v5066, 0
      %v5090 = vsel %vm665, %v5067, 0
      %v5093 = vsel %vm665, %v5068, 0
      %v5096 = vsel %vm665, %v5069, 0
      %v5099 = vsel %vm665, %v5070, 0
      %5101 = vmatpush.bf16.msra.mxu0 0
      %5102 = vmatpush.bf16.msra.mxu0 0
      %5103 = vmatpush.bf16.msra.mxu0 0
      %5104 = vmatpush.bf16.msra.mxu0 0
      %5105 = vmatpush.bf16.msra.mxu0 0
      %5106 = vmatpush.bf16.msra.mxu0 0
      %5107 = vmatpush.bf16.msra.mxu0 0
      %5108 = vmatpush.bf16.msra.mxu0 %v5078
      %5109 = vmatmul.bf16.gmra.mxu0 %v5081
      %v5110 = vpop.f32.mrf.mxu0
      %v5111 = vadd.f32 0.0, %v5110
      %v5112 = vpop.f32.mrf.mxu0
      %v5113 = vadd.f32 0.0, %v5112
      %5114 = vmatmul.bf16.gmra.mxu0 %v5084
      %v5115 = vpop.f32.mrf.mxu0
      %v5116 = vadd.f32 0.0, %v5115
      %v5117 = vpop.f32.mrf.mxu0
      %v5118 = vadd.f32 0.0, %v5117
      %5119 = vmatmul.bf16.gmra.mxu0 %v5087
      %v5120 = vpop.f32.mrf.mxu0
      %v5121 = vadd.f32 0.0, %v5120
      %v5122 = vpop.f32.mrf.mxu0
      %v5123 = vadd.f32 0.0, %v5122
      %5124 = vmatmul.bf16.gmra.mxu0 %v5090
      %v5125 = vpop.f32.mrf.mxu0
      %v5126 = vadd.f32 0.0, %v5125
      %v5127 = vpop.f32.mrf.mxu0
      %v5128 = vadd.f32 0.0, %v5127
      %5129 = vmatmul.bf16.gmra.mxu0 %v5093
      %v5130 = vpop.f32.mrf.mxu0
      %v5131 = vadd.f32 0.0, %v5130
      %v5132 = vpop.f32.mrf.mxu0
      %v5133 = vadd.f32 0.0, %v5132
      %5134 = vmatmul.bf16.gmra.mxu0 %v5096
      %v5135 = vpop.f32.mrf.mxu0
      %v5136 = vadd.f32 0.0, %v5135
      %v5137 = vpop.f32.mrf.mxu0
      %v5138 = vadd.f32 0.0, %v5137
      %5139 = vmatmul.bf16.gmra.mxu0 %v5099
      %v5140 = vpop.f32.mrf.mxu0
      %v5141 = vadd.f32 0.0, %v5140
      %v5142 = vpop.f32.mrf.mxu0
      %5143 = vdwg.mxu0
      %v5144 = vadd.f32 %v5038, %v5111
      %v5145 = vadd.f32 %v5039, %v5113
      %v5146 = vadd.f32 %v5040, %v5116
      %v5147 = vadd.f32 %v5041, %v5118
      %v5148 = vadd.f32 %v5042, %v5121
      %v5149 = vadd.f32 %v5043, %v5123
      %v5150 = vadd.f32 %v5044, %v5126
      %v5151 = vadd.f32 %v5045, %v5128
      %v5152 = vadd.f32 %v5046, %v5131
      %v5153 = vadd.f32 %v5047, %v5133
      %v5154 = vadd.f32 %v5048, %v5136
      %v5155 = vadd.f32 %v5049, %v5138
      %v5156 = vadd.f32 %v5050, %v5141
      %v5157 = vld [vmem:[#allocation3 + $0x16] sm:$0xff]
      %v5158 = vld [vmem:[#allocation3 + $0x1e] sm:$0xff]
      %v5159 = vld [vmem:[#allocation3 + $0x26] sm:$0xff]
      %v5160 = vld [vmem:[#allocation3 + $0x2e] sm:$0xff]
      %v5161 = vld [vmem:[#allocation3 + $0x36] sm:$0xff]
      %v5162 = vld [vmem:[#allocation3 + $0x3e] sm:$0xff]
      %v5163 = vld [vmem:[#allocation3 + $0x46] sm:$0xff]
      %v5164 = vld [vmem:[#allocation3 + $0x4e] sm:$0xff]
      %v5165 = vld [vmem:[#allocation3 + $0x56] sm:$0xff]
      %v5166 = vld [vmem:[#allocation3 + $0x5e] sm:$0xff]
      %v5167 = vld [vmem:[#allocation3 + $0x66] sm:$0xff]
      %v5168 = vld [vmem:[#allocation3 + $0x6e] sm:$0xff]
      %v5169 = vld [vmem:[#allocation3 + $0x76] sm:$0xf]
      %v5170 = vpack.c.bf16 %v5158, %v5157
      %v5171 = vpack.c.bf16 %v5160, %v5159
      %v5172 = vpack.c.bf16 %v5162, %v5161
      %v5173 = vpack.c.bf16 %v5164, %v5163
      %v5174 = vpack.c.bf16 %v5166, %v5165
      %v5175 = vpack.c.bf16 %v5168, %v5167
      %v5176 = vpack.c.bf16 %v5169, %v5169
      %s5177 = scalar_lea.vmem %s4, 56
      %v5178 = vld [vmem:[%s5177] sm:$0xf]
      %v5179 = vld [vmem:[%s5177 + $0x4] sm:$0xf]
      %v5182 = vunpack.c.l.b16 %v5178
      %v5183 = vunpack.c.l.b16 %v5179
      %v5184 = vpack.c.b16 %v5183, %v5182
      %v5187 = vsel %vm665, %v5170, 0
      %v5190 = vsel %vm665, %v5171, 0
      %v5193 = vsel %vm665, %v5172, 0
      %v5196 = vsel %vm665, %v5173, 0
      %v5199 = vsel %vm665, %v5174, 0
      %v5202 = vsel %vm665, %v5175, 0
      %v5205 = vsel %vm665, %v5176, 0
      %5207 = vmatpush.bf16.msra.mxu0 0
      %5208 = vmatpush.bf16.msra.mxu0 0
      %5209 = vmatpush.bf16.msra.mxu0 0
      %5210 = vmatpush.bf16.msra.mxu0 0
      %5211 = vmatpush.bf16.msra.mxu0 0
      %5212 = vmatpush.bf16.msra.mxu0 0
      %5213 = vmatpush.bf16.msra.mxu0 0
      %5214 = vmatpush.bf16.msra.mxu0 %v5184
      %5215 = vmatmul.bf16.gmra.mxu0 %v5187
      %v5216 = vpop.f32.mrf.mxu0
      %v5217 = vadd.f32 0.0, %v5216
      %v5218 = vpop.f32.mrf.mxu0
      %v5219 = vadd.f32 0.0, %v5218
      %5220 = vmatmul.bf16.gmra.mxu0 %v5190
      %v5221 = vpop.f32.mrf.mxu0
      %v5222 = vadd.f32 0.0, %v5221
      %v5223 = vpop.f32.mrf.mxu0
      %v5224 = vadd.f32 0.0, %v5223
      %5225 = vmatmul.bf16.gmra.mxu0 %v5193
      %v5226 = vpop.f32.mrf.mxu0
      %v5227 = vadd.f32 0.0, %v5226
      %v5228 = vpop.f32.mrf.mxu0
      %v5229 = vadd.f32 0.0, %v5228
      %5230 = vmatmul.bf16.gmra.mxu0 %v5196
      %v5231 = vpop.f32.mrf.mxu0
      %v5232 = vadd.f32 0.0, %v5231
      %v5233 = vpop.f32.mrf.mxu0
      %v5234 = vadd.f32 0.0, %v5233
      %5235 = vmatmul.bf16.gmra.mxu0 %v5199
      %v5236 = vpop.f32.mrf.mxu0
      %v5237 = vadd.f32 0.0, %v5236
      %v5238 = vpop.f32.mrf.mxu0
      %v5239 = vadd.f32 0.0, %v5238
      %5240 = vmatmul.bf16.gmra.mxu0 %v5202
      %v5241 = vpop.f32.mrf.mxu0
      %v5242 = vadd.f32 0.0, %v5241
      %v5243 = vpop.f32.mrf.mxu0
      %v5244 = vadd.f32 0.0, %v5243
      %5245 = vmatmul.bf16.gmra.mxu0 %v5205
      %v5246 = vpop.f32.mrf.mxu0
      %v5247 = vadd.f32 0.0, %v5246
      %v5248 = vpop.f32.mrf.mxu0
      %5249 = vdwg.mxu0
      %v5250 = vadd.f32 %v5144, %v5217
      %v5251 = vadd.f32 %v5145, %v5219
      %v5252 = vadd.f32 %v5146, %v5222
      %v5253 = vadd.f32 %v5147, %v5224
      %v5254 = vadd.f32 %v5148, %v5227
      %v5255 = vadd.f32 %v5149, %v5229
      %v5256 = vadd.f32 %v5150, %v5232
      %v5257 = vadd.f32 %v5151, %v5234
      %v5258 = vadd.f32 %v5152, %v5237
      %v5259 = vadd.f32 %v5153, %v5239
      %v5260 = vadd.f32 %v5154, %v5242
      %v5261 = vadd.f32 %v5155, %v5244
      %v5262 = vadd.f32 %v5156, %v5247
      %v5263 = vld [vmem:[#allocation3 + $0x17] sm:$0xff]
      %v5264 = vld [vmem:[#allocation3 + $0x1f] sm:$0xff]
      %v5265 = vld [vmem:[#allocation3 + $0x27] sm:$0xff]
      %v5266 = vld [vmem:[#allocation3 + $0x2f] sm:$0xff]
      %v5267 = vld [vmem:[#allocation3 + $0x37] sm:$0xff]
      %v5268 = vld [vmem:[#allocation3 + $0x3f] sm:$0xff]
      %v5269 = vld [vmem:[#allocation3 + $0x47] sm:$0xff]
      %v5270 = vld [vmem:[#allocation3 + $0x4f] sm:$0xff]
      %v5271 = vld [vmem:[#allocation3 + $0x57] sm:$0xff]
      %v5272 = vld [vmem:[#allocation3 + $0x5f] sm:$0xff]
      %v5273 = vld [vmem:[#allocation3 + $0x67] sm:$0xff]
      %v5274 = vld [vmem:[#allocation3 + $0x6f] sm:$0xff]
      %v5275 = vld [vmem:[#allocation3 + $0x77] sm:$0xf]
      %v5276 = vpack.c.bf16 %v5264, %v5263
      %v5277 = vpack.c.bf16 %v5266, %v5265
      %v5278 = vpack.c.bf16 %v5268, %v5267
      %v5279 = vpack.c.bf16 %v5270, %v5269
      %v5280 = vpack.c.bf16 %v5272, %v5271
      %v5281 = vpack.c.bf16 %v5274, %v5273
      %v5282 = vpack.c.bf16 %v5275, %v5275
      %s5283 = scalar_lea.vmem %s4, 64
      %v5284 = vld [vmem:[%s5283] sm:$0xf]
      %v5285 = vld [vmem:[%s5283 + $0x4] sm:$0xf]
      %v5288 = vunpack.c.l.b16 %v5284
      %v5289 = vunpack.c.l.b16 %v5285
      %v5290 = vpack.c.b16 %v5289, %v5288
      %v5293 = vsel %vm665, %v5276, 0
      %v5296 = vsel %vm665, %v5277, 0
      %v5299 = vsel %vm665, %v5278, 0
      %v5302 = vsel %vm665, %v5279, 0
      %v5305 = vsel %vm665, %v5280, 0
      %v5308 = vsel %vm665, %v5281, 0
      %v5311 = vsel %vm665, %v5282, 0
      %5313 = vmatpush.bf16.msra.mxu0 0
      %5314 = vmatpush.bf16.msra.mxu0 0
      %5315 = vmatpush.bf16.msra.mxu0 0
      %5316 = vmatpush.bf16.msra.mxu0 0
      %5317 = vmatpush.bf16.msra.mxu0 0
      %5318 = vmatpush.bf16.msra.mxu0 0
      %5319 = vmatpush.bf16.msra.mxu0 0
      %5320 = vmatpush.bf16.msra.mxu0 %v5290
      %5321 = vmatmul.bf16.gmra.mxu0 %v5293
      %v5322 = vpop.f32.mrf.mxu0
      %v5323 = vadd.f32 0.0, %v5322
      %v5324 = vpop.f32.mrf.mxu0
      %v5325 = vadd.f32 0.0, %v5324
      %5326 = vmatmul.bf16.gmra.mxu0 %v5296
      %v5327 = vpop.f32.mrf.mxu0
      %v5328 = vadd.f32 0.0, %v5327
      %v5329 = vpop.f32.mrf.mxu0
      %v5330 = vadd.f32 0.0, %v5329
      %5331 = vmatmul.bf16.gmra.mxu0 %v5299
      %v5332 = vpop.f32.mrf.mxu0
      %v5333 = vadd.f32 0.0, %v5332
      %v5334 = vpop.f32.mrf.mxu0
      %v5335 = vadd.f32 0.0, %v5334
      %5336 = vmatmul.bf16.gmra.mxu0 %v5302
      %v5337 = vpop.f32.mrf.mxu0
      %v5338 = vadd.f32 0.0, %v5337
      %v5339 = vpop.f32.mrf.mxu0
      %v5340 = vadd.f32 0.0, %v5339
      %5341 = vmatmul.bf16.gmra.mxu0 %v5305
      %v5342 = vpop.f32.mrf.mxu0
      %v5343 = vadd.f32 0.0, %v5342
      %v5344 = vpop.f32.mrf.mxu0
      %v5345 = vadd.f32 0.0, %v5344
      %5346 = vmatmul.bf16.gmra.mxu0 %v5308
      %v5347 = vpop.f32.mrf.mxu0
      %v5348 = vadd.f32 0.0, %v5347
      %v5349 = vpop.f32.mrf.mxu0
      %v5350 = vadd.f32 0.0, %v5349
      %5351 = vmatmul.bf16.gmra.mxu0 %v5311
      %v5352 = vpop.f32.mrf.mxu0
      %v5353 = vadd.f32 0.0, %v5352
      %v5354 = vpop.f32.mrf.mxu0
      %5355 = vdwg.mxu0
      %v5356 = vadd.f32 %v5250, %v5323
      %v5357 = vadd.f32 %v5251, %v5325
      %v5358 = vadd.f32 %v5252, %v5328
      %v5359 = vadd.f32 %v5253, %v5330
      %v5360 = vadd.f32 %v5254, %v5333
      %v5361 = vadd.f32 %v5255, %v5335
      %v5362 = vadd.f32 %v5256, %v5338
      %v5363 = vadd.f32 %v5257, %v5340
      %v5364 = vadd.f32 %v5258, %v5343
      %v5365 = vadd.f32 %v5259, %v5345
      %v5366 = vadd.f32 %v5260, %v5348
      %v5367 = vadd.f32 %v5261, %v5350
      %v5368 = vadd.f32 %v5262, %v5353
      %v5369 = vld [vmem:[%s5] sm:$0x1]
      %v5371 = vperm.slane %v5369, 0
      %v5373 = vadd.f32 %v5356, %v5371
      %v5374 = vadd.f32 %v5357, %v5371
      %v5375 = vadd.f32 %v5358, %v5371
      %v5376 = vadd.f32 %v5359, %v5371
      %v5377 = vadd.f32 %v5360, %v5371
      %v5378 = vadd.f32 %v5361, %v5371
      %v5379 = vadd.f32 %v5362, %v5371
      %v5380 = vadd.f32 %v5363, %v5371
      %v5381 = vadd.f32 %v5364, %v5371
      %v5382 = vadd.f32 %v5365, %v5371
      %v5383 = vadd.f32 %v5366, %v5371
      %v5384 = vadd.f32 %v5367, %v5371
      %v5385 = vadd.f32 %v5368, %v5371
      %v5386 = vmax.f32 %v5373, 0.0
      %v5387 = vmax.f32 %v5374, 0.0
      %v5388 = vmax.f32 %v5375, 0.0
      %v5389 = vmax.f32 %v5376, 0.0
      %v5390 = vmax.f32 %v5377, 0.0
      %v5391 = vmax.f32 %v5378, 0.0
      %v5392 = vmax.f32 %v5379, 0.0
      %v5393 = vmax.f32 %v5380, 0.0
      %v5394 = vmax.f32 %v5381, 0.0
      %v5395 = vmax.f32 %v5382, 0.0
      %v5396 = vmax.f32 %v5383, 0.0
      %v5397 = vmax.f32 %v5384, 0.0
      %v5398 = vmax.f32 %v5385, 0.0
      %vm5399 = vcmask 31744
      %5400 = vst.msk [vmem:[#allocation4] sm:$0xff] %vm5399, %v5386
      %5401 = vst.msk [vmem:[#allocation4 + $0x8] sm:$0xff] %vm5399, %v5387
      %5402 = vst.msk [vmem:[#allocation4 + $0x10] sm:$0xff] %vm5399, %v5388
      %5403 = vst.msk [vmem:[#allocation4 + $0x18] sm:$0xff] %vm5399, %v5389
      %5404 = vst.msk [vmem:[#allocation4 + $0x20] sm:$0xff] %vm5399, %v5390
      %5405 = vst.msk [vmem:[#allocation4 + $0x28] sm:$0xff] %vm5399, %v5391
      %5406 = vst.msk [vmem:[#allocation4 + $0x30] sm:$0xff] %vm5399, %v5392
      %5407 = vst.msk [vmem:[#allocation4 + $0x38] sm:$0xff] %vm5399, %v5393
      %5408 = vst.msk [vmem:[#allocation4 + $0x40] sm:$0xff] %vm5399, %v5394
      %5409 = vst.msk [vmem:[#allocation4 + $0x48] sm:$0xff] %vm5399, %v5395
      %5410 = vst.msk [vmem:[#allocation4 + $0x50] sm:$0xff] %vm5399, %v5396
      %5411 = vst.msk [vmem:[#allocation4 + $0x58] sm:$0xff] %vm5399, %v5397
      %vm5412 = vcmask 27648
      %5413 = vst.msk [vmem:[#allocation4 + $0x60] sm:$0xf] %vm5412, %v5398
      %v5414 = vld [vmem:[#allocation4] sm:$0xff]
      %v5415 = vld [vmem:[#allocation4 + $0x8] sm:$0xff]
      %v5416 = vld [vmem:[#allocation4 + $0x10] sm:$0xff]
      %v5417 = vld [vmem:[#allocation4 + $0x18] sm:$0xff]
      %v5418 = vld [vmem:[#allocation4 + $0x20] sm:$0xff]
      %v5419 = vld [vmem:[#allocation4 + $0x28] sm:$0xff]
      %v5420 = vld [vmem:[#allocation4 + $0x30] sm:$0xff]
      %v5421 = vld [vmem:[#allocation4 + $0x38] sm:$0xff]
      %v5422 = vld [vmem:[#allocation4 + $0x40] sm:$0xff]
      %v5423 = vld [vmem:[#allocation4 + $0x48] sm:$0xff]
      %v5424 = vld [vmem:[#allocation4 + $0x50] sm:$0xff]
      %v5425 = vld [vmem:[#allocation4 + $0x58] sm:$0x1]
      %v5426 = vld [vmem:[#allocation4 + $0x1] sm:$0xff]
      %v5427 = vld [vmem:[#allocation4 + $0x9] sm:$0xff]
      %v5428 = vld [vmem:[#allocation4 + $0x11] sm:$0xff]
      %v5429 = vld [vmem:[#allocation4 + $0x19] sm:$0xff]
      %v5430 = vld [vmem:[#allocation4 + $0x21] sm:$0xff]
      %v5431 = vld [vmem:[#allocation4 + $0x29] sm:$0xff]
      %v5432 = vld [vmem:[#allocation4 + $0x31] sm:$0xff]
      %v5433 = vld [vmem:[#allocation4 + $0x39] sm:$0xff]
      %v5434 = vld [vmem:[#allocation4 + $0x41] sm:$0xff]
      %v5435 = vld [vmem:[#allocation4 + $0x49] sm:$0xff]
      %v5436 = vld [vmem:[#allocation4 + $0x51] sm:$0xff]
      %v5437 = vld [vmem:[#allocation4 + $0x59] sm:$0x1]
      %v5438 = vmax.f32 %v5414, %v5426
      %v5439 = vmax.f32 %v5415, %v5427
      %v5440 = vmax.f32 %v5416, %v5428
      %v5441 = vmax.f32 %v5417, %v5429
      %v5442 = vmax.f32 %v5418, %v5430
      %v5443 = vmax.f32 %v5419, %v5431
      %v5444 = vmax.f32 %v5420, %v5432
      %v5445 = vmax.f32 %v5421, %v5433
      %v5446 = vmax.f32 %v5422, %v5434
      %v5447 = vmax.f32 %v5423, %v5435
      %v5448 = vmax.f32 %v5424, %v5436
      %v5449 = vmax.f32 %v5425, %v5437
      %v5450 = vld [vmem:[#allocation4 + $0xa] sm:$0xff]
      %v5451 = vld [vmem:[#allocation4 + $0x12] sm:$0xff]
      %v5452 = vld [vmem:[#allocation4 + $0x1a] sm:$0xff]
      %v5453 = vld [vmem:[#allocation4 + $0x22] sm:$0xff]
      %v5454 = vld [vmem:[#allocation4 + $0x2a] sm:$0xff]
      %v5455 = vld [vmem:[#allocation4 + $0x32] sm:$0xff]
      %v5456 = vld [vmem:[#allocation4 + $0x3a] sm:$0xff]
      %v5457 = vld [vmem:[#allocation4 + $0x42] sm:$0xff]
      %v5458 = vld [vmem:[#allocation4 + $0x4a] sm:$0xff]
      %v5459 = vld [vmem:[#allocation4 + $0x52] sm:$0xff]
      %v5460 = vld [vmem:[#allocation4 + $0x5a] sm:$0xff]
      %v5461 = vld [vmem:[#allocation4 + $0x62] sm:$0x1]
      %v5462 = vld [vmem:[#allocation4 + $0xb] sm:$0xff]
      %v5463 = vld [vmem:[#allocation4 + $0x13] sm:$0xff]
      %v5464 = vld [vmem:[#allocation4 + $0x1b] sm:$0xff]
      %v5465 = vld [vmem:[#allocation4 + $0x23] sm:$0xff]
      %v5466 = vld [vmem:[#allocation4 + $0x2b] sm:$0xff]
      %v5467 = vld [vmem:[#allocation4 + $0x33] sm:$0xff]
      %v5468 = vld [vmem:[#allocation4 + $0x3b] sm:$0xff]
      %v5469 = vld [vmem:[#allocation4 + $0x43] sm:$0xff]
      %v5470 = vld [vmem:[#allocation4 + $0x4b] sm:$0xff]
      %v5471 = vld [vmem:[#allocation4 + $0x53] sm:$0xff]
      %v5472 = vld [vmem:[#allocation4 + $0x5b] sm:$0xff]
      %v5473 = vld [vmem:[#allocation4 + $0x63] sm:$0x1]
      %v5474 = vmax.f32 %v5450, %v5462
      %v5475 = vmax.f32 %v5451, %v5463
      %v5476 = vmax.f32 %v5452, %v5464
      %v5477 = vmax.f32 %v5453, %v5465
      %v5478 = vmax.f32 %v5454, %v5466
      %v5479 = vmax.f32 %v5455, %v5467
      %v5480 = vmax.f32 %v5456, %v5468
      %v5481 = vmax.f32 %v5457, %v5469
      %v5482 = vmax.f32 %v5458, %v5470
      %v5483 = vmax.f32 %v5459, %v5471
      %v5484 = vmax.f32 %v5460, %v5472
      %v5485 = vmax.f32 %v5461, %v5473
      %v5486 = vmax.f32 %v5438, %v5474
      %v5487 = vmax.f32 %v5439, %v5475
      %v5488 = vmax.f32 %v5440, %v5476
      %v5489 = vmax.f32 %v5441, %v5477
      %v5490 = vmax.f32 %v5442, %v5478
      %v5491 = vmax.f32 %v5443, %v5479
      %v5492 = vmax.f32 %v5444, %v5480
      %v5493 = vmax.f32 %v5445, %v5481
      %v5494 = vmax.f32 %v5446, %v5482
      %v5495 = vmax.f32 %v5447, %v5483
      %v5496 = vmax.f32 %v5448, %v5484
      %v5497 = vmax.f32 %v5449, %v5485
      %v5498 = vpack.c.bf16 %v5487, %v5486
      %v5499 = vpack.c.bf16 %v5489, %v5488
      %v5500 = vpack.c.bf16 %v5491, %v5490
      %v5501 = vpack.c.bf16 %v5493, %v5492
      %v5502 = vpack.c.bf16 %v5495, %v5494
      %v5503 = vpack.c.bf16 %v5497, %v5496
      %v5504 = vld [vmem:[%s6] sm:$0x3]
      %vm5505 = vcmask 728064
      %v5507 = vsel %vm5505, %v5504, 0
      %vm5509 = vcmask 1043456
      %vm5510 = vcmask 1044480
      %v5511 = vsel %vm5509, 4294967295, 65535
      %v5512 = vsel %vm5510, %v5511, 0
      %v5514 = vand.u32 %v5503, %v5512
      %5516 = vmatpush.bf16.msra.mxu0 0
      %5517 = vmatpush.bf16.msra.mxu0 0
      %5518 = vmatpush.bf16.msra.mxu0 %v5514
      %5519 = vmatpush.bf16.msra.mxu0 %v5502
      %5520 = vmatpush.bf16.msra.mxu0 %v5501
      %5521 = vmatpush.bf16.msra.mxu0 %v5500
      %5522 = vmatpush.bf16.msra.mxu0 %v5499
      %5523 = vmatpush.bf16.msra.mxu0 %v5498
      %5524 = vmatmul.bf16.gmra.mxu0 %v5507
      %v5525 = vpop.f32.mrf.mxu0
      %v5526 = vadd.f32 0.0, %v5525
      %v5527 = vpop.f32.mrf.mxu0
      %5528 = vdwg.mxu0
      %v5529 = vpack.c.bf16 %v5526, %v5526
      %v5530 = vld [vmem:[%s7] sm:$0x3]
      %s5531 = scalar_lea.vmem %s6, 2
      %v5532 = vld [vmem:[%s5531] sm:$0x3]
      %v5534 = vsel %vm5505, %v5532, 0
      %5536 = vmatpush.bf16.msra.mxu0 0
      %5537 = vmatpush.bf16.msra.mxu0 0
      %5538 = vmatpush.bf16.msra.mxu0 %v5514
      %5539 = vmatpush.bf16.msra.mxu0 %v5502
      %5540 = vmatpush.bf16.msra.mxu0 %v5501
      %5541 = vmatpush.bf16.msra.mxu0 %v5500
      %5542 = vmatpush.bf16.msra.mxu0 %v5499
      %5543 = vmatpush.bf16.msra.mxu0 %v5498
      %5544 = vmatmul.bf16.gmra.mxu0 %v5534
      %v5545 = vpop.f32.mrf.mxu0
      %v5546 = vadd.f32 0.0, %v5545
      %v5547 = vpop.f32.mrf.mxu0
      %5548 = vdwg.mxu0
      %v5549 = vpack.c.bf16 %v5546, %v5546
      %s5550 = scalar_lea.vmem %s7, 2
      %v5551 = vld [vmem:[%s5550] sm:$0x3]
      %v5553 = vsel %vm5399, %v5549, 0
      %v5556 = vsel %vm546, %v5551, 0
      %5558 = vmatpush.bf16.msra.mxu0 0
      %5559 = vmatpush.bf16.msra.mxu0 0
      %5560 = vmatpush.bf16.msra.mxu0 0
      %5561 = vmatpush.bf16.msra.mxu0 0
      %5562 = vmatpush.bf16.msra.mxu0 0
      %5563 = vmatpush.bf16.msra.mxu0 0
      %5564 = vmatpush.bf16.msra.mxu0 0
      %5565 = vmatpush.bf16.msra.mxu0 %v5556
      %5566 = vmatmul.bf16.gmra.mxu0 %v5553
      %v5567 = vpop.f32.mrf.mxu0
      %v5568 = vadd.f32 0.0, %v5567
      %v5569 = vpop.f32.mrf.mxu0
      %5570 = vdwg.mxu0
      %v5572 = vsel %vm5399, %v5529, 0
      %v5575 = vsel %vm546, %v5530, 0
      %5577 = vmatpush.bf16.msra.mxu0 0
      %5578 = vmatpush.bf16.msra.mxu0 0
      %5579 = vmatpush.bf16.msra.mxu0 0
      %5580 = vmatpush.bf16.msra.mxu0 0
      %5581 = vmatpush.bf16.msra.mxu0 0
      %5582 = vmatpush.bf16.msra.mxu0 0
      %5583 = vmatpush.bf16.msra.mxu0 0
      %5584 = vmatpush.bf16.msra.mxu0 %v5575
      %5585 = vmatmul.bf16.gmra.mxu0 %v5572
      %v5586 = vpop.f32.mrf.mxu0
      %v5587 = vadd.f32 %v5568, %v5586
      %v5588 = vpop.f32.mrf.mxu0
      %5589 = vdwg.mxu0
      %s5590 = scalar_lea.vmem %s6, 4
      %v5591 = vld [vmem:[%s5590] sm:$0x3]
      %v5593 = vsel %vm5505, %v5591, 0
      %5595 = vmatpush.bf16.msra.mxu0 0
      %5596 = vmatpush.bf16.msra.mxu0 0
      %5597 = vmatpush.bf16.msra.mxu0 %v5514
      %5598 = vmatpush.bf16.msra.mxu0 %v5502
      %5599 = vmatpush.bf16.msra.mxu0 %v5501
      %5600 = vmatpush.bf16.msra.mxu0 %v5500
      %5601 = vmatpush.bf16.msra.mxu0 %v5499
      %5602 = vmatpush.bf16.msra.mxu0 %v5498
      %5603 = vmatmul.bf16.gmra.mxu0 %v5593
      %v5604 = vpop.f32.mrf.mxu0
      %v5605 = vadd.f32 0.0, %v5604
      %v5606 = vpop.f32.mrf.mxu0
      %5607 = vdwg.mxu0
      %v5608 = vpack.c.bf16 %v5605, %v5605
      %s5609 = scalar_lea.vmem %s7, 4
      %v5610 = vld [vmem:[%s5609] sm:$0x3]
      %v5612 = vsel %vm5399, %v5608, 0
      %v5615 = vsel %vm546, %v5610, 0
      %5617 = vmatpush.bf16.msra.mxu0 0
      %5618 = vmatpush.bf16.msra.mxu0 0
      %5619 = vmatpush.bf16.msra.mxu0 0
      %5620 = vmatpush.bf16.msra.mxu0 0
      %5621 = vmatpush.bf16.msra.mxu0 0
      %5622 = vmatpush.bf16.msra.mxu0 0
      %5623 = vmatpush.bf16.msra.mxu0 0
      %5624 = vmatpush.bf16.msra.mxu0 %v5615
      %5625 = vmatmul.bf16.gmra.mxu0 %v5612
      %v5626 = vpop.f32.mrf.mxu0
      %v5627 = vadd.f32 0.0, %v5626
      %v5628 = vpop.f32.mrf.mxu0
      %5629 = vdwg.mxu0
      %v5630 = vadd.f32 %v5587, %v5627
      %s5631 = scalar_lea.vmem %s6, 6
      %v5632 = vld [vmem:[%s5631] sm:$0x3]
      %v5634 = vsel %vm5505, %v5632, 0
      %5636 = vmatpush.bf16.msra.mxu0 0
      %5637 = vmatpush.bf16.msra.mxu0 0
      %5638 = vmatpush.bf16.msra.mxu0 %v5514
      %5639 = vmatpush.bf16.msra.mxu0 %v5502
      %5640 = vmatpush.bf16.msra.mxu0 %v5501
      %5641 = vmatpush.bf16.msra.mxu0 %v5500
      %5642 = vmatpush.bf16.msra.mxu0 %v5499
      %5643 = vmatpush.bf16.msra.mxu0 %v5498
      %5644 = vmatmul.bf16.gmra.mxu0 %v5634
      %v5645 = vpop.f32.mrf.mxu0
      %v5646 = vadd.f32 0.0, %v5645
      %v5647 = vpop.f32.mrf.mxu0
      %5648 = vdwg.mxu0
      %v5649 = vpack.c.bf16 %v5646, %v5646
      %s5650 = scalar_lea.vmem %s7, 6
      %v5651 = vld [vmem:[%s5650] sm:$0x3]
      %v5653 = vsel %vm5399, %v5649, 0
      %v5656 = vsel %vm546, %v5651, 0
      %5658 = vmatpush.bf16.msra.mxu0 0
      %5659 = vmatpush.bf16.msra.mxu0 0
      %5660 = vmatpush.bf16.msra.mxu0 0
      %5661 = vmatpush.bf16.msra.mxu0 0
      %5662 = vmatpush.bf16.msra.mxu0 0
      %5663 = vmatpush.bf16.msra.mxu0 0
      %5664 = vmatpush.bf16.msra.mxu0 0
      %5665 = vmatpush.bf16.msra.mxu0 %v5656
      %5666 = vmatmul.bf16.gmra.mxu0 %v5653
      %v5667 = vpop.f32.mrf.mxu0
      %v5668 = vadd.f32 0.0, %v5667
      %v5669 = vpop.f32.mrf.mxu0
      %5670 = vdwg.mxu0
      %v5671 = vadd.f32 %v5630, %v5668
      %v5672 = vpack.c.bf16 %v5671, %v5671
      %v5673 = vld [vmem:[%s8] sm:$0xf]
      %v5674 = vld [vmem:[%s8 + $0x4] sm:$0xf]
      %v5675 = vld [vmem:[%s9] sm:$0x1]
      %v5677 = vperm.slane %v5675, 0
      %v5681 = vunpack.c.l.b16 %v5673
      %v5682 = vunpack.c.l.b16 %v5674
      %v5683 = vpack.c.b16 %v5682, %v5681
      %v5686 = vsel %vm665, %v5672, 0
      %5688 = vmatpush.bf16.msra.mxu0 0
      %5689 = vmatpush.bf16.msra.mxu0 0
      %5690 = vmatpush.bf16.msra.mxu0 0
      %5691 = vmatpush.bf16.msra.mxu0 0
      %5692 = vmatpush.bf16.msra.mxu0 0
      %5693 = vmatpush.bf16.msra.mxu0 0
      %5694 = vmatpush.bf16.msra.mxu0 0
      %5695 = vmatpush.bf16.msra.mxu0 %v5683
      %5696 = vmatmul.bf16.gmra.mxu0 %v5686
      %v5697 = vpop.f32.mrf.mxu0
      %v5698 = vadd.f32 %v5677, %v5697
      %v5699 = vpop.f32.mrf.mxu0
      %5700 = vdwg.mxu0
      %v5701 = vmax.f32 %v5698, 0.0
      %v5702 = vpack.c.bf16 %v5701, %v5701
      %v5703 = vld [vmem:[%s10] sm:$0xf]
      %v5704 = vld [vmem:[%s10 + $0x4] sm:$0xf]
      %v5705 = vld [vmem:[%s10 + $0x8] sm:$0xf]
      %v5706 = vld [vmem:[%s10 + $0xc] sm:$0xf]
      %v5707 = vld [vmem:[%s10 + $0x10] sm:$0xf]
      %v5708 = vld [vmem:[%s10 + $0x14] sm:$0xf]
      %v5709 = vld [vmem:[%s10 + $0x18] sm:$0xf]
      %v5710 = vld [vmem:[%s10 + $0x1c] sm:$0xf]
      %v5711 = vld [vmem:[%s10 + $0x20] sm:$0xf]
      %v5712 = vld [vmem:[%s10 + $0x24] sm:$0xf]
      %v5713 = vld [vmem:[%s10 + $0x28] sm:$0xf]
      %v5714 = vld [vmem:[%s10 + $0x2c] sm:$0xf]
      %v5715 = vld [vmem:[%s10 + $0x30] sm:$0xf]
      %v5716 = vld [vmem:[%s10 + $0x34] sm:$0xf]
      %v5717 = vld [vmem:[%s10 + $0x38] sm:$0xf]
      %v5718 = vld [vmem:[%s10 + $0x3c] sm:$0xf]
      %v5719 = vld [vmem:[%s11] sm:$0x1]
      %v5721 = vperm.slane %v5719, 0
      %v5739 = vunpack.c.l.b16 %v5703
      %v5740 = vunpack.c.l.b16 %v5704
      %v5741 = vunpack.c.l.b16 %v5705
      %v5742 = vunpack.c.l.b16 %v5706
      %v5743 = vunpack.c.l.b16 %v5707
      %v5744 = vunpack.c.l.b16 %v5708
      %v5745 = vunpack.c.l.b16 %v5709
      %v5746 = vunpack.c.l.b16 %v5710
      %v5747 = vunpack.c.l.b16 %v5711
      %v5748 = vunpack.c.l.b16 %v5712
      %v5749 = vunpack.c.l.b16 %v5713
      %v5750 = vunpack.c.l.b16 %v5714
      %v5751 = vunpack.c.l.b16 %v5715
      %v5752 = vunpack.c.l.b16 %v5716
      %v5753 = vunpack.c.l.b16 %v5717
      %v5754 = vunpack.c.l.b16 %v5718
      %v5755 = vpack.c.b16 %v5740, %v5739
      %v5756 = vpack.c.b16 %v5742, %v5741
      %v5757 = vpack.c.b16 %v5744, %v5743
      %v5758 = vpack.c.b16 %v5746, %v5745
      %v5759 = vpack.c.b16 %v5748, %v5747
      %v5760 = vpack.c.b16 %v5750, %v5749
      %v5761 = vpack.c.b16 %v5752, %v5751
      %v5762 = vpack.c.b16 %v5754, %v5753
      %5771 = vmatpush.bf16.msra.mxu0 %v5762
      %5772 = vmatpush.bf16.msra.mxu0 %v5761
      %5773 = vmatpush.bf16.msra.mxu0 %v5760
      %5774 = vmatpush.bf16.msra.mxu0 %v5759
      %5775 = vmatpush.bf16.msra.mxu0 %v5758
      %5776 = vmatpush.bf16.msra.mxu0 %v5757
      %5777 = vmatpush.bf16.msra.mxu0 %v5756
      %5778 = vmatpush.bf16.msra.mxu0 %v5755
      %5779 = vmatmul.bf16.gmra.mxu0 %v5702
      %v5780 = vpop.f32.mrf.mxu0
      %v5781 = vadd.f32 %v5721, %v5780
      %v5782 = vpop.f32.mrf.mxu0
      %5783 = vdwg.mxu0
      %v5784 = vxor.u32 %v5781, 2147483648
      %v5785 = vmul.f32 %v5784, 1.442695
      %v5786 = vpow.pop %v5785
      %v5787 = vadd.f32 %v5786, 1.0
      %v5788 = vrcp.pop %v5787
      %v5789 = vmul.f32 %v5787, %v5788
      %v5790 = vsub.f32 1.0, %v5789
      %v5791 = vmul.f32 %v5788, %v5790
      %v5792 = vadd.f32 %v5788, %v5791
      %vm5793 = vweird.f32 %v5787
      %vm5794 = vweird.f32 %v5788
      %vm5795 = vmor %vm5793, %vm5794
      %v5796 = vsel %vm5795, %v5788, %v5792
      %v5797 = vand.u32 2147483647, %v5787
      %vm5798 = vcmp.eq.f32.partialorder %v5797, 8.507059e+37
      %v5799 = vand.u32 %v5787, 2147483648
      %v5800 = vor.u32 1.1754944e-38, %v5799
      %v5801 = vsel %vm5798, %v5800, %v5796
      %v5802 = vmul.f32 1.0, %v5801
      %vm5803 = vcmask 385024
      %5804 = vst.msk [vmem:[%s415] sm:$0x1] %vm5803, %v5802
      %vm5805 = vcmask 386049
      %5806 = vst.msk [vmem:[%s415 + $0x3] sm:$0x2] %vm5805, %v5802
      %vm5807 = vcmask 387074
      %5808 = vst.msk [vmem:[%s415 + $0x6] sm:$0x4] %vm5807, %v5802
      %vm5809 = vcmask 388099
      %5810 = vst.msk [vmem:[%s415 + $0x9] sm:$0x8] %vm5809, %v5802
      %s5811 = scalar_lea.vmem %s10, 64
      %v5812 = vld [vmem:[%s5811] sm:$0xf]
      %v5813 = vld [vmem:[%s5811 + $0x4] sm:$0xf]
      %v5814 = vld [vmem:[%s5811 + $0x8] sm:$0xf]
      %v5815 = vld [vmem:[%s5811 + $0xc] sm:$0xf]
      %v5816 = vld [vmem:[%s5811 + $0x10] sm:$0xf]
      %v5817 = vld [vmem:[%s5811 + $0x14] sm:$0xf]
      %v5818 = vld [vmem:[%s5811 + $0x18] sm:$0xf]
      %v5819 = vld [vmem:[%s5811 + $0x1c] sm:$0xf]
      %v5820 = vld [vmem:[%s5811 + $0x20] sm:$0xf]
      %v5821 = vld [vmem:[%s5811 + $0x24] sm:$0xf]
      %v5822 = vld [vmem:[%s5811 + $0x28] sm:$0xf]
      %v5823 = vld [vmem:[%s5811 + $0x2c] sm:$0xf]
      %v5824 = vld [vmem:[%s5811 + $0x30] sm:$0xf]
      %v5825 = vld [vmem:[%s5811 + $0x34] sm:$0xf]
      %v5826 = vld [vmem:[%s5811 + $0x38] sm:$0xf]
      %v5827 = vld [vmem:[%s5811 + $0x3c] sm:$0xf]
      %v5828 = vld [vmem:[%s11] sm:$0x1]
      %v5830 = vperm.slane %v5828, 0
      %v5848 = vunpack.c.l.b16 %v5812
      %v5849 = vunpack.c.l.b16 %v5813
      %v5850 = vunpack.c.l.b16 %v5814
      %v5851 = vunpack.c.l.b16 %v5815
      %v5852 = vunpack.c.l.b16 %v5816
      %v5853 = vunpack.c.l.b16 %v5817
      %v5854 = vunpack.c.l.b16 %v5818
      %v5855 = vunpack.c.l.b16 %v5819
      %v5856 = vunpack.c.l.b16 %v5820
      %v5857 = vunpack.c.l.b16 %v5821
      %v5858 = vunpack.c.l.b16 %v5822
      %v5859 = vunpack.c.l.b16 %v5823
      %v5860 = vunpack.c.l.b16 %v5824
      %v5861 = vunpack.c.l.b16 %v5825
      %v5862 = vunpack.c.l.b16 %v5826
      %v5863 = vunpack.c.l.b16 %v5827
      %v5864 = vpack.c.b16 %v5849, %v5848
      %v5865 = vpack.c.b16 %v5851, %v5850
      %v5866 = vpack.c.b16 %v5853, %v5852
      %v5867 = vpack.c.b16 %v5855, %v5854
      %v5868 = vpack.c.b16 %v5857, %v5856
      %v5869 = vpack.c.b16 %v5859, %v5858
      %v5870 = vpack.c.b16 %v5861, %v5860
      %v5871 = vpack.c.b16 %v5863, %v5862
      %5880 = vmatpush.bf16.msra.mxu0 %v5871
      %5881 = vmatpush.bf16.msra.mxu0 %v5870
      %5882 = vmatpush.bf16.msra.mxu0 %v5869
      %5883 = vmatpush.bf16.msra.mxu0 %v5868
      %5884 = vmatpush.bf16.msra.mxu0 %v5867
      %5885 = vmatpush.bf16.msra.mxu0 %v5866
      %5886 = vmatpush.bf16.msra.mxu0 %v5865
      %5887 = vmatpush.bf16.msra.mxu0 %v5864
      %5888 = vmatmul.bf16.gmra.mxu0 %v5702
      %v5889 = vpop.f32.mrf.mxu0
      %v5890 = vadd.f32 %v5830, %v5889
      %v5891 = vpop.f32.mrf.mxu0
      %5892 = vdwg.mxu0
      %v5893 = vxor.u32 %v5890, 2147483648
      %v5894 = vmul.f32 %v5893, 1.442695
      %v5895 = vpow.pop %v5894
      %v5896 = vadd.f32 %v5895, 1.0
      %v5897 = vrcp.pop %v5896
      %v5898 = vmul.f32 %v5896, %v5897
      %v5899 = vsub.f32 1.0, %v5898
      %v5900 = vmul.f32 %v5897, %v5899
      %v5901 = vadd.f32 %v5897, %v5900
      %vm5902 = vweird.f32 %v5896
      %vm5903 = vweird.f32 %v5897
      %vm5904 = vmor %vm5902, %vm5903
      %v5905 = vsel %vm5904, %v5897, %v5901
      %v5906 = vand.u32 2147483647, %v5896
      %vm5907 = vcmp.eq.f32.partialorder %v5906, 8.507059e+37
      %v5908 = vand.u32 %v5896, 2147483648
      %v5909 = vor.u32 1.1754944e-38, %v5908
      %v5910 = vsel %vm5907, %v5909, %v5905
      %v5911 = vmul.f32 1.0, %v5910
      %5912 = vst.msk [vmem:[%s415 + $0x1] sm:$0x1] %vm5803, %v5911
      %5913 = vst.msk [vmem:[%s415 + $0x4] sm:$0x2] %vm5805, %v5911
      %5914 = vst.msk [vmem:[%s415 + $0x7] sm:$0x4] %vm5807, %v5911
      %5915 = vst.msk [vmem:[%s415 + $0xa] sm:$0x8] %vm5809, %v5911
      %s5916 = scalar_lea.vmem %s8, 8
      %v5917 = vld [vmem:[%s5916] sm:$0xf]
      %v5918 = vld [vmem:[%s5916 + $0x4] sm:$0xf]
      %v5919 = vld [vmem:[%s9] sm:$0x1]
      %v5921 = vperm.slane %v5919, 0
      %v5925 = vunpack.c.l.b16 %v5917
      %v5926 = vunpack.c.l.b16 %v5918
      %v5927 = vpack.c.b16 %v5926, %v5925
      %5929 = vmatpush.bf16.msra.mxu0 0
      %5930 = vmatpush.bf16.msra.mxu0 0
      %5931 = vmatpush.bf16.msra.mxu0 0
      %5932 = vmatpush.bf16.msra.mxu0 0
      %5933 = vmatpush.bf16.msra.mxu0 0
      %5934 = vmatpush.bf16.msra.mxu0 0
      %5935 = vmatpush.bf16.msra.mxu0 0
      %5936 = vmatpush.bf16.msra.mxu0 %v5927
      %5937 = vmatmul.bf16.gmra.mxu0 %v5686
      %v5938 = vpop.f32.mrf.mxu0
      %v5939 = vadd.f32 %v5921, %v5938
      %v5940 = vpop.f32.mrf.mxu0
      %5941 = vdwg.mxu0
      %v5942 = vmax.f32 %v5939, 0.0
      %v5943 = vpack.c.bf16 %v5942, %v5942
      %v5944 = vld [vmem:[%s10] sm:$0xf]
      %v5945 = vld [vmem:[%s10 + $0x4] sm:$0xf]
      %v5946 = vld [vmem:[%s10 + $0x8] sm:$0xf]
      %v5947 = vld [vmem:[%s10 + $0xc] sm:$0xf]
      %v5948 = vld [vmem:[%s10 + $0x10] sm:$0xf]
      %v5949 = vld [vmem:[%s10 + $0x14] sm:$0xf]
      %v5950 = vld [vmem:[%s10 + $0x18] sm:$0xf]
      %v5951 = vld [vmem:[%s10 + $0x1c] sm:$0xf]
      %v5952 = vld [vmem:[%s10 + $0x20] sm:$0xf]
      %v5953 = vld [vmem:[%s10 + $0x24] sm:$0xf]
      %v5954 = vld [vmem:[%s10 + $0x28] sm:$0xf]
      %v5955 = vld [vmem:[%s10 + $0x2c] sm:$0xf]
      %v5956 = vld [vmem:[%s10 + $0x30] sm:$0xf]
      %v5957 = vld [vmem:[%s10 + $0x34] sm:$0xf]
      %v5958 = vld [vmem:[%s10 + $0x38] sm:$0xf]
      %v5959 = vld [vmem:[%s10 + $0x3c] sm:$0xf]
      %v5960 = vld [vmem:[%s11] sm:$0x1]
      %v5962 = vperm.slane %v5960, 0
      %v5980 = vunpack.c.l.b16 %v5944
      %v5981 = vunpack.c.l.b16 %v5945
      %v5982 = vunpack.c.l.b16 %v5946
      %v5983 = vunpack.c.l.b16 %v5947
      %v5984 = vunpack.c.l.b16 %v5948
      %v5985 = vunpack.c.l.b16 %v5949
      %v5986 = vunpack.c.l.b16 %v5950
      %v5987 = vunpack.c.l.b16 %v5951
      %v5988 = vunpack.c.l.b16 %v5952
      %v5989 = vunpack.c.l.b16 %v5953
      %v5990 = vunpack.c.l.b16 %v5954
      %v5991 = vunpack.c.l.b16 %v5955
      %v5992 = vunpack.c.l.b16 %v5956
      %v5993 = vunpack.c.l.b16 %v5957
      %v5994 = vunpack.c.l.b16 %v5958
      %v5995 = vunpack.c.l.b16 %v5959
      %v5996 = vpack.c.b16 %v5981, %v5980
      %v5997 = vpack.c.b16 %v5983, %v5982
      %v5998 = vpack.c.b16 %v5985, %v5984
      %v5999 = vpack.c.b16 %v5987, %v5986
      %v6000 = vpack.c.b16 %v5989, %v5988
      %v6001 = vpack.c.b16 %v5991, %v5990
      %v6002 = vpack.c.b16 %v5993, %v5992
      %v6003 = vpack.c.b16 %v5995, %v5994
      %6012 = vmatpush.bf16.msra.mxu0 %v6003
      %6013 = vmatpush.bf16.msra.mxu0 %v6002
      %6014 = vmatpush.bf16.msra.mxu0 %v6001
      %6015 = vmatpush.bf16.msra.mxu0 %v6000
      %6016 = vmatpush.bf16.msra.mxu0 %v5999
      %6017 = vmatpush.bf16.msra.mxu0 %v5998
      %6018 = vmatpush.bf16.msra.mxu0 %v5997
      %6019 = vmatpush.bf16.msra.mxu0 %v5996
      %6020 = vmatmul.bf16.gmra.mxu0 %v5943
      %v6021 = vpop.f32.mrf.mxu0
      %v6022 = vadd.f32 %v5962, %v6021
      %v6023 = vpop.f32.mrf.mxu0
      %6024 = vdwg.mxu0
      %v6025 = vxor.u32 %v6022, 2147483648
      %v6026 = vmul.f32 %v6025, 1.442695
      %v6027 = vpow.pop %v6026
      %v6028 = vadd.f32 %v6027, 1.0
      %v6029 = vrcp.pop %v6028
      %v6030 = vmul.f32 %v6028, %v6029
      %v6031 = vsub.f32 1.0, %v6030
      %v6032 = vmul.f32 %v6029, %v6031
      %v6033 = vadd.f32 %v6029, %v6032
      %vm6034 = vweird.f32 %v6028
      %vm6035 = vweird.f32 %v6029
      %vm6036 = vmor %vm6034, %vm6035
      %v6037 = vsel %vm6036, %v6029, %v6033
      %v6038 = vand.u32 2147483647, %v6028
      %vm6039 = vcmp.eq.f32.partialorder %v6038, 8.507059e+37
      %v6040 = vand.u32 %v6028, 2147483648
      %v6041 = vor.u32 1.1754944e-38, %v6040
      %v6042 = vsel %vm6039, %v6041, %v6037
      %v6043 = vmul.f32 1.0, %v6042
      %6044 = vst.msk [vmem:[%s415 + $0x2] sm:$0x1] %vm5803, %v6043
      %6045 = vst.msk [vmem:[%s415 + $0x5] sm:$0x2] %vm5805, %v6043
      %6046 = vst.msk [vmem:[%s415 + $0x8] sm:$0x4] %vm5807, %v6043
      %6047 = vst.msk [vmem:[%s415 + $0xb] sm:$0x8] %vm5809, %v6043
      %v6048 = vld [vmem:[%s5811] sm:$0xf]
      %v6049 = vld [vmem:[%s5811 + $0x4] sm:$0xf]
      %v6050 = vld [vmem:[%s5811 + $0x8] sm:$0xf]
      %v6051 = vld [vmem:[%s5811 + $0xc] sm:$0xf]
      %v6052 = vld [vmem:[%s5811 + $0x10] sm:$0xf]
      %v6053 = vld [vmem:[%s5811 + $0x14] sm:$0xf]
      %v6054 = vld [vmem:[%s5811 + $0x18] sm:$0xf]
      %v6055 = vld [vmem:[%s5811 + $0x1c] sm:$0xf]
      %v6056 = vld [vmem:[%s5811 + $0x20] sm:$0xf]
      %v6057 = vld [vmem:[%s5811 + $0x24] sm:$0xf]
      %v6058 = vld [vmem:[%s5811 + $0x28] sm:$0xf]
      %v6059 = vld [vmem:[%s5811 + $0x2c] sm:$0xf]
      %v6060 = vld [vmem:[%s5811 + $0x30] sm:$0xf]
      %v6061 = vld [vmem:[%s5811 + $0x34] sm:$0xf]
      %v6062 = vld [vmem:[%s5811 + $0x38] sm:$0xf]
      %v6063 = vld [vmem:[%s5811 + $0x3c] sm:$0xf]
      %v6064 = vld [vmem:[%s11] sm:$0x1]
      %v6066 = vperm.slane %v6064, 0
      %v6084 = vunpack.c.l.b16 %v6048
      %v6085 = vunpack.c.l.b16 %v6049
      %v6086 = vunpack.c.l.b16 %v6050
      %v6087 = vunpack.c.l.b16 %v6051
      %v6088 = vunpack.c.l.b16 %v6052
      %v6089 = vunpack.c.l.b16 %v6053
      %v6090 = vunpack.c.l.b16 %v6054
      %v6091 = vunpack.c.l.b16 %v6055
      %v6092 = vunpack.c.l.b16 %v6056
      %v6093 = vunpack.c.l.b16 %v6057
      %v6094 = vunpack.c.l.b16 %v6058
      %v6095 = vunpack.c.l.b16 %v6059
      %v6096 = vunpack.c.l.b16 %v6060
      %v6097 = vunpack.c.l.b16 %v6061
      %v6098 = vunpack.c.l.b16 %v6062
      %v6099 = vunpack.c.l.b16 %v6063
      %v6100 = vpack.c.b16 %v6085, %v6084
      %v6101 = vpack.c.b16 %v6087, %v6086
      %v6102 = vpack.c.b16 %v6089, %v6088
      %v6103 = vpack.c.b16 %v6091, %v6090
      %v6104 = vpack.c.b16 %v6093, %v6092
      %v6105 = vpack.c.b16 %v6095, %v6094
      %v6106 = vpack.c.b16 %v6097, %v6096
      %v6107 = vpack.c.b16 %v6099, %v6098
      %6116 = vmatpush.bf16.msra.mxu0 %v6107
      %6117 = vmatpush.bf16.msra.mxu0 %v6106
      %6118 = vmatpush.bf16.msra.mxu0 %v6105
      %6119 = vmatpush.bf16.msra.mxu0 %v6104
      %6120 = vmatpush.bf16.msra.mxu0 %v6103
      %6121 = vmatpush.bf16.msra.mxu0 %v6102
      %6122 = vmatpush.bf16.msra.mxu0 %v6101
      %6123 = vmatpush.bf16.msra.mxu0 %v6100
      %6124 = vmatmul.bf16.gmra.mxu0 %v5943
      %v6125 = vpop.f32.mrf.mxu0
      %v6126 = vadd.f32 %v6066, %v6125
      %v6127 = vpop.f32.mrf.mxu0
      %6128 = vdwg.mxu0
      %v6129 = vxor.u32 %v6126, 2147483648
      %v6130 = vmul.f32 %v6129, 1.442695
      %v6131 = vpow.pop %v6130
      %v6132 = vadd.f32 %v6131, 1.0
      %v6133 = vrcp.pop %v6132
      %v6134 = vmul.f32 %v6132, %v6133
      %v6135 = vsub.f32 1.0, %v6134
      %v6136 = vmul.f32 %v6133, %v6135
      %v6137 = vadd.f32 %v6133, %v6136
      %vm6138 = vweird.f32 %v6132
      %vm6139 = vweird.f32 %v6133
      %vm6140 = vmor %vm6138, %vm6139
      %v6141 = vsel %vm6140, %v6133, %v6137
      %v6142 = vand.u32 2147483647, %v6132
      %vm6143 = vcmp.eq.f32.partialorder %v6142, 8.507059e+37
      %v6144 = vand.u32 %v6132, 2147483648
      %v6145 = vor.u32 1.1754944e-38, %v6144
      %v6146 = vsel %vm6143, %v6145, %v6141
      %v6147 = vmul.f32 1.0, %v6146
      %6148 = vst.msk [vmem:[%s415 + $0x3] sm:$0x1] %vm5803, %v6147
      %6149 = vst.msk [vmem:[%s415 + $0x6] sm:$0x2] %vm5805, %v6147
      %6150 = vst.msk [vmem:[%s415 + $0x9] sm:$0x4] %vm5807, %v6147
      %6151 = vst.msk [vmem:[%s415 + $0xc] sm:$0x8] %vm5809, %v6147
      %s6152 = smul.u32 2, %s23
      %p6153 = scmp.lt.s32.totalorder %s6152, 3
      %s6154 = scalar_select %p6153, %s6152, 3
      %s6155 = smul.addr %s6154, 8
      %s6156 = scalar_lea.vmem %s12, %s6155
      // Predicated region
      $region69: #{conv_autoencoder_forward.1} parent=67 // pred_check
        %p6157 = pneg %p298
      $region70: #{conv_autoencoder_forward.1} parent=67 // pred_check_branch
        %6159 = sbr.rel (%p6157) target = $region72
      $region71: #{conv_autoencoder_forward.1} parent=67 // pred_region
        %s6160 = smul.u32 2, %s23
      $region72: #{conv_autoencoder_forward.1} parent=67 // pred_fallthru
        _
    $region68: #{conv_autoencoder_forward.1} parent=5 // pred_fallthru
      _
    %p6161 = scmp.le.s32.totalorder 2, %s18
    // Predicated region
    $region73: #{conv_autoencoder_forward.1} parent=5 // pred_check
      %p6162 = pneg %p6161
    $region74: #{conv_autoencoder_forward.1} parent=5 // pred_check_branch
      %6164 = sbr.rel (%p6162) target = $region76
    $region75: #{conv_autoencoder_forward.1} parent=5 // pred_region
      %s6165 = ssub.s32 %s18, 2
      // Predicated region
      $region77: #{conv_autoencoder_forward.1} parent=75 // pred_check
        %p6166 = pneg %p304
      $region78: #{conv_autoencoder_forward.1} parent=75 // pred_check_branch
        %6168 = sbr.rel (%p6166) target = $region80
      $region79: #{conv_autoencoder_forward.1} parent=75 // pred_region
        %s6169 = smul.u32 2, %s24
        %p6170 = scmp.lt.s32.totalorder %s6169, 3
        %s6171 = scalar_select %p6170, %s6169, 3
        %s6172 = smul.addr %s6171, 8
        %s6173 = scalar_lea.vmem %s12, %s6172
      $region80: #{conv_autoencoder_forward.1} parent=75 // pred_fallthru
        _
    $region76: #{conv_autoencoder_forward.1} parent=5 // pred_fallthru
      _
  $region6: #{conv_autoencoder_forward.1} parent=0 // loop_footer
    %s22 = sadd.s32 1, %s18
  $region7: #{conv_autoencoder_forward.1} parent=0 // loop_footer_branch
    %17 = sbr.rel target = $region3
  $region8: #{conv_autoencoder_forward.1} parent=0 // loop_exit
    _

</llo_original>
